<compile_context>
chip_gen: v7x
topology: tpu7x:2x2x1
jax: 0.10.0
libtpu: 0.0.40
codegen_flags: <defaults>
</compile_context>

<pallas_src>
import functools

import jax
import jax.numpy as jnp
from jax import lax
from jax.experimental import pallas as pl
from jax.experimental.pallas import tpu as pltpu


LN_EPS = 1e-6
NORM_EPS = 1e-12
NEG_LARGE = -1e30

# Perf knobs (see header).  _MXU_DTYPE=jnp.bfloat16 is the v6e/v7x throughput knob.
_MXU_DTYPE = jnp.float32
RVQ_TILE_M = 512        # keep <=512 for v7x's 32 MiB scoped VMEM; raise on v6e (+vmem_limit_bytes)
CONV_TILE_T = 256       # ConvNeXt / downsample T tile
MATMUL_TILE_M = 1024    # upsample transposed-conv matmul tile


def _round_up(n, m):
    return ((n + m - 1) // m) * m


def _tile_rows(m, cap):
    """Split m rows into near-equal, sublane-aligned tiles <= cap; returns (tile, m_padded)."""
    nt = -(-m // cap)
    tile = _round_up(-(-m // nt), 8)
    return tile, _round_up(m, tile)


def _const_spec(arr):
    """Whole-array BlockSpec with a constant index map (resident in VMEM for the whole grid)."""
    zeros = (0,) * arr.ndim
    return pl.BlockSpec(arr.shape, lambda *_: zeros)


# --------------------------------------------------------------------- tiled matmul + bias

def _matmul_bias_kernel(a_ref, w_ref, b_ref, o_ref):
    o_ref[...] = (
        jnp.dot(a_ref[...].astype(_MXU_DTYPE), w_ref[...].astype(_MXU_DTYPE),
                preferred_element_type=jnp.float32) + b_ref[...]
    )


def matmul_bias(a, w, b):
    """a: (M, K) @ w: (K, N) + b: (1, N) -> (M, N), tiled over M rows (parallel grid)."""
    M, Kd = a.shape
    N = w.shape[1]
    tm, M_pad = _tile_rows(M, MATMUL_TILE_M)
    if M_pad != M:
        a = jnp.pad(a, ((0, M_pad - M), (0, 0)))
    out = pl.pallas_call(
        _matmul_bias_kernel,
        grid=(M_pad // tm,),
        out_shape=jax.ShapeDtypeStruct((M_pad, N), jnp.float32),
        in_specs=[
            pl.BlockSpec((tm, Kd), lambda i: (i, 0)),
            pl.BlockSpec((Kd, N), lambda i: (0, 0)),
            pl.BlockSpec((1, N), lambda i: (0, 0)),
        ],
        out_specs=pl.BlockSpec((tm, N), lambda i: (i, 0)),
        compiler_params=pltpu.CompilerParams(dimension_semantics=("parallel",)),
    )(a, w, b)
    return out[:M] if M_pad != M else out


# --------------------------------------------------------------------- ConvNeXt block body (T-tiled)

def _convnext_tail(y, buf_ref, t_idx, wdw_ref, bdw_ref, lnw_ref, lnb_ref,
                   w1_ref, b1_ref, w2_ref, b2_ref, gamma_ref,
                   *, Tt, K, pad_off, single_tile):
    """ConvNeXt block on a (Tt, C) tile `y`; the causal (K-1)-row halo from the previous T tile
    is carried in the VMEM scratch `buf_ref` (zeros at the start of every batch item)."""
    C = y.shape[1]
    base = pad_off - (K - 1)

    # --- causal depthwise conv (kernel K, groups=C)
    if single_tile:
        buf_ref[0:pad_off, :] = jnp.zeros((pad_off, C), jnp.float32)
    else:
        @pl.when(t_idx == 0)
        def _():
            buf_ref[0:pad_off, :] = jnp.zeros((pad_off, C), jnp.float32)
    buf_ref[pad_off:pad_off + Tt, :] = y

    acc = jnp.broadcast_to(bdw_ref[...], (Tt, C)).astype(jnp.float32)
    # TODO(synk): taps could be built from pltpu.roll on the in-register tile + the (K-1)-row
    # carry instead of this VMEM scratch round-trip; kept as plain loads for lowering robustness.
    for k in range(K):
        acc = acc + buf_ref[base + k:base + k + Tt, :] * wdw_ref[k:k + 1, :]

    if not single_tile:
        # carry the last K-1 rows of the (halo + tile) stream for the next T tile
        buf_ref[base:pad_off, :] = buf_ref[pad_off + Tt - (K - 1):pad_off + Tt, :]

    # --- LayerNorm over channels (eps=1e-6)
    mu = jnp.mean(acc, axis=-1, keepdims=True)
    d = acc - mu
    var = jnp.mean(d * d, axis=-1, keepdims=True)
    xn = d * lax.rsqrt(var + LN_EPS) * lnw_ref[...] + lnb_ref[...]

    # --- pointwise MLP
    h = jnp.dot(xn.astype(_MXU_DTYPE), w1_ref[...].astype(_MXU_DTYPE),
                preferred_element_type=jnp.float32) + b1_ref[...]
    # TODO(synk): nn.GELU() default is exact (erf) GELU; tanh approximation used because erf
    # lowering in Mosaic is not guaranteed (max abs deviation ~1e-3).
    h = jax.nn.gelu(h, approximate=True)
    m = jnp.dot(h.astype(_MXU_DTYPE), w2_ref[...].astype(_MXU_DTYPE),
                preferred_element_type=jnp.float32) + b2_ref[...]

    # --- layer scale + residual
    return y + gamma_ref[...] * m


def _convnext_kernel(x_ref, wdw_ref, bdw_ref, lnw_ref, lnb_ref,
                     w1_ref, b1_ref, w2_ref, b2_ref, gamma_ref, o_ref, buf_ref,
                     *, Tt, K, pad_off, single_tile):
    o_ref[...] = _convnext_tail(x_ref[...], buf_ref, pl.program_id(1),
                                wdw_ref, bdw_ref, lnw_ref, lnb_ref,
                                w1_ref, b1_ref, w2_ref, b2_ref, gamma_ref,
                                Tt=Tt, K=K, pad_off=pad_off, single_tile=single_tile)


def convnext_block(x, p):
    """x: (B, T, C) channels-last. Returns (B, T, C). Grid (B, T_tiles)."""
    B, T, C = x.shape
    K = p["wdw"].shape[0]
    pad_off = _round_up(K - 1, 8)
    tile_t, T_pad = _tile_rows(T, CONV_TILE_T)
    if T_pad != T:
        x = jnp.pad(x, ((0, 0), (0, T_pad - T), (0, 0)))
    nt = T_pad // tile_t
    kernel = functools.partial(_convnext_kernel, Tt=tile_t, K=K, pad_off=pad_off,
                               single_tile=(nt == 1))
    out = pl.pallas_call(
        kernel,
        grid=(B, nt),
        out_shape=jax.ShapeDtypeStruct((B, T_pad, C), jnp.float32),
        in_specs=[
            pl.BlockSpec((None, tile_t, C), lambda b, t: (b, t, 0)),
            _const_spec(p["wdw"]), _const_spec(p["bdw"]),
            _const_spec(p["lnw"]), _const_spec(p["lnb"]),
            _const_spec(p["w1"]), _const_spec(p["b1"]),
            _const_spec(p["w2"]), _const_spec(p["b2"]),
            _const_spec(p["gamma"]),
        ],
        out_specs=pl.BlockSpec((None, tile_t, C), lambda b, t: (b, t, 0)),
        scratch_shapes=[pltpu.VMEM((pad_off + tile_t, C), jnp.float32)],
        compiler_params=pltpu.CompilerParams(
            dimension_semantics=("parallel", "arbitrary")),
    )(x, p["wdw"], p["bdw"], p["lnw"], p["lnb"],
      p["w1"], p["b1"], p["w2"], p["b2"], p["gamma"])
    return out[:, :T, :] if T_pad != T else out


# --------------------------------------------------------------------- fused downsample stage

def _down_stage_kernel(xr_ref, cw_ref, cbias_ref, wdw_ref, bdw_ref, lnw_ref, lnb_ref,
                       w1_ref, b1_ref, w2_ref, b2_ref, gamma_ref, o_ref, buf_ref,
                       *, Tt, K, pad_off, single_tile):
    # strided causal Conv1d (kernel == stride == f) reduced to one matmul, fused with ConvNeXt.
    y = jnp.dot(xr_ref[...].astype(_MXU_DTYPE), cw_ref[...].astype(_MXU_DTYPE),
                preferred_element_type=jnp.float32) + cbias_ref[...]
    o_ref[...] = _convnext_tail(y, buf_ref, pl.program_id(1),
                                wdw_ref, bdw_ref, lnw_ref, lnb_ref,
                                w1_ref, b1_ref, w2_ref, b2_ref, gamma_ref,
                                Tt=Tt, K=K, pad_off=pad_off, single_tile=single_tile)


def down_stage(x, stage):
    """x: (B, T, Cin) -> (B, ceil(T/f), Cout). Fused [CausalConvNet(k=f, stride=f), ConvNeXt]."""
    B, T, Cin = x.shape
    KCin, Cout = stage["conv_w"].shape
    f = KCin // Cin
    T_in_pad = -(-T // f) * f                  # CausalConvNet extra right zero-padding
    if T_in_pad != T:
        x = jnp.pad(x, ((0, 0), (0, T_in_pad - T), (0, 0)))
    Td = T_in_pad // f
    xr = x.reshape(B, Td, f * Cin)             # free, contiguous reshape
    p = stage["cnx"]
    K = p["wdw"].shape[0]
    pad_off = _round_up(K - 1, 8)
    tile_t, Td_pad = _tile_rows(Td, CONV_TILE_T)
    if Td_pad != Td:
        xr = jnp.pad(xr, ((0, 0), (0, Td_pad - Td), (0, 0)))
    nt = Td_pad // tile_t
    kernel = functools.partial(_down_stage_kernel, Tt=tile_t, K=K, pad_off=pad_off,
                               single_tile=(nt == 1))
    out = pl.pallas_call(
        kernel,
        grid=(B, nt),
        out_shape=jax.ShapeDtypeStruct((B, Td_pad, Cout), jnp.float32),
        in_specs=[
            pl.BlockSpec((None, tile_t, f * Cin), lambda b, t: (b, t, 0)),
            _const_spec(stage["conv_w"]), _const_spec(stage["conv_b"]),
            _const_spec(p["wdw"]), _const_spec(p["bdw"]),
            _const_spec(p["lnw"]), _const_spec(p["lnb"]),
            _const_spec(p["w1"]), _const_spec(p["b1"]),
            _const_spec(p["w2"]), _const_spec(p["b2"]),
            _const_spec(p["gamma"]),
        ],
        out_specs=pl.BlockSpec((None, tile_t, Cout), lambda b, t: (b, t, 0)),
        scratch_shapes=[pltpu.VMEM((pad_off + tile_t, Cout), jnp.float32)],
        compiler_params=pltpu.CompilerParams(
            dimension_semantics=("parallel", "arbitrary")),
    )(xr, stage["conv_w"], stage["conv_b"], p["wdw"], p["bdw"], p["lnw"], p["lnb"],
      p["w1"], p["b1"], p["w2"], p["b2"], p["gamma"])
    return out[:, :Td, :] if Td_pad != Td else out


# --------------------------------------------------------------------- fused residual VQ chain

def _rvq_kernel(sizes_ref, z_ref, wi_ref, bi_ref, cnt_ref, cb_ref, wq_ref, bo_ref,
                zq_ref, codes_ref, lat_ref, loss_ref,
                *, inv_total, m_real, tm, mask_rows):
    q = pl.program_id(1)

    @pl.when(q == 0)
    def _init():
        zq_ref[...] = jnp.zeros_like(zq_ref)
        loss_ref[...] = jnp.zeros_like(loss_ref)

    # Running RVQ residual: z and the z_q accumulator stay resident in VMEM across q.
    residual = z_ref[...] - zq_ref[...]

    # in_proj (1x1 conv == matmul); weights indexed ref[q] from the VMEM-resident stack.
    z_e = jnp.dot(residual.astype(_MXU_DTYPE), wi_ref[q].astype(_MXU_DTYPE),
                  preferred_element_type=jnp.float32) + bi_ref[q]

    # Cosine-similarity search.  The codebook is pre-L2-normalised (and transposed) in the
    # wrapper; |z_e| is constant per row and positive, so
    #   argmin ||normalize(z_e) - normalize(c)||^2 == argmax  z_e . normalize(c).
    sim = jnp.dot(z_e.astype(_MXU_DTYPE), cnt_ref[q].astype(_MXU_DTYPE),
                  preferred_element_type=jnp.float32)            # (tm, N_max)
    n_codes = sizes_ref[q]
    col = lax.broadcasted_iota(jnp.int32, sim.shape, 1)
    sim = jnp.where(col < n_codes, sim, NEG_LARGE)               # mask padded codebook rows
    best = jnp.max(sim, axis=1, keepdims=True)
    idx = jnp.min(jnp.where(sim >= best, col, sim.shape[1]), axis=1, keepdims=True)  # (tm, 1)
    onehot = (col == idx).astype(jnp.float32)

    # codes / latents: each (q, m) block is written exactly once (no resident-slab RMW).
    codes_ref[...] = idx
    lat_ref[...] = z_e

    # commitment / codebook loss (identical values in the eval forward); scalar reduce into the
    # resident per-M-tile (1, 128) loss block.  z_q_e (codebook-space) is only needed here.
    z_q_e = jnp.dot(onehot, cb_ref[q], preferred_element_type=jnp.float32)           # (tm, D)
    diff = z_e - z_q_e
    sq = diff * diff
    if mask_rows:
        row = lax.broadcasted_iota(jnp.int32, sq.shape, 0) + pl.program_id(0) * tm
        sq = jnp.where(row < m_real, sq, 0.0)
    loss_ref[...] += jnp.sum(sq) * inv_total

    # Fused quantize + out_proj: W_q = codebook @ w_out precomputed in the wrapper, so the
    # accumulate is one well-shaped MXU op (contraction N_max, C output lanes).
    zq_ref[...] += jnp.dot(onehot.astype(_MXU_DTYPE), wq_ref[q].astype(_MXU_DTYPE),
                           preferred_element_type=jnp.float32) + bo_ref[q]


def rvq_fused(x, rvq):
    """x: (B, T, C). Runs semantic + residual quantizers as ONE fused residual chain.

    Returns z_q (B,T,C), codes (B,n_q,T) int32, latents (B,T,n_q*D), loss (scalar)."""
    B, T, C = x.shape
    M = B * T
    z = x.reshape(M, C)
    n_q, _, D = rvq["w_in"].shape

    tm, M_pad = _tile_rows(M, RVQ_TILE_M)
    if M_pad != M:
        z = jnp.pad(z, ((0, M_pad - M), (0, 0)))
    mt = M_pad // tm
    inv_total = 1.0 / float(M * D)

    kernel = functools.partial(_rvq_kernel, inv_total=inv_total, m_real=M, tm=tm,
                               mask_rows=(M_pad != M))
    # NOTE: all quantizer weights (incl. W_q) are loaded once and stay VMEM-resident; at very
    # large codebook_size*input_dim, W_q should instead be streamed per-q.
    grid_spec = pltpu.PrefetchScalarGridSpec(
        num_scalar_prefetch=1,
        grid=(mt, n_q),
        in_specs=[
            pl.BlockSpec((tm, C), lambda m, q, s: (m, 0)),    # z (resident across q)
            _const_spec(rvq["w_in"]),                         # (n_q, C, D)
            _const_spec(rvq["b_in"]),                         # (n_q, 1, D)
            _const_spec(rvq["cb_norm_t"]),                    # (n_q, D, N_max) pre-normalised
            _const_spec(rvq["codebook"]),                     # (n_q, N_max, D)
            _const_spec(rvq["w_q"]),                          # (n_q, N_max, C) = cb @ w_out
            _const_spec(rvq["b_out"]),                        # (n_q, 1, C)
        ],
        out_specs=[
            pl.BlockSpec((tm, C), lambda m, q, s: (m, 0)),          # z_q accumulator
            pl.BlockSpec((None, tm, 1), lambda m, q, s: (q, m, 0)),  # codes[q]
            pl.BlockSpec((None, tm, D), lambda m, q, s: (q, m, 0)),  # latents[q]
            pl.BlockSpec((None, 1, 128), lambda m, q, s: (m, 0, 0)),  # per-tile loss
        ],
    )
    zq, codes, lat, loss_parts = pl.pallas_call(
        kernel,
        grid_spec=grid_spec,
        out_shape=(
            jax.ShapeDtypeStruct((M_pad, C), jnp.float32),
            jax.ShapeDtypeStruct((n_q, M_pad, 1), jnp.int32),
            jax.ShapeDtypeStruct((n_q, M_pad, D), jnp.float32),
            jax.ShapeDtypeStruct((mt, 1, 128), jnp.float32),
        ),
        compiler_params=pltpu.CompilerParams(
            dimension_semantics=("parallel", "arbitrary")),
    )(rvq["sizes"], z, rvq["w_in"], rvq["b_in"], rvq["cb_norm_t"], rvq["codebook"],
      rvq["w_q"], rvq["b_out"])

    loss = jnp.sum(loss_parts[:, 0, 0])
    z_q = zq[:M].reshape(B, T, C)
    codes = codes[:, :M, 0].reshape(n_q, B, T).transpose(1, 0, 2)          # (B, n_q, T)
    latents = (lat[:, :M, :].reshape(n_q, B, T, D)
               .transpose(1, 2, 0, 3).reshape(B, T, n_q * D))              # q-major channels
    return z_q, codes, latents, loss


# --------------------------------------------------------------------- model glue

def downsample_rvq_forward(z_nct, params):
    """Full DownsampleResidualVectorQuantize.forward. Input z_nct: (B, C, T) like PyTorch."""
    B, C0, T0 = z_nct.shape
    x = jnp.transpose(z_nct, (0, 2, 1)).astype(jnp.float32)          # -> (B, T, C)

    # ---- downsample: fused [CausalConvNet(k=f, stride=f) + ConvNeXtBlock] per factor ----
    for stage in params["downsample"]:
        x = down_stage(x, stage)

    # pre_module = Identity
    # ---- semantic + residual quantizers as one fused residual chain ----
    zq, codes, latents, loss = rvq_fused(x, params["rvq"])
    commitment_loss = loss
    codebook_loss = loss
    # post_module = Identity

    # ---- upsample: [CausalTransConvNet(k=f, stride=f), ConvNeXtBlock] (reversed dims) ----
    x = zq
    for stage in params["upsample"]:
        Bc, Tc, Cc = x.shape
        Cout = stage["cnx"]["lnw"].shape[1]
        f = stage["tconv_w"].shape[1] // Cout
        y = matmul_bias(x.reshape(Bc * Tc, Cc), stage["tconv_w"], stage["tconv_b"])
        # TODO(synk): fusing this transposed-conv matmul with the following ConvNeXt block would
        # remove one (B, T*f, C) HBM round-trip but needs an in-kernel (T, f*C) -> (T*f, C)
        # lane<->sublane regroup; kept as two kernels with a free contiguous reshape in between.
        x = y.reshape(Bc, Tc * f, Cout)
        x = convnext_block(x, stage["cnx"])

    # ---- match original length (F.pad left / left-trim) ----
    Tup = x.shape[1]
    diff = T0 - Tup
    if diff > 0:
        x = jnp.pad(x, ((0, 0), (diff, 0), (0, 0)))
    elif diff < 0:
        x = x[:, -diff:, :]

    return dict(
        z=jnp.transpose(x, (0, 2, 1)),               # (B, C, T) — NCT, like PyTorch
        codes=codes,                                 # (B, 1+n_codebooks, T_ds) int32
        latents=jnp.transpose(latents, (0, 2, 1)),   # (B, (1+n)*codebook_dim, T_ds)
        commitment_loss=commitment_loss,
        codebook_loss=codebook_loss,
    )


# --------------------------------------------------------------------- params

def init_params(key, input_dim, n_codebooks, codebook_dim, codebook_size,
                semantic_codebook_size, downsample_factor, downsample_dims=None):
    if downsample_dims is None:
        downsample_dims = [input_dim for _ in range(len(downsample_factor))]
    all_dims = (input_dim,) + tuple(downsample_dims)
    keys = iter(jax.random.split(key, 256))
    nk = lambda: next(keys)

    def tn(shape, std=0.02):
        return (std * jax.random.truncated_normal(nk(), -2.0, 2.0, shape)).astype(jnp.float32)

    def init_convnext(dim, mlp_ratio=4.0, ksize=7):
        hid = int(mlp_ratio * dim)
        w_dw = tn((dim, 1, ksize))                           # torch Conv1d (dim, 1, K), groups=dim
        return dict(
            wdw=jnp.transpose(w_dw[:, 0, :], (1, 0)),        # (K, dim)
            bdw=jnp.zeros((1, dim), jnp.float32),
            lnw=jnp.ones((1, dim), jnp.float32),
            lnb=jnp.zeros((1, dim), jnp.float32),
            w1=jnp.transpose(tn((hid, dim)), (1, 0)),        # (dim, hid)
            b1=jnp.zeros((1, hid), jnp.float32),
            w2=jnp.transpose(tn((dim, hid)), (1, 0)),        # (hid, dim)
            b2=jnp.zeros((1, dim), jnp.float32),
            gamma=jnp.full((1, dim), 1e-6, jnp.float32),
        )

    n_max = max(semantic_codebook_size, codebook_size)

    def init_vq(in_dim, cb_size, cb_dim):
        w_in = tn((cb_dim, in_dim, 1))                       # torch Conv1d (out, in, 1)
        w_out = tn((in_dim, cb_dim, 1))
        cb = jax.random.normal(nk(), (cb_size, cb_dim), jnp.float32)
        cb_pad = jnp.zeros((n_max, cb_dim), jnp.float32).at[:cb_size].set(cb)
        return dict(
            w_in=jnp.transpose(w_in[:, :, 0], (1, 0)),       # (in_dim, cb_dim)
            b_in=jnp.zeros((1, cb_dim), jnp.float32),
            codebook=cb_pad,                                 # zero-padded to n_max rows
            w_out=jnp.transpose(w_out[:, :, 0], (1, 0)),     # (cb_dim, in_dim)
            b_out=jnp.zeros((1, in_dim), jnp.float32),
            size=cb_size,
        )

    downsample = []
    for idx, f in enumerate(downsample_factor):
        cin, cout = all_dims[idx], all_dims[idx + 1]
        w = tn((cout, cin, f))                               # torch Conv1d (out, in, K)
        downsample.append(dict(
            conv_w=jnp.transpose(w, (2, 1, 0)).reshape(f * cin, cout),   # (K*Cin, Cout)
            conv_b=jnp.zeros((1, cout), jnp.float32),
            cnx=init_convnext(cout),
        ))

    upsample = []
    for idx, f in reversed(list(enumerate(downsample_factor))):
        cin, cout = all_dims[idx + 1], all_dims[idx]
        w = (0.05 * jax.random.normal(nk(), (cin, cout, f))).astype(jnp.float32)  # ConvTranspose1d
        b = (0.05 * jax.random.normal(nk(), (cout,))).astype(jnp.float32)
        upsample.append(dict(
            tconv_w=jnp.transpose(w, (0, 2, 1)).reshape(cin, f * cout),  # (Cin, K*Cout)
            tconv_b=jnp.tile(b, f).reshape(1, f * cout),
            cnx=init_convnext(cout),
        ))

    # semantic quantizer first (1 codebook), then the residual RVQ codebooks — stacked so the
    # whole chain runs as one fused Pallas kernel with a grid axis over quantizers.
    vqs = [init_vq(input_dim, semantic_codebook_size, codebook_dim)]
    vqs += [init_vq(input_dim, codebook_size, codebook_dim) for _ in range(n_codebooks)]
    cb = jnp.stack([v["codebook"] for v in vqs])              # (n_q, N_max, D)
    w_out = jnp.stack([v["w_out"] for v in vqs])              # (n_q, D, C)
    # Hoisted constants: L2-normalised (and transposed) codebook for the cosine search, and the
    # fused codebook->output projection W_q = cb @ w_out.
    norms = jnp.maximum(jnp.sqrt(jnp.sum(cb * cb, axis=-1, keepdims=True)), NORM_EPS)
    rvq = dict(
        w_in=jnp.stack([v["w_in"] for v in vqs]),             # (n_q, C, D)
        b_in=jnp.stack([v["b_in"] for v in vqs]),             # (n_q, 1, D)
        codebook=cb,
        cb_norm_t=jnp.transpose(cb / norms, (0, 2, 1)),       # (n_q, D, N_max)
        w_q=jnp.einsum("qnd,qdc->qnc", cb, w_out),            # (n_q, N_max, C)
        b_out=jnp.stack([v["b_out"] for v in vqs]),            # (n_q, 1, C)
        sizes=jnp.array([v["size"] for v in vqs], jnp.int32),
    )

    return dict(downsample=downsample, upsample=upsample, rvq=rvq)


# --------------------------------------------------------------------- main

if __name__ == "__main__":
    key = jax.random.PRNGKey(0)
    k_param, k_x = jax.random.split(key)

    B, INPUT_DIM, T = 2, 32, 16
    N_CODEBOOKS, CODEBOOK_DIM = 3, 8
    CODEBOOK_SIZE, SEM_CODEBOOK_SIZE = 64, 128
    DOWNSAMPLE_FACTOR = (2, 2)

    params = init_params(
        k_param,
        input_dim=INPUT_DIM,
        n_codebooks=N_CODEBOOKS,
        codebook_dim=CODEBOOK_DIM,
        codebook_size=CODEBOOK_SIZE,
        semantic_codebook_size=SEM_CODEBOOK_SIZE,
        downsample_factor=DOWNSAMPLE_FACTOR,
    )

    x = jax.random.normal(k_x, (B, INPUT_DIM, T), jnp.float32)   # NCT, like PyTorch

    fwd = jax.jit(functools.partial(downsample_rvq_forward, params=params))
    out = fwd(x)
    jax.block_until_ready(out)

    T_ds = T // (DOWNSAMPLE_FACTOR[0] * DOWNSAMPLE_FACTOR[1])
    assert out["z"].shape == (B, INPUT_DIM, T)
    assert out["codes"].shape == (B, 1 + N_CODEBOOKS, T_ds)
    assert out["latents"].shape == (B, (1 + N_CODEBOOKS) * CODEBOOK_DIM, T_ds)
    assert out["commitment_loss"].shape == ()
    assert out["codebook_loss"].shape == ()
    assert bool(jnp.isfinite(out["commitment_loss"]))

    print("KERNEL_OK")
</pallas_src>

<mosaic_0001>
module attributes {stable_mosaic.version = 11 : i64} {
  func.func @_down_stage_kernel(%arg0: i32, %arg1: i32, %arg2: memref<1x8x64xf32, #tpu.memory_space<vmem>>, %arg3: memref<64x32xf32, #tpu.memory_space<vmem>>, %arg4: memref<1x32xf32, #tpu.memory_space<vmem>>, %arg5: memref<7x32xf32, #tpu.memory_space<vmem>>, %arg6: memref<1x32xf32, #tpu.memory_space<vmem>>, %arg7: memref<1x32xf32, #tpu.memory_space<vmem>>, %arg8: memref<1x32xf32, #tpu.memory_space<vmem>>, %arg9: memref<32x128xf32, #tpu.memory_space<vmem>>, %arg10: memref<1x128xf32, #tpu.memory_space<vmem>>, %arg11: memref<128x32xf32, #tpu.memory_space<vmem>>, %arg12: memref<1x32xf32, #tpu.memory_space<vmem>>, %arg13: memref<1x32xf32, #tpu.memory_space<vmem>>, %arg14: memref<1x8x32xf32, #tpu.memory_space<vmem>>, %arg15: memref<16x32xf32, #tpu.memory_space<vmem>>) attributes {dimension_semantics = [#tpu.dimension_semantics<parallel>, #tpu.dimension_semantics<arbitrary>], iteration_bounds = array<i64: 2, 1>, scalar_prefetch = 0 : i64, scratch_operands = 1 : i64, tpu.core_type = #tpu.core_type<tc>, window_params = [{transform_indices = @transform_0, window_bounds = array<i64: 1, 8, 64>}, {pipeline_mode = #tpu.pipeline_mode<synchronous>, transform_indices = @transform_1, window_bounds = array<i64: 64, 32>}, {pipeline_mode = #tpu.pipeline_mode<synchronous>, transform_indices = @transform_2, window_bounds = array<i64: 1, 32>}, {pipeline_mode = #tpu.pipeline_mode<synchronous>, transform_indices = @transform_3, window_bounds = array<i64: 7, 32>}, {pipeline_mode = #tpu.pipeline_mode<synchronous>, transform_indices = @transform_4, window_bounds = array<i64: 1, 32>}, {pipeline_mode = #tpu.pipeline_mode<synchronous>, transform_indices = @transform_5, window_bounds = array<i64: 1, 32>}, {pipeline_mode = #tpu.pipeline_mode<synchronous>, transform_indices = @transform_6, window_bounds = array<i64: 1, 32>}, {pipeline_mode = #tpu.pipeline_mode<synchronous>, transform_indices = @transform_7, window_bounds = array<i64: 32, 128>}, {pipeline_mode = #tpu.pipeline_mode<synchronous>, transform_indices = @transform_8, window_bounds = array<i64: 1, 128>}, {pipeline_mode = #tpu.pipeline_mode<synchronous>, transform_indices = @transform_9, window_bounds = array<i64: 128, 32>}, {pipeline_mode = #tpu.pipeline_mode<synchronous>, transform_indices = @transform_10, window_bounds = array<i64: 1, 32>}, {pipeline_mode = #tpu.pipeline_mode<synchronous>, transform_indices = @transform_11, window_bounds = array<i64: 1, 32>}, {transform_indices = @transform_12, window_bounds = array<i64: 1, 8, 32>}]} {
    %c0 = arith.constant 0 : index
    %c0_0 = arith.constant 0 : index
    %c0_1 = arith.constant 0 : index
    %0 = vector.load %arg2[%c0, %c0_0, %c0_1] : memref<1x8x64xf32, #tpu.memory_space<vmem>>, vector<1x8x64xf32>
    %1 = vector.shape_cast %0 : vector<1x8x64xf32> to vector<8x64xf32>
    %c0_2 = arith.constant 0 : index
    %c0_3 = arith.constant 0 : index
    %2 = vector.load %arg3[%c0_2, %c0_3] : memref<64x32xf32, #tpu.memory_space<vmem>>, vector<64x32xf32>
    %cst = arith.constant dense<0.000000e+00> : vector<8x32xf32>
    %3 = tpu.matmul %1, %2, %cst {dimension_numbers = #tpu.dot_dimension_numbers<[1], [0], [0], [1], [0, 0, 1, 1], [], []>} : vector<8x64xf32>, vector<64x32xf32>, vector<8x32xf32> -> vector<8x32xf32>
    %c0_4 = arith.constant 0 : index
    %c0_5 = arith.constant 0 : index
    %4 = vector.load %arg4[%c0_4, %c0_5] : memref<1x32xf32, #tpu.memory_space<vmem>>, vector<1x32xf32>
    %5 = vector.broadcast %4 : vector<1x32xf32> to vector<8x32xf32>
    %6 = arith.addf %3, %5 : vector<8x32xf32>
    %cst_6 = arith.constant 0.000000e+00 : f32
    %7 = vector.broadcast %cst_6 : f32 to vector<8x32xf32>
    %c0_7 = arith.constant 0 : index
    %c0_8 = arith.constant 0 : index
    %8 = vector.load %arg15[%c0_7, %c0_8] : memref<16x32xf32, #tpu.memory_space<vmem>>, vector<8x32xf32>
    tpu.vector_store %arg15[%c0_7, %c0_8], %7 {strides = array<i32>} : memref<16x32xf32, #tpu.memory_space<vmem>>, vector<8x32xf32>,
    %c8 = arith.constant 8 : index
    %c0_9 = arith.constant 0 : index
    %9 = vector.load %arg15[%c8, %c0_9] : memref<16x32xf32, #tpu.memory_space<vmem>>, vector<8x32xf32>
    tpu.vector_store %arg15[%c8, %c0_9], %6 {strides = array<i32>} : memref<16x32xf32, #tpu.memory_space<vmem>>, vector<8x32xf32>,
    %c0_10 = arith.constant 0 : index
    %c0_11 = arith.constant 0 : index
    %10 = vector.load %arg6[%c0_10, %c0_11] : memref<1x32xf32, #tpu.memory_space<vmem>>, vector<1x32xf32>
    %11 = vector.shape_cast %10 : vector<1x32xf32> to vector<1x32xf32>
    %12 = vector.broadcast %11 : vector<1x32xf32> to vector<8x32xf32>
    %c2 = arith.constant 2 : index
    %c0_12 = arith.constant 0 : index
    %13 = vector.load %arg15[%c2, %c0_12] : memref<16x32xf32, #tpu.memory_space<vmem>>, vector<8x32xf32>
    %c0_13 = arith.constant 0 : index
    %c0_14 = arith.constant 0 : index
    %14 = vector.load %arg5[%c0_13, %c0_14] : memref<7x32xf32, #tpu.memory_space<vmem>>, vector<1x32xf32>
    %15 = vector.broadcast %14 : vector<1x32xf32> to vector<8x32xf32>
    %16 = arith.mulf %13, %15 : vector<8x32xf32>
    %17 = arith.addf %12, %16 : vector<8x32xf32>
    %c3 = arith.constant 3 : index
    %c0_15 = arith.constant 0 : index
    %18 = vector.load %arg15[%c3, %c0_15] : memref<16x32xf32, #tpu.memory_space<vmem>>, vector<8x32xf32>
    %c1 = arith.constant 1 : index
    %c0_16 = arith.constant 0 : index
    %19 = vector.load %arg5[%c1, %c0_16] : memref<7x32xf32, #tpu.memory_space<vmem>>, vector<1x32xf32>
    %20 = vector.broadcast %19 : vector<1x32xf32> to vector<8x32xf32>
    %21 = arith.mulf %18, %20 : vector<8x32xf32>
    %22 = arith.addf %17, %21 : vector<8x32xf32>
    %c4 = arith.constant 4 : index
    %c0_17 = arith.constant 0 : index
    %23 = vector.load %arg15[%c4, %c0_17] : memref<16x32xf32, #tpu.memory_space<vmem>>, vector<8x32xf32>
    %c2_18 = arith.constant 2 : index
    %c0_19 = arith.constant 0 : index
    %24 = vector.load %arg5[%c2_18, %c0_19] : memref<7x32xf32, #tpu.memory_space<vmem>>, vector<1x32xf32>
    %25 = vector.broadcast %24 : vector<1x32xf32> to vector<8x32xf32>
    %26 = arith.mulf %23, %25 : vector<8x32xf32>
    %27 = arith.addf %22, %26 : vector<8x32xf32>
    %c5 = arith.constant 5 : index
    %c0_20 = arith.constant 0 : index
    %28 = vector.load %arg15[%c5, %c0_20] : memref<16x32xf32, #tpu.memory_space<vmem>>, vector<8x32xf32>
    %c3_21 = arith.constant 3 : index
    %c0_22 = arith.constant 0 : index
    %29 = vector.load %arg5[%c3_21, %c0_22] : memref<7x32xf32, #tpu.memory_space<vmem>>, vector<1x32xf32>
    %30 = vector.broadcast %29 : vector<1x32xf32> to vector<8x32xf32>
    %31 = arith.mulf %28, %30 : vector<8x32xf32>
    %32 = arith.addf %27, %31 : vector<8x32xf32>
    %c6 = arith.constant 6 : index
    %c0_23 = arith.constant 0 : index
    %33 = vector.load %arg15[%c6, %c0_23] : memref<16x32xf32, #tpu.memory_space<vmem>>, vector<8x32xf32>
    %c4_24 = arith.constant 4 : index
    %c0_25 = arith.constant 0 : index
    %34 = vector.load %arg5[%c4_24, %c0_25] : memref<7x32xf32, #tpu.memory_space<vmem>>, vector<1x32xf32>
    %35 = vector.broadcast %34 : vector<1x32xf32> to vector<8x32xf32>
    %36 = arith.mulf %33, %35 : vector<8x32xf32>
    %37 = arith.addf %32, %36 : vector<8x32xf32>
    %c7 = arith.constant 7 : index
    %c0_26 = arith.constant 0 : index
    %38 = vector.load %arg15[%c7, %c0_26] : memref<16x32xf32, #tpu.memory_space<vmem>>, vector<8x32xf32>
    %c5_27 = arith.constant 5 : index
    %c0_28 = arith.constant 0 : index
    %39 = vector.load %arg5[%c5_27, %c0_28] : memref<7x32xf32, #tpu.memory_space<vmem>>, vector<1x32xf32>
    %40 = vector.broadcast %39 : vector<1x32xf32> to vector<8x32xf32>
    %41 = arith.mulf %38, %40 : vector<8x32xf32>
    %42 = arith.addf %37, %41 : vector<8x32xf32>
    %c8_29 = arith.constant 8 : index
    %c0_30 = arith.constant 0 : index
    %43 = vector.load %arg15[%c8_29, %c0_30] : memref<16x32xf32, #tpu.memory_space<vmem>>, vector<8x32xf32>
    %c6_31 = arith.constant 6 : index
    %c0_32 = arith.constant 0 : index
    %44 = vector.load %arg5[%c6_31, %c0_32] : memref<7x32xf32, #tpu.memory_space<vmem>>, vector<1x32xf32>
    %45 = vector.broadcast %44 : vector<1x32xf32> to vector<8x32xf32>
    %46 = arith.mulf %43, %45 : vector<8x32xf32>
    %47 = arith.addf %42, %46 : vector<8x32xf32>
    %cst_33 = arith.constant dense<0.000000e+00> : vector<8xf32>
    %48 = vector.multi_reduction <add>, %47, %cst_33 [1] : vector<8x32xf32> to vector<8xf32>
    %49 = vector.shape_cast %48 : vector<8xf32> to vector<8x1xf32>
    %cst_34 = arith.constant 3.200000e+01 : f32
    %50 = vector.broadcast %cst_34 : f32 to vector<8x1xf32>
    %51 = arith.divf %49, %50 : vector<8x1xf32>
    %52 = vector.broadcast %51 : vector<8x1xf32> to vector<8x32xf32>
    %53 = arith.subf %47, %52 : vector<8x32xf32>
    %54 = arith.mulf %53, %53 : vector<8x32xf32>
    %cst_35 = arith.constant dense<0.000000e+00> : vector<8xf32>
    %55 = vector.multi_reduction <add>, %54, %cst_35 [1] : vector<8x32xf32> to vector<8xf32>
    %56 = vector.shape_cast %55 : vector<8xf32> to vector<8x1xf32>
    %cst_36 = arith.constant 3.200000e+01 : f32
    %57 = vector.broadcast %cst_36 : f32 to vector<8x1xf32>
    %58 = arith.divf %56, %57 : vector<8x1xf32>
    %cst_37 = arith.constant 9.99999997E-7 : f32
    %59 = vector.broadcast %cst_37 : f32 to vector<8x1xf32>
    %60 = arith.addf %58, %59 : vector<8x1xf32>
    %61 = math.rsqrt %60 : vector<8x1xf32>
    %62 = vector.broadcast %61 : vector<8x1xf32> to vector<8x32xf32>
    %63 = arith.mulf %53, %62 : vector<8x32xf32>
    %c0_38 = arith.constant 0 : index
    %c0_39 = arith.constant 0 : index
    %64 = vector.load %arg7[%c0_38, %c0_39] : memref<1x32xf32, #tpu.memory_space<vmem>>, vector<1x32xf32>
    %65 = vector.broadcast %64 : vector<1x32xf32> to vector<8x32xf32>
    %66 = arith.mulf %63, %65 : vector<8x32xf32>
    %c0_40 = arith.constant 0 : index
    %c0_41 = arith.constant 0 : index
    %67 = vector.load %arg8[%c0_40, %c0_41] : memref<1x32xf32, #tpu.memory_space<vmem>>, vector<1x32xf32>
    %68 = vector.broadcast %67 : vector<1x32xf32> to vector<8x32xf32>
    %69 = arith.addf %66, %68 : vector<8x32xf32>
    %c0_42 = arith.constant 0 : index
    %c0_43 = arith.constant 0 : index
    %70 = vector.load %arg9[%c0_42, %c0_43] : memref<32x128xf32, #tpu.memory_space<vmem>>, vector<32x128xf32>
    %cst_44 = arith.constant dense<0.000000e+00> : vector<8x128xf32>
    %71 = tpu.matmul %69, %70, %cst_44 {dimension_numbers = #tpu.dot_dimension_numbers<[1], [0], [0], [1], [0, 0, 1, 1], [], []>} : vector<8x32xf32>, vector<32x128xf32>, vector<8x128xf32> -> vector<8x128xf32>
    %c0_45 = arith.constant 0 : index
    %c0_46 = arith.constant 0 : index
    %72 = vector.load %arg10[%c0_45, %c0_46] : memref<1x128xf32, #tpu.memory_space<vmem>>, vector<1x128xf32>
    %73 = vector.broadcast %72 : vector<1x128xf32> to vector<8x128xf32>
    %74 = arith.addf %71, %73 : vector<8x128xf32>
    %75 = arith.mulf %74, %74 : vector<8x128xf32>
    %76 = arith.mulf %74, %75 : vector<8x128xf32>
    %cst_47 = arith.constant 4.471500e-02 : f32
    %77 = vector.broadcast %cst_47 : f32 to vector<8x128xf32>
    %78 = arith.mulf %77, %76 : vector<8x128xf32>
    %79 = arith.addf %74, %78 : vector<8x128xf32>
    %cst_48 = arith.constant 0.797884583 : f32
    %80 = vector.broadcast %cst_48 : f32 to vector<8x128xf32>
    %81 = arith.mulf %80, %79 : vector<8x128xf32>
    %82 = math.tanh %81 : vector<8x128xf32>
    %cst_49 = arith.constant 1.000000e+00 : f32
    %83 = vector.broadcast %cst_49 : f32 to vector<8x128xf32>
    %84 = arith.addf %83, %82 : vector<8x128xf32>
    %cst_50 = arith.constant 5.000000e-01 : f32
    %85 = vector.broadcast %cst_50 : f32 to vector<8x128xf32>
    %86 = arith.mulf %85, %84 : vector<8x128xf32>
    %87 = arith.mulf %74, %86 : vector<8x128xf32>
    %c0_51 = arith.constant 0 : index
    %c0_52 = arith.constant 0 : index
    %88 = vector.load %arg11[%c0_51, %c0_52] : memref<128x32xf32, #tpu.memory_space<vmem>>, vector<128x32xf32>
    %cst_53 = arith.constant dense<0.000000e+00> : vector<8x32xf32>
    %89 = tpu.matmul %87, %88, %cst_53 {dimension_numbers = #tpu.dot_dimension_numbers<[1], [0], [0], [1], [0, 0, 1, 1], [], []>} : vector<8x128xf32>, vector<128x32xf32>, vector<8x32xf32> -> vector<8x32xf32>
    %c0_54 = arith.constant 0 : index
    %c0_55 = arith.constant 0 : index
    %90 = vector.load %arg12[%c0_54, %c0_55] : memref<1x32xf32, #tpu.memory_space<vmem>>, vector<1x32xf32>
    %91 = vector.broadcast %90 : vector<1x32xf32> to vector<8x32xf32>
    %92 = arith.addf %89, %91 : vector<8x32xf32>
    %c0_56 = arith.constant 0 : index
    %c0_57 = arith.constant 0 : index
    %93 = vector.load %arg13[%c0_56, %c0_57] : memref<1x32xf32, #tpu.memory_space<vmem>>, vector<1x32xf32>
    %94 = vector.broadcast %93 : vector<1x32xf32> to vector<8x32xf32>
    %95 = arith.mulf %94, %92 : vector<8x32xf32>
    %96 = arith.addf %6, %95 : vector<8x32xf32>
    %c0_58 = arith.constant 0 : index
    %c0_59 = arith.constant 0 : index
    %c0_60 = arith.constant 0 : index
    %97 = vector.load %arg14[%c0_58, %c0_59, %c0_60] : memref<1x8x32xf32, #tpu.memory_space<vmem>>, vector<1x8x32xf32>
    %98 = vector.shape_cast %97 : vector<1x8x32xf32> to vector<8x32xf32>
    %99 = vector.shape_cast %96 : vector<8x32xf32> to vector<1x8x32xf32>
    tpu.vector_store %arg14[%c0_58, %c0_59, %c0_60], %99 {strides = array<i32>} : memref<1x8x32xf32, #tpu.memory_space<vmem>>, vector<1x8x32xf32>,
    return
  }
  func.func @transform_0(%arg0: i32, %arg1: i32) -> (i32, i32, i32) {
    %c0_i32 = arith.constant 0 : i32
    %c0_i32_0 = arith.constant 0 : i32
    return %arg0, %arg1, %c0_i32 : i32, i32, i32
  }
  func.func @transform_1(%arg0: i32, %arg1: i32) -> (i32, i32) {
    %c0_i32 = arith.constant 0 : i32
    %c0_i32_0 = arith.constant 0 : i32
    %c0_i32_1 = arith.constant 0 : i32
    return %c0_i32, %c0_i32_0 : i32, i32
  }
  func.func @transform_2(%arg0: i32, %arg1: i32) -> (i32, i32) {
    %c0_i32 = arith.constant 0 : i32
    %c0_i32_0 = arith.constant 0 : i32
    %c0_i32_1 = arith.constant 0 : i32
    return %c0_i32, %c0_i32_0 : i32, i32
  }
  func.func @transform_3(%arg0: i32, %arg1: i32) -> (i32, i32) {
    %c0_i32 = arith.constant 0 : i32
    %c0_i32_0 = arith.constant 0 : i32
    %c0_i32_1 = arith.constant 0 : i32
    return %c0_i32, %c0_i32_0 : i32, i32
  }
  func.func @transform_4(%arg0: i32, %arg1: i32) -> (i32, i32) {
    %c0_i32 = arith.constant 0 : i32
    %c0_i32_0 = arith.constant 0 : i32
    %c0_i32_1 = arith.constant 0 : i32
    return %c0_i32, %c0_i32_0 : i32, i32
  }
  func.func @transform_5(%arg0: i32, %arg1: i32) -> (i32, i32) {
    %c0_i32 = arith.constant 0 : i32
    %c0_i32_0 = arith.constant 0 : i32
    %c0_i32_1 = arith.constant 0 : i32
    return %c0_i32, %c0_i32_0 : i32, i32
  }
  func.func @transform_6(%arg0: i32, %arg1: i32) -> (i32, i32) {
    %c0_i32 = arith.constant 0 : i32
    %c0_i32_0 = arith.constant 0 : i32
    %c0_i32_1 = arith.constant 0 : i32
    return %c0_i32, %c0_i32_0 : i32, i32
  }
  func.func @transform_7(%arg0: i32, %arg1: i32) -> (i32, i32) {
    %c0_i32 = arith.constant 0 : i32
    %c0_i32_0 = arith.constant 0 : i32
    %c0_i32_1 = arith.constant 0 : i32
    return %c0_i32, %c0_i32_0 : i32, i32
  }
  func.func @transform_8(%arg0: i32, %arg1: i32) -> (i32, i32) {
    %c0_i32 = arith.constant 0 : i32
    %c0_i32_0 = arith.constant 0 : i32
    %c0_i32_1 = arith.constant 0 : i32
    return %c0_i32, %c0_i32_0 : i32, i32
  }
  func.func @transform_9(%arg0: i32, %arg1: i32) -> (i32, i32) {
    %c0_i32 = arith.constant 0 : i32
    %c0_i32_0 = arith.constant 0 : i32
    %c0_i32_1 = arith.constant 0 : i32
    return %c0_i32, %c0_i32_0 : i32, i32
  }
  func.func @transform_10(%arg0: i32, %arg1: i32) -> (i32, i32) {
    %c0_i32 = arith.constant 0 : i32
    %c0_i32_0 = arith.constant 0 : i32
    %c0_i32_1 = arith.constant 0 : i32
    return %c0_i32, %c0_i32_0 : i32, i32
  }
  func.func @transform_11(%arg0: i32, %arg1: i32) -> (i32, i32) {
    %c0_i32 = arith.constant 0 : i32
    %c0_i32_0 = arith.constant 0 : i32
    %c0_i32_1 = arith.constant 0 : i32
    return %c0_i32, %c0_i32_0 : i32, i32
  }
  func.func @transform_12(%arg0: i32, %arg1: i32) -> (i32, i32, i32) {
    %c0_i32 = arith.constant 0 : i32
    %c0_i32_0 = arith.constant 0 : i32
    return %arg0, %arg1, %c0_i32 : i32, i32, i32
  }
}

module attributes {stable_mosaic.version = 11 : i64} {
  func.func @_down_stage_kernel(%arg0: i32, %arg1: i32, %arg2: memref<1x8x64xf32, #tpu.memory_space<vmem>>, %arg3: memref<64x32xf32, #tpu.memory_space<vmem>>, %arg4: memref<1x32xf32, #tpu.memory_space<vmem>>, %arg5: memref<7x32xf32, #tpu.memory_space<vmem>>, %arg6: memref<1x32xf32, #tpu.memory_space<vmem>>, %arg7: memref<1x32xf32, #tpu.memory_space<vmem>>, %arg8: memref<1x32xf32, #tpu.memory_space<vmem>>, %arg9: memref<32x128xf32, #tpu.memory_space<vmem>>, %arg10: memref<1x128xf32, #tpu.memory_space<vmem>>, %arg11: memref<128x32xf32, #tpu.memory_space<vmem>>, %arg12: memref<1x32xf32, #tpu.memory_space<vmem>>, %arg13: memref<1x32xf32, #tpu.memory_space<vmem>>, %arg14: memref<1x8x32xf32, #tpu.memory_space<vmem>>, %arg15: memref<16x32xf32, #tpu.memory_space<vmem>>) attributes {dimension_semantics = [#tpu.dimension_semantics<parallel>, #tpu.dimension_semantics<arbitrary>], iteration_bounds = array<i64: 2, 1>, scalar_prefetch = 0 : i64, scratch_operands = 1 : i64, tpu.core_type = #tpu.core_type<tc>, window_params = [{transform_indices = @transform_0, window_bounds = array<i64: 1, 8, 64>}, {pipeline_mode = #tpu.pipeline_mode<synchronous>, transform_indices = @transform_1, window_bounds = array<i64: 64, 32>}, {pipeline_mode = #tpu.pipeline_mode<synchronous>, transform_indices = @transform_2, window_bounds = array<i64: 1, 32>}, {pipeline_mode = #tpu.pipeline_mode<synchronous>, transform_indices = @transform_3, window_bounds = array<i64: 7, 32>}, {pipeline_mode = #tpu.pipeline_mode<synchronous>, transform_indices = @transform_4, window_bounds = array<i64: 1, 32>}, {pipeline_mode = #tpu.pipeline_mode<synchronous>, transform_indices = @transform_5, window_bounds = array<i64: 1, 32>}, {pipeline_mode = #tpu.pipeline_mode<synchronous>, transform_indices = @transform_6, window_bounds = array<i64: 1, 32>}, {pipeline_mode = #tpu.pipeline_mode<synchronous>, transform_indices = @transform_7, window_bounds = array<i64: 32, 128>}, {pipeline_mode = #tpu.pipeline_mode<synchronous>, transform_indices = @transform_8, window_bounds = array<i64: 1, 128>}, {pipeline_mode = #tpu.pipeline_mode<synchronous>, transform_indices = @transform_9, window_bounds = array<i64: 128, 32>}, {pipeline_mode = #tpu.pipeline_mode<synchronous>, transform_indices = @transform_10, window_bounds = array<i64: 1, 32>}, {pipeline_mode = #tpu.pipeline_mode<synchronous>, transform_indices = @transform_11, window_bounds = array<i64: 1, 32>}, {transform_indices = @transform_12, window_bounds = array<i64: 1, 8, 32>}]} {
    %c0 = arith.constant 0 : index
    %c0_0 = arith.constant 0 : index
    %c0_1 = arith.constant 0 : index
    %0 = vector.load %arg2[%c0, %c0_0, %c0_1] : memref<1x8x64xf32, #tpu.memory_space<vmem>>, vector<1x8x64xf32>
    %1 = vector.shape_cast %0 : vector<1x8x64xf32> to vector<8x64xf32>
    %c0_2 = arith.constant 0 : index
    %c0_3 = arith.constant 0 : index
    %2 = vector.load %arg3[%c0_2, %c0_3] : memref<64x32xf32, #tpu.memory_space<vmem>>, vector<64x32xf32>
    %cst = arith.constant dense<0.000000e+00> : vector<8x32xf32>
    %3 = tpu.matmul %1, %2, %cst {dimension_numbers = #tpu.dot_dimension_numbers<[1], [0], [0], [1], [0, 0, 1, 1], [], []>} : vector<8x64xf32>, vector<64x32xf32>, vector<8x32xf32> -> vector<8x32xf32>
    %c0_4 = arith.constant 0 : index
    %c0_5 = arith.constant 0 : index
    %4 = vector.load %arg4[%c0_4, %c0_5] : memref<1x32xf32, #tpu.memory_space<vmem>>, vector<1x32xf32>
    %5 = vector.broadcast %4 : vector<1x32xf32> to vector<8x32xf32>
    %6 = arith.addf %3, %5 : vector<8x32xf32>
    %cst_6 = arith.constant 0.000000e+00 : f32
    %7 = vector.broadcast %cst_6 : f32 to vector<8x32xf32>
    %c0_7 = arith.constant 0 : index
    %c0_8 = arith.constant 0 : index
    %8 = vector.load %arg15[%c0_7, %c0_8] : memref<16x32xf32, #tpu.memory_space<vmem>>, vector<8x32xf32>
    tpu.vector_store %arg15[%c0_7, %c0_8], %7 {strides = array<i32>} : memref<16x32xf32, #tpu.memory_space<vmem>>, vector<8x32xf32>,
    %c8 = arith.constant 8 : index
    %c0_9 = arith.constant 0 : index
    %9 = vector.load %arg15[%c8, %c0_9] : memref<16x32xf32, #tpu.memory_space<vmem>>, vector<8x32xf32>
    tpu.vector_store %arg15[%c8, %c0_9], %6 {strides = array<i32>} : memref<16x32xf32, #tpu.memory_space<vmem>>, vector<8x32xf32>,
    %c0_10 = arith.constant 0 : index
    %c0_11 = arith.constant 0 : index
    %10 = vector.load %arg6[%c0_10, %c0_11] : memref<1x32xf32, #tpu.memory_space<vmem>>, vector<1x32xf32>
    %11 = vector.shape_cast %10 : vector<1x32xf32> to vector<1x32xf32>
    %12 = vector.broadcast %11 : vector<1x32xf32> to vector<8x32xf32>
    %c2 = arith.constant 2 : index
    %c0_12 = arith.constant 0 : index
    %13 = vector.load %arg15[%c2, %c0_12] : memref<16x32xf32, #tpu.memory_space<vmem>>, vector<8x32xf32>
    %c0_13 = arith.constant 0 : index
    %c0_14 = arith.constant 0 : index
    %14 = vector.load %arg5[%c0_13, %c0_14] : memref<7x32xf32, #tpu.memory_space<vmem>>, vector<1x32xf32>
    %15 = vector.broadcast %14 : vector<1x32xf32> to vector<8x32xf32>
    %16 = arith.mulf %13, %15 : vector<8x32xf32>
    %17 = arith.addf %12, %16 : vector<8x32xf32>
    %c3 = arith.constant 3 : index
    %c0_15 = arith.constant 0 : index
    %18 = vector.load %arg15[%c3, %c0_15] : memref<16x32xf32, #tpu.memory_space<vmem>>, vector<8x32xf32>
    %c1 = arith.constant 1 : index
    %c0_16 = arith.constant 0 : index
    %19 = vector.load %arg5[%c1, %c0_16] : memref<7x32xf32, #tpu.memory_space<vmem>>, vector<1x32xf32>
    %20 = vector.broadcast %19 : vector<1x32xf32> to vector<8x32xf32>
    %21 = arith.mulf %18, %20 : vector<8x32xf32>
    %22 = arith.addf %17, %21 : vector<8x32xf32>
    %c4 = arith.constant 4 : index
    %c0_17 = arith.constant 0 : index
    %23 = vector.load %arg15[%c4, %c0_17] : memref<16x32xf32, #tpu.memory_space<vmem>>, vector<8x32xf32>
    %c2_18 = arith.constant 2 : index
    %c0_19 = arith.constant 0 : index
    %24 = vector.load %arg5[%c2_18, %c0_19] : memref<7x32xf32, #tpu.memory_space<vmem>>, vector<1x32xf32>
    %25 = vector.broadcast %24 : vector<1x32xf32> to vector<8x32xf32>
    %26 = arith.mulf %23, %25 : vector<8x32xf32>
    %27 = arith.addf %22, %26 : vector<8x32xf32>
    %c5 = arith.constant 5 : index
    %c0_20 = arith.constant 0 : index
    %28 = vector.load %arg15[%c5, %c0_20] : memref<16x32xf32, #tpu.memory_space<vmem>>, vector<8x32xf32>
    %c3_21 = arith.constant 3 : index
    %c0_22 = arith.constant 0 : index
    %29 = vector.load %arg5[%c3_21, %c0_22] : memref<7x32xf32, #tpu.memory_space<vmem>>, vector<1x32xf32>
    %30 = vector.broadcast %29 : vector<1x32xf32> to vector<8x32xf32>
    %31 = arith.mulf %28, %30 : vector<8x32xf32>
    %32 = arith.addf %27, %31 : vector<8x32xf32>
    %c6 = arith.constant 6 : index
    %c0_23 = arith.constant 0 : index
    %33 = vector.load %arg15[%c6, %c0_23] : memref<16x32xf32, #tpu.memory_space<vmem>>, vector<8x32xf32>
    %c4_24 = arith.constant 4 : index
    %c0_25 = arith.constant 0 : index
    %34 = vector.load %arg5[%c4_24, %c0_25] : memref<7x32xf32, #tpu.memory_space<vmem>>, vector<1x32xf32>
    %35 = vector.broadcast %34 : vector<1x32xf32> to vector<8x32xf32>
    %36 = arith.mulf %33, %35 : vector<8x32xf32>
    %37 = arith.addf %32, %36 : vector<8x32xf32>
    %c7 = arith.constant 7 : index
    %c0_26 = arith.constant 0 : index
    %38 = vector.load %arg15[%c7, %c0_26] : memref<16x32xf32, #tpu.memory_space<vmem>>, vector<8x32xf32>
    %c5_27 = arith.constant 5 : index
    %c0_28 = arith.constant 0 : index
    %39 = vector.load %arg5[%c5_27, %c0_28] : memref<7x32xf32, #tpu.memory_space<vmem>>, vector<1x32xf32>
    %40 = vector.broadcast %39 : vector<1x32xf32> to vector<8x32xf32>
    %41 = arith.mulf %38, %40 : vector<8x32xf32>
    %42 = arith.addf %37, %41 : vector<8x32xf32>
    %c8_29 = arith.constant 8 : index
    %c0_30 = arith.constant 0 : index
    %43 = vector.load %arg15[%c8_29, %c0_30] : memref<16x32xf32, #tpu.memory_space<vmem>>, vector<8x32xf32>
    %c6_31 = arith.constant 6 : index
    %c0_32 = arith.constant 0 : index
    %44 = vector.load %arg5[%c6_31, %c0_32] : memref<7x32xf32, #tpu.memory_space<vmem>>, vector<1x32xf32>
    %45 = vector.broadcast %44 : vector<1x32xf32> to vector<8x32xf32>
    %46 = arith.mulf %43, %45 : vector<8x32xf32>
    %47 = arith.addf %42, %46 : vector<8x32xf32>
    %cst_33 = arith.constant dense<0.000000e+00> : vector<8xf32>
    %48 = vector.multi_reduction <add>, %47, %cst_33 [1] : vector<8x32xf32> to vector<8xf32>
    %49 = vector.shape_cast %48 : vector<8xf32> to vector<8x1xf32>
    %cst_34 = arith.constant 3.200000e+01 : f32
    %50 = vector.broadcast %cst_34 : f32 to vector<8x1xf32>
    %51 = arith.divf %49, %50 : vector<8x1xf32>
    %52 = vector.broadcast %51 : vector<8x1xf32> to vector<8x32xf32>
    %53 = arith.subf %47, %52 : vector<8x32xf32>
    %54 = arith.mulf %53, %53 : vector<8x32xf32>
    %cst_35 = arith.constant dense<0.000000e+00> : vector<8xf32>
    %55 = vector.multi_reduction <add>, %54, %cst_35 [1] : vector<8x32xf32> to vector<8xf32>
    %56 = vector.shape_cast %55 : vector<8xf32> to vector<8x1xf32>
    %cst_36 = arith.constant 3.200000e+01 : f32
    %57 = vector.broadcast %cst_36 : f32 to vector<8x1xf32>
    %58 = arith.divf %56, %57 : vector<8x1xf32>
    %cst_37 = arith.constant 9.99999997E-7 : f32
    %59 = vector.broadcast %cst_37 : f32 to vector<8x1xf32>
    %60 = arith.addf %58, %59 : vector<8x1xf32>
    %61 = math.rsqrt %60 : vector<8x1xf32>
    %62 = vector.broadcast %61 : vector<8x1xf32> to vector<8x32xf32>
    %63 = arith.mulf %53, %62 : vector<8x32xf32>
    %c0_38 = arith.constant 0 : index
    %c0_39 = arith.constant 0 : index
    %64 = vector.load %arg7[%c0_38, %c0_39] : memref<1x32xf32, #tpu.memory_space<vmem>>, vector<1x32xf32>
    %65 = vector.broadcast %64 : vector<1x32xf32> to vector<8x32xf32>
    %66 = arith.mulf %63, %65 : vector<8x32xf32>
    %c0_40 = arith.constant 0 : index
    %c0_41 = arith.constant 0 : index
    %67 = vector.load %arg8[%c0_40, %c0_41] : memref<1x32xf32, #tpu.memory_space<vmem>>, vector<1x32xf32>
    %68 = vector.broadcast %67 : vector<1x32xf32> to vector<8x32xf32>
    %69 = arith.addf %66, %68 : vector<8x32xf32>
    %c0_42 = arith.constant 0 : index
    %c0_43 = arith.constant 0 : index
    %70 = vector.load %arg9[%c0_42, %c0_43] : memref<32x128xf32, #tpu.memory_space<vmem>>, vector<32x128xf32>
    %cst_44 = arith.constant dense<0.000000e+00> : vector<8x128xf32>
    %71 = tpu.matmul %69, %70, %cst_44 {dimension_numbers = #tpu.dot_dimension_numbers<[1], [0], [0], [1], [0, 0, 1, 1], [], []>} : vector<8x32xf32>, vector<32x128xf32>, vector<8x128xf32> -> vector<8x128xf32>
    %c0_45 = arith.constant 0 : index
    %c0_46 = arith.constant 0 : index
    %72 = vector.load %arg10[%c0_45, %c0_46] : memref<1x128xf32, #tpu.memory_space<vmem>>, vector<1x128xf32>
    %73 = vector.broadcast %72 : vector<1x128xf32> to vector<8x128xf32>
    %74 = arith.addf %71, %73 : vector<8x128xf32>
    %75 = arith.mulf %74, %74 : vector<8x128xf32>
    %76 = arith.mulf %74, %75 : vector<8x128xf32>
    %cst_47 = arith.constant 4.471500e-02 : f32
    %77 = vector.broadcast %cst_47 : f32 to vector<8x128xf32>
    %78 = arith.mulf %77, %76 : vector<8x128xf32>
    %79 = arith.addf %74, %78 : vector<8x128xf32>
    %cst_48 = arith.constant 0.797884583 : f32
    %80 = vector.broadcast %cst_48 : f32 to vector<8x128xf32>
    %81 = arith.mulf %80, %79 : vector<8x128xf32>
    %82 = math.tanh %81 : vector<8x128xf32>
    %cst_49 = arith.constant 1.000000e+00 : f32
    %83 = vector.broadcast %cst_49 : f32 to vector<8x128xf32>
    %84 = arith.addf %83, %82 : vector<8x128xf32>
    %cst_50 = arith.constant 5.000000e-01 : f32
    %85 = vector.broadcast %cst_50 : f32 to vector<8x128xf32>
    %86 = arith.mulf %85, %84 : vector<8x128xf32>
    %87 = arith.mulf %74, %86 : vector<8x128xf32>
    %c0_51 = arith.constant 0 : index
    %c0_52 = arith.constant 0 : index
    %88 = vector.load %arg11[%c0_51, %c0_52] : memref<128x32xf32, #tpu.memory_space<vmem>>, vector<128x32xf32>
    %cst_53 = arith.constant dense<0.000000e+00> : vector<8x32xf32>
    %89 = tpu.matmul %87, %88, %cst_53 {dimension_numbers = #tpu.dot_dimension_numbers<[1], [0], [0], [1], [0, 0, 1, 1], [], []>} : vector<8x128xf32>, vector<128x32xf32>, vector<8x32xf32> -> vector<8x32xf32>
    %c0_54 = arith.constant 0 : index
    %c0_55 = arith.constant 0 : index
    %90 = vector.load %arg12[%c0_54, %c0_55] : memref<1x32xf32, #tpu.memory_space<vmem>>, vector<1x32xf32>
    %91 = vector.broadcast %90 : vector<1x32xf32> to vector<8x32xf32>
    %92 = arith.addf %89, %91 : vector<8x32xf32>
    %c0_56 = arith.constant 0 : index
    %c0_57 = arith.constant 0 : index
    %93 = vector.load %arg13[%c0_56, %c0_57] : memref<1x32xf32, #tpu.memory_space<vmem>>, vector<1x32xf32>
    %94 = vector.broadcast %93 : vector<1x32xf32> to vector<8x32xf32>
    %95 = arith.mulf %94, %92 : vector<8x32xf32>
    %96 = arith.addf %6, %95 : vector<8x32xf32>
    %c0_58 = arith.constant 0 : index
    %c0_59 = arith.constant 0 : index
    %c0_60 = arith.constant 0 : index
    %97 = vector.load %arg14[%c0_58, %c0_59, %c0_60] : memref<1x8x32xf32, #tpu.memory_space<vmem>>, vector<1x8x32xf32>
    %98 = vector.shape_cast %97 : vector<1x8x32xf32> to vector<8x32xf32>
    %99 = vector.shape_cast %96 : vector<8x32xf32> to vector<1x8x32xf32>
    tpu.vector_store %arg14[%c0_58, %c0_59, %c0_60], %99 {strides = array<i32>} : memref<1x8x32xf32, #tpu.memory_space<vmem>>, vector<1x8x32xf32>,
    return
  }
  func.func @transform_0(%arg0: i32, %arg1: i32) -> (i32, i32, i32) {
    %c0_i32 = arith.constant 0 : i32
    %c0_i32_0 = arith.constant 0 : i32
    return %arg0, %arg1, %c0_i32 : i32, i32, i32
  }
  func.func @transform_1(%arg0: i32, %arg1: i32) -> (i32, i32) {
    %c0_i32 = arith.constant 0 : i32
    %c0_i32_0 = arith.constant 0 : i32
    %c0_i32_1 = arith.constant 0 : i32
    return %c0_i32, %c0_i32_0 : i32, i32
  }
  func.func @transform_2(%arg0: i32, %arg1: i32) -> (i32, i32) {
    %c0_i32 = arith.constant 0 : i32
    %c0_i32_0 = arith.constant 0 : i32
    %c0_i32_1 = arith.constant 0 : i32
    return %c0_i32, %c0_i32_0 : i32, i32
  }
  func.func @transform_3(%arg0: i32, %arg1: i32) -> (i32, i32) {
    %c0_i32 = arith.constant 0 : i32
    %c0_i32_0 = arith.constant 0 : i32
    %c0_i32_1 = arith.constant 0 : i32
    return %c0_i32, %c0_i32_0 : i32, i32
  }
  func.func @transform_4(%arg0: i32, %arg1: i32) -> (i32, i32) {
    %c0_i32 = arith.constant 0 : i32
    %c0_i32_0 = arith.constant 0 : i32
    %c0_i32_1 = arith.constant 0 : i32
    return %c0_i32, %c0_i32_0 : i32, i32
  }
  func.func @transform_5(%arg0: i32, %arg1: i32) -> (i32, i32) {
    %c0_i32 = arith.constant 0 : i32
    %c0_i32_0 = arith.constant 0 : i32
    %c0_i32_1 = arith.constant 0 : i32
    return %c0_i32, %c0_i32_0 : i32, i32
  }
  func.func @transform_6(%arg0: i32, %arg1: i32) -> (i32, i32) {
    %c0_i32 = arith.constant 0 : i32
    %c0_i32_0 = arith.constant 0 : i32
    %c0_i32_1 = arith.constant 0 : i32
    return %c0_i32, %c0_i32_0 : i32, i32
  }
  func.func @transform_7(%arg0: i32, %arg1: i32) -> (i32, i32) {
    %c0_i32 = arith.constant 0 : i32
    %c0_i32_0 = arith.constant 0 : i32
    %c0_i32_1 = arith.constant 0 : i32
    return %c0_i32, %c0_i32_0 : i32, i32
  }
  func.func @transform_8(%arg0: i32, %arg1: i32) -> (i32, i32) {
    %c0_i32 = arith.constant 0 : i32
    %c0_i32_0 = arith.constant 0 : i32
    %c0_i32_1 = arith.constant 0 : i32
    return %c0_i32, %c0_i32_0 : i32, i32
  }
  func.func @transform_9(%arg0: i32, %arg1: i32) -> (i32, i32) {
    %c0_i32 = arith.constant 0 : i32
    %c0_i32_0 = arith.constant 0 : i32
    %c0_i32_1 = arith.constant 0 : i32
    return %c0_i32, %c0_i32_0 : i32, i32
  }
  func.func @transform_10(%arg0: i32, %arg1: i32) -> (i32, i32) {
    %c0_i32 = arith.constant 0 : i32
    %c0_i32_0 = arith.constant 0 : i32
    %c0_i32_1 = arith.constant 0 : i32
    return %c0_i32, %c0_i32_0 : i32, i32
  }
  func.func @transform_11(%arg0: i32, %arg1: i32) -> (i32, i32) {
    %c0_i32 = arith.constant 0 : i32
    %c0_i32_0 = arith.constant 0 : i32
    %c0_i32_1 = arith.constant 0 : i32
    return %c0_i32, %c0_i32_0 : i32, i32
  }
  func.func @transform_12(%arg0: i32, %arg1: i32) -> (i32, i32, i32) {
    %c0_i32 = arith.constant 0 : i32
    %c0_i32_0 = arith.constant 0 : i32
    return %arg0, %arg1, %c0_i32 : i32, i32, i32
  }
}

module attributes {stable_mosaic.version = 11 : i64} {
  func.func @_rvq_kernel(%arg0: i32, %arg1: i32, %arg2: memref<4xi32, #tpu.memory_space<smem>>, %arg3: memref<8x32xf32, #tpu.memory_space<vmem>>, %arg4: memref<4x32x8xf32, #tpu.memory_space<vmem>>, %arg5: memref<4x1x8xf32, #tpu.memory_space<vmem>>, %arg6: memref<4x8x128xf32, #tpu.memory_space<vmem>>, %arg7: memref<4x128x8xf32, #tpu.memory_space<vmem>>, %arg8: memref<4x128x32xf32, #tpu.memory_space<vmem>>, %arg9: memref<4x1x32xf32, #tpu.memory_space<vmem>>, %arg10: memref<8x32xf32, #tpu.memory_space<vmem>>, %arg11: memref<1x8x1xi32, #tpu.memory_space<vmem>>, %arg12: memref<1x8x8xf32, #tpu.memory_space<vmem>>, %arg13: memref<1x1x128xf32, #tpu.memory_space<vmem>>) attributes {dimension_semantics = [#tpu.dimension_semantics<parallel>, #tpu.dimension_semantics<arbitrary>], iteration_bounds = array<i64: 1, 4>, scalar_prefetch = 1 : i64, scratch_operands = 0 : i64, tpu.core_type = #tpu.core_type<tc>, window_params = [{transform_indices = @transform_0, window_bounds = array<i64: 8, 32>}, {pipeline_mode = #tpu.pipeline_mode<synchronous>, transform_indices = @transform_1, window_bounds = array<i64: 4, 32, 8>}, {pipeline_mode = #tpu.pipeline_mode<synchronous>, transform_indices = @transform_2, window_bounds = array<i64: 4, 1, 8>}, {pipeline_mode = #tpu.pipeline_mode<synchronous>, transform_indices = @transform_3, window_bounds = array<i64: 4, 8, 128>}, {pipeline_mode = #tpu.pipeline_mode<synchronous>, transform_indices = @transform_4, window_bounds = array<i64: 4, 128, 8>}, {pipeline_mode = #tpu.pipeline_mode<synchronous>, transform_indices = @transform_5, window_bounds = array<i64: 4, 128, 32>}, {pipeline_mode = #tpu.pipeline_mode<synchronous>, transform_indices = @transform_6, window_bounds = array<i64: 4, 1, 32>}, {transform_indices = @transform_7, window_bounds = array<i64: 8, 32>}, {transform_indices = @transform_8, window_bounds = array<i64: 1, 8, 1>}, {transform_indices = @transform_9, window_bounds = array<i64: 1, 8, 8>}, {transform_indices = @transform_10, window_bounds = array<i64: 1, 1, 128>}]} {
    %c0_i32 = arith.constant 0 : i32
    %0 = arith.cmpi eq, %arg1, %c0_i32 : i32
    %1 = arith.extui %0 : i1 to i32
    %c0_i32_0 = arith.constant 0 : i32
    %2 = arith.cmpi ne, %1, %c0_i32_0 : i32
    scf.if %2 {
      %cst_40 = arith.constant 0.000000e+00 : f32
      %74 = vector.broadcast %cst_40 : f32 to vector<8x32xf32>
      %c0_41 = arith.constant 0 : index
      %c0_42 = arith.constant 0 : index
      %75 = vector.load %arg10[%c0_41, %c0_42] : memref<8x32xf32, #tpu.memory_space<vmem>>, vector<8x32xf32>
      tpu.vector_store %arg10[%c0_41, %c0_42], %74 {strides = array<i32>} : memref<8x32xf32, #tpu.memory_space<vmem>>, vector<8x32xf32>,
      %cst_43 = arith.constant 0.000000e+00 : f32
      %76 = vector.broadcast %cst_43 : f32 to vector<1x128xf32>
      %c0_44 = arith.constant 0 : index
      %c0_45 = arith.constant 0 : index
      %c0_46 = arith.constant 0 : index
      %77 = vector.load %arg13[%c0_44, %c0_45, %c0_46] : memref<1x1x128xf32, #tpu.memory_space<vmem>>, vector<1x1x128xf32>
      %78 = vector.shape_cast %77 : vector<1x1x128xf32> to vector<1x128xf32>
      %79 = vector.shape_cast %76 : vector<1x128xf32> to vector<1x1x128xf32>
      tpu.vector_store %arg13[%c0_44, %c0_45, %c0_46], %79 {strides = array<i32>} : memref<1x1x128xf32, #tpu.memory_space<vmem>>, vector<1x1x128xf32>,
    } else {
    }
    %c0 = arith.constant 0 : index
    %c0_1 = arith.constant 0 : index
    %3 = vector.load %arg3[%c0, %c0_1] : memref<8x32xf32, #tpu.memory_space<vmem>>, vector<8x32xf32>
    %c0_2 = arith.constant 0 : index
    %c0_3 = arith.constant 0 : index
    %4 = vector.load %arg10[%c0_2, %c0_3] : memref<8x32xf32, #tpu.memory_space<vmem>>, vector<8x32xf32>
    %5 = arith.subf %3, %4 : vector<8x32xf32>
    %6 = arith.index_cast %arg1 : i32 to index
    %c0_4 = arith.constant 0 : index
    %c0_5 = arith.constant 0 : index
    %7 = vector.load %arg4[%6, %c0_4, %c0_5] : memref<4x32x8xf32, #tpu.memory_space<vmem>>, vector<1x32x8xf32>
    %8 = vector.shape_cast %7 : vector<1x32x8xf32> to vector<32x8xf32>
    %cst = arith.constant dense<0.000000e+00> : vector<8x8xf32>
    %9 = tpu.matmul %5, %8, %cst {dimension_numbers = #tpu.dot_dimension_numbers<[1], [0], [0], [1], [0, 0, 1, 1], [], []>} : vector<8x32xf32>, vector<32x8xf32>, vector<8x8xf32> -> vector<8x8xf32>
    %10 = arith.index_cast %arg1 : i32 to index
    %c0_6 = arith.constant 0 : index
    %c0_7 = arith.constant 0 : index
    %11 = vector.load %arg5[%10, %c0_6, %c0_7] : memref<4x1x8xf32, #tpu.memory_space<vmem>>, vector<1x1x8xf32>
    %12 = vector.shape_cast %11 : vector<1x1x8xf32> to vector<1x8xf32>
    %13 = vector.broadcast %12 : vector<1x8xf32> to vector<8x8xf32>
    %14 = arith.addf %9, %13 : vector<8x8xf32>
    %15 = arith.index_cast %arg1 : i32 to index
    %c0_8 = arith.constant 0 : index
    %c0_9 = arith.constant 0 : index
    %16 = vector.load %arg6[%15, %c0_8, %c0_9] : memref<4x8x128xf32, #tpu.memory_space<vmem>>, vector<1x8x128xf32>
    %17 = vector.shape_cast %16 : vector<1x8x128xf32> to vector<8x128xf32>
    %cst_10 = arith.constant dense<0.000000e+00> : vector<8x128xf32>
    %18 = tpu.matmul %14, %17, %cst_10 {dimension_numbers = #tpu.dot_dimension_numbers<[1], [0], [0], [1], [0, 0, 1, 1], [], []>} : vector<8x8xf32>, vector<8x128xf32>, vector<8x128xf32> -> vector<8x128xf32>
    %19 = arith.index_cast %arg1 : i32 to index
    %20 = memref.load %arg2[%19] : memref<4xi32, #tpu.memory_space<smem>>
    %21 = tpu.iota {dimensions = array<i32: 1>} : vector<8x128xi32>
    %22 = vector.broadcast %20 : i32 to vector<8x128xi32>
    %23 = arith.cmpi slt, %21, %22 : vector<8x128xi32>
    %cst_11 = arith.constant -1.000000e+30 : f32
    %24 = vector.broadcast %cst_11 : f32 to vector<8x128xf32>
    %25 = arith.select %23, %18, %24 : vector<8x128xi1>, vector<8x128xf32>
    %cst_12 = arith.constant dense<0xFF800000> : vector<8xf32>
    %26 = vector.multi_reduction <maximumf>, %25, %cst_12 [1] : vector<8x128xf32> to vector<8xf32>
    %27 = vector.shape_cast %26 : vector<8xf32> to vector<8x1xf32>
    %28 = vector.broadcast %27 : vector<8x1xf32> to vector<8x128xf32>
    %29 = arith.cmpf oge, %25, %28 : vector<8x128xf32>
    %c128_i32 = arith.constant 128 : i32
    %30 = vector.broadcast %c128_i32 : i32 to vector<8x128xi32>
    %31 = arith.select %29, %21, %30 : vector<8x128xi1>, vector<8x128xi32>
    %cst_13 = arith.constant dense<2147483647> : vector<8xi32>
    %32 = vector.multi_reduction <minsi>, %31, %cst_13 [1] : vector<8x128xi32> to vector<8xi32>
    %33 = vector.shape_cast %32 : vector<8xi32> to vector<8x1xi32>
    %34 = vector.broadcast %33 : vector<8x1xi32> to vector<8x128xi32>
    %35 = arith.cmpi eq, %21, %34 : vector<8x128xi32>
    %36 = arith.extui %35 : vector<8x128xi1> to vector<8x128xi32>
    %37 = arith.sitofp %36 : vector<8x128xi32> to vector<8x128xf32>
    %c0_14 = arith.constant 0 : index
    %c0_15 = arith.constant 0 : index
    %c0_16 = arith.constant 0 : index
    %38 = vector.load %arg11[%c0_14, %c0_15, %c0_16] : memref<1x8x1xi32, #tpu.memory_space<vmem>>, vector<1x8x1xi32>
    %39 = vector.shape_cast %38 : vector<1x8x1xi32> to vector<8x1xi32>
    %40 = vector.shape_cast %33 : vector<8x1xi32> to vector<1x8x1xi32>
    tpu.vector_store %arg11[%c0_14, %c0_15, %c0_16], %40 {strides = array<i32>} : memref<1x8x1xi32, #tpu.memory_space<vmem>>, vector<1x8x1xi32>,
    %c0_17 = arith.constant 0 : index
    %c0_18 = arith.constant 0 : index
    %c0_19 = arith.constant 0 : index
    %41 = vector.load %arg12[%c0_17, %c0_18, %c0_19] : memref<1x8x8xf32, #tpu.memory_space<vmem>>, vector<1x8x8xf32>
    %42 = vector.shape_cast %41 : vector<1x8x8xf32> to vector<8x8xf32>
    %43 = vector.shape_cast %14 : vector<8x8xf32> to vector<1x8x8xf32>
    tpu.vector_store %arg12[%c0_17, %c0_18, %c0_19], %43 {strides = array<i32>} : memref<1x8x8xf32, #tpu.memory_space<vmem>>, vector<1x8x8xf32>,
    %44 = arith.index_cast %arg1 : i32 to index
    %c0_20 = arith.constant 0 : index
    %c0_21 = arith.constant 0 : index
    %45 = vector.load %arg7[%44, %c0_20, %c0_21] : memref<4x128x8xf32, #tpu.memory_space<vmem>>, vector<1x128x8xf32>
    %46 = vector.shape_cast %45 : vector<1x128x8xf32> to vector<128x8xf32>
    %cst_22 = arith.constant dense<0.000000e+00> : vector<8x8xf32>
    %47 = tpu.matmul %37, %46, %cst_22 {dimension_numbers = #tpu.dot_dimension_numbers<[1], [0], [0], [1], [0, 0, 1, 1], [], []>} : vector<8x128xf32>, vector<128x8xf32>, vector<8x8xf32> -> vector<8x8xf32>
    %48 = arith.subf %14, %47 : vector<8x8xf32>
    %49 = arith.mulf %48, %48 : vector<8x8xf32>
    %c0_23 = arith.constant 0 : index
    %c0_24 = arith.constant 0 : index
    %c0_25 = arith.constant 0 : index
    %50 = vector.load %arg13[%c0_23, %c0_24, %c0_25] : memref<1x1x128xf32, #tpu.memory_space<vmem>>, vector<1x1x128xf32>
    %51 = vector.shape_cast %50 : vector<1x1x128xf32> to vector<1x128xf32>
    %52 = vector.shape_cast %49 : vector<8x8xf32> to vector<1x8x8xf32>
    %cst_26 = arith.constant dense<0.000000e+00> : vector<1xf32>
    %53 = vector.multi_reduction <add>, %52, %cst_26 [1, 2] : vector<1x8x8xf32> to vector<1xf32>
    %54 = vector.shape_cast %53 : vector<1xf32> to vector<1x1x1xf32>
    %55 = vector.extract %54[0, 0, 0] : f32 from vector<1x1x1xf32>
    %cst_27 = arith.constant 1.562500e-02 : f32
    %56 = arith.mulf %55, %cst_27 : f32
    %57 = vector.broadcast %56 : f32 to vector<1x128xf32>
    %58 = arith.addf %51, %57 : vector<1x128xf32>
    %c0_28 = arith.constant 0 : index
    %c0_29 = arith.constant 0 : index
    %c0_30 = arith.constant 0 : index
    %59 = vector.load %arg13[%c0_28, %c0_29, %c0_30] : memref<1x1x128xf32, #tpu.memory_space<vmem>>, vector<1x1x128xf32>
    %60 = vector.shape_cast %59 : vector<1x1x128xf32> to vector<1x128xf32>
    %61 = vector.shape_cast %58 : vector<1x128xf32> to vector<1x1x128xf32>
    tpu.vector_store %arg13[%c0_28, %c0_29, %c0_30], %61 {strides = array<i32>} : memref<1x1x128xf32, #tpu.memory_space<vmem>>, vector<1x1x128xf32>,
    %c0_31 = arith.constant 0 : index
    %c0_32 = arith.constant 0 : index
    %62 = vector.load %arg10[%c0_31, %c0_32] : memref<8x32xf32, #tpu.memory_space<vmem>>, vector<8x32xf32>
    %63 = arith.index_cast %arg1 : i32 to index
    %c0_33 = arith.constant 0 : index
    %c0_34 = arith.constant 0 : index
    %64 = vector.load %arg8[%63, %c0_33, %c0_34] : memref<4x128x32xf32, #tpu.memory_space<vmem>>, vector<1x128x32xf32>
    %65 = vector.shape_cast %64 : vector<1x128x32xf32> to vector<128x32xf32>
    %cst_35 = arith.constant dense<0.000000e+00> : vector<8x32xf32>
    %66 = tpu.matmul %37, %65, %cst_35 {dimension_numbers = #tpu.dot_dimension_numbers<[1], [0], [0], [1], [0, 0, 1, 1], [], []>} : vector<8x128xf32>, vector<128x32xf32>, vector<8x32xf32> -> vector<8x32xf32>
    %67 = arith.index_cast %arg1 : i32 to index
    %c0_36 = arith.constant 0 : index
    %c0_37 = arith.constant 0 : index
    %68 = vector.load %arg9[%67, %c0_36, %c0_37] : memref<4x1x32xf32, #tpu.memory_space<vmem>>, vector<1x1x32xf32>
    %69 = vector.shape_cast %68 : vector<1x1x32xf32> to vector<1x32xf32>
    %70 = vector.broadcast %69 : vector<1x32xf32> to vector<8x32xf32>
    %71 = arith.addf %66, %70 : vector<8x32xf32>
    %72 = arith.addf %62, %71 : vector<8x32xf32>
    %c0_38 = arith.constant 0 : index
    %c0_39 = arith.constant 0 : index
    %73 = vector.load %arg10[%c0_38, %c0_39] : memref<8x32xf32, #tpu.memory_space<vmem>>, vector<8x32xf32>
    tpu.vector_store %arg10[%c0_38, %c0_39], %72 {strides = array<i32>} : memref<8x32xf32, #tpu.memory_space<vmem>>, vector<8x32xf32>,
    return
  }
  func.func @transform_0(%arg0: i32, %arg1: i32, %arg2: memref<4xi32, #tpu.memory_space<smem>>) -> (i32, i32) {
    %c0_i32 = arith.constant 0 : i32
    %c0_i32_0 = arith.constant 0 : i32
    return %arg0, %c0_i32 : i32, i32
  }
  func.func @transform_1(%arg0: i32, %arg1: i32, %arg2: memref<4xi32, #tpu.memory_space<smem>>) -> (i32, i32, i32) {
    %c0_i32 = arith.constant 0 : i32
    %c0_i32_0 = arith.constant 0 : i32
    %c0_i32_1 = arith.constant 0 : i32
    %c0_i32_2 = arith.constant 0 : i32
    return %c0_i32, %c0_i32_0, %c0_i32_1 : i32, i32, i32
  }
  func.func @transform_2(%arg0: i32, %arg1: i32, %arg2: memref<4xi32, #tpu.memory_space<smem>>) -> (i32, i32, i32) {
    %c0_i32 = arith.constant 0 : i32
    %c0_i32_0 = arith.constant 0 : i32
    %c0_i32_1 = arith.constant 0 : i32
    %c0_i32_2 = arith.constant 0 : i32
    return %c0_i32, %c0_i32_0, %c0_i32_1 : i32, i32, i32
  }
  func.func @transform_3(%arg0: i32, %arg1: i32, %arg2: memref<4xi32, #tpu.memory_space<smem>>) -> (i32, i32, i32) {
    %c0_i32 = arith.constant 0 : i32
    %c0_i32_0 = arith.constant 0 : i32
    %c0_i32_1 = arith.constant 0 : i32
    %c0_i32_2 = arith.constant 0 : i32
    return %c0_i32, %c0_i32_0, %c0_i32_1 : i32, i32, i32
  }
  func.func @transform_4(%arg0: i32, %arg1: i32, %arg2: memref<4xi32, #tpu.memory_space<smem>>) -> (i32, i32, i32) {
    %c0_i32 = arith.constant 0 : i32
    %c0_i32_0 = arith.constant 0 : i32
    %c0_i32_1 = arith.constant 0 : i32
    %c0_i32_2 = arith.constant 0 : i32
    return %c0_i32, %c0_i32_0, %c0_i32_1 : i32, i32, i32
  }
  func.func @transform_5(%arg0: i32, %arg1: i32, %arg2: memref<4xi32, #tpu.memory_space<smem>>) -> (i32, i32, i32) {
    %c0_i32 = arith.constant 0 : i32
    %c0_i32_0 = arith.constant 0 : i32
    %c0_i32_1 = arith.constant 0 : i32
    %c0_i32_2 = arith.constant 0 : i32
    return %c0_i32, %c0_i32_0, %c0_i32_1 : i32, i32, i32
  }
  func.func @transform_6(%arg0: i32, %arg1: i32, %arg2: memref<4xi32, #tpu.memory_space<smem>>) -> (i32, i32, i32) {
    %c0_i32 = arith.constant 0 : i32
    %c0_i32_0 = arith.constant 0 : i32
    %c0_i32_1 = arith.constant 0 : i32
    %c0_i32_2 = arith.constant 0 : i32
    return %c0_i32, %c0_i32_0, %c0_i32_1 : i32, i32, i32
  }
  func.func @transform_7(%arg0: i32, %arg1: i32, %arg2: memref<4xi32, #tpu.memory_space<smem>>) -> (i32, i32) {
    %c0_i32 = arith.constant 0 : i32
    %c0_i32_0 = arith.constant 0 : i32
    return %arg0, %c0_i32 : i32, i32
  }
  func.func @transform_8(%arg0: i32, %arg1: i32, %arg2: memref<4xi32, #tpu.memory_space<smem>>) -> (i32, i32, i32) {
    %c0_i32 = arith.constant 0 : i32
    %c0_i32_0 = arith.constant 0 : i32
    return %arg1, %arg0, %c0_i32 : i32, i32, i32
  }
  func.func @transform_9(%arg0: i32, %arg1: i32, %arg2: memref<4xi32, #tpu.memory_space<smem>>) -> (i32, i32, i32) {
    %c0_i32 = arith.constant 0 : i32
    %c0_i32_0 = arith.constant 0 : i32
    return %arg1, %arg0, %c0_i32 : i32, i32, i32
  }
  func.func @transform_10(%arg0: i32, %arg1: i32, %arg2: memref<4xi32, #tpu.memory_space<smem>>) -> (i32, i32, i32) {
    %c0_i32 = arith.constant 0 : i32
    %c0_i32_0 = arith.constant 0 : i32
    %c0_i32_1 = arith.constant 0 : i32
    return %arg0, %c0_i32, %c0_i32_0 : i32, i32, i32
  }
}

module attributes {stable_mosaic.version = 11 : i64} {
  func.func @_matmul_bias_kernel(%arg0: i32, %arg1: memref<8x32xf32, #tpu.memory_space<vmem>>, %arg2: memref<32x64xf32, #tpu.memory_space<vmem>>, %arg3: memref<1x64xf32, #tpu.memory_space<vmem>>, %arg4: memref<8x64xf32, #tpu.memory_space<vmem>>) attributes {dimension_semantics = [#tpu.dimension_semantics<parallel>], iteration_bounds = array<i64: 1>, scalar_prefetch = 0 : i64, scratch_operands = 0 : i64, tpu.core_type = #tpu.core_type<tc>, window_params = [{transform_indices = @transform_0, window_bounds = array<i64: 8, 32>}, {pipeline_mode = #tpu.pipeline_mode<synchronous>, transform_indices = @transform_1, window_bounds = array<i64: 32, 64>}, {pipeline_mode = #tpu.pipeline_mode<synchronous>, transform_indices = @transform_2, window_bounds = array<i64: 1, 64>}, {transform_indices = @transform_3, window_bounds = array<i64: 8, 64>}]} {
    %c0 = arith.constant 0 : index
    %c0_0 = arith.constant 0 : index
    %0 = vector.load %arg1[%c0, %c0_0] : memref<8x32xf32, #tpu.memory_space<vmem>>, vector<8x32xf32>
    %c0_1 = arith.constant 0 : index
    %c0_2 = arith.constant 0 : index
    %1 = vector.load %arg2[%c0_1, %c0_2] : memref<32x64xf32, #tpu.memory_space<vmem>>, vector<32x64xf32>
    %cst = arith.constant dense<0.000000e+00> : vector<8x64xf32>
    %2 = tpu.matmul %0, %1, %cst {dimension_numbers = #tpu.dot_dimension_numbers<[1], [0], [0], [1], [0, 0, 1, 1], [], []>} : vector<8x32xf32>, vector<32x64xf32>, vector<8x64xf32> -> vector<8x64xf32>
    %c0_3 = arith.constant 0 : index
    %c0_4 = arith.constant 0 : index
    %3 = vector.load %arg3[%c0_3, %c0_4] : memref<1x64xf32, #tpu.memory_space<vmem>>, vector<1x64xf32>
    %4 = vector.broadcast %3 : vector<1x64xf32> to vector<8x64xf32>
    %5 = arith.addf %2, %4 : vector<8x64xf32>
    %c0_5 = arith.constant 0 : index
    %c0_6 = arith.constant 0 : index
    %6 = vector.load %arg4[%c0_5, %c0_6] : memref<8x64xf32, #tpu.memory_space<vmem>>, vector<8x64xf32>
    tpu.vector_store %arg4[%c0_5, %c0_6], %5 {strides = array<i32>} : memref<8x64xf32, #tpu.memory_space<vmem>>, vector<8x64xf32>,
    return
  }
  func.func @transform_0(%arg0: i32) -> (i32, i32) {
    %c0_i32 = arith.constant 0 : i32
    %c0_i32_0 = arith.constant 0 : i32
    return %arg0, %c0_i32 : i32, i32
  }
  func.func @transform_1(%arg0: i32) -> (i32, i32) {
    %c0_i32 = arith.constant 0 : i32
    %c0_i32_0 = arith.constant 0 : i32
    %c0_i32_1 = arith.constant 0 : i32
    return %c0_i32, %c0_i32_0 : i32, i32
  }
  func.func @transform_2(%arg0: i32) -> (i32, i32) {
    %c0_i32 = arith.constant 0 : i32
    %c0_i32_0 = arith.constant 0 : i32
    %c0_i32_1 = arith.constant 0 : i32
    return %c0_i32, %c0_i32_0 : i32, i32
  }
  func.func @transform_3(%arg0: i32) -> (i32, i32) {
    %c0_i32 = arith.constant 0 : i32
    %c0_i32_0 = arith.constant 0 : i32
    return %arg0, %c0_i32 : i32, i32
  }
}

module attributes {stable_mosaic.version = 11 : i64} {
  func.func @_matmul_bias_kernel(%arg0: i32, %arg1: memref<16x32xf32, #tpu.memory_space<vmem>>, %arg2: memref<32x64xf32, #tpu.memory_space<vmem>>, %arg3: memref<1x64xf32, #tpu.memory_space<vmem>>, %arg4: memref<16x64xf32, #tpu.memory_space<vmem>>) attributes {dimension_semantics = [#tpu.dimension_semantics<parallel>], iteration_bounds = array<i64: 1>, scalar_prefetch = 0 : i64, scratch_operands = 0 : i64, tpu.core_type = #tpu.core_type<tc>, window_params = [{transform_indices = @transform_0, window_bounds = array<i64: 16, 32>}, {pipeline_mode = #tpu.pipeline_mode<synchronous>, transform_indices = @transform_1, window_bounds = array<i64: 32, 64>}, {pipeline_mode = #tpu.pipeline_mode<synchronous>, transform_indices = @transform_2, window_bounds = array<i64: 1, 64>}, {transform_indices = @transform_3, window_bounds = array<i64: 16, 64>}]} {
    %c0 = arith.constant 0 : index
    %c0_0 = arith.constant 0 : index
    %0 = vector.load %arg1[%c0, %c0_0] : memref<16x32xf32, #tpu.memory_space<vmem>>, vector<16x32xf32>
    %c0_1 = arith.constant 0 : index
    %c0_2 = arith.constant 0 : index
    %1 = vector.load %arg2[%c0_1, %c0_2] : memref<32x64xf32, #tpu.memory_space<vmem>>, vector<32x64xf32>
    %cst = arith.constant dense<0.000000e+00> : vector<16x64xf32>
    %2 = tpu.matmul %0, %1, %cst {dimension_numbers = #tpu.dot_dimension_numbers<[1], [0], [0], [1], [0, 0, 1, 1], [], []>} : vector<16x32xf32>, vector<32x64xf32>, vector<16x64xf32> -> vector<16x64xf32>
    %c0_3 = arith.constant 0 : index
    %c0_4 = arith.constant 0 : index
    %3 = vector.load %arg3[%c0_3, %c0_4] : memref<1x64xf32, #tpu.memory_space<vmem>>, vector<1x64xf32>
    %4 = vector.broadcast %3 : vector<1x64xf32> to vector<16x64xf32>
    %5 = arith.addf %2, %4 : vector<16x64xf32>
    %c0_5 = arith.constant 0 : index
    %c0_6 = arith.constant 0 : index
    %6 = vector.load %arg4[%c0_5, %c0_6] : memref<16x64xf32, #tpu.memory_space<vmem>>, vector<16x64xf32>
    tpu.vector_store %arg4[%c0_5, %c0_6], %5 {strides = array<i32>} : memref<16x64xf32, #tpu.memory_space<vmem>>, vector<16x64xf32>,
    return
  }
  func.func @transform_0(%arg0: i32) -> (i32, i32) {
    %c0_i32 = arith.constant 0 : i32
    %c0_i32_0 = arith.constant 0 : i32
    return %arg0, %c0_i32 : i32, i32
  }
  func.func @transform_1(%arg0: i32) -> (i32, i32) {
    %c0_i32 = arith.constant 0 : i32
    %c0_i32_0 = arith.constant 0 : i32
    %c0_i32_1 = arith.constant 0 : i32
    return %c0_i32, %c0_i32_0 : i32, i32
  }
  func.func @transform_2(%arg0: i32) -> (i32, i32) {
    %c0_i32 = arith.constant 0 : i32
    %c0_i32_0 = arith.constant 0 : i32
    %c0_i32_1 = arith.constant 0 : i32
    return %c0_i32, %c0_i32_0 : i32, i32
  }
  func.func @transform_3(%arg0: i32) -> (i32, i32) {
    %c0_i32 = arith.constant 0 : i32
    %c0_i32_0 = arith.constant 0 : i32
    return %arg0, %c0_i32 : i32, i32
  }
}

module attributes {stable_mosaic.version = 11 : i64} {
  func.func @_convnext_kernel(%arg0: i32, %arg1: i32, %arg2: memref<1x8x32xf32, #tpu.memory_space<vmem>>, %arg3: memref<7x32xf32, #tpu.memory_space<vmem>>, %arg4: memref<1x32xf32, #tpu.memory_space<vmem>>, %arg5: memref<1x32xf32, #tpu.memory_space<vmem>>, %arg6: memref<1x32xf32, #tpu.memory_space<vmem>>, %arg7: memref<32x128xf32, #tpu.memory_space<vmem>>, %arg8: memref<1x128xf32, #tpu.memory_space<vmem>>, %arg9: memref<128x32xf32, #tpu.memory_space<vmem>>, %arg10: memref<1x32xf32, #tpu.memory_space<vmem>>, %arg11: memref<1x32xf32, #tpu.memory_space<vmem>>, %arg12: memref<1x8x32xf32, #tpu.memory_space<vmem>>, %arg13: memref<16x32xf32, #tpu.memory_space<vmem>>) attributes {dimension_semantics = [#tpu.dimension_semantics<parallel>, #tpu.dimension_semantics<arbitrary>], iteration_bounds = array<i64: 2, 1>, scalar_prefetch = 0 : i64, scratch_operands = 1 : i64, tpu.core_type = #tpu.core_type<tc>, window_params = [{transform_indices = @transform_0, window_bounds = array<i64: 1, 8, 32>}, {pipeline_mode = #tpu.pipeline_mode<synchronous>, transform_indices = @transform_1, window_bounds = array<i64: 7, 32>}, {pipeline_mode = #tpu.pipeline_mode<synchronous>, transform_indices = @transform_2, window_bounds = array<i64: 1, 32>}, {pipeline_mode = #tpu.pipeline_mode<synchronous>, transform_indices = @transform_3, window_bounds = array<i64: 1, 32>}, {pipeline_mode = #tpu.pipeline_mode<synchronous>, transform_indices = @transform_4, window_bounds = array<i64: 1, 32>}, {pipeline_mode = #tpu.pipeline_mode<synchronous>, transform_indices = @transform_5, window_bounds = array<i64: 32, 128>}, {pipeline_mode = #tpu.pipeline_mode<synchronous>, transform_indices = @transform_6, window_bounds = array<i64: 1, 128>}, {pipeline_mode = #tpu.pipeline_mode<synchronous>, transform_indices = @transform_7, window_bounds = array<i64: 128, 32>}, {pipeline_mode = #tpu.pipeline_mode<synchronous>, transform_indices = @transform_8, window_bounds = array<i64: 1, 32>}, {pipeline_mode = #tpu.pipeline_mode<synchronous>, transform_indices = @transform_9, window_bounds = array<i64: 1, 32>}, {transform_indices = @transform_10, window_bounds = array<i64: 1, 8, 32>}]} {
    %c0 = arith.constant 0 : index
    %c0_0 = arith.constant 0 : index
    %c0_1 = arith.constant 0 : index
    %0 = vector.load %arg2[%c0, %c0_0, %c0_1] : memref<1x8x32xf32, #tpu.memory_space<vmem>>, vector<1x8x32xf32>
    %1 = vector.shape_cast %0 : vector<1x8x32xf32> to vector<8x32xf32>
    %cst = arith.constant 0.000000e+00 : f32
    %2 = vector.broadcast %cst : f32 to vector<8x32xf32>
    %c0_2 = arith.constant 0 : index
    %c0_3 = arith.constant 0 : index
    %3 = vector.load %arg13[%c0_2, %c0_3] : memref<16x32xf32, #tpu.memory_space<vmem>>, vector<8x32xf32>
    tpu.vector_store %arg13[%c0_2, %c0_3], %2 {strides = array<i32>} : memref<16x32xf32, #tpu.memory_space<vmem>>, vector<8x32xf32>,
    %c8 = arith.constant 8 : index
    %c0_4 = arith.constant 0 : index
    %4 = vector.load %arg13[%c8, %c0_4] : memref<16x32xf32, #tpu.memory_space<vmem>>, vector<8x32xf32>
    tpu.vector_store %arg13[%c8, %c0_4], %1 {strides = array<i32>} : memref<16x32xf32, #tpu.memory_space<vmem>>, vector<8x32xf32>,
    %c0_5 = arith.constant 0 : index
    %c0_6 = arith.constant 0 : index
    %5 = vector.load %arg4[%c0_5, %c0_6] : memref<1x32xf32, #tpu.memory_space<vmem>>, vector<1x32xf32>
    %6 = vector.shape_cast %5 : vector<1x32xf32> to vector<1x32xf32>
    %7 = vector.broadcast %6 : vector<1x32xf32> to vector<8x32xf32>
    %c2 = arith.constant 2 : index
    %c0_7 = arith.constant 0 : index
    %8 = vector.load %arg13[%c2, %c0_7] : memref<16x32xf32, #tpu.memory_space<vmem>>, vector<8x32xf32>
    %c0_8 = arith.constant 0 : index
    %c0_9 = arith.constant 0 : index
    %9 = vector.load %arg3[%c0_8, %c0_9] : memref<7x32xf32, #tpu.memory_space<vmem>>, vector<1x32xf32>
    %10 = vector.broadcast %9 : vector<1x32xf32> to vector<8x32xf32>
    %11 = arith.mulf %8, %10 : vector<8x32xf32>
    %12 = arith.addf %7, %11 : vector<8x32xf32>
    %c3 = arith.constant 3 : index
    %c0_10 = arith.constant 0 : index
    %13 = vector.load %arg13[%c3, %c0_10] : memref<16x32xf32, #tpu.memory_space<vmem>>, vector<8x32xf32>
    %c1 = arith.constant 1 : index
    %c0_11 = arith.constant 0 : index
    %14 = vector.load %arg3[%c1, %c0_11] : memref<7x32xf32, #tpu.memory_space<vmem>>, vector<1x32xf32>
    %15 = vector.broadcast %14 : vector<1x32xf32> to vector<8x32xf32>
    %16 = arith.mulf %13, %15 : vector<8x32xf32>
    %17 = arith.addf %12, %16 : vector<8x32xf32>
    %c4 = arith.constant 4 : index
    %c0_12 = arith.constant 0 : index
    %18 = vector.load %arg13[%c4, %c0_12] : memref<16x32xf32, #tpu.memory_space<vmem>>, vector<8x32xf32>
    %c2_13 = arith.constant 2 : index
    %c0_14 = arith.constant 0 : index
    %19 = vector.load %arg3[%c2_13, %c0_14] : memref<7x32xf32, #tpu.memory_space<vmem>>, vector<1x32xf32>
    %20 = vector.broadcast %19 : vector<1x32xf32> to vector<8x32xf32>
    %21 = arith.mulf %18, %20 : vector<8x32xf32>
    %22 = arith.addf %17, %21 : vector<8x32xf32>
    %c5 = arith.constant 5 : index
    %c0_15 = arith.constant 0 : index
    %23 = vector.load %arg13[%c5, %c0_15] : memref<16x32xf32, #tpu.memory_space<vmem>>, vector<8x32xf32>
    %c3_16 = arith.constant 3 : index
    %c0_17 = arith.constant 0 : index
    %24 = vector.load %arg3[%c3_16, %c0_17] : memref<7x32xf32, #tpu.memory_space<vmem>>, vector<1x32xf32>
    %25 = vector.broadcast %24 : vector<1x32xf32> to vector<8x32xf32>
    %26 = arith.mulf %23, %25 : vector<8x32xf32>
    %27 = arith.addf %22, %26 : vector<8x32xf32>
    %c6 = arith.constant 6 : index
    %c0_18 = arith.constant 0 : index
    %28 = vector.load %arg13[%c6, %c0_18] : memref<16x32xf32, #tpu.memory_space<vmem>>, vector<8x32xf32>
    %c4_19 = arith.constant 4 : index
    %c0_20 = arith.constant 0 : index
    %29 = vector.load %arg3[%c4_19, %c0_20] : memref<7x32xf32, #tpu.memory_space<vmem>>, vector<1x32xf32>
    %30 = vector.broadcast %29 : vector<1x32xf32> to vector<8x32xf32>
    %31 = arith.mulf %28, %30 : vector<8x32xf32>
    %32 = arith.addf %27, %31 : vector<8x32xf32>
    %c7 = arith.constant 7 : index
    %c0_21 = arith.constant 0 : index
    %33 = vector.load %arg13[%c7, %c0_21] : memref<16x32xf32, #tpu.memory_space<vmem>>, vector<8x32xf32>
    %c5_22 = arith.constant 5 : index
    %c0_23 = arith.constant 0 : index
    %34 = vector.load %arg3[%c5_22, %c0_23] : memref<7x32xf32, #tpu.memory_space<vmem>>, vector<1x32xf32>
    %35 = vector.broadcast %34 : vector<1x32xf32> to vector<8x32xf32>
    %36 = arith.mulf %33, %35 : vector<8x32xf32>
    %37 = arith.addf %32, %36 : vector<8x32xf32>
    %c8_24 = arith.constant 8 : index
    %c0_25 = arith.constant 0 : index
    %38 = vector.load %arg13[%c8_24, %c0_25] : memref<16x32xf32, #tpu.memory_space<vmem>>, vector<8x32xf32>
    %c6_26 = arith.constant 6 : index
    %c0_27 = arith.constant 0 : index
    %39 = vector.load %arg3[%c6_26, %c0_27] : memref<7x32xf32, #tpu.memory_space<vmem>>, vector<1x32xf32>
    %40 = vector.broadcast %39 : vector<1x32xf32> to vector<8x32xf32>
    %41 = arith.mulf %38, %40 : vector<8x32xf32>
    %42 = arith.addf %37, %41 : vector<8x32xf32>
    %cst_28 = arith.constant dense<0.000000e+00> : vector<8xf32>
    %43 = vector.multi_reduction <add>, %42, %cst_28 [1] : vector<8x32xf32> to vector<8xf32>
    %44 = vector.shape_cast %43 : vector<8xf32> to vector<8x1xf32>
    %cst_29 = arith.constant 3.200000e+01 : f32
    %45 = vector.broadcast %cst_29 : f32 to vector<8x1xf32>
    %46 = arith.divf %44, %45 : vector<8x1xf32>
    %47 = vector.broadcast %46 : vector<8x1xf32> to vector<8x32xf32>
    %48 = arith.subf %42, %47 : vector<8x32xf32>
    %49 = arith.mulf %48, %48 : vector<8x32xf32>
    %cst_30 = arith.constant dense<0.000000e+00> : vector<8xf32>
    %50 = vector.multi_reduction <add>, %49, %cst_30 [1] : vector<8x32xf32> to vector<8xf32>
    %51 = vector.shape_cast %50 : vector<8xf32> to vector<8x1xf32>
    %cst_31 = arith.constant 3.200000e+01 : f32
    %52 = vector.broadcast %cst_31 : f32 to vector<8x1xf32>
    %53 = arith.divf %51, %52 : vector<8x1xf32>
    %cst_32 = arith.constant 9.99999997E-7 : f32
    %54 = vector.broadcast %cst_32 : f32 to vector<8x1xf32>
    %55 = arith.addf %53, %54 : vector<8x1xf32>
    %56 = math.rsqrt %55 : vector<8x1xf32>
    %57 = vector.broadcast %56 : vector<8x1xf32> to vector<8x32xf32>
    %58 = arith.mulf %48, %57 : vector<8x32xf32>
    %c0_33 = arith.constant 0 : index
    %c0_34 = arith.constant 0 : index
    %59 = vector.load %arg5[%c0_33, %c0_34] : memref<1x32xf32, #tpu.memory_space<vmem>>, vector<1x32xf32>
    %60 = vector.broadcast %59 : vector<1x32xf32> to vector<8x32xf32>
    %61 = arith.mulf %58, %60 : vector<8x32xf32>
    %c0_35 = arith.constant 0 : index
    %c0_36 = arith.constant 0 : index
    %62 = vector.load %arg6[%c0_35, %c0_36] : memref<1x32xf32, #tpu.memory_space<vmem>>, vector<1x32xf32>
    %63 = vector.broadcast %62 : vector<1x32xf32> to vector<8x32xf32>
    %64 = arith.addf %61, %63 : vector<8x32xf32>
    %c0_37 = arith.constant 0 : index
    %c0_38 = arith.constant 0 : index
    %65 = vector.load %arg7[%c0_37, %c0_38] : memref<32x128xf32, #tpu.memory_space<vmem>>, vector<32x128xf32>
    %cst_39 = arith.constant dense<0.000000e+00> : vector<8x128xf32>
    %66 = tpu.matmul %64, %65, %cst_39 {dimension_numbers = #tpu.dot_dimension_numbers<[1], [0], [0], [1], [0, 0, 1, 1], [], []>} : vector<8x32xf32>, vector<32x128xf32>, vector<8x128xf32> -> vector<8x128xf32>
    %c0_40 = arith.constant 0 : index
    %c0_41 = arith.constant 0 : index
    %67 = vector.load %arg8[%c0_40, %c0_41] : memref<1x128xf32, #tpu.memory_space<vmem>>, vector<1x128xf32>
    %68 = vector.broadcast %67 : vector<1x128xf32> to vector<8x128xf32>
    %69 = arith.addf %66, %68 : vector<8x128xf32>
    %70 = arith.mulf %69, %69 : vector<8x128xf32>
    %71 = arith.mulf %69, %70 : vector<8x128xf32>
    %cst_42 = arith.constant 4.471500e-02 : f32
    %72 = vector.broadcast %cst_42 : f32 to vector<8x128xf32>
    %73 = arith.mulf %72, %71 : vector<8x128xf32>
    %74 = arith.addf %69, %73 : vector<8x128xf32>
    %cst_43 = arith.constant 0.797884583 : f32
    %75 = vector.broadcast %cst_43 : f32 to vector<8x128xf32>
    %76 = arith.mulf %75, %74 : vector<8x128xf32>
    %77 = math.tanh %76 : vector<8x128xf32>
    %cst_44 = arith.constant 1.000000e+00 : f32
    %78 = vector.broadcast %cst_44 : f32 to vector<8x128xf32>
    %79 = arith.addf %78, %77 : vector<8x128xf32>
    %cst_45 = arith.constant 5.000000e-01 : f32
    %80 = vector.broadcast %cst_45 : f32 to vector<8x128xf32>
    %81 = arith.mulf %80, %79 : vector<8x128xf32>
    %82 = arith.mulf %69, %81 : vector<8x128xf32>
    %c0_46 = arith.constant 0 : index
    %c0_47 = arith.constant 0 : index
    %83 = vector.load %arg9[%c0_46, %c0_47] : memref<128x32xf32, #tpu.memory_space<vmem>>, vector<128x32xf32>
    %cst_48 = arith.constant dense<0.000000e+00> : vector<8x32xf32>
    %84 = tpu.matmul %82, %83, %cst_48 {dimension_numbers = #tpu.dot_dimension_numbers<[1], [0], [0], [1], [0, 0, 1, 1], [], []>} : vector<8x128xf32>, vector<128x32xf32>, vector<8x32xf32> -> vector<8x32xf32>
    %c0_49 = arith.constant 0 : index
    %c0_50 = arith.constant 0 : index
    %85 = vector.load %arg10[%c0_49, %c0_50] : memref<1x32xf32, #tpu.memory_space<vmem>>, vector<1x32xf32>
    %86 = vector.broadcast %85 : vector<1x32xf32> to vector<8x32xf32>
    %87 = arith.addf %84, %86 : vector<8x32xf32>
    %c0_51 = arith.constant 0 : index
    %c0_52 = arith.constant 0 : index
    %88 = vector.load %arg11[%c0_51, %c0_52] : memref<1x32xf32, #tpu.memory_space<vmem>>, vector<1x32xf32>
    %89 = vector.broadcast %88 : vector<1x32xf32> to vector<8x32xf32>
    %90 = arith.mulf %89, %87 : vector<8x32xf32>
    %91 = arith.addf %1, %90 : vector<8x32xf32>
    %c0_53 = arith.constant 0 : index
    %c0_54 = arith.constant 0 : index
    %c0_55 = arith.constant 0 : index
    %92 = vector.load %arg12[%c0_53, %c0_54, %c0_55] : memref<1x8x32xf32, #tpu.memory_space<vmem>>, vector<1x8x32xf32>
    %93 = vector.shape_cast %92 : vector<1x8x32xf32> to vector<8x32xf32>
    %94 = vector.shape_cast %91 : vector<8x32xf32> to vector<1x8x32xf32>
    tpu.vector_store %arg12[%c0_53, %c0_54, %c0_55], %94 {strides = array<i32>} : memref<1x8x32xf32, #tpu.memory_space<vmem>>, vector<1x8x32xf32>,
    return
  }
  func.func @transform_0(%arg0: i32, %arg1: i32) -> (i32, i32, i32) {
    %c0_i32 = arith.constant 0 : i32
    %c0_i32_0 = arith.constant 0 : i32
    return %arg0, %arg1, %c0_i32 : i32, i32, i32
  }
  func.func @transform_1(%arg0: i32, %arg1: i32) -> (i32, i32) {
    %c0_i32 = arith.constant 0 : i32
    %c0_i32_0 = arith.constant 0 : i32
    %c0_i32_1 = arith.constant 0 : i32
    return %c0_i32, %c0_i32_0 : i32, i32
  }
  func.func @transform_2(%arg0: i32, %arg1: i32) -> (i32, i32) {
    %c0_i32 = arith.constant 0 : i32
    %c0_i32_0 = arith.constant 0 : i32
    %c0_i32_1 = arith.constant 0 : i32
    return %c0_i32, %c0_i32_0 : i32, i32
  }
  func.func @transform_3(%arg0: i32, %arg1: i32) -> (i32, i32) {
    %c0_i32 = arith.constant 0 : i32
    %c0_i32_0 = arith.constant 0 : i32
    %c0_i32_1 = arith.constant 0 : i32
    return %c0_i32, %c0_i32_0 : i32, i32
  }
  func.func @transform_4(%arg0: i32, %arg1: i32) -> (i32, i32) {
    %c0_i32 = arith.constant 0 : i32
    %c0_i32_0 = arith.constant 0 : i32
    %c0_i32_1 = arith.constant 0 : i32
    return %c0_i32, %c0_i32_0 : i32, i32
  }
  func.func @transform_5(%arg0: i32, %arg1: i32) -> (i32, i32) {
    %c0_i32 = arith.constant 0 : i32
    %c0_i32_0 = arith.constant 0 : i32
    %c0_i32_1 = arith.constant 0 : i32
    return %c0_i32, %c0_i32_0 : i32, i32
  }
  func.func @transform_6(%arg0: i32, %arg1: i32) -> (i32, i32) {
    %c0_i32 = arith.constant 0 : i32
    %c0_i32_0 = arith.constant 0 : i32
    %c0_i32_1 = arith.constant 0 : i32
    return %c0_i32, %c0_i32_0 : i32, i32
  }
  func.func @transform_7(%arg0: i32, %arg1: i32) -> (i32, i32) {
    %c0_i32 = arith.constant 0 : i32
    %c0_i32_0 = arith.constant 0 : i32
    %c0_i32_1 = arith.constant 0 : i32
    return %c0_i32, %c0_i32_0 : i32, i32
  }
  func.func @transform_8(%arg0: i32, %arg1: i32) -> (i32, i32) {
    %c0_i32 = arith.constant 0 : i32
    %c0_i32_0 = arith.constant 0 : i32
    %c0_i32_1 = arith.constant 0 : i32
    return %c0_i32, %c0_i32_0 : i32, i32
  }
  func.func @transform_9(%arg0: i32, %arg1: i32) -> (i32, i32) {
    %c0_i32 = arith.constant 0 : i32
    %c0_i32_0 = arith.constant 0 : i32
    %c0_i32_1 = arith.constant 0 : i32
    return %c0_i32, %c0_i32_0 : i32, i32
  }
  func.func @transform_10(%arg0: i32, %arg1: i32) -> (i32, i32, i32) {
    %c0_i32 = arith.constant 0 : i32
    %c0_i32_0 = arith.constant 0 : i32
    return %arg0, %arg1, %c0_i32 : i32, i32, i32
  }
}

module attributes {stable_mosaic.version = 11 : i64} {
  func.func @_convnext_kernel(%arg0: i32, %arg1: i32, %arg2: memref<1x16x32xf32, #tpu.memory_space<vmem>>, %arg3: memref<7x32xf32, #tpu.memory_space<vmem>>, %arg4: memref<1x32xf32, #tpu.memory_space<vmem>>, %arg5: memref<1x32xf32, #tpu.memory_space<vmem>>, %arg6: memref<1x32xf32, #tpu.memory_space<vmem>>, %arg7: memref<32x128xf32, #tpu.memory_space<vmem>>, %arg8: memref<1x128xf32, #tpu.memory_space<vmem>>, %arg9: memref<128x32xf32, #tpu.memory_space<vmem>>, %arg10: memref<1x32xf32, #tpu.memory_space<vmem>>, %arg11: memref<1x32xf32, #tpu.memory_space<vmem>>, %arg12: memref<1x16x32xf32, #tpu.memory_space<vmem>>, %arg13: memref<24x32xf32, #tpu.memory_space<vmem>>) attributes {dimension_semantics = [#tpu.dimension_semantics<parallel>, #tpu.dimension_semantics<arbitrary>], iteration_bounds = array<i64: 2, 1>, scalar_prefetch = 0 : i64, scratch_operands = 1 : i64, tpu.core_type = #tpu.core_type<tc>, window_params = [{transform_indices = @transform_0, window_bounds = array<i64: 1, 16, 32>}, {pipeline_mode = #tpu.pipeline_mode<synchronous>, transform_indices = @transform_1, window_bounds = array<i64: 7, 32>}, {pipeline_mode = #tpu.pipeline_mode<synchronous>, transform_indices = @transform_2, window_bounds = array<i64: 1, 32>}, {pipeline_mode = #tpu.pipeline_mode<synchronous>, transform_indices = @transform_3, window_bounds = array<i64: 1, 32>}, {pipeline_mode = #tpu.pipeline_mode<synchronous>, transform_indices = @transform_4, window_bounds = array<i64: 1, 32>}, {pipeline_mode = #tpu.pipeline_mode<synchronous>, transform_indices = @transform_5, window_bounds = array<i64: 32, 128>}, {pipeline_mode = #tpu.pipeline_mode<synchronous>, transform_indices = @transform_6, window_bounds = array<i64: 1, 128>}, {pipeline_mode = #tpu.pipeline_mode<synchronous>, transform_indices = @transform_7, window_bounds = array<i64: 128, 32>}, {pipeline_mode = #tpu.pipeline_mode<synchronous>, transform_indices = @transform_8, window_bounds = array<i64: 1, 32>}, {pipeline_mode = #tpu.pipeline_mode<synchronous>, transform_indices = @transform_9, window_bounds = array<i64: 1, 32>}, {transform_indices = @transform_10, window_bounds = array<i64: 1, 16, 32>}]} {
    %c0 = arith.constant 0 : index
    %c0_0 = arith.constant 0 : index
    %c0_1 = arith.constant 0 : index
    %0 = vector.load %arg2[%c0, %c0_0, %c0_1] : memref<1x16x32xf32, #tpu.memory_space<vmem>>, vector<1x16x32xf32>
    %1 = vector.shape_cast %0 : vector<1x16x32xf32> to vector<16x32xf32>
    %cst = arith.constant 0.000000e+00 : f32
    %2 = vector.broadcast %cst : f32 to vector<8x32xf32>
    %c0_2 = arith.constant 0 : index
    %c0_3 = arith.constant 0 : index
    %3 = vector.load %arg13[%c0_2, %c0_3] : memref<24x32xf32, #tpu.memory_space<vmem>>, vector<8x32xf32>
    tpu.vector_store %arg13[%c0_2, %c0_3], %2 {strides = array<i32>} : memref<24x32xf32, #tpu.memory_space<vmem>>, vector<8x32xf32>,
    %c8 = arith.constant 8 : index
    %c0_4 = arith.constant 0 : index
    %4 = vector.load %arg13[%c8, %c0_4] : memref<24x32xf32, #tpu.memory_space<vmem>>, vector<16x32xf32>
    tpu.vector_store %arg13[%c8, %c0_4], %1 {strides = array<i32>} : memref<24x32xf32, #tpu.memory_space<vmem>>, vector<16x32xf32>,
    %c0_5 = arith.constant 0 : index
    %c0_6 = arith.constant 0 : index
    %5 = vector.load %arg4[%c0_5, %c0_6] : memref<1x32xf32, #tpu.memory_space<vmem>>, vector<1x32xf32>
    %6 = vector.shape_cast %5 : vector<1x32xf32> to vector<1x32xf32>
    %7 = vector.broadcast %6 : vector<1x32xf32> to vector<16x32xf32>
    %c2 = arith.constant 2 : index
    %c0_7 = arith.constant 0 : index
    %8 = vector.load %arg13[%c2, %c0_7] : memref<24x32xf32, #tpu.memory_space<vmem>>, vector<16x32xf32>
    %c0_8 = arith.constant 0 : index
    %c0_9 = arith.constant 0 : index
    %9 = vector.load %arg3[%c0_8, %c0_9] : memref<7x32xf32, #tpu.memory_space<vmem>>, vector<1x32xf32>
    %10 = vector.broadcast %9 : vector<1x32xf32> to vector<16x32xf32>
    %11 = arith.mulf %8, %10 : vector<16x32xf32>
    %12 = arith.addf %7, %11 : vector<16x32xf32>
    %c3 = arith.constant 3 : index
    %c0_10 = arith.constant 0 : index
    %13 = vector.load %arg13[%c3, %c0_10] : memref<24x32xf32, #tpu.memory_space<vmem>>, vector<16x32xf32>
    %c1 = arith.constant 1 : index
    %c0_11 = arith.constant 0 : index
    %14 = vector.load %arg3[%c1, %c0_11] : memref<7x32xf32, #tpu.memory_space<vmem>>, vector<1x32xf32>
    %15 = vector.broadcast %14 : vector<1x32xf32> to vector<16x32xf32>
    %16 = arith.mulf %13, %15 : vector<16x32xf32>
    %17 = arith.addf %12, %16 : vector<16x32xf32>
    %c4 = arith.constant 4 : index
    %c0_12 = arith.constant 0 : index
    %18 = vector.load %arg13[%c4, %c0_12] : memref<24x32xf32, #tpu.memory_space<vmem>>, vector<16x32xf32>
    %c2_13 = arith.constant 2 : index
    %c0_14 = arith.constant 0 : index
    %19 = vector.load %arg3[%c2_13, %c0_14] : memref<7x32xf32, #tpu.memory_space<vmem>>, vector<1x32xf32>
    %20 = vector.broadcast %19 : vector<1x32xf32> to vector<16x32xf32>
    %21 = arith.mulf %18, %20 : vector<16x32xf32>
    %22 = arith.addf %17, %21 : vector<16x32xf32>
    %c5 = arith.constant 5 : index
    %c0_15 = arith.constant 0 : index
    %23 = vector.load %arg13[%c5, %c0_15] : memref<24x32xf32, #tpu.memory_space<vmem>>, vector<16x32xf32>
    %c3_16 = arith.constant 3 : index
    %c0_17 = arith.constant 0 : index
    %24 = vector.load %arg3[%c3_16, %c0_17] : memref<7x32xf32, #tpu.memory_space<vmem>>, vector<1x32xf32>
    %25 = vector.broadcast %24 : vector<1x32xf32> to vector<16x32xf32>
    %26 = arith.mulf %23, %25 : vector<16x32xf32>
    %27 = arith.addf %22, %26 : vector<16x32xf32>
    %c6 = arith.constant 6 : index
    %c0_18 = arith.constant 0 : index
    %28 = vector.load %arg13[%c6, %c0_18] : memref<24x32xf32, #tpu.memory_space<vmem>>, vector<16x32xf32>
    %c4_19 = arith.constant 4 : index
    %c0_20 = arith.constant 0 : index
    %29 = vector.load %arg3[%c4_19, %c0_20] : memref<7x32xf32, #tpu.memory_space<vmem>>, vector<1x32xf32>
    %30 = vector.broadcast %29 : vector<1x32xf32> to vector<16x32xf32>
    %31 = arith.mulf %28, %30 : vector<16x32xf32>
    %32 = arith.addf %27, %31 : vector<16x32xf32>
    %c7 = arith.constant 7 : index
    %c0_21 = arith.constant 0 : index
    %33 = vector.load %arg13[%c7, %c0_21] : memref<24x32xf32, #tpu.memory_space<vmem>>, vector<16x32xf32>
    %c5_22 = arith.constant 5 : index
    %c0_23 = arith.constant 0 : index
    %34 = vector.load %arg3[%c5_22, %c0_23] : memref<7x32xf32, #tpu.memory_space<vmem>>, vector<1x32xf32>
    %35 = vector.broadcast %34 : vector<1x32xf32> to vector<16x32xf32>
    %36 = arith.mulf %33, %35 : vector<16x32xf32>
    %37 = arith.addf %32, %36 : vector<16x32xf32>
    %c8_24 = arith.constant 8 : index
    %c0_25 = arith.constant 0 : index
    %38 = vector.load %arg13[%c8_24, %c0_25] : memref<24x32xf32, #tpu.memory_space<vmem>>, vector<16x32xf32>
    %c6_26 = arith.constant 6 : index
    %c0_27 = arith.constant 0 : index
    %39 = vector.load %arg3[%c6_26, %c0_27] : memref<7x32xf32, #tpu.memory_space<vmem>>, vector<1x32xf32>
    %40 = vector.broadcast %39 : vector<1x32xf32> to vector<16x32xf32>
    %41 = arith.mulf %38, %40 : vector<16x32xf32>
    %42 = arith.addf %37, %41 : vector<16x32xf32>
    %cst_28 = arith.constant dense<0.000000e+00> : vector<16xf32>
    %43 = vector.multi_reduction <add>, %42, %cst_28 [1] : vector<16x32xf32> to vector<16xf32>
    %44 = vector.shape_cast %43 : vector<16xf32> to vector<16x1xf32>
    %cst_29 = arith.constant 3.200000e+01 : f32
    %45 = vector.broadcast %cst_29 : f32 to vector<16x1xf32>
    %46 = arith.divf %44, %45 : vector<16x1xf32>
    %47 = vector.broadcast %46 : vector<16x1xf32> to vector<16x32xf32>
    %48 = arith.subf %42, %47 : vector<16x32xf32>
    %49 = arith.mulf %48, %48 : vector<16x32xf32>
    %cst_30 = arith.constant dense<0.000000e+00> : vector<16xf32>
    %50 = vector.multi_reduction <add>, %49, %cst_30 [1] : vector<16x32xf32> to vector<16xf32>
    %51 = vector.shape_cast %50 : vector<16xf32> to vector<16x1xf32>
    %cst_31 = arith.constant 3.200000e+01 : f32
    %52 = vector.broadcast %cst_31 : f32 to vector<16x1xf32>
    %53 = arith.divf %51, %52 : vector<16x1xf32>
    %cst_32 = arith.constant 9.99999997E-7 : f32
    %54 = vector.broadcast %cst_32 : f32 to vector<16x1xf32>
    %55 = arith.addf %53, %54 : vector<16x1xf32>
    %56 = math.rsqrt %55 : vector<16x1xf32>
    %57 = vector.broadcast %56 : vector<16x1xf32> to vector<16x32xf32>
    %58 = arith.mulf %48, %57 : vector<16x32xf32>
    %c0_33 = arith.constant 0 : index
    %c0_34 = arith.constant 0 : index
    %59 = vector.load %arg5[%c0_33, %c0_34] : memref<1x32xf32, #tpu.memory_space<vmem>>, vector<1x32xf32>
    %60 = vector.broadcast %59 : vector<1x32xf32> to vector<16x32xf32>
    %61 = arith.mulf %58, %60 : vector<16x32xf32>
    %c0_35 = arith.constant 0 : index
    %c0_36 = arith.constant 0 : index
    %62 = vector.load %arg6[%c0_35, %c0_36] : memref<1x32xf32, #tpu.memory_space<vmem>>, vector<1x32xf32>
    %63 = vector.broadcast %62 : vector<1x32xf32> to vector<16x32xf32>
    %64 = arith.addf %61, %63 : vector<16x32xf32>
    %c0_37 = arith.constant 0 : index
    %c0_38 = arith.constant 0 : index
    %65 = vector.load %arg7[%c0_37, %c0_38] : memref<32x128xf32, #tpu.memory_space<vmem>>, vector<32x128xf32>
    %cst_39 = arith.constant dense<0.000000e+00> : vector<16x128xf32>
    %66 = tpu.matmul %64, %65, %cst_39 {dimension_numbers = #tpu.dot_dimension_numbers<[1], [0], [0], [1], [0, 0, 1, 1], [], []>} : vector<16x32xf32>, vector<32x128xf32>, vector<16x128xf32> -> vector<16x128xf32>
    %c0_40 = arith.constant 0 : index
    %c0_41 = arith.constant 0 : index
    %67 = vector.load %arg8[%c0_40, %c0_41] : memref<1x128xf32, #tpu.memory_space<vmem>>, vector<1x128xf32>
    %68 = vector.broadcast %67 : vector<1x128xf32> to vector<16x128xf32>
    %69 = arith.addf %66, %68 : vector<16x128xf32>
    %70 = arith.mulf %69, %69 : vector<16x128xf32>
    %71 = arith.mulf %69, %70 : vector<16x128xf32>
    %cst_42 = arith.constant 4.471500e-02 : f32
    %72 = vector.broadcast %cst_42 : f32 to vector<16x128xf32>
    %73 = arith.mulf %72, %71 : vector<16x128xf32>
    %74 = arith.addf %69, %73 : vector<16x128xf32>
    %cst_43 = arith.constant 0.797884583 : f32
    %75 = vector.broadcast %cst_43 : f32 to vector<16x128xf32>
    %76 = arith.mulf %75, %74 : vector<16x128xf32>
    %77 = math.tanh %76 : vector<16x128xf32>
    %cst_44 = arith.constant 1.000000e+00 : f32
    %78 = vector.broadcast %cst_44 : f32 to vector<16x128xf32>
    %79 = arith.addf %78, %77 : vector<16x128xf32>
    %cst_45 = arith.constant 5.000000e-01 : f32
    %80 = vector.broadcast %cst_45 : f32 to vector<16x128xf32>
    %81 = arith.mulf %80, %79 : vector<16x128xf32>
    %82 = arith.mulf %69, %81 : vector<16x128xf32>
    %c0_46 = arith.constant 0 : index
    %c0_47 = arith.constant 0 : index
    %83 = vector.load %arg9[%c0_46, %c0_47] : memref<128x32xf32, #tpu.memory_space<vmem>>, vector<128x32xf32>
    %cst_48 = arith.constant dense<0.000000e+00> : vector<16x32xf32>
    %84 = tpu.matmul %82, %83, %cst_48 {dimension_numbers = #tpu.dot_dimension_numbers<[1], [0], [0], [1], [0, 0, 1, 1], [], []>} : vector<16x128xf32>, vector<128x32xf32>, vector<16x32xf32> -> vector<16x32xf32>
    %c0_49 = arith.constant 0 : index
    %c0_50 = arith.constant 0 : index
    %85 = vector.load %arg10[%c0_49, %c0_50] : memref<1x32xf32, #tpu.memory_space<vmem>>, vector<1x32xf32>
    %86 = vector.broadcast %85 : vector<1x32xf32> to vector<16x32xf32>
    %87 = arith.addf %84, %86 : vector<16x32xf32>
    %c0_51 = arith.constant 0 : index
    %c0_52 = arith.constant 0 : index
    %88 = vector.load %arg11[%c0_51, %c0_52] : memref<1x32xf32, #tpu.memory_space<vmem>>, vector<1x32xf32>
    %89 = vector.broadcast %88 : vector<1x32xf32> to vector<16x32xf32>
    %90 = arith.mulf %89, %87 : vector<16x32xf32>
    %91 = arith.addf %1, %90 : vector<16x32xf32>
    %c0_53 = arith.constant 0 : index
    %c0_54 = arith.constant 0 : index
    %c0_55 = arith.constant 0 : index
    %92 = vector.load %arg12[%c0_53, %c0_54, %c0_55] : memref<1x16x32xf32, #tpu.memory_space<vmem>>, vector<1x16x32xf32>
    %93 = vector.shape_cast %92 : vector<1x16x32xf32> to vector<16x32xf32>
    %94 = vector.shape_cast %91 : vector<16x32xf32> to vector<1x16x32xf32>
    tpu.vector_store %arg12[%c0_53, %c0_54, %c0_55], %94 {strides = array<i32>} : memref<1x16x32xf32, #tpu.memory_space<vmem>>, vector<1x16x32xf32>,
    return
  }
  func.func @transform_0(%arg0: i32, %arg1: i32) -> (i32, i32, i32) {
    %c0_i32 = arith.constant 0 : i32
    %c0_i32_0 = arith.constant 0 : i32
    return %arg0, %arg1, %c0_i32 : i32, i32, i32
  }
  func.func @transform_1(%arg0: i32, %arg1: i32) -> (i32, i32) {
    %c0_i32 = arith.constant 0 : i32
    %c0_i32_0 = arith.constant 0 : i32
    %c0_i32_1 = arith.constant 0 : i32
    return %c0_i32, %c0_i32_0 : i32, i32
  }
  func.func @transform_2(%arg0: i32, %arg1: i32) -> (i32, i32) {
    %c0_i32 = arith.constant 0 : i32
    %c0_i32_0 = arith.constant 0 : i32
    %c0_i32_1 = arith.constant 0 : i32
    return %c0_i32, %c0_i32_0 : i32, i32
  }
  func.func @transform_3(%arg0: i32, %arg1: i32) -> (i32, i32) {
    %c0_i32 = arith.constant 0 : i32
    %c0_i32_0 = arith.constant 0 : i32
    %c0_i32_1 = arith.constant 0 : i32
    return %c0_i32, %c0_i32_0 : i32, i32
  }
  func.func @transform_4(%arg0: i32, %arg1: i32) -> (i32, i32) {
    %c0_i32 = arith.constant 0 : i32
    %c0_i32_0 = arith.constant 0 : i32
    %c0_i32_1 = arith.constant 0 : i32
    return %c0_i32, %c0_i32_0 : i32, i32
  }
  func.func @transform_5(%arg0: i32, %arg1: i32) -> (i32, i32) {
    %c0_i32 = arith.constant 0 : i32
    %c0_i32_0 = arith.constant 0 : i32
    %c0_i32_1 = arith.constant 0 : i32
    return %c0_i32, %c0_i32_0 : i32, i32
  }
  func.func @transform_6(%arg0: i32, %arg1: i32) -> (i32, i32) {
    %c0_i32 = arith.constant 0 : i32
    %c0_i32_0 = arith.constant 0 : i32
    %c0_i32_1 = arith.constant 0 : i32
    return %c0_i32, %c0_i32_0 : i32, i32
  }
  func.func @transform_7(%arg0: i32, %arg1: i32) -> (i32, i32) {
    %c0_i32 = arith.constant 0 : i32
    %c0_i32_0 = arith.constant 0 : i32
    %c0_i32_1 = arith.constant 0 : i32
    return %c0_i32, %c0_i32_0 : i32, i32
  }
  func.func @transform_8(%arg0: i32, %arg1: i32) -> (i32, i32) {
    %c0_i32 = arith.constant 0 : i32
    %c0_i32_0 = arith.constant 0 : i32
    %c0_i32_1 = arith.constant 0 : i32
    return %c0_i32, %c0_i32_0 : i32, i32
  }
  func.func @transform_9(%arg0: i32, %arg1: i32) -> (i32, i32) {
    %c0_i32 = arith.constant 0 : i32
    %c0_i32_0 = arith.constant 0 : i32
    %c0_i32_1 = arith.constant 0 : i32
    return %c0_i32, %c0_i32_0 : i32, i32
  }
  func.func @transform_10(%arg0: i32, %arg1: i32) -> (i32, i32, i32) {
    %c0_i32 = arith.constant 0 : i32
    %c0_i32_0 = arith.constant 0 : i32
    return %arg0, %arg1, %c0_i32 : i32, i32, i32
  }
}

</mosaic_0001>

<llo_original>
// kernel: squeeze.3
$region0: #{squeeze.3}
  %s0 = inlined_call_operand.vmem [shape: s32[4,8], index: 0, kind: input, shape index: {}]
  %s1 = inlined_call_operand.vmem [shape: s32[4,2,4], index: 1, kind: output, shape index: {}]
  $region1: #{squeeze.3} parent=0
    #allocation0 [shape = 'u8[16384]{0}', space=vmem, size = 0x4000, scoped, tag = 'scoped mem for output reshape']
    #allocation1 [shape = 'u8[4096]{0}', space=vmem, size = 0x1000, scoped, tag = 'scoped mem for input reshape']
    %s3 = sshllo.u32 0, 4
    %v4 = vld [vmem:[%s0] sm:%s3]
    %5 = vst [vmem:[#allocation1] sm:%s3] %v4
    %v6 = vld [vmem:[#allocation1] sm:$0xf]
    %vm7 = vcmask 31744
    %8 = vst.msk [vmem:[#allocation0] ss:$8 sm:$0xf] %vm7, %v6
    %v9 = vld [vmem:[#allocation1] sm:$0xf]
    %10 = vrot.lane.b32.xlu0 %v9, 124
    %v11 = vpop.permute.xlu0 %10
    %vm12 = vcmask 31744
    %s13 = scalar_lea.vmem [#allocation0], 1
    %14 = vst.msk [vmem:[%s13] ss:$8 sm:$0xf] %vm12, %v11
    %s16 = sshllo.u32 0, 2
    %v18 = vld [vmem:[#allocation0] sm:%s16]
    %s19 = sshllo.u32 0, 2
    %20 = vst [vmem:[%s1] sm:%s19] %v18
    %s21 = scalar_lea.vmem [#allocation0], 8
    %v22 = vld [vmem:[%s21] sm:%s16]
    %s23 = sshllo.u32 0, 2
    %s24 = scalar_lea.vmem %s1, 2
    %25 = vst [vmem:[%s24] sm:%s23] %v22
    %s26 = scalar_lea.vmem [#allocation0], 16
    %v27 = vld [vmem:[%s26] sm:%s16]
    %s28 = sshllo.u32 0, 2
    %s29 = smul.addr 2, 2
    %s30 = scalar_lea.vmem %s1, %s29
    %31 = vst [vmem:[%s30] sm:%s28] %v27
    %s32 = scalar_lea.vmem [#allocation0], 24
    %v33 = vld [vmem:[%s32] sm:%s16]
    %s34 = sshllo.u32 0, 2
    %s35 = smul.addr 2, 3
    %s36 = scalar_lea.vmem %s1, %s35
    %37 = vst [vmem:[%s36] sm:%s34] %v33

// kernel: downsample_rvq_forward.7
$region0: #{downsample_rvq_forward.7}
  #allocation0 [shape = 'u32[]', space=smem, size = 0x4, offset = 0x4, fixed_abs, tag = 'smem constant byte address 0x4 - core index']
  #allocation1 [shape = 'u32[144,128]{1,0:T(1,128)}', space=vmem, size = 0x12000, scoped, tag = 'internal scratch']
  #allocation2 [shape = 'f32[16,32]{1,0:T(8,128)}', space=vmem, size = 0x2000, scoped, tag = 'scratch operand']
  %s0 = inlined_call_operand.vmem [shape: f32[2,8,64], index: 0, kind: input, shape index: {}]
  %s1 = inlined_call_operand.hbm [shape: f32[64,32], index: 1, kind: input, shape index: {}]
  %s2 = inlined_call_operand.vmem [shape: f32[1,32], index: 2, kind: input, shape index: {}, may-alias: {2,4,6,10}]
  %s3 = inlined_call_operand.vmem [shape: f32[7,32], index: 3, kind: input, shape index: {}]
  %s4 = inlined_call_operand.vmem [shape: f32[1,32], index: 4, kind: input, shape index: {}, may-alias: {2,4,6,10}]
  %s5 = inlined_call_operand.vmem [shape: f32[1,32], index: 5, kind: input, shape index: {}]
  %s6 = inlined_call_operand.vmem [shape: f32[1,32], index: 6, kind: input, shape index: {}, may-alias: {2,4,6,10}]
  %s7 = inlined_call_operand.hbm [shape: f32[32,128], index: 7, kind: input, shape index: {}]
  %s8 = inlined_call_operand.vmem [shape: f32[1,128], index: 8, kind: input, shape index: {}]
  %s9 = inlined_call_operand.vmem [shape: f32[128,32], index: 9, kind: input, shape index: {}]
  %s10 = inlined_call_operand.vmem [shape: f32[1,32], index: 10, kind: input, shape index: {}, may-alias: {2,4,6,10}]
  %s11 = inlined_call_operand.vmem [shape: f32[1,32], index: 11, kind: input, shape index: {}]
  %s12 = inlined_call_operand.vmem [shape: f32[2,8,32], index: 12, kind: output, shape index: {}]
  %s13 = sld [smem:[#allocation0]]
  $region89: #{downsample_rvq_forward.7} parent=0
    _
  %s15 = ssub.s32 1, %s13
  %s16 = scalar_select 0, %s15, %s13
  $region1: #{downsample_rvq_forward.7} parent=0
    #allocation3 [shape = 'u8[32768]{0}', space=vmem, size = 0x8000, scoped, tag = 'input window, operand 1, single buffered']
    #allocation4 [shape = 's32[2]{0}', space=sflag, size = 0x8, scoped, tag = 'scoped memory for downsample_rvq_forward.7']
    #allocation5 [shape = 'u8[16384]{0}', space=vmem, size = 0x4000, scoped, tag = 'input window, operand 7, single buffered']
    #allocation6 [shape = 's32[1]{0}', space=sflag, size = 0x4, scoped, tag = 'scoped memory for downsample_rvq_forward.7']
    %17 = vsyncpa [#allocation4], 0
    %18 = vsyncpa [#allocation6], 0
    loop: start=0, step=1, limit=4
    $region2: #{downsample_rvq_forward.7} parent=1 // loop_pre_header
      _
    $region3: #{downsample_rvq_forward.7} parent=1 // loop_header
      %s20 = sphi 0, %s24
      %p21 = scmp.ge.s32.totalorder %s20, 4
      %s27 = sphi 0, %s39
      %s28 = sphi 0, %s35
      %s29 = sphi 0, %s27
      %s30 = sphi 0, %s28
      %s31 = sphi 0, %s29
      %s32 = sphi 0, %s30
      %s44 = sphi 0, %s46
      %s47 = sphi 0, %s44
      %s48 = sphi 0, %s47
      %s64 = sphi 0, %s48
      %s68 = sphi 0, %s68
      %s70 = sphi 0, %s68
      %s71 = sphi 0, %s70
      %s85 = sphi 0, %s71
      %s89 = sphi 0, %s89
      %s91 = sphi 0, %s89
      %s92 = sphi 0, %s91
      %s106 = sphi 0, %s92
      %s110 = sphi 0, %s110
      %s112 = sphi 0, %s110
      %s113 = sphi 0, %s112
      %s127 = sphi 0, %s113
      %s131 = sphi 0, %s131
      %s133 = sphi 0, %s131
      %s134 = sphi 0, %s133
      %s148 = sphi 0, %s134
      %s152 = sphi 0, %s152
      %s154 = sphi 0, %s152
      %s155 = sphi 0, %s154
      %s169 = sphi 0, %s155
      %s173 = sphi 0, %s173
      %s175 = sphi 0, %s173
      %s176 = sphi 0, %s175
      %s190 = sphi 0, %s176
      %s194 = sphi 0, %s194
      %s196 = sphi 0, %s194
      %s197 = sphi 0, %s196
      %s211 = sphi 0, %s197
      %s215 = sphi 0, %s215
      %s217 = sphi 0, %s215
      %s218 = sphi 0, %s217
      %s232 = sphi 0, %s218
      %s236 = sphi 0, %s236
      %s238 = sphi 0, %s236
      %s239 = sphi 0, %s238
      %s253 = sphi 0, %s239
      %s257 = sphi 0, %s257
      %s259 = sphi 0, %s257
      %s260 = sphi 0, %s259
      %s274 = sphi 0, %s260
      %s278 = sphi 0, %s278
      %s280 = sphi 0, %s278
      %s281 = sphi 0, %s280
      %s295 = sphi 0, %s281
      %s303 = sphi 0, %s305
      %s306 = sphi 0, %s303
      %s307 = sphi 0, %s306
      %s323 = sphi 0, %s307
    $region4: #{downsample_rvq_forward.7} parent=1 // loop_header_branch
      %23 = sbr.rel (%p21) target = $region8
    $region5: #{downsample_rvq_forward.7} parent=1 // loop_body
      %s25 = ssub.s32 %s20, 1
      %s26 = ssub.s32 %s20, 2
      %s33 = sadd.s32 1, %s28
      %p34 = scmp.ge.s32.totalorder %s33, 1
      %s35 = scalar_select %p34, 0, %s33
      %s36 = sadd.s32 1, %s27
      %s37 = scalar_select %p34, %s36, %s27
      %p38 = scmp.ge.s32.totalorder %s37, 2
      %s39 = scalar_select %p38, 0, %s37
      %s40 = ssub.s32 %s27, %s39
      %s41 = ssub.s32 %s28, %s35
      %s42 = sor.u32 %s40, %s41
      %p43 = scmp.eq.s32.totalorder %s42, 0
      %s45 = sadd.s32 %s44, 1
      %s46 = scalar_select %p43, %s44, %s45
      %p49 = pneg %p43
      %p50 = scmp.eq.s32.totalorder %s20, 1
      %p51 = por %p49, %p50
      %p52 = scmp.ne.s32.totalorder %s44, %s47
      %p53 = scmp.eq.s32.totalorder %s20, 0
      %p54 = por %p52, %p53
      %p55 = scmp.ne.s32.totalorder %s44, %s47
      %p56 = scmp.eq.s32.totalorder %s25, 1
      %p57 = por %p55, %p56
      %p58 = scmp.ne.s32.totalorder %s47, %s48
      %p59 = scmp.eq.s32.totalorder %s25, 0
      %p60 = por %p58, %p59
      %p61 = scmp.ne.s32.totalorder %s47, %s48
      %p62 = scmp.eq.s32.totalorder %s26, 1
      %p63 = por %p61, %p62
      %p65 = scmp.ne.s32.totalorder %s48, %s64
      %p66 = scmp.eq.s32.totalorder %s26, 0
      %p67 = por %p65, %p66
      %s69 = sadd.s32 %s68, 1
      %p72 = scmp.eq.s32.totalorder %s20, 1
      %p73 = scmp.ne.s32.totalorder %s68, %s70
      %p74 = scmp.eq.s32.totalorder %s20, 0
      %p75 = por %p73, %p74
      %p76 = scmp.ne.s32.totalorder %s68, %s70
      %p77 = scmp.eq.s32.totalorder %s25, 1
      %p78 = por %p76, %p77
      %p79 = scmp.ne.s32.totalorder %s70, %s71
      %p80 = scmp.eq.s32.totalorder %s25, 0
      %p81 = por %p79, %p80
      %p82 = scmp.ne.s32.totalorder %s70, %s71
      %p83 = scmp.eq.s32.totalorder %s26, 1
      %p84 = por %p82, %p83
      %p86 = scmp.ne.s32.totalorder %s71, %s85
      %p87 = scmp.eq.s32.totalorder %s26, 0
      %p88 = por %p86, %p87
      %s90 = sadd.s32 %s89, 1
      %p93 = scmp.eq.s32.totalorder %s20, 1
      %p94 = scmp.ne.s32.totalorder %s89, %s91
      %p95 = scmp.eq.s32.totalorder %s20, 0
      %p96 = por %p94, %p95
      %p97 = scmp.ne.s32.totalorder %s89, %s91
      %p98 = scmp.eq.s32.totalorder %s25, 1
      %p99 = por %p97, %p98
      %p100 = scmp.ne.s32.totalorder %s91, %s92
      %p101 = scmp.eq.s32.totalorder %s25, 0
      %p102 = por %p100, %p101
      %p103 = scmp.ne.s32.totalorder %s91, %s92
      %p104 = scmp.eq.s32.totalorder %s26, 1
      %p105 = por %p103, %p104
      %p107 = scmp.ne.s32.totalorder %s92, %s106
      %p108 = scmp.eq.s32.totalorder %s26, 0
      %p109 = por %p107, %p108
      %s111 = sadd.s32 %s110, 1
      %p114 = scmp.eq.s32.totalorder %s20, 1
      %p115 = scmp.ne.s32.totalorder %s110, %s112
      %p116 = scmp.eq.s32.totalorder %s20, 0
      %p117 = por %p115, %p116
      %p118 = scmp.ne.s32.totalorder %s110, %s112
      %p119 = scmp.eq.s32.totalorder %s25, 1
      %p120 = por %p118, %p119
      %p121 = scmp.ne.s32.totalorder %s112, %s113
      %p122 = scmp.eq.s32.totalorder %s25, 0
      %p123 = por %p121, %p122
      %p124 = scmp.ne.s32.totalorder %s112, %s113
      %p125 = scmp.eq.s32.totalorder %s26, 1
      %p126 = por %p124, %p125
      %p128 = scmp.ne.s32.totalorder %s113, %s127
      %p129 = scmp.eq.s32.totalorder %s26, 0
      %p130 = por %p128, %p129
      %s132 = sadd.s32 %s131, 1
      %p135 = scmp.eq.s32.totalorder %s20, 1
      %p136 = scmp.ne.s32.totalorder %s131, %s133
      %p137 = scmp.eq.s32.totalorder %s20, 0
      %p138 = por %p136, %p137
      %p139 = scmp.ne.s32.totalorder %s131, %s133
      %p140 = scmp.eq.s32.totalorder %s25, 1
      %p141 = por %p139, %p140
      %p142 = scmp.ne.s32.totalorder %s133, %s134
      %p143 = scmp.eq.s32.totalorder %s25, 0
      %p144 = por %p142, %p143
      %p145 = scmp.ne.s32.totalorder %s133, %s134
      %p146 = scmp.eq.s32.totalorder %s26, 1
      %p147 = por %p145, %p146
      %p149 = scmp.ne.s32.totalorder %s134, %s148
      %p150 = scmp.eq.s32.totalorder %s26, 0
      %p151 = por %p149, %p150
      %s153 = sadd.s32 %s152, 1
      %p156 = scmp.eq.s32.totalorder %s20, 1
      %p157 = scmp.ne.s32.totalorder %s152, %s154
      %p158 = scmp.eq.s32.totalorder %s20, 0
      %p159 = por %p157, %p158
      %p160 = scmp.ne.s32.totalorder %s152, %s154
      %p161 = scmp.eq.s32.totalorder %s25, 1
      %p162 = por %p160, %p161
      %p163 = scmp.ne.s32.totalorder %s154, %s155
      %p164 = scmp.eq.s32.totalorder %s25, 0
      %p165 = por %p163, %p164
      %p166 = scmp.ne.s32.totalorder %s154, %s155
      %p167 = scmp.eq.s32.totalorder %s26, 1
      %p168 = por %p166, %p167
      %p170 = scmp.ne.s32.totalorder %s155, %s169
      %p171 = scmp.eq.s32.totalorder %s26, 0
      %p172 = por %p170, %p171
      %s174 = sadd.s32 %s173, 1
      %p177 = scmp.eq.s32.totalorder %s20, 1
      %p178 = scmp.ne.s32.totalorder %s173, %s175
      %p179 = scmp.eq.s32.totalorder %s20, 0
      %p180 = por %p178, %p179
      %p181 = scmp.ne.s32.totalorder %s173, %s175
      %p182 = scmp.eq.s32.totalorder %s25, 1
      %p183 = por %p181, %p182
      %p184 = scmp.ne.s32.totalorder %s175, %s176
      %p185 = scmp.eq.s32.totalorder %s25, 0
      %p186 = por %p184, %p185
      %p187 = scmp.ne.s32.totalorder %s175, %s176
      %p188 = scmp.eq.s32.totalorder %s26, 1
      %p189 = por %p187, %p188
      %p191 = scmp.ne.s32.totalorder %s176, %s190
      %p192 = scmp.eq.s32.totalorder %s26, 0
      %p193 = por %p191, %p192
      %s195 = sadd.s32 %s194, 1
      %p198 = scmp.eq.s32.totalorder %s20, 1
      %p199 = scmp.ne.s32.totalorder %s194, %s196
      %p200 = scmp.eq.s32.totalorder %s20, 0
      %p201 = por %p199, %p200
      %p202 = scmp.ne.s32.totalorder %s194, %s196
      %p203 = scmp.eq.s32.totalorder %s25, 1
      %p204 = por %p202, %p203
      %p205 = scmp.ne.s32.totalorder %s196, %s197
      %p206 = scmp.eq.s32.totalorder %s25, 0
      %p207 = por %p205, %p206
      %p208 = scmp.ne.s32.totalorder %s196, %s197
      %p209 = scmp.eq.s32.totalorder %s26, 1
      %p210 = por %p208, %p209
      %p212 = scmp.ne.s32.totalorder %s197, %s211
      %p213 = scmp.eq.s32.totalorder %s26, 0
      %p214 = por %p212, %p213
      %s216 = sadd.s32 %s215, 1
      %p219 = scmp.eq.s32.totalorder %s20, 1
      %p220 = scmp.ne.s32.totalorder %s215, %s217
      %p221 = scmp.eq.s32.totalorder %s20, 0
      %p222 = por %p220, %p221
      %p223 = scmp.ne.s32.totalorder %s215, %s217
      %p224 = scmp.eq.s32.totalorder %s25, 1
      %p225 = por %p223, %p224
      %p226 = scmp.ne.s32.totalorder %s217, %s218
      %p227 = scmp.eq.s32.totalorder %s25, 0
      %p228 = por %p226, %p227
      %p229 = scmp.ne.s32.totalorder %s217, %s218
      %p230 = scmp.eq.s32.totalorder %s26, 1
      %p231 = por %p229, %p230
      %p233 = scmp.ne.s32.totalorder %s218, %s232
      %p234 = scmp.eq.s32.totalorder %s26, 0
      %p235 = por %p233, %p234
      %s237 = sadd.s32 %s236, 1
      %p240 = scmp.eq.s32.totalorder %s20, 1
      %p241 = scmp.ne.s32.totalorder %s236, %s238
      %p242 = scmp.eq.s32.totalorder %s20, 0
      %p243 = por %p241, %p242
      %p244 = scmp.ne.s32.totalorder %s236, %s238
      %p245 = scmp.eq.s32.totalorder %s25, 1
      %p246 = por %p244, %p245
      %p247 = scmp.ne.s32.totalorder %s238, %s239
      %p248 = scmp.eq.s32.totalorder %s25, 0
      %p249 = por %p247, %p248
      %p250 = scmp.ne.s32.totalorder %s238, %s239
      %p251 = scmp.eq.s32.totalorder %s26, 1
      %p252 = por %p250, %p251
      %p254 = scmp.ne.s32.totalorder %s239, %s253
      %p255 = scmp.eq.s32.totalorder %s26, 0
      %p256 = por %p254, %p255
      %s258 = sadd.s32 %s257, 1
      %p261 = scmp.eq.s32.totalorder %s20, 1
      %p262 = scmp.ne.s32.totalorder %s257, %s259
      %p263 = scmp.eq.s32.totalorder %s20, 0
      %p264 = por %p262, %p263
      %p265 = scmp.ne.s32.totalorder %s257, %s259
      %p266 = scmp.eq.s32.totalorder %s25, 1
      %p267 = por %p265, %p266
      %p268 = scmp.ne.s32.totalorder %s259, %s260
      %p269 = scmp.eq.s32.totalorder %s25, 0
      %p270 = por %p268, %p269
      %p271 = scmp.ne.s32.totalorder %s259, %s260
      %p272 = scmp.eq.s32.totalorder %s26, 1
      %p273 = por %p271, %p272
      %p275 = scmp.ne.s32.totalorder %s260, %s274
      %p276 = scmp.eq.s32.totalorder %s26, 0
      %p277 = por %p275, %p276
      %s279 = sadd.s32 %s278, 1
      %p282 = scmp.eq.s32.totalorder %s20, 1
      %p283 = scmp.ne.s32.totalorder %s278, %s280
      %p284 = scmp.eq.s32.totalorder %s20, 0
      %p285 = por %p283, %p284
      %p286 = scmp.ne.s32.totalorder %s278, %s280
      %p287 = scmp.eq.s32.totalorder %s25, 1
      %p288 = por %p286, %p287
      %p289 = scmp.ne.s32.totalorder %s280, %s281
      %p290 = scmp.eq.s32.totalorder %s25, 0
      %p291 = por %p289, %p290
      %p292 = scmp.ne.s32.totalorder %s280, %s281
      %p293 = scmp.eq.s32.totalorder %s26, 1
      %p294 = por %p292, %p293
      %p296 = scmp.ne.s32.totalorder %s281, %s295
      %p297 = scmp.eq.s32.totalorder %s26, 0
      %p298 = por %p296, %p297
      %s299 = ssub.s32 %s27, %s39
      %s300 = ssub.s32 %s28, %s35
      %s301 = sor.u32 %s299, %s300
      %p302 = scmp.eq.s32.totalorder %s301, 0
      %s304 = sadd.s32 %s303, 1
      %s305 = scalar_select %p302, %s303, %s304
      %p308 = pneg %p302
      %p309 = scmp.eq.s32.totalorder %s20, 1
      %p310 = por %p308, %p309
      %p311 = scmp.ne.s32.totalorder %s303, %s306
      %p312 = scmp.eq.s32.totalorder %s20, 0
      %p313 = por %p311, %p312
      %p314 = scmp.ne.s32.totalorder %s303, %s306
      %p315 = scmp.eq.s32.totalorder %s25, 1
      %p316 = por %p314, %p315
      %p317 = scmp.ne.s32.totalorder %s306, %s307
      %p318 = scmp.eq.s32.totalorder %s25, 0
      %p319 = por %p317, %p318
      %p320 = scmp.ne.s32.totalorder %s306, %s307
      %p321 = scmp.eq.s32.totalorder %s26, 1
      %p322 = por %p320, %p321
      %p324 = scmp.ne.s32.totalorder %s307, %s323
      %p325 = scmp.eq.s32.totalorder %s26, 0
      %p326 = por %p324, %p325
      %p327 = scmp.le.s32.totalorder 1, %s20
      %p328 = scmp.lt.s32.totalorder %s20, 3
      %p329 = pnand %p327, %p328
      %p330 = pneg %p329
      // Predicated region
      $region9: #{downsample_rvq_forward.7} parent=5 // pred_check
        _
      $region10: #{downsample_rvq_forward.7} parent=5 // pred_check_branch
        %332 = sbr.rel (%p329) target = $region12
      $region11: #{downsample_rvq_forward.7} parent=5 // pred_region
        %s333 = ssub.s32 %s20, 1
        // Predicated region
        $region13: #{downsample_rvq_forward.7} parent=11 // pred_check
          %p334 = pneg %p81
        $region14: #{downsample_rvq_forward.7} parent=11 // pred_check_branch
          %336 = sbr.rel (%p334) target = $region16
        $region15: #{downsample_rvq_forward.7} parent=11 // pred_region
          %s338 = ssub.s32 1024, 1024
          %339 = vsyncadd [#allocation4], %s338
          %s340 = sshll.u32 [#allocation3], 4
          %s341 = int_to_ptr.vmem [resolvable:$true] %s340
          %346 = dma.hbm_to_vmem [thread:$0]  %s1, 1024, %s341, [#allocation4], 128, 128, 8
        $region16: #{downsample_rvq_forward.7} parent=11 // pred_fallthru
          _
        // Predicated region
        $region17: #{downsample_rvq_forward.7} parent=11 // pred_check
          %p347 = pneg %p102
        $region18: #{downsample_rvq_forward.7} parent=11 // pred_check_branch
          %349 = sbr.rel (%p347) target = $region20
        $region19: #{downsample_rvq_forward.7} parent=11 // pred_region
          _
        $region20: #{downsample_rvq_forward.7} parent=11 // pred_fallthru
          _
        // Predicated region
        $region21: #{downsample_rvq_forward.7} parent=11 // pred_check
          %p350 = pneg %p123
        $region22: #{downsample_rvq_forward.7} parent=11 // pred_check_branch
          %352 = sbr.rel (%p350) target = $region24
        $region23: #{downsample_rvq_forward.7} parent=11 // pred_region
          _
        $region24: #{downsample_rvq_forward.7} parent=11 // pred_fallthru
          _
        // Predicated region
        $region25: #{downsample_rvq_forward.7} parent=11 // pred_check
          %p353 = pneg %p144
        $region26: #{downsample_rvq_forward.7} parent=11 // pred_check_branch
          %355 = sbr.rel (%p353) target = $region28
        $region27: #{downsample_rvq_forward.7} parent=11 // pred_region
          _
        $region28: #{downsample_rvq_forward.7} parent=11 // pred_fallthru
          _
        // Predicated region
        $region29: #{downsample_rvq_forward.7} parent=11 // pred_check
          %p356 = pneg %p165
        $region30: #{downsample_rvq_forward.7} parent=11 // pred_check_branch
          %358 = sbr.rel (%p356) target = $region32
        $region31: #{downsample_rvq_forward.7} parent=11 // pred_region
          _
        $region32: #{downsample_rvq_forward.7} parent=11 // pred_fallthru
          _
        // Predicated region
        $region33: #{downsample_rvq_forward.7} parent=11 // pred_check
          %p359 = pneg %p186
        $region34: #{downsample_rvq_forward.7} parent=11 // pred_check_branch
          %361 = sbr.rel (%p359) target = $region36
        $region35: #{downsample_rvq_forward.7} parent=11 // pred_region
          _
        $region36: #{downsample_rvq_forward.7} parent=11 // pred_fallthru
          _
        // Predicated region
        $region37: #{downsample_rvq_forward.7} parent=11 // pred_check
          %p362 = pneg %p207
        $region38: #{downsample_rvq_forward.7} parent=11 // pred_check_branch
          %364 = sbr.rel (%p362) target = $region40
        $region39: #{downsample_rvq_forward.7} parent=11 // pred_region
          %s366 = ssub.s32 512, 512
          %367 = vsyncadd [#allocation6], %s366
          %s368 = sshll.u32 [#allocation5], 4
          %s369 = int_to_ptr.vmem [resolvable:$true] %s368
          %374 = dma.hbm_to_vmem [thread:$0]  %s7, 512, %s369, [#allocation6], 128, 128, 8
        $region40: #{downsample_rvq_forward.7} parent=11 // pred_fallthru
          _
        // Predicated region
        $region41: #{downsample_rvq_forward.7} parent=11 // pred_check
          %p375 = pneg %p228
        $region42: #{downsample_rvq_forward.7} parent=11 // pred_check_branch
          %377 = sbr.rel (%p375) target = $region44
        $region43: #{downsample_rvq_forward.7} parent=11 // pred_region
          _
        $region44: #{downsample_rvq_forward.7} parent=11 // pred_fallthru
          _
        // Predicated region
        $region45: #{downsample_rvq_forward.7} parent=11 // pred_check
          %p378 = pneg %p249
        $region46: #{downsample_rvq_forward.7} parent=11 // pred_check_branch
          %380 = sbr.rel (%p378) target = $region48
        $region47: #{downsample_rvq_forward.7} parent=11 // pred_region
          _
        $region48: #{downsample_rvq_forward.7} parent=11 // pred_fallthru
          _
        // Predicated region
        $region49: #{downsample_rvq_forward.7} parent=11 // pred_check
          %p381 = pneg %p270
        $region50: #{downsample_rvq_forward.7} parent=11 // pred_check_branch
          %383 = sbr.rel (%p381) target = $region52
        $region51: #{downsample_rvq_forward.7} parent=11 // pred_region
          _
        $region52: #{downsample_rvq_forward.7} parent=11 // pred_fallthru
          _
        // Predicated region
        $region53: #{downsample_rvq_forward.7} parent=11 // pred_check
          %p384 = pneg %p291
        $region54: #{downsample_rvq_forward.7} parent=11 // pred_check_branch
          %386 = sbr.rel (%p384) target = $region56
        $region55: #{downsample_rvq_forward.7} parent=11 // pred_region
          _
        $region56: #{downsample_rvq_forward.7} parent=11 // pred_fallthru
          _
      $region12: #{downsample_rvq_forward.7} parent=5 // pred_fallthru
        _
      %p387 = scmp.lt.s32.totalorder %s20, 2
      // Predicated region
      $region57: #{downsample_rvq_forward.7} parent=5 // pred_check
        %p388 = pneg %p387
      $region58: #{downsample_rvq_forward.7} parent=5 // pred_check_branch
        %390 = sbr.rel (%p388) target = $region60
      $region59: #{downsample_rvq_forward.7} parent=5 // pred_region
        // Predicated region
        $region61: #{downsample_rvq_forward.7} parent=59 // pred_check
          %p391 = pneg %p54
        $region62: #{downsample_rvq_forward.7} parent=59 // pred_check_branch
          %393 = sbr.rel (%p391) target = $region64
        $region63: #{downsample_rvq_forward.7} parent=59 // pred_region
          %p394 = scmp.lt.s32.totalorder %s27, 1
          %s395 = scalar_select %p394, %s27, 1
          %p396 = scmp.lt.s32.totalorder %s28, 0
          %s397 = scalar_select %p396, %s28, 0
          %s398 = sadd.s32 %s397, %s395
          %s399 = smul.addr %s398, 8
          %s400 = scalar_lea.vmem %s0, %s399
        $region64: #{downsample_rvq_forward.7} parent=59 // pred_fallthru
          _
      $region60: #{downsample_rvq_forward.7} parent=5 // pred_fallthru
        _
      %p401 = scmp.le.s32.totalorder 1, %s20
      %p402 = scmp.lt.s32.totalorder %s20, 3
      %p403 = pnand %p401, %p402
      %p404 = pneg %p403
      // Predicated region
      $region65: #{downsample_rvq_forward.7} parent=5 // pred_check
        _
      $region66: #{downsample_rvq_forward.7} parent=5 // pred_check_branch
        %406 = sbr.rel (%p403) target = $region68
      $region67: #{downsample_rvq_forward.7} parent=5 // pred_region
        %s407 = ssub.s32 %s20, 1
        // Predicated region
        $region69: #{downsample_rvq_forward.7} parent=67 // pred_check
          %p408 = pneg %p81
        $region70: #{downsample_rvq_forward.7} parent=67 // pred_check_branch
          %410 = sbr.rel (%p408) target = $region72
        $region71: #{downsample_rvq_forward.7} parent=67 // pred_region
          %411 = dma.done [#allocation4], 1024
        $region72: #{downsample_rvq_forward.7} parent=67 // pred_fallthru
          _
        // Predicated region
        $region73: #{downsample_rvq_forward.7} parent=67 // pred_check
          %p412 = pneg %p207
        $region74: #{downsample_rvq_forward.7} parent=67 // pred_check_branch
          %414 = sbr.rel (%p412) target = $region76
        $region75: #{downsample_rvq_forward.7} parent=67 // pred_region
          %415 = dma.done [#allocation6], 512
        $region76: #{downsample_rvq_forward.7} parent=67 // pred_fallthru
          _
        %p416 = scmp.lt.s32.totalorder %s29, 1
        %s417 = scalar_select %p416, %s29, 1
        %p418 = scmp.lt.s32.totalorder %s30, 0
        %s419 = scalar_select %p418, %s30, 0
        %s420 = sadd.s32 %s419, %s417
        %s421 = smul.addr %s420, 8
        %s422 = scalar_lea.vmem %s0, %s421
        %p423 = pneg %p60
        %p424 = pneg %p57
        %p425 = pneg %p81
        %p426 = pneg %p78
        %p427 = pneg %p102
        %p428 = pneg %p99
        %p429 = pneg %p123
        %p430 = pneg %p120
        %p431 = pneg %p144
        %p432 = pneg %p141
        %p433 = pneg %p165
        %p434 = pneg %p162
        %p435 = pneg %p186
        %p436 = pneg %p183
        %p437 = pneg %p207
        %p438 = pneg %p204
        %p439 = pneg %p228
        %p440 = pneg %p225
        %p441 = pneg %p249
        %p442 = pneg %p246
        %p443 = pneg %p270
        %p444 = pneg %p267
        %p445 = pneg %p291
        %p446 = pneg %p288
        %p447 = pneg %p319
        %p448 = pneg %p316
        %p449 = scmp.lt.s32.totalorder %s29, 1
        %s450 = scalar_select %p449, %s29, 1
        %p451 = scmp.lt.s32.totalorder %s30, 0
        %s452 = scalar_select %p451, %s30, 0
        %s453 = sadd.s32 %s452, %s450
        %s454 = smul.addr %s453, 8
        %s455 = scalar_lea.vmem %s12, %s454
        %p456 = scmp.lt.s32.totalorder %s29, 1
        %s457 = scalar_select %p456, %s29, 1
        %p458 = scmp.lt.s32.totalorder %s30, 0
        %s459 = scalar_select %p458, %s30, 0
        %s460 = sadd.s32 %s459, %s457
        %s461 = smul.addr %s460, 8
        %s462 = scalar_lea.vmem %s0, %s461
        %p463 = scmp.lt.s32.totalorder %s29, 1
        %s464 = scalar_select %p463, %s29, 1
        %p465 = scmp.lt.s32.totalorder %s30, 0
        %s466 = scalar_select %p465, %s30, 0
        %s467 = sadd.s32 %s466, %s464
        %s468 = smul.addr %s467, 8
        %s469 = scalar_lea.vmem %s12, %s468
        %v470 = vld [vmem:[%s462] sm:$0xff]
        %v471 = vld [vmem:[#allocation3] sm:$0xff]
        %v472 = vld [vmem:[#allocation3 + $0x8] sm:$0xff]
        %v473 = vld [vmem:[#allocation3 + $0x10] sm:$0xff]
        %v474 = vld [vmem:[#allocation3 + $0x18] sm:$0xff]
        %v475 = vld [vmem:[#allocation3 + $0x20] sm:$0xff]
        %v476 = vld [vmem:[#allocation3 + $0x28] sm:$0xff]
        %v477 = vld [vmem:[#allocation3 + $0x30] sm:$0xff]
        %v478 = vld [vmem:[#allocation3 + $0x38] sm:$0xff]
        %v479 = vld [vmem:[%s2] sm:$0x1]
        %v481 = vlaneseq
        %v482 = vshrl.u32 %v481, 7
        %v483 = vsub.s32 0, %v482
        %v484 = vrot.slane %v479, %v483
        %vm486 = vcmask 523264
        %v488 = vsel %vm486, %v470, 0
        %490 = vmatprep.subr.mxu0 0.0
        %491 = vmatpush1.msra.mxu0 %v471
        %492 = vmatprep.subr.mxu0 0.0
        %493 = vmatpush1.msra.mxu0 %v472
        %494 = vmatprep.subr.mxu0 0.0
        %495 = vmatpush1.msra.mxu0 %v473
        %496 = vmatprep.subr.mxu0 0.0
        %497 = vmatpush1.msra.mxu0 %v474
        %498 = vmatprep.subr.mxu0 0.0
        %499 = vmatpush1.msra.mxu0 %v475
        %500 = vmatprep.subr.mxu0 0.0
        %501 = vmatpush1.msra.mxu0 %v476
        %502 = vmatprep.subr.mxu0 0.0
        %503 = vmatpush1.msra.mxu0 %v477
        %504 = vmatprep.subr.mxu0 0.0
        %505 = vmatpush1.msra.mxu0 %v478
        %506 = vmatprep.subr.mxu0 0.0
        %507 = vmatpush1.msra.mxu0 0.0
        %508 = vmatprep.subr.mxu0 0.0
        %509 = vmatpush1.msra.mxu0 0.0
        %510 = vmatprep.subr.mxu0 0.0
        %511 = vmatpush1.msra.mxu0 0.0
        %512 = vmatprep.subr.mxu0 0.0
        %513 = vmatpush1.msra.mxu0 0.0
        %514 = vmatprep.subr.mxu0 0.0
        %515 = vmatpush1.msra.mxu0 0.0
        %516 = vmatprep.subr.mxu0 0.0
        %517 = vmatpush1.msra.mxu0 0.0
        %518 = vmatprep.subr.mxu0 0.0
        %519 = vmatpush1.msra.mxu0 0.0
        %520 = vmatprep.subr.mxu0 0.0
        %521 = vmatpush1.msra.mxu0 0.0
        %522 = vmatprep.subr.mxu0 0.0
        %523 = vmatpush1.msra.mxu0 0.0
        %524 = vmatprep.subr.mxu0 0.0
        %525 = vmatpush1.msra.mxu0 0.0
        %526 = vmatprep.subr.mxu0 0.0
        %527 = vmatpush1.msra.mxu0 0.0
        %528 = vmatprep.subr.mxu0 0.0
        %529 = vmatpush1.msra.mxu0 0.0
        %530 = vmatprep.subr.mxu0 0.0
        %531 = vmatpush1.msra.mxu0 0.0
        %532 = vmatprep.subr.mxu0 0.0
        %533 = vmatpush1.msra.mxu0 0.0
        %534 = vmatprep.subr.mxu0 0.0
        %535 = vmatpush1.msra.mxu0 0.0
        %536 = vmatprep.subr.mxu0 0.0
        %537 = vmatpush1.msra.mxu0 0.0
        %538 = vmatprep.subr.mxu0 0.0
        %539 = vmatpush1.msra.mxu0 0.0
        %540 = vmatprep.subr.mxu0 0.0
        %541 = vmatpush1.msra.mxu0 0.0
        %542 = vmatprep.subr.mxu0 0.0
        %543 = vmatpush1.msra.mxu0 0.0
        %544 = vmatprep.subr.mxu0 0.0
        %545 = vmatpush1.msra.mxu0 0.0
        %546 = vmatprep.subr.mxu0 0.0
        %547 = vmatpush1.msra.mxu0 0.0
        %548 = vmatprep.subr.mxu0 0.0
        %549 = vmatpush1.msra.mxu0 0.0
        %550 = vmatprep.subr.mxu0 0.0
        %551 = vmatpush1.msra.mxu0 0.0
        %552 = vmatprep.subr.mxu0 0.0
        %553 = vmatpush1.msra.mxu0 0.0
        %554 = vmatprep.mubr.f32.mxu0 0.0
        %555 = vmatmul.mubr.f32.gmra.mrb[0].mxu0 %v488
        %v556 = vpop.f32.mrb[0].mxu0
        %v557 = vadd.f32 %v484, %v556
        %v558 = vpop.f32.mrb[0].mxu0
        %559 = vdwg.mxu0
        %vm560 = vcmask 261120
        %561 = vst.msk [vmem:[#allocation2] sm:$0xff] %vm560, 0.0
        %562 = vst.msk [vmem:[#allocation2 + $0x8] sm:$0xff] %vm560, %v557
        %v563 = vld [vmem:[%s4] sm:$0x1]
        %v565 = vlaneseq
        %v566 = vshrl.u32 %v565, 7
        %v567 = vsub.s32 0, %v566
        %v568 = vrot.slane %v563, %v567
        %v570 = vld [vmem:[#allocation2 + $0x2] sm:$0xff]
        %v571 = vld [vmem:[%s3] sm:$0x1]
        %v572 = vlaneseq
        %v573 = vshrl.u32 %v572, 7
        %v574 = vsub.s32 0, %v573
        %v575 = vrot.slane %v571, %v574
        %v576 = vmul.f32 %v570, %v575
        %v577 = vadd.f32 %v568, %v576
        %v578 = vld [vmem:[#allocation2 + $0x3] sm:$0xff]
        %v579 = vld [vmem:[%s3 + $0x1] sm:$0x1]
        %v580 = vlaneseq
        %v581 = vshrl.u32 %v580, 7
        %v582 = vsub.s32 0, %v581
        %v583 = vrot.slane %v579, %v582
        %v584 = vmul.f32 %v578, %v583
        %v585 = vadd.f32 %v577, %v584
        %v586 = vld [vmem:[#allocation2 + $0x4] sm:$0xff]
        %v587 = vld [vmem:[%s3 + $0x2] sm:$0x1]
        %v588 = vlaneseq
        %v589 = vshrl.u32 %v588, 7
        %v590 = vsub.s32 0, %v589
        %v591 = vrot.slane %v587, %v590
        %v592 = vmul.f32 %v586, %v591
        %v593 = vadd.f32 %v585, %v592
        %v594 = vld [vmem:[#allocation2 + $0x5] sm:$0xff]
        %v595 = vld [vmem:[%s3 + $0x3] sm:$0x1]
        %v596 = vlaneseq
        %v597 = vshrl.u32 %v596, 7
        %v598 = vsub.s32 0, %v597
        %v599 = vrot.slane %v595, %v598
        %v600 = vmul.f32 %v594, %v599
        %v601 = vadd.f32 %v593, %v600
        %v602 = vld [vmem:[#allocation2 + $0x6] sm:$0xff]
        %v603 = vld [vmem:[%s3 + $0x4] sm:$0x1]
        %v604 = vlaneseq
        %v605 = vshrl.u32 %v604, 7
        %v606 = vsub.s32 0, %v605
        %v607 = vrot.slane %v603, %v606
        %v608 = vmul.f32 %v602, %v607
        %v609 = vadd.f32 %v601, %v608
        %v610 = vld [vmem:[#allocation2 + $0x7] sm:$0xff]
        %v611 = vld [vmem:[%s3 + $0x5] sm:$0x1]
        %v612 = vlaneseq
        %v613 = vshrl.u32 %v612, 7
        %v614 = vsub.s32 0, %v613
        %v615 = vrot.slane %v611, %v614
        %v616 = vmul.f32 %v610, %v615
        %v617 = vadd.f32 %v609, %v616
        %v618 = vld [vmem:[#allocation2 + $0x8] sm:$0xff]
        %v619 = vld [vmem:[%s3 + $0x6] sm:$0x1]
        %v620 = vlaneseq
        %v621 = vshrl.u32 %v620, 7
        %v622 = vsub.s32 0, %v621
        %v623 = vrot.slane %v619, %v622
        %v624 = vmul.f32 %v618, %v623
        %v625 = vadd.f32 %v617, %v624
        %v626 = vsel %vm560, %v625, 0.0
        %627 = vadd.xlane.f32.xlu0 %v626
        %v628 = vpop.xlane.xlu0 %627
        %v629 = vrcp.pop 32.0
        %v630 = vmul.f32 %v628, %v629
        %v631 = vsub.f32 %v625, %v630
        %v632 = vmul.f32 %v631, %v631
        %v633 = vsel %vm560, %v632, 0.0
        %634 = vadd.xlane.f32.xlu0 %v633
        %v635 = vpop.xlane.xlu0 %634
        %v636 = vmul.f32 %v635, %v629
        %v637 = vadd.f32 %v636, 1e-06
        %v638 = vrsqrt.pop %v637
        %v639 = vmul.f32 %v631, %v638
        %v640 = vld [vmem:[%s5] sm:$0x1]
        %v642 = vlaneseq
        %v643 = vshrl.u32 %v642, 7
        %v644 = vsub.s32 0, %v643
        %v645 = vrot.slane %v640, %v644
        %v647 = vmul.f32 %v639, %v645
        %v648 = vld [vmem:[%s6] sm:$0x1]
        %v650 = vlaneseq
        %v651 = vshrl.u32 %v650, 7
        %v652 = vsub.s32 0, %v651
        %v653 = vrot.slane %v648, %v652
        %v655 = vadd.f32 %v647, %v653
        %v656 = vld [vmem:[#allocation5] sm:$0xff]
        %v657 = vld [vmem:[#allocation5 + $0x8] sm:$0xff]
        %v658 = vld [vmem:[#allocation5 + $0x10] sm:$0xff]
        %v659 = vld [vmem:[#allocation5 + $0x18] sm:$0xff]
        %v660 = vld [vmem:[%s8] sm:$0x1]
        %v662 = vlaneseq
        %v663 = vshrl.u32 %v662, 7
        %v664 = vsub.s32 0, %v663
        %v665 = vrot.slane %v660, %v664
        %v668 = vsel %vm560, %v655, 0
        %670 = vmatprep.subr.mxu0 0.0
        %671 = vmatpush1.msra.mxu0 %v656
        %672 = vmatprep.subr.mxu0 0.0
        %673 = vmatpush1.msra.mxu0 %v657
        %674 = vmatprep.subr.mxu0 0.0
        %675 = vmatpush1.msra.mxu0 %v658
        %676 = vmatprep.subr.mxu0 0.0
        %677 = vmatpush1.msra.mxu0 %v659
        %678 = vmatprep.subr.mxu0 0.0
        %679 = vmatpush1.msra.mxu0 0.0
        %680 = vmatprep.subr.mxu0 0.0
        %681 = vmatpush1.msra.mxu0 0.0
        %682 = vmatprep.subr.mxu0 0.0
        %683 = vmatpush1.msra.mxu0 0.0
        %684 = vmatprep.subr.mxu0 0.0
        %685 = vmatpush1.msra.mxu0 0.0
        %686 = vmatprep.subr.mxu0 0.0
        %687 = vmatpush1.msra.mxu0 0.0
        %688 = vmatprep.subr.mxu0 0.0
        %689 = vmatpush1.msra.mxu0 0.0
        %690 = vmatprep.subr.mxu0 0.0
        %691 = vmatpush1.msra.mxu0 0.0
        %692 = vmatprep.subr.mxu0 0.0
        %693 = vmatpush1.msra.mxu0 0.0
        %694 = vmatprep.subr.mxu0 0.0
        %695 = vmatpush1.msra.mxu0 0.0
        %696 = vmatprep.subr.mxu0 0.0
        %697 = vmatpush1.msra.mxu0 0.0
        %698 = vmatprep.subr.mxu0 0.0
        %699 = vmatpush1.msra.mxu0 0.0
        %700 = vmatprep.subr.mxu0 0.0
        %701 = vmatpush1.msra.mxu0 0.0
        %702 = vmatprep.subr.mxu0 0.0
        %703 = vmatpush1.msra.mxu0 0.0
        %704 = vmatprep.subr.mxu0 0.0
        %705 = vmatpush1.msra.mxu0 0.0
        %706 = vmatprep.subr.mxu0 0.0
        %707 = vmatpush1.msra.mxu0 0.0
        %708 = vmatprep.subr.mxu0 0.0
        %709 = vmatpush1.msra.mxu0 0.0
        %710 = vmatprep.subr.mxu0 0.0
        %711 = vmatpush1.msra.mxu0 0.0
        %712 = vmatprep.subr.mxu0 0.0
        %713 = vmatpush1.msra.mxu0 0.0
        %714 = vmatprep.subr.mxu0 0.0
        %715 = vmatpush1.msra.mxu0 0.0
        %716 = vmatprep.subr.mxu0 0.0
        %717 = vmatpush1.msra.mxu0 0.0
        %718 = vmatprep.subr.mxu0 0.0
        %719 = vmatpush1.msra.mxu0 0.0
        %720 = vmatprep.subr.mxu0 0.0
        %721 = vmatpush1.msra.mxu0 0.0
        %722 = vmatprep.subr.mxu0 0.0
        %723 = vmatpush1.msra.mxu0 0.0
        %724 = vmatprep.subr.mxu0 0.0
        %725 = vmatpush1.msra.mxu0 0.0
        %726 = vmatprep.subr.mxu0 0.0
        %727 = vmatpush1.msra.mxu0 0.0
        %728 = vmatprep.subr.mxu0 0.0
        %729 = vmatpush1.msra.mxu0 0.0
        %730 = vmatprep.subr.mxu0 0.0
        %731 = vmatpush1.msra.mxu0 0.0
        %732 = vmatprep.subr.mxu0 0.0
        %733 = vmatpush1.msra.mxu0 0.0
        %734 = vmatprep.mubr.f32.mxu0 0.0
        %735 = vmatmul.mubr.f32.gmra.mrb[0].mxu0 %v668
        %v736 = vpop.f32.mrb[0].mxu0
        %v737 = vadd.f32 %v665, %v736
        %v738 = vpop.f32.mrb[0].mxu0
        %739 = vdwg.mxu0
        %v740 = vmul.f32 %v737, %v737
        %v741 = vmul.f32 %v737, %v740
        %v742 = vmul.f32 %v741, 0.044715
        %v743 = vadd.f32 %v737, %v742
        %v744 = vmul.f32 %v743, 0.7978846
        %v745 = vtanh.pop %v744
        %v746 = vadd.f32 %v745, 1.0
        %v747 = vmul.f32 %v746, 0.5
        %v748 = vmul.f32 %v737, %v747
        %v749 = vld [vmem:[%s9] sm:$0xff]
        %v750 = vld [vmem:[%s9 + $0x8] sm:$0xff]
        %v751 = vld [vmem:[%s9 + $0x10] sm:$0xff]
        %v752 = vld [vmem:[%s9 + $0x18] sm:$0xff]
        %v753 = vld [vmem:[%s9 + $0x20] sm:$0xff]
        %v754 = vld [vmem:[%s9 + $0x28] sm:$0xff]
        %v755 = vld [vmem:[%s9 + $0x30] sm:$0xff]
        %v756 = vld [vmem:[%s9 + $0x38] sm:$0xff]
        %v757 = vld [vmem:[%s9 + $0x40] sm:$0xff]
        %v758 = vld [vmem:[%s9 + $0x48] sm:$0xff]
        %v759 = vld [vmem:[%s9 + $0x50] sm:$0xff]
        %v760 = vld [vmem:[%s9 + $0x58] sm:$0xff]
        %v761 = vld [vmem:[%s9 + $0x60] sm:$0xff]
        %v762 = vld [vmem:[%s9 + $0x68] sm:$0xff]
        %v763 = vld [vmem:[%s9 + $0x70] sm:$0xff]
        %v764 = vld [vmem:[%s9 + $0x78] sm:$0xff]
        %v765 = vld [vmem:[%s10] sm:$0x1]
        %v767 = vlaneseq
        %v768 = vshrl.u32 %v767, 7
        %v769 = vsub.s32 0, %v768
        %v770 = vrot.slane %v765, %v769
        %772 = vmatprep.subr.mxu0 0.0
        %773 = vmatpush1.msra.mxu0 %v749
        %774 = vmatprep.subr.mxu0 0.0
        %775 = vmatpush1.msra.mxu0 %v750
        %776 = vmatprep.subr.mxu0 0.0
        %777 = vmatpush1.msra.mxu0 %v751
        %778 = vmatprep.subr.mxu0 0.0
        %779 = vmatpush1.msra.mxu0 %v752
        %780 = vmatprep.subr.mxu0 0.0
        %781 = vmatpush1.msra.mxu0 %v753
        %782 = vmatprep.subr.mxu0 0.0
        %783 = vmatpush1.msra.mxu0 %v754
        %784 = vmatprep.subr.mxu0 0.0
        %785 = vmatpush1.msra.mxu0 %v755
        %786 = vmatprep.subr.mxu0 0.0
        %787 = vmatpush1.msra.mxu0 %v756
        %788 = vmatprep.subr.mxu0 0.0
        %789 = vmatpush1.msra.mxu0 %v757
        %790 = vmatprep.subr.mxu0 0.0
        %791 = vmatpush1.msra.mxu0 %v758
        %792 = vmatprep.subr.mxu0 0.0
        %793 = vmatpush1.msra.mxu0 %v759
        %794 = vmatprep.subr.mxu0 0.0
        %795 = vmatpush1.msra.mxu0 %v760
        %796 = vmatprep.subr.mxu0 0.0
        %797 = vmatpush1.msra.mxu0 %v761
        %798 = vmatprep.subr.mxu0 0.0
        %799 = vmatpush1.msra.mxu0 %v762
        %800 = vmatprep.subr.mxu0 0.0
        %801 = vmatpush1.msra.mxu0 %v763
        %802 = vmatprep.subr.mxu0 0.0
        %803 = vmatpush1.msra.mxu0 %v764
        %804 = vmatprep.subr.mxu0 0.0
        %805 = vmatpush1.msra.mxu0 0.0
        %806 = vmatprep.subr.mxu0 0.0
        %807 = vmatpush1.msra.mxu0 0.0
        %808 = vmatprep.subr.mxu0 0.0
        %809 = vmatpush1.msra.mxu0 0.0
        %810 = vmatprep.subr.mxu0 0.0
        %811 = vmatpush1.msra.mxu0 0.0
        %812 = vmatprep.subr.mxu0 0.0
        %813 = vmatpush1.msra.mxu0 0.0
        %814 = vmatprep.subr.mxu0 0.0
        %815 = vmatpush1.msra.mxu0 0.0
        %816 = vmatprep.subr.mxu0 0.0
        %817 = vmatpush1.msra.mxu0 0.0
        %818 = vmatprep.subr.mxu0 0.0
        %819 = vmatpush1.msra.mxu0 0.0
        %820 = vmatprep.subr.mxu0 0.0
        %821 = vmatpush1.msra.mxu0 0.0
        %822 = vmatprep.subr.mxu0 0.0
        %823 = vmatpush1.msra.mxu0 0.0
        %824 = vmatprep.subr.mxu0 0.0
        %825 = vmatpush1.msra.mxu0 0.0
        %826 = vmatprep.subr.mxu0 0.0
        %827 = vmatpush1.msra.mxu0 0.0
        %828 = vmatprep.subr.mxu0 0.0
        %829 = vmatpush1.msra.mxu0 0.0
        %830 = vmatprep.subr.mxu0 0.0
        %831 = vmatpush1.msra.mxu0 0.0
        %832 = vmatprep.subr.mxu0 0.0
        %833 = vmatpush1.msra.mxu0 0.0
        %834 = vmatprep.subr.mxu0 0.0
        %835 = vmatpush1.msra.mxu0 0.0
        %836 = vmatprep.mubr.f32.mxu0 0.0
        %837 = vmatmul.mubr.f32.gmra.mrb[0].mxu0 %v748
        %v838 = vpop.f32.mrb[0].mxu0
        %v839 = vadd.f32 %v770, %v838
        %v840 = vpop.f32.mrb[0].mxu0
        %841 = vdwg.mxu0
        %v842 = vld [vmem:[%s11] sm:$0x1]
        %v844 = vlaneseq
        %v845 = vshrl.u32 %v844, 7
        %v846 = vsub.s32 0, %v845
        %v847 = vrot.slane %v842, %v846
        %v849 = vmul.f32 %v847, %v839
        %v850 = vadd.f32 %v557, %v849
        %851 = vst.msk [vmem:[%s469] sm:$0xff] %vm560, %v850
        %p852 = scmp.lt.s32.totalorder %s29, 1
        %s853 = scalar_select %p852, %s29, 1
        %p854 = scmp.lt.s32.totalorder %s30, 0
        %s855 = scalar_select %p854, %s30, 0
        %s856 = sadd.s32 %s855, %s853
        %s857 = smul.addr %s856, 8
        %s858 = scalar_lea.vmem %s12, %s857
        // Predicated region
        $region77: #{downsample_rvq_forward.7} parent=67 // pred_check
          %p859 = pneg %p316
        $region78: #{downsample_rvq_forward.7} parent=67 // pred_check_branch
          %861 = sbr.rel (%p859) target = $region80
        $region79: #{downsample_rvq_forward.7} parent=67 // pred_region
          _
        $region80: #{downsample_rvq_forward.7} parent=67 // pred_fallthru
          _
      $region68: #{downsample_rvq_forward.7} parent=5 // pred_fallthru
        _
      %p862 = scmp.le.s32.totalorder 2, %s20
      // Predicated region
      $region81: #{downsample_rvq_forward.7} parent=5 // pred_check
        %p863 = pneg %p862
      $region82: #{downsample_rvq_forward.7} parent=5 // pred_check_branch
        %865 = sbr.rel (%p863) target = $region84
      $region83: #{downsample_rvq_forward.7} parent=5 // pred_region
        %s866 = ssub.s32 %s20, 2
        // Predicated region
        $region85: #{downsample_rvq_forward.7} parent=83 // pred_check
          %p867 = pneg %p322
        $region86: #{downsample_rvq_forward.7} parent=83 // pred_check_branch
          %869 = sbr.rel (%p867) target = $region88
        $region87: #{downsample_rvq_forward.7} parent=83 // pred_region
          %p870 = scmp.lt.s32.totalorder %s31, 1
          %s871 = scalar_select %p870, %s31, 1
          %p872 = scmp.lt.s32.totalorder %s32, 0
          %s873 = scalar_select %p872, %s32, 0
          %s874 = sadd.s32 %s873, %s871
          %s875 = smul.addr %s874, 8
          %s876 = scalar_lea.vmem %s12, %s875
        $region88: #{downsample_rvq_forward.7} parent=83 // pred_fallthru
          _
      $region84: #{downsample_rvq_forward.7} parent=5 // pred_fallthru
        _
    $region6: #{downsample_rvq_forward.7} parent=1 // loop_footer
      %s24 = sadd.s32 1, %s20
    $region7: #{downsample_rvq_forward.7} parent=1 // loop_footer_branch
      %19 = sbr.rel target = $region3
    $region8: #{downsample_rvq_forward.7} parent=1 // loop_exit
      _
    %877 = vsyncpa [#allocation4], 1
    %s878 = scalar_lea.sflag [#allocation4], 1
    %879 = vsyncpa %s878, 1
    %880 = vsyncpa [#allocation6], 1

// kernel: downsample_rvq_forward.8
$region0: #{downsample_rvq_forward.8}
  #allocation0 [shape = 'u32[]', space=smem, size = 0x4, offset = 0x4, fixed_abs, tag = 'smem constant byte address 0x4 - core index']
  #allocation1 [shape = 'u32[144,128]{1,0:T(1,128)}', space=vmem, size = 0x12000, scoped, tag = 'internal scratch']
  #allocation2 [shape = 'f32[16,32]{1,0:T(8,128)}', space=vmem, size = 0x2000, scoped, tag = 'scratch operand']
  %s0 = inlined_call_operand.vmem [shape: f32[2,8,64], index: 0, kind: input, shape index: {}]
  %s1 = inlined_call_operand.hbm [shape: f32[64,32], index: 1, kind: input, shape index: {}]
  %s2 = inlined_call_operand.vmem [shape: f32[1,32], index: 2, kind: input, shape index: {}, may-alias: {2,4,6,10}]
  %s3 = inlined_call_operand.hbm [shape: f32[7,32], index: 3, kind: input, shape index: {}]
  %s4 = inlined_call_operand.vmem [shape: f32[1,32], index: 4, kind: input, shape index: {}, may-alias: {2,4,6,10}]
  %s5 = inlined_call_operand.vmem [shape: f32[1,32], index: 5, kind: input, shape index: {}]
  %s6 = inlined_call_operand.vmem [shape: f32[1,32], index: 6, kind: input, shape index: {}, may-alias: {2,4,6,10}]
  %s7 = inlined_call_operand.hbm [shape: f32[32,128], index: 7, kind: input, shape index: {}]
  %s8 = inlined_call_operand.vmem [shape: f32[1,128], index: 8, kind: input, shape index: {}]
  %s9 = inlined_call_operand.vmem [shape: f32[128,32], index: 9, kind: input, shape index: {}]
  %s10 = inlined_call_operand.vmem [shape: f32[1,32], index: 10, kind: input, shape index: {}, may-alias: {2,4,6,10}]
  %s11 = inlined_call_operand.vmem [shape: f32[1,32], index: 11, kind: input, shape index: {}]
  %s12 = inlined_call_operand.vmem [shape: f32[2,8,32], index: 12, kind: output, shape index: {}]
  %s13 = sld [smem:[#allocation0]]
  $region93: #{downsample_rvq_forward.8} parent=0
    _
  %s15 = ssub.s32 1, %s13
  %s16 = scalar_select 0, %s15, %s13
  $region1: #{downsample_rvq_forward.8} parent=0
    #allocation3 [shape = 'u8[32768]{0}', space=vmem, size = 0x8000, scoped, tag = 'input window, operand 1, single buffered']
    #allocation4 [shape = 's32[2]{0}', space=sflag, size = 0x8, scoped, tag = 'scoped memory for downsample_rvq_forward.8']
    #allocation5 [shape = 'u8[4096]{0}', space=vmem, size = 0x1000, scoped, tag = 'input window, operand 3, single buffered']
    #allocation6 [shape = 's32[1]{0}', space=sflag, size = 0x4, scoped, tag = 'scoped memory for downsample_rvq_forward.8']
    #allocation7 [shape = 'u8[16384]{0}', space=vmem, size = 0x4000, scoped, tag = 'input window, operand 7, single buffered']
    %17 = vsyncpa [#allocation4], 0
    %18 = vsyncpa [#allocation6], 0
    loop: start=0, step=1, limit=4
    $region2: #{downsample_rvq_forward.8} parent=1 // loop_pre_header
      _
    $region3: #{downsample_rvq_forward.8} parent=1 // loop_header
      %s20 = sphi 0, %s24
      %p21 = scmp.ge.s32.totalorder %s20, 4
      %s27 = sphi 0, %s39
      %s28 = sphi 0, %s35
      %s29 = sphi 0, %s27
      %s30 = sphi 0, %s28
      %s31 = sphi 0, %s29
      %s32 = sphi 0, %s30
      %s44 = sphi 0, %s46
      %s47 = sphi 0, %s44
      %s48 = sphi 0, %s47
      %s64 = sphi 0, %s48
      %s68 = sphi 0, %s68
      %s70 = sphi 0, %s68
      %s71 = sphi 0, %s70
      %s85 = sphi 0, %s71
      %s89 = sphi 0, %s89
      %s91 = sphi 0, %s89
      %s92 = sphi 0, %s91
      %s106 = sphi 0, %s92
      %s110 = sphi 0, %s110
      %s112 = sphi 0, %s110
      %s113 = sphi 0, %s112
      %s127 = sphi 0, %s113
      %s131 = sphi 0, %s131
      %s133 = sphi 0, %s131
      %s134 = sphi 0, %s133
      %s148 = sphi 0, %s134
      %s152 = sphi 0, %s152
      %s154 = sphi 0, %s152
      %s155 = sphi 0, %s154
      %s169 = sphi 0, %s155
      %s173 = sphi 0, %s173
      %s175 = sphi 0, %s173
      %s176 = sphi 0, %s175
      %s190 = sphi 0, %s176
      %s194 = sphi 0, %s194
      %s196 = sphi 0, %s194
      %s197 = sphi 0, %s196
      %s211 = sphi 0, %s197
      %s215 = sphi 0, %s215
      %s217 = sphi 0, %s215
      %s218 = sphi 0, %s217
      %s232 = sphi 0, %s218
      %s236 = sphi 0, %s236
      %s238 = sphi 0, %s236
      %s239 = sphi 0, %s238
      %s253 = sphi 0, %s239
      %s257 = sphi 0, %s257
      %s259 = sphi 0, %s257
      %s260 = sphi 0, %s259
      %s274 = sphi 0, %s260
      %s278 = sphi 0, %s278
      %s280 = sphi 0, %s278
      %s281 = sphi 0, %s280
      %s295 = sphi 0, %s281
      %s303 = sphi 0, %s305
      %s306 = sphi 0, %s303
      %s307 = sphi 0, %s306
      %s323 = sphi 0, %s307
    $region4: #{downsample_rvq_forward.8} parent=1 // loop_header_branch
      %23 = sbr.rel (%p21) target = $region8
    $region5: #{downsample_rvq_forward.8} parent=1 // loop_body
      %s25 = ssub.s32 %s20, 1
      %s26 = ssub.s32 %s20, 2
      %s33 = sadd.s32 1, %s28
      %p34 = scmp.ge.s32.totalorder %s33, 1
      %s35 = scalar_select %p34, 0, %s33
      %s36 = sadd.s32 1, %s27
      %s37 = scalar_select %p34, %s36, %s27
      %p38 = scmp.ge.s32.totalorder %s37, 2
      %s39 = scalar_select %p38, 0, %s37
      %s40 = ssub.s32 %s27, %s39
      %s41 = ssub.s32 %s28, %s35
      %s42 = sor.u32 %s40, %s41
      %p43 = scmp.eq.s32.totalorder %s42, 0
      %s45 = sadd.s32 %s44, 1
      %s46 = scalar_select %p43, %s44, %s45
      %p49 = pneg %p43
      %p50 = scmp.eq.s32.totalorder %s20, 1
      %p51 = por %p49, %p50
      %p52 = scmp.ne.s32.totalorder %s44, %s47
      %p53 = scmp.eq.s32.totalorder %s20, 0
      %p54 = por %p52, %p53
      %p55 = scmp.ne.s32.totalorder %s44, %s47
      %p56 = scmp.eq.s32.totalorder %s25, 1
      %p57 = por %p55, %p56
      %p58 = scmp.ne.s32.totalorder %s47, %s48
      %p59 = scmp.eq.s32.totalorder %s25, 0
      %p60 = por %p58, %p59
      %p61 = scmp.ne.s32.totalorder %s47, %s48
      %p62 = scmp.eq.s32.totalorder %s26, 1
      %p63 = por %p61, %p62
      %p65 = scmp.ne.s32.totalorder %s48, %s64
      %p66 = scmp.eq.s32.totalorder %s26, 0
      %p67 = por %p65, %p66
      %s69 = sadd.s32 %s68, 1
      %p72 = scmp.eq.s32.totalorder %s20, 1
      %p73 = scmp.ne.s32.totalorder %s68, %s70
      %p74 = scmp.eq.s32.totalorder %s20, 0
      %p75 = por %p73, %p74
      %p76 = scmp.ne.s32.totalorder %s68, %s70
      %p77 = scmp.eq.s32.totalorder %s25, 1
      %p78 = por %p76, %p77
      %p79 = scmp.ne.s32.totalorder %s70, %s71
      %p80 = scmp.eq.s32.totalorder %s25, 0
      %p81 = por %p79, %p80
      %p82 = scmp.ne.s32.totalorder %s70, %s71
      %p83 = scmp.eq.s32.totalorder %s26, 1
      %p84 = por %p82, %p83
      %p86 = scmp.ne.s32.totalorder %s71, %s85
      %p87 = scmp.eq.s32.totalorder %s26, 0
      %p88 = por %p86, %p87
      %s90 = sadd.s32 %s89, 1
      %p93 = scmp.eq.s32.totalorder %s20, 1
      %p94 = scmp.ne.s32.totalorder %s89, %s91
      %p95 = scmp.eq.s32.totalorder %s20, 0
      %p96 = por %p94, %p95
      %p97 = scmp.ne.s32.totalorder %s89, %s91
      %p98 = scmp.eq.s32.totalorder %s25, 1
      %p99 = por %p97, %p98
      %p100 = scmp.ne.s32.totalorder %s91, %s92
      %p101 = scmp.eq.s32.totalorder %s25, 0
      %p102 = por %p100, %p101
      %p103 = scmp.ne.s32.totalorder %s91, %s92
      %p104 = scmp.eq.s32.totalorder %s26, 1
      %p105 = por %p103, %p104
      %p107 = scmp.ne.s32.totalorder %s92, %s106
      %p108 = scmp.eq.s32.totalorder %s26, 0
      %p109 = por %p107, %p108
      %s111 = sadd.s32 %s110, 1
      %p114 = scmp.eq.s32.totalorder %s20, 1
      %p115 = scmp.ne.s32.totalorder %s110, %s112
      %p116 = scmp.eq.s32.totalorder %s20, 0
      %p117 = por %p115, %p116
      %p118 = scmp.ne.s32.totalorder %s110, %s112
      %p119 = scmp.eq.s32.totalorder %s25, 1
      %p120 = por %p118, %p119
      %p121 = scmp.ne.s32.totalorder %s112, %s113
      %p122 = scmp.eq.s32.totalorder %s25, 0
      %p123 = por %p121, %p122
      %p124 = scmp.ne.s32.totalorder %s112, %s113
      %p125 = scmp.eq.s32.totalorder %s26, 1
      %p126 = por %p124, %p125
      %p128 = scmp.ne.s32.totalorder %s113, %s127
      %p129 = scmp.eq.s32.totalorder %s26, 0
      %p130 = por %p128, %p129
      %s132 = sadd.s32 %s131, 1
      %p135 = scmp.eq.s32.totalorder %s20, 1
      %p136 = scmp.ne.s32.totalorder %s131, %s133
      %p137 = scmp.eq.s32.totalorder %s20, 0
      %p138 = por %p136, %p137
      %p139 = scmp.ne.s32.totalorder %s131, %s133
      %p140 = scmp.eq.s32.totalorder %s25, 1
      %p141 = por %p139, %p140
      %p142 = scmp.ne.s32.totalorder %s133, %s134
      %p143 = scmp.eq.s32.totalorder %s25, 0
      %p144 = por %p142, %p143
      %p145 = scmp.ne.s32.totalorder %s133, %s134
      %p146 = scmp.eq.s32.totalorder %s26, 1
      %p147 = por %p145, %p146
      %p149 = scmp.ne.s32.totalorder %s134, %s148
      %p150 = scmp.eq.s32.totalorder %s26, 0
      %p151 = por %p149, %p150
      %s153 = sadd.s32 %s152, 1
      %p156 = scmp.eq.s32.totalorder %s20, 1
      %p157 = scmp.ne.s32.totalorder %s152, %s154
      %p158 = scmp.eq.s32.totalorder %s20, 0
      %p159 = por %p157, %p158
      %p160 = scmp.ne.s32.totalorder %s152, %s154
      %p161 = scmp.eq.s32.totalorder %s25, 1
      %p162 = por %p160, %p161
      %p163 = scmp.ne.s32.totalorder %s154, %s155
      %p164 = scmp.eq.s32.totalorder %s25, 0
      %p165 = por %p163, %p164
      %p166 = scmp.ne.s32.totalorder %s154, %s155
      %p167 = scmp.eq.s32.totalorder %s26, 1
      %p168 = por %p166, %p167
      %p170 = scmp.ne.s32.totalorder %s155, %s169
      %p171 = scmp.eq.s32.totalorder %s26, 0
      %p172 = por %p170, %p171
      %s174 = sadd.s32 %s173, 1
      %p177 = scmp.eq.s32.totalorder %s20, 1
      %p178 = scmp.ne.s32.totalorder %s173, %s175
      %p179 = scmp.eq.s32.totalorder %s20, 0
      %p180 = por %p178, %p179
      %p181 = scmp.ne.s32.totalorder %s173, %s175
      %p182 = scmp.eq.s32.totalorder %s25, 1
      %p183 = por %p181, %p182
      %p184 = scmp.ne.s32.totalorder %s175, %s176
      %p185 = scmp.eq.s32.totalorder %s25, 0
      %p186 = por %p184, %p185
      %p187 = scmp.ne.s32.totalorder %s175, %s176
      %p188 = scmp.eq.s32.totalorder %s26, 1
      %p189 = por %p187, %p188
      %p191 = scmp.ne.s32.totalorder %s176, %s190
      %p192 = scmp.eq.s32.totalorder %s26, 0
      %p193 = por %p191, %p192
      %s195 = sadd.s32 %s194, 1
      %p198 = scmp.eq.s32.totalorder %s20, 1
      %p199 = scmp.ne.s32.totalorder %s194, %s196
      %p200 = scmp.eq.s32.totalorder %s20, 0
      %p201 = por %p199, %p200
      %p202 = scmp.ne.s32.totalorder %s194, %s196
      %p203 = scmp.eq.s32.totalorder %s25, 1
      %p204 = por %p202, %p203
      %p205 = scmp.ne.s32.totalorder %s196, %s197
      %p206 = scmp.eq.s32.totalorder %s25, 0
      %p207 = por %p205, %p206
      %p208 = scmp.ne.s32.totalorder %s196, %s197
      %p209 = scmp.eq.s32.totalorder %s26, 1
      %p210 = por %p208, %p209
      %p212 = scmp.ne.s32.totalorder %s197, %s211
      %p213 = scmp.eq.s32.totalorder %s26, 0
      %p214 = por %p212, %p213
      %s216 = sadd.s32 %s215, 1
      %p219 = scmp.eq.s32.totalorder %s20, 1
      %p220 = scmp.ne.s32.totalorder %s215, %s217
      %p221 = scmp.eq.s32.totalorder %s20, 0
      %p222 = por %p220, %p221
      %p223 = scmp.ne.s32.totalorder %s215, %s217
      %p224 = scmp.eq.s32.totalorder %s25, 1
      %p225 = por %p223, %p224
      %p226 = scmp.ne.s32.totalorder %s217, %s218
      %p227 = scmp.eq.s32.totalorder %s25, 0
      %p228 = por %p226, %p227
      %p229 = scmp.ne.s32.totalorder %s217, %s218
      %p230 = scmp.eq.s32.totalorder %s26, 1
      %p231 = por %p229, %p230
      %p233 = scmp.ne.s32.totalorder %s218, %s232
      %p234 = scmp.eq.s32.totalorder %s26, 0
      %p235 = por %p233, %p234
      %s237 = sadd.s32 %s236, 1
      %p240 = scmp.eq.s32.totalorder %s20, 1
      %p241 = scmp.ne.s32.totalorder %s236, %s238
      %p242 = scmp.eq.s32.totalorder %s20, 0
      %p243 = por %p241, %p242
      %p244 = scmp.ne.s32.totalorder %s236, %s238
      %p245 = scmp.eq.s32.totalorder %s25, 1
      %p246 = por %p244, %p245
      %p247 = scmp.ne.s32.totalorder %s238, %s239
      %p248 = scmp.eq.s32.totalorder %s25, 0
      %p249 = por %p247, %p248
      %p250 = scmp.ne.s32.totalorder %s238, %s239
      %p251 = scmp.eq.s32.totalorder %s26, 1
      %p252 = por %p250, %p251
      %p254 = scmp.ne.s32.totalorder %s239, %s253
      %p255 = scmp.eq.s32.totalorder %s26, 0
      %p256 = por %p254, %p255
      %s258 = sadd.s32 %s257, 1
      %p261 = scmp.eq.s32.totalorder %s20, 1
      %p262 = scmp.ne.s32.totalorder %s257, %s259
      %p263 = scmp.eq.s32.totalorder %s20, 0
      %p264 = por %p262, %p263
      %p265 = scmp.ne.s32.totalorder %s257, %s259
      %p266 = scmp.eq.s32.totalorder %s25, 1
      %p267 = por %p265, %p266
      %p268 = scmp.ne.s32.totalorder %s259, %s260
      %p269 = scmp.eq.s32.totalorder %s25, 0
      %p270 = por %p268, %p269
      %p271 = scmp.ne.s32.totalorder %s259, %s260
      %p272 = scmp.eq.s32.totalorder %s26, 1
      %p273 = por %p271, %p272
      %p275 = scmp.ne.s32.totalorder %s260, %s274
      %p276 = scmp.eq.s32.totalorder %s26, 0
      %p277 = por %p275, %p276
      %s279 = sadd.s32 %s278, 1
      %p282 = scmp.eq.s32.totalorder %s20, 1
      %p283 = scmp.ne.s32.totalorder %s278, %s280
      %p284 = scmp.eq.s32.totalorder %s20, 0
      %p285 = por %p283, %p284
      %p286 = scmp.ne.s32.totalorder %s278, %s280
      %p287 = scmp.eq.s32.totalorder %s25, 1
      %p288 = por %p286, %p287
      %p289 = scmp.ne.s32.totalorder %s280, %s281
      %p290 = scmp.eq.s32.totalorder %s25, 0
      %p291 = por %p289, %p290
      %p292 = scmp.ne.s32.totalorder %s280, %s281
      %p293 = scmp.eq.s32.totalorder %s26, 1
      %p294 = por %p292, %p293
      %p296 = scmp.ne.s32.totalorder %s281, %s295
      %p297 = scmp.eq.s32.totalorder %s26, 0
      %p298 = por %p296, %p297
      %s299 = ssub.s32 %s27, %s39
      %s300 = ssub.s32 %s28, %s35
      %s301 = sor.u32 %s299, %s300
      %p302 = scmp.eq.s32.totalorder %s301, 0
      %s304 = sadd.s32 %s303, 1
      %s305 = scalar_select %p302, %s303, %s304
      %p308 = pneg %p302
      %p309 = scmp.eq.s32.totalorder %s20, 1
      %p310 = por %p308, %p309
      %p311 = scmp.ne.s32.totalorder %s303, %s306
      %p312 = scmp.eq.s32.totalorder %s20, 0
      %p313 = por %p311, %p312
      %p314 = scmp.ne.s32.totalorder %s303, %s306
      %p315 = scmp.eq.s32.totalorder %s25, 1
      %p316 = por %p314, %p315
      %p317 = scmp.ne.s32.totalorder %s306, %s307
      %p318 = scmp.eq.s32.totalorder %s25, 0
      %p319 = por %p317, %p318
      %p320 = scmp.ne.s32.totalorder %s306, %s307
      %p321 = scmp.eq.s32.totalorder %s26, 1
      %p322 = por %p320, %p321
      %p324 = scmp.ne.s32.totalorder %s307, %s323
      %p325 = scmp.eq.s32.totalorder %s26, 0
      %p326 = por %p324, %p325
      %p327 = scmp.le.s32.totalorder 1, %s20
      %p328 = scmp.lt.s32.totalorder %s20, 3
      %p329 = pnand %p327, %p328
      %p330 = pneg %p329
      // Predicated region
      $region9: #{downsample_rvq_forward.8} parent=5 // pred_check
        _
      $region10: #{downsample_rvq_forward.8} parent=5 // pred_check_branch
        %332 = sbr.rel (%p329) target = $region12
      $region11: #{downsample_rvq_forward.8} parent=5 // pred_region
        %s333 = ssub.s32 %s20, 1
        // Predicated region
        $region13: #{downsample_rvq_forward.8} parent=11 // pred_check
          %p334 = pneg %p81
        $region14: #{downsample_rvq_forward.8} parent=11 // pred_check_branch
          %336 = sbr.rel (%p334) target = $region16
        $region15: #{downsample_rvq_forward.8} parent=11 // pred_region
          %s338 = ssub.s32 1024, 1024
          %339 = vsyncadd [#allocation4], %s338
          %s340 = sshll.u32 [#allocation3], 4
          %s341 = int_to_ptr.vmem [resolvable:$true] %s340
          %346 = dma.hbm_to_vmem [thread:$0]  %s1, 1024, %s341, [#allocation4], 128, 128, 8
        $region16: #{downsample_rvq_forward.8} parent=11 // pred_fallthru
          _
        // Predicated region
        $region17: #{downsample_rvq_forward.8} parent=11 // pred_check
          %p347 = pneg %p102
        $region18: #{downsample_rvq_forward.8} parent=11 // pred_check_branch
          %349 = sbr.rel (%p347) target = $region20
        $region19: #{downsample_rvq_forward.8} parent=11 // pred_region
          _
        $region20: #{downsample_rvq_forward.8} parent=11 // pred_fallthru
          _
        // Predicated region
        $region21: #{downsample_rvq_forward.8} parent=11 // pred_check
          %p350 = pneg %p123
        $region22: #{downsample_rvq_forward.8} parent=11 // pred_check_branch
          %352 = sbr.rel (%p350) target = $region24
        $region23: #{downsample_rvq_forward.8} parent=11 // pred_region
          %s354 = ssub.s32 128, 128
          %355 = vsyncadd [#allocation6], %s354
          %s357 = sshll.u32 [#allocation5], 4
          %s358 = int_to_ptr.vmem [resolvable:$true] %s357
          %360 = dma.hbm_to_vmem [thread:$0]  %s3, 128, %s358, [#allocation6]
        $region24: #{downsample_rvq_forward.8} parent=11 // pred_fallthru
          _
        // Predicated region
        $region25: #{downsample_rvq_forward.8} parent=11 // pred_check
          %p361 = pneg %p144
        $region26: #{downsample_rvq_forward.8} parent=11 // pred_check_branch
          %363 = sbr.rel (%p361) target = $region28
        $region27: #{downsample_rvq_forward.8} parent=11 // pred_region
          _
        $region28: #{downsample_rvq_forward.8} parent=11 // pred_fallthru
          _
        // Predicated region
        $region29: #{downsample_rvq_forward.8} parent=11 // pred_check
          %p364 = pneg %p165
        $region30: #{downsample_rvq_forward.8} parent=11 // pred_check_branch
          %366 = sbr.rel (%p364) target = $region32
        $region31: #{downsample_rvq_forward.8} parent=11 // pred_region
          _
        $region32: #{downsample_rvq_forward.8} parent=11 // pred_fallthru
          _
        // Predicated region
        $region33: #{downsample_rvq_forward.8} parent=11 // pred_check
          %p367 = pneg %p186
        $region34: #{downsample_rvq_forward.8} parent=11 // pred_check_branch
          %369 = sbr.rel (%p367) target = $region36
        $region35: #{downsample_rvq_forward.8} parent=11 // pred_region
          _
        $region36: #{downsample_rvq_forward.8} parent=11 // pred_fallthru
          _
        // Predicated region
        $region37: #{downsample_rvq_forward.8} parent=11 // pred_check
          %p370 = pneg %p207
        $region38: #{downsample_rvq_forward.8} parent=11 // pred_check_branch
          %372 = sbr.rel (%p370) target = $region40
        $region39: #{downsample_rvq_forward.8} parent=11 // pred_region
          %s374 = ssub.s32 512, 512
          %375 = vsyncadd [#allocation6], %s374
          %s376 = sshll.u32 [#allocation7], 4
          %s377 = int_to_ptr.vmem [resolvable:$true] %s376
          %382 = dma.hbm_to_vmem [thread:$0]  %s7, 512, %s377, [#allocation6], 128, 128, 8
        $region40: #{downsample_rvq_forward.8} parent=11 // pred_fallthru
          _
        // Predicated region
        $region41: #{downsample_rvq_forward.8} parent=11 // pred_check
          %p383 = pneg %p228
        $region42: #{downsample_rvq_forward.8} parent=11 // pred_check_branch
          %385 = sbr.rel (%p383) target = $region44
        $region43: #{downsample_rvq_forward.8} parent=11 // pred_region
          _
        $region44: #{downsample_rvq_forward.8} parent=11 // pred_fallthru
          _
        // Predicated region
        $region45: #{downsample_rvq_forward.8} parent=11 // pred_check
          %p386 = pneg %p249
        $region46: #{downsample_rvq_forward.8} parent=11 // pred_check_branch
          %388 = sbr.rel (%p386) target = $region48
        $region47: #{downsample_rvq_forward.8} parent=11 // pred_region
          _
        $region48: #{downsample_rvq_forward.8} parent=11 // pred_fallthru
          _
        // Predicated region
        $region49: #{downsample_rvq_forward.8} parent=11 // pred_check
          %p389 = pneg %p270
        $region50: #{downsample_rvq_forward.8} parent=11 // pred_check_branch
          %391 = sbr.rel (%p389) target = $region52
        $region51: #{downsample_rvq_forward.8} parent=11 // pred_region
          _
        $region52: #{downsample_rvq_forward.8} parent=11 // pred_fallthru
          _
        // Predicated region
        $region53: #{downsample_rvq_forward.8} parent=11 // pred_check
          %p392 = pneg %p291
        $region54: #{downsample_rvq_forward.8} parent=11 // pred_check_branch
          %394 = sbr.rel (%p392) target = $region56
        $region55: #{downsample_rvq_forward.8} parent=11 // pred_region
          _
        $region56: #{downsample_rvq_forward.8} parent=11 // pred_fallthru
          _
      $region12: #{downsample_rvq_forward.8} parent=5 // pred_fallthru
        _
      %p395 = scmp.lt.s32.totalorder %s20, 2
      // Predicated region
      $region57: #{downsample_rvq_forward.8} parent=5 // pred_check
        %p396 = pneg %p395
      $region58: #{downsample_rvq_forward.8} parent=5 // pred_check_branch
        %398 = sbr.rel (%p396) target = $region60
      $region59: #{downsample_rvq_forward.8} parent=5 // pred_region
        // Predicated region
        $region61: #{downsample_rvq_forward.8} parent=59 // pred_check
          %p399 = pneg %p54
        $region62: #{downsample_rvq_forward.8} parent=59 // pred_check_branch
          %401 = sbr.rel (%p399) target = $region64
        $region63: #{downsample_rvq_forward.8} parent=59 // pred_region
          %p402 = scmp.lt.s32.totalorder %s27, 1
          %s403 = scalar_select %p402, %s27, 1
          %p404 = scmp.lt.s32.totalorder %s28, 0
          %s405 = scalar_select %p404, %s28, 0
          %s406 = sadd.s32 %s405, %s403
          %s407 = smul.addr %s406, 8
          %s408 = scalar_lea.vmem %s0, %s407
        $region64: #{downsample_rvq_forward.8} parent=59 // pred_fallthru
          _
      $region60: #{downsample_rvq_forward.8} parent=5 // pred_fallthru
        _
      %p409 = scmp.le.s32.totalorder 1, %s20
      %p410 = scmp.lt.s32.totalorder %s20, 3
      %p411 = pnand %p409, %p410
      %p412 = pneg %p411
      // Predicated region
      $region65: #{downsample_rvq_forward.8} parent=5 // pred_check
        _
      $region66: #{downsample_rvq_forward.8} parent=5 // pred_check_branch
        %414 = sbr.rel (%p411) target = $region68
      $region67: #{downsample_rvq_forward.8} parent=5 // pred_region
        %s415 = ssub.s32 %s20, 1
        // Predicated region
        $region69: #{downsample_rvq_forward.8} parent=67 // pred_check
          %p416 = pneg %p81
        $region70: #{downsample_rvq_forward.8} parent=67 // pred_check_branch
          %418 = sbr.rel (%p416) target = $region72
        $region71: #{downsample_rvq_forward.8} parent=67 // pred_region
          %419 = dma.done [#allocation4], 1024
        $region72: #{downsample_rvq_forward.8} parent=67 // pred_fallthru
          _
        // Predicated region
        $region73: #{downsample_rvq_forward.8} parent=67 // pred_check
          %p420 = pneg %p123
        $region74: #{downsample_rvq_forward.8} parent=67 // pred_check_branch
          %422 = sbr.rel (%p420) target = $region76
        $region75: #{downsample_rvq_forward.8} parent=67 // pred_region
          %423 = dma.done [#allocation6], 128
        $region76: #{downsample_rvq_forward.8} parent=67 // pred_fallthru
          _
        // Predicated region
        $region77: #{downsample_rvq_forward.8} parent=67 // pred_check
          %p424 = pneg %p207
        $region78: #{downsample_rvq_forward.8} parent=67 // pred_check_branch
          %426 = sbr.rel (%p424) target = $region80
        $region79: #{downsample_rvq_forward.8} parent=67 // pred_region
          %427 = dma.done [#allocation6], 512
        $region80: #{downsample_rvq_forward.8} parent=67 // pred_fallthru
          _
        %p428 = scmp.lt.s32.totalorder %s29, 1
        %s429 = scalar_select %p428, %s29, 1
        %p430 = scmp.lt.s32.totalorder %s30, 0
        %s431 = scalar_select %p430, %s30, 0
        %s432 = sadd.s32 %s431, %s429
        %s433 = smul.addr %s432, 8
        %s434 = scalar_lea.vmem %s0, %s433
        %p435 = pneg %p60
        %p436 = pneg %p57
        %p437 = pneg %p81
        %p438 = pneg %p78
        %p439 = pneg %p102
        %p440 = pneg %p99
        %p441 = pneg %p123
        %p442 = pneg %p120
        %p443 = pneg %p144
        %p444 = pneg %p141
        %p445 = pneg %p165
        %p446 = pneg %p162
        %p447 = pneg %p186
        %p448 = pneg %p183
        %p449 = pneg %p207
        %p450 = pneg %p204
        %p451 = pneg %p228
        %p452 = pneg %p225
        %p453 = pneg %p249
        %p454 = pneg %p246
        %p455 = pneg %p270
        %p456 = pneg %p267
        %p457 = pneg %p291
        %p458 = pneg %p288
        %p459 = pneg %p319
        %p460 = pneg %p316
        %p461 = scmp.lt.s32.totalorder %s29, 1
        %s462 = scalar_select %p461, %s29, 1
        %p463 = scmp.lt.s32.totalorder %s30, 0
        %s464 = scalar_select %p463, %s30, 0
        %s465 = sadd.s32 %s464, %s462
        %s466 = smul.addr %s465, 8
        %s467 = scalar_lea.vmem %s12, %s466
        %p468 = scmp.lt.s32.totalorder %s29, 1
        %s469 = scalar_select %p468, %s29, 1
        %p470 = scmp.lt.s32.totalorder %s30, 0
        %s471 = scalar_select %p470, %s30, 0
        %s472 = sadd.s32 %s471, %s469
        %s473 = smul.addr %s472, 8
        %s474 = scalar_lea.vmem %s0, %s473
        %p475 = scmp.lt.s32.totalorder %s29, 1
        %s476 = scalar_select %p475, %s29, 1
        %p477 = scmp.lt.s32.totalorder %s30, 0
        %s478 = scalar_select %p477, %s30, 0
        %s479 = sadd.s32 %s478, %s476
        %s480 = smul.addr %s479, 8
        %s481 = scalar_lea.vmem %s12, %s480
        %v482 = vld [vmem:[%s474] sm:$0xff]
        %v483 = vld [vmem:[#allocation3] sm:$0xff]
        %v484 = vld [vmem:[#allocation3 + $0x8] sm:$0xff]
        %v485 = vld [vmem:[#allocation3 + $0x10] sm:$0xff]
        %v486 = vld [vmem:[#allocation3 + $0x18] sm:$0xff]
        %v487 = vld [vmem:[#allocation3 + $0x20] sm:$0xff]
        %v488 = vld [vmem:[#allocation3 + $0x28] sm:$0xff]
        %v489 = vld [vmem:[#allocation3 + $0x30] sm:$0xff]
        %v490 = vld [vmem:[#allocation3 + $0x38] sm:$0xff]
        %v491 = vld [vmem:[%s2] sm:$0x1]
        %v493 = vlaneseq
        %v494 = vshrl.u32 %v493, 7
        %v495 = vsub.s32 0, %v494
        %v496 = vrot.slane %v491, %v495
        %vm498 = vcmask 523264
        %v500 = vsel %vm498, %v482, 0
        %502 = vmatprep.subr.mxu0 0.0
        %503 = vmatpush1.msra.mxu0 %v483
        %504 = vmatprep.subr.mxu0 0.0
        %505 = vmatpush1.msra.mxu0 %v484
        %506 = vmatprep.subr.mxu0 0.0
        %507 = vmatpush1.msra.mxu0 %v485
        %508 = vmatprep.subr.mxu0 0.0
        %509 = vmatpush1.msra.mxu0 %v486
        %510 = vmatprep.subr.mxu0 0.0
        %511 = vmatpush1.msra.mxu0 %v487
        %512 = vmatprep.subr.mxu0 0.0
        %513 = vmatpush1.msra.mxu0 %v488
        %514 = vmatprep.subr.mxu0 0.0
        %515 = vmatpush1.msra.mxu0 %v489
        %516 = vmatprep.subr.mxu0 0.0
        %517 = vmatpush1.msra.mxu0 %v490
        %518 = vmatprep.subr.mxu0 0.0
        %519 = vmatpush1.msra.mxu0 0.0
        %520 = vmatprep.subr.mxu0 0.0
        %521 = vmatpush1.msra.mxu0 0.0
        %522 = vmatprep.subr.mxu0 0.0
        %523 = vmatpush1.msra.mxu0 0.0
        %524 = vmatprep.subr.mxu0 0.0
        %525 = vmatpush1.msra.mxu0 0.0
        %526 = vmatprep.subr.mxu0 0.0
        %527 = vmatpush1.msra.mxu0 0.0
        %528 = vmatprep.subr.mxu0 0.0
        %529 = vmatpush1.msra.mxu0 0.0
        %530 = vmatprep.subr.mxu0 0.0
        %531 = vmatpush1.msra.mxu0 0.0
        %532 = vmatprep.subr.mxu0 0.0
        %533 = vmatpush1.msra.mxu0 0.0
        %534 = vmatprep.subr.mxu0 0.0
        %535 = vmatpush1.msra.mxu0 0.0
        %536 = vmatprep.subr.mxu0 0.0
        %537 = vmatpush1.msra.mxu0 0.0
        %538 = vmatprep.subr.mxu0 0.0
        %539 = vmatpush1.msra.mxu0 0.0
        %540 = vmatprep.subr.mxu0 0.0
        %541 = vmatpush1.msra.mxu0 0.0
        %542 = vmatprep.subr.mxu0 0.0
        %543 = vmatpush1.msra.mxu0 0.0
        %544 = vmatprep.subr.mxu0 0.0
        %545 = vmatpush1.msra.mxu0 0.0
        %546 = vmatprep.subr.mxu0 0.0
        %547 = vmatpush1.msra.mxu0 0.0
        %548 = vmatprep.subr.mxu0 0.0
        %549 = vmatpush1.msra.mxu0 0.0
        %550 = vmatprep.subr.mxu0 0.0
        %551 = vmatpush1.msra.mxu0 0.0
        %552 = vmatprep.subr.mxu0 0.0
        %553 = vmatpush1.msra.mxu0 0.0
        %554 = vmatprep.subr.mxu0 0.0
        %555 = vmatpush1.msra.mxu0 0.0
        %556 = vmatprep.subr.mxu0 0.0
        %557 = vmatpush1.msra.mxu0 0.0
        %558 = vmatprep.subr.mxu0 0.0
        %559 = vmatpush1.msra.mxu0 0.0
        %560 = vmatprep.subr.mxu0 0.0
        %561 = vmatpush1.msra.mxu0 0.0
        %562 = vmatprep.subr.mxu0 0.0
        %563 = vmatpush1.msra.mxu0 0.0
        %564 = vmatprep.subr.mxu0 0.0
        %565 = vmatpush1.msra.mxu0 0.0
        %566 = vmatprep.mubr.f32.mxu0 0.0
        %567 = vmatmul.mubr.f32.gmra.mrb[0].mxu0 %v500
        %v568 = vpop.f32.mrb[0].mxu0
        %v569 = vadd.f32 %v496, %v568
        %v570 = vpop.f32.mrb[0].mxu0
        %571 = vdwg.mxu0
        %vm572 = vcmask 261120
        %573 = vst.msk [vmem:[#allocation2] sm:$0xff] %vm572, 0.0
        %574 = vst.msk [vmem:[#allocation2 + $0x8] sm:$0xff] %vm572, %v569
        %v575 = vld [vmem:[%s4] sm:$0x1]
        %v577 = vlaneseq
        %v578 = vshrl.u32 %v577, 7
        %v579 = vsub.s32 0, %v578
        %v580 = vrot.slane %v575, %v579
        %v582 = vld [vmem:[#allocation2 + $0x2] sm:$0xff]
        %v583 = vld [vmem:[#allocation5] sm:$0x1]
        %v584 = vlaneseq
        %v585 = vshrl.u32 %v584, 7
        %v586 = vsub.s32 0, %v585
        %v587 = vrot.slane %v583, %v586
        %v588 = vmul.f32 %v582, %v587
        %v589 = vadd.f32 %v580, %v588
        %v590 = vld [vmem:[#allocation2 + $0x3] sm:$0xff]
        %v591 = vld [vmem:[#allocation5 + $0x1] sm:$0x1]
        %v592 = vlaneseq
        %v593 = vshrl.u32 %v592, 7
        %v594 = vsub.s32 0, %v593
        %v595 = vrot.slane %v591, %v594
        %v596 = vmul.f32 %v590, %v595
        %v597 = vadd.f32 %v589, %v596
        %v598 = vld [vmem:[#allocation2 + $0x4] sm:$0xff]
        %v599 = vld [vmem:[#allocation5 + $0x2] sm:$0x1]
        %v600 = vlaneseq
        %v601 = vshrl.u32 %v600, 7
        %v602 = vsub.s32 0, %v601
        %v603 = vrot.slane %v599, %v602
        %v604 = vmul.f32 %v598, %v603
        %v605 = vadd.f32 %v597, %v604
        %v606 = vld [vmem:[#allocation2 + $0x5] sm:$0xff]
        %v607 = vld [vmem:[#allocation5 + $0x3] sm:$0x1]
        %v608 = vlaneseq
        %v609 = vshrl.u32 %v608, 7
        %v610 = vsub.s32 0, %v609
        %v611 = vrot.slane %v607, %v610
        %v612 = vmul.f32 %v606, %v611
        %v613 = vadd.f32 %v605, %v612
        %v614 = vld [vmem:[#allocation2 + $0x6] sm:$0xff]
        %v615 = vld [vmem:[#allocation5 + $0x4] sm:$0x1]
        %v616 = vlaneseq
        %v617 = vshrl.u32 %v616, 7
        %v618 = vsub.s32 0, %v617
        %v619 = vrot.slane %v615, %v618
        %v620 = vmul.f32 %v614, %v619
        %v621 = vadd.f32 %v613, %v620
        %v622 = vld [vmem:[#allocation2 + $0x7] sm:$0xff]
        %v623 = vld [vmem:[#allocation5 + $0x5] sm:$0x1]
        %v624 = vlaneseq
        %v625 = vshrl.u32 %v624, 7
        %v626 = vsub.s32 0, %v625
        %v627 = vrot.slane %v623, %v626
        %v628 = vmul.f32 %v622, %v627
        %v629 = vadd.f32 %v621, %v628
        %v630 = vld [vmem:[#allocation2 + $0x8] sm:$0xff]
        %v631 = vld [vmem:[#allocation5 + $0x6] sm:$0x1]
        %v632 = vlaneseq
        %v633 = vshrl.u32 %v632, 7
        %v634 = vsub.s32 0, %v633
        %v635 = vrot.slane %v631, %v634
        %v636 = vmul.f32 %v630, %v635
        %v637 = vadd.f32 %v629, %v636
        %v638 = vsel %vm572, %v637, 0.0
        %639 = vadd.xlane.f32.xlu0 %v638
        %v640 = vpop.xlane.xlu0 %639
        %v641 = vrcp.pop 32.0
        %v642 = vmul.f32 %v640, %v641
        %v643 = vsub.f32 %v637, %v642
        %v644 = vmul.f32 %v643, %v643
        %v645 = vsel %vm572, %v644, 0.0
        %646 = vadd.xlane.f32.xlu0 %v645
        %v647 = vpop.xlane.xlu0 %646
        %v648 = vmul.f32 %v647, %v641
        %v649 = vadd.f32 %v648, 1e-06
        %v650 = vrsqrt.pop %v649
        %v651 = vmul.f32 %v643, %v650
        %v652 = vld [vmem:[%s5] sm:$0x1]
        %v654 = vlaneseq
        %v655 = vshrl.u32 %v654, 7
        %v656 = vsub.s32 0, %v655
        %v657 = vrot.slane %v652, %v656
        %v659 = vmul.f32 %v651, %v657
        %v660 = vld [vmem:[%s6] sm:$0x1]
        %v662 = vlaneseq
        %v663 = vshrl.u32 %v662, 7
        %v664 = vsub.s32 0, %v663
        %v665 = vrot.slane %v660, %v664
        %v667 = vadd.f32 %v659, %v665
        %v668 = vld [vmem:[#allocation7] sm:$0xff]
        %v669 = vld [vmem:[#allocation7 + $0x8] sm:$0xff]
        %v670 = vld [vmem:[#allocation7 + $0x10] sm:$0xff]
        %v671 = vld [vmem:[#allocation7 + $0x18] sm:$0xff]
        %v672 = vld [vmem:[%s8] sm:$0x1]
        %v674 = vlaneseq
        %v675 = vshrl.u32 %v674, 7
        %v676 = vsub.s32 0, %v675
        %v677 = vrot.slane %v672, %v676
        %v680 = vsel %vm572, %v667, 0
        %682 = vmatprep.subr.mxu0 0.0
        %683 = vmatpush1.msra.mxu0 %v668
        %684 = vmatprep.subr.mxu0 0.0
        %685 = vmatpush1.msra.mxu0 %v669
        %686 = vmatprep.subr.mxu0 0.0
        %687 = vmatpush1.msra.mxu0 %v670
        %688 = vmatprep.subr.mxu0 0.0
        %689 = vmatpush1.msra.mxu0 %v671
        %690 = vmatprep.subr.mxu0 0.0
        %691 = vmatpush1.msra.mxu0 0.0
        %692 = vmatprep.subr.mxu0 0.0
        %693 = vmatpush1.msra.mxu0 0.0
        %694 = vmatprep.subr.mxu0 0.0
        %695 = vmatpush1.msra.mxu0 0.0
        %696 = vmatprep.subr.mxu0 0.0
        %697 = vmatpush1.msra.mxu0 0.0
        %698 = vmatprep.subr.mxu0 0.0
        %699 = vmatpush1.msra.mxu0 0.0
        %700 = vmatprep.subr.mxu0 0.0
        %701 = vmatpush1.msra.mxu0 0.0
        %702 = vmatprep.subr.mxu0 0.0
        %703 = vmatpush1.msra.mxu0 0.0
        %704 = vmatprep.subr.mxu0 0.0
        %705 = vmatpush1.msra.mxu0 0.0
        %706 = vmatprep.subr.mxu0 0.0
        %707 = vmatpush1.msra.mxu0 0.0
        %708 = vmatprep.subr.mxu0 0.0
        %709 = vmatpush1.msra.mxu0 0.0
        %710 = vmatprep.subr.mxu0 0.0
        %711 = vmatpush1.msra.mxu0 0.0
        %712 = vmatprep.subr.mxu0 0.0
        %713 = vmatpush1.msra.mxu0 0.0
        %714 = vmatprep.subr.mxu0 0.0
        %715 = vmatpush1.msra.mxu0 0.0
        %716 = vmatprep.subr.mxu0 0.0
        %717 = vmatpush1.msra.mxu0 0.0
        %718 = vmatprep.subr.mxu0 0.0
        %719 = vmatpush1.msra.mxu0 0.0
        %720 = vmatprep.subr.mxu0 0.0
        %721 = vmatpush1.msra.mxu0 0.0
        %722 = vmatprep.subr.mxu0 0.0
        %723 = vmatpush1.msra.mxu0 0.0
        %724 = vmatprep.subr.mxu0 0.0
        %725 = vmatpush1.msra.mxu0 0.0
        %726 = vmatprep.subr.mxu0 0.0
        %727 = vmatpush1.msra.mxu0 0.0
        %728 = vmatprep.subr.mxu0 0.0
        %729 = vmatpush1.msra.mxu0 0.0
        %730 = vmatprep.subr.mxu0 0.0
        %731 = vmatpush1.msra.mxu0 0.0
        %732 = vmatprep.subr.mxu0 0.0
        %733 = vmatpush1.msra.mxu0 0.0
        %734 = vmatprep.subr.mxu0 0.0
        %735 = vmatpush1.msra.mxu0 0.0
        %736 = vmatprep.subr.mxu0 0.0
        %737 = vmatpush1.msra.mxu0 0.0
        %738 = vmatprep.subr.mxu0 0.0
        %739 = vmatpush1.msra.mxu0 0.0
        %740 = vmatprep.subr.mxu0 0.0
        %741 = vmatpush1.msra.mxu0 0.0
        %742 = vmatprep.subr.mxu0 0.0
        %743 = vmatpush1.msra.mxu0 0.0
        %744 = vmatprep.subr.mxu0 0.0
        %745 = vmatpush1.msra.mxu0 0.0
        %746 = vmatprep.mubr.f32.mxu0 0.0
        %747 = vmatmul.mubr.f32.gmra.mrb[0].mxu0 %v680
        %v748 = vpop.f32.mrb[0].mxu0
        %v749 = vadd.f32 %v677, %v748
        %v750 = vpop.f32.mrb[0].mxu0
        %751 = vdwg.mxu0
        %v752 = vmul.f32 %v749, %v749
        %v753 = vmul.f32 %v749, %v752
        %v754 = vmul.f32 %v753, 0.044715
        %v755 = vadd.f32 %v749, %v754
        %v756 = vmul.f32 %v755, 0.7978846
        %v757 = vtanh.pop %v756
        %v758 = vadd.f32 %v757, 1.0
        %v759 = vmul.f32 %v758, 0.5
        %v760 = vmul.f32 %v749, %v759
        %v761 = vld [vmem:[%s9] sm:$0xff]
        %v762 = vld [vmem:[%s9 + $0x8] sm:$0xff]
        %v763 = vld [vmem:[%s9 + $0x10] sm:$0xff]
        %v764 = vld [vmem:[%s9 + $0x18] sm:$0xff]
        %v765 = vld [vmem:[%s9 + $0x20] sm:$0xff]
        %v766 = vld [vmem:[%s9 + $0x28] sm:$0xff]
        %v767 = vld [vmem:[%s9 + $0x30] sm:$0xff]
        %v768 = vld [vmem:[%s9 + $0x38] sm:$0xff]
        %v769 = vld [vmem:[%s9 + $0x40] sm:$0xff]
        %v770 = vld [vmem:[%s9 + $0x48] sm:$0xff]
        %v771 = vld [vmem:[%s9 + $0x50] sm:$0xff]
        %v772 = vld [vmem:[%s9 + $0x58] sm:$0xff]
        %v773 = vld [vmem:[%s9 + $0x60] sm:$0xff]
        %v774 = vld [vmem:[%s9 + $0x68] sm:$0xff]
        %v775 = vld [vmem:[%s9 + $0x70] sm:$0xff]
        %v776 = vld [vmem:[%s9 + $0x78] sm:$0xff]
        %v777 = vld [vmem:[%s10] sm:$0x1]
        %v779 = vlaneseq
        %v780 = vshrl.u32 %v779, 7
        %v781 = vsub.s32 0, %v780
        %v782 = vrot.slane %v777, %v781
        %784 = vmatprep.subr.mxu0 0.0
        %785 = vmatpush1.msra.mxu0 %v761
        %786 = vmatprep.subr.mxu0 0.0
        %787 = vmatpush1.msra.mxu0 %v762
        %788 = vmatprep.subr.mxu0 0.0
        %789 = vmatpush1.msra.mxu0 %v763
        %790 = vmatprep.subr.mxu0 0.0
        %791 = vmatpush1.msra.mxu0 %v764
        %792 = vmatprep.subr.mxu0 0.0
        %793 = vmatpush1.msra.mxu0 %v765
        %794 = vmatprep.subr.mxu0 0.0
        %795 = vmatpush1.msra.mxu0 %v766
        %796 = vmatprep.subr.mxu0 0.0
        %797 = vmatpush1.msra.mxu0 %v767
        %798 = vmatprep.subr.mxu0 0.0
        %799 = vmatpush1.msra.mxu0 %v768
        %800 = vmatprep.subr.mxu0 0.0
        %801 = vmatpush1.msra.mxu0 %v769
        %802 = vmatprep.subr.mxu0 0.0
        %803 = vmatpush1.msra.mxu0 %v770
        %804 = vmatprep.subr.mxu0 0.0
        %805 = vmatpush1.msra.mxu0 %v771
        %806 = vmatprep.subr.mxu0 0.0
        %807 = vmatpush1.msra.mxu0 %v772
        %808 = vmatprep.subr.mxu0 0.0
        %809 = vmatpush1.msra.mxu0 %v773
        %810 = vmatprep.subr.mxu0 0.0
        %811 = vmatpush1.msra.mxu0 %v774
        %812 = vmatprep.subr.mxu0 0.0
        %813 = vmatpush1.msra.mxu0 %v775
        %814 = vmatprep.subr.mxu0 0.0
        %815 = vmatpush1.msra.mxu0 %v776
        %816 = vmatprep.subr.mxu0 0.0
        %817 = vmatpush1.msra.mxu0 0.0
        %818 = vmatprep.subr.mxu0 0.0
        %819 = vmatpush1.msra.mxu0 0.0
        %820 = vmatprep.subr.mxu0 0.0
        %821 = vmatpush1.msra.mxu0 0.0
        %822 = vmatprep.subr.mxu0 0.0
        %823 = vmatpush1.msra.mxu0 0.0
        %824 = vmatprep.subr.mxu0 0.0
        %825 = vmatpush1.msra.mxu0 0.0
        %826 = vmatprep.subr.mxu0 0.0
        %827 = vmatpush1.msra.mxu0 0.0
        %828 = vmatprep.subr.mxu0 0.0
        %829 = vmatpush1.msra.mxu0 0.0
        %830 = vmatprep.subr.mxu0 0.0
        %831 = vmatpush1.msra.mxu0 0.0
        %832 = vmatprep.subr.mxu0 0.0
        %833 = vmatpush1.msra.mxu0 0.0
        %834 = vmatprep.subr.mxu0 0.0
        %835 = vmatpush1.msra.mxu0 0.0
        %836 = vmatprep.subr.mxu0 0.0
        %837 = vmatpush1.msra.mxu0 0.0
        %838 = vmatprep.subr.mxu0 0.0
        %839 = vmatpush1.msra.mxu0 0.0
        %840 = vmatprep.subr.mxu0 0.0
        %841 = vmatpush1.msra.mxu0 0.0
        %842 = vmatprep.subr.mxu0 0.0
        %843 = vmatpush1.msra.mxu0 0.0
        %844 = vmatprep.subr.mxu0 0.0
        %845 = vmatpush1.msra.mxu0 0.0
        %846 = vmatprep.subr.mxu0 0.0
        %847 = vmatpush1.msra.mxu0 0.0
        %848 = vmatprep.mubr.f32.mxu0 0.0
        %849 = vmatmul.mubr.f32.gmra.mrb[0].mxu0 %v760
        %v850 = vpop.f32.mrb[0].mxu0
        %v851 = vadd.f32 %v782, %v850
        %v852 = vpop.f32.mrb[0].mxu0
        %853 = vdwg.mxu0
        %v854 = vld [vmem:[%s11] sm:$0x1]
        %v856 = vlaneseq
        %v857 = vshrl.u32 %v856, 7
        %v858 = vsub.s32 0, %v857
        %v859 = vrot.slane %v854, %v858
        %v861 = vmul.f32 %v859, %v851
        %v862 = vadd.f32 %v569, %v861
        %863 = vst.msk [vmem:[%s481] sm:$0xff] %vm572, %v862
        %p864 = scmp.lt.s32.totalorder %s29, 1
        %s865 = scalar_select %p864, %s29, 1
        %p866 = scmp.lt.s32.totalorder %s30, 0
        %s867 = scalar_select %p866, %s30, 0
        %s868 = sadd.s32 %s867, %s865
        %s869 = smul.addr %s868, 8
        %s870 = scalar_lea.vmem %s12, %s869
        // Predicated region
        $region81: #{downsample_rvq_forward.8} parent=67 // pred_check
          %p871 = pneg %p316
        $region82: #{downsample_rvq_forward.8} parent=67 // pred_check_branch
          %873 = sbr.rel (%p871) target = $region84
        $region83: #{downsample_rvq_forward.8} parent=67 // pred_region
          _
        $region84: #{downsample_rvq_forward.8} parent=67 // pred_fallthru
          _
      $region68: #{downsample_rvq_forward.8} parent=5 // pred_fallthru
        _
      %p874 = scmp.le.s32.totalorder 2, %s20
      // Predicated region
      $region85: #{downsample_rvq_forward.8} parent=5 // pred_check
        %p875 = pneg %p874
      $region86: #{downsample_rvq_forward.8} parent=5 // pred_check_branch
        %877 = sbr.rel (%p875) target = $region88
      $region87: #{downsample_rvq_forward.8} parent=5 // pred_region
        %s878 = ssub.s32 %s20, 2
        // Predicated region
        $region89: #{downsample_rvq_forward.8} parent=87 // pred_check
          %p879 = pneg %p322
        $region90: #{downsample_rvq_forward.8} parent=87 // pred_check_branch
          %881 = sbr.rel (%p879) target = $region92
        $region91: #{downsample_rvq_forward.8} parent=87 // pred_region
          %p882 = scmp.lt.s32.totalorder %s31, 1
          %s883 = scalar_select %p882, %s31, 1
          %p884 = scmp.lt.s32.totalorder %s32, 0
          %s885 = scalar_select %p884, %s32, 0
          %s886 = sadd.s32 %s885, %s883
          %s887 = smul.addr %s886, 8
          %s888 = scalar_lea.vmem %s12, %s887
        $region92: #{downsample_rvq_forward.8} parent=87 // pred_fallthru
          _
      $region88: #{downsample_rvq_forward.8} parent=5 // pred_fallthru
        _
    $region6: #{downsample_rvq_forward.8} parent=1 // loop_footer
      %s24 = sadd.s32 1, %s20
    $region7: #{downsample_rvq_forward.8} parent=1 // loop_footer_branch
      %19 = sbr.rel target = $region3
    $region8: #{downsample_rvq_forward.8} parent=1 // loop_exit
      _
    %889 = vsyncpa [#allocation4], 1
    %s890 = scalar_lea.sflag [#allocation4], 1
    %891 = vsyncpa %s890, 1
    %892 = vsyncpa [#allocation6], 1

// kernel: downsample_rvq_forward.9
$region0: #{downsample_rvq_forward.9}
  #allocation0 [shape = 'u32[]', space=smem, size = 0x4, offset = 0x4, fixed_abs, tag = 'smem constant byte address 0x4 - core index']
  #allocation1 [shape = 'u32[144,128]{1,0:T(1,128)}', space=vmem, size = 0x12000, scoped, tag = 'internal scratch']
  #allocation2 [shape = 's32[1]{0}', space=sflag, size = 0x4, scoped, tag = 'scoped memory for downsample_rvq_forward.9']
  #allocation3 [shape = 'u8[512]{0}', space=smem, size = 0x200, scoped, tag = 'prefetched SMEM operand 0']
  %s0 = inlined_call_operand.vmem [shape: s32[4], index: 0, kind: input, shape index: {}]
  %s1 = inlined_call_operand.vmem [shape: f32[8,32], index: 1, kind: input, shape index: {}]
  %s2 = inlined_call_operand.hbm [shape: f32[4,32,8], index: 2, kind: input, shape index: {}]
  %s3 = inlined_call_operand.vmem [shape: f32[4,1,8], index: 3, kind: input, shape index: {}]
  %s4 = inlined_call_operand.hbm [shape: f32[4,8,128], index: 4, kind: input, shape index: {}]
  %s5 = inlined_call_operand.vmem [shape: f32[4,128,8], index: 5, kind: input, shape index: {}]
  %s6 = inlined_call_operand.hbm [shape: f32[4,128,32], index: 6, kind: input, shape index: {}]
  %s7 = inlined_call_operand.vmem [shape: f32[4,1,32], index: 7, kind: input, shape index: {}]
  %s8 = inlined_call_operand.vmem [shape: f32[8,32], index: 8, kind: output, shape index: {0}]
  %s9 = inlined_call_operand.vmem [shape: s32[4,8,1], index: 9, kind: output, shape index: {1}]
  %s10 = inlined_call_operand.vmem [shape: f32[4,8,8], index: 10, kind: output, shape index: {2}]
  %s11 = inlined_call_operand.vmem [shape: f32[1,1,128], index: 11, kind: output, shape index: {3}]
  %12 = xla_tuple %s8, %s9, %s10, %s11
  %s13 = sld [smem:[#allocation0]]
  $region101: #{downsample_rvq_forward.9} parent=0
    _
  %s15 = ssub.s32 1, %s13
  %s16 = scalar_select 0, %s15, %s13
  %s17 = sshll.u32 %s0, 4
  %s18 = int_to_ptr.vmem [resolvable:$true] %s17
  %20 = dma.vmem_to_smem %s18, 16, [#allocation3], [#allocation2]
  %21 = dma.done [#allocation2], 16
  %22 = sfence
  $region1: #{downsample_rvq_forward.9} parent=0
    #allocation4 [shape = 'u8[65536]{0}', space=vmem, size = 0x10000, scoped, tag = 'input window, operand 2, single buffered']
    #allocation5 [shape = 's32[2]{0}', space=sflag, size = 0x8, scoped, tag = 'scoped memory for downsample_rvq_forward.9']
    #allocation6 [shape = 'u8[16384]{0}', space=vmem, size = 0x4000, scoped, tag = 'input window, operand 4, single buffered']
    #allocation7 [shape = 's32[1]{0}', space=sflag, size = 0x4, scoped, tag = 'scoped memory for downsample_rvq_forward.9']
    #allocation8 [shape = 'u8[262144]{0}', space=vmem, size = 0x40000, scoped, tag = 'input window, operand 6, single buffered']
    %23 = vsyncpa [#allocation5], 0
    %24 = vsyncpa [#allocation7], 0
    loop: start=0, step=1, limit=6
    $region2: #{downsample_rvq_forward.9} parent=1 // loop_pre_header
      _
    $region3: #{downsample_rvq_forward.9} parent=1 // loop_header
      %s26 = sphi 0, %s30
      %p27 = scmp.ge.s32.totalorder %s26, 6
      %s33 = sphi 0, %s45
      %s34 = sphi 0, %s41
      %s35 = sphi 0, %s33
      %s36 = sphi 0, %s34
      %s37 = sphi 0, %s35
      %s38 = sphi 0, %s36
      %s48 = sphi 0, %s50
      %s51 = sphi 0, %s48
      %s52 = sphi 0, %s51
      %s68 = sphi 0, %s52
      %s72 = sphi 0, %s72
      %s74 = sphi 0, %s72
      %s75 = sphi 0, %s74
      %s89 = sphi 0, %s75
      %s93 = sphi 0, %s93
      %s95 = sphi 0, %s93
      %s96 = sphi 0, %s95
      %s110 = sphi 0, %s96
      %s114 = sphi 0, %s114
      %s116 = sphi 0, %s114
      %s117 = sphi 0, %s116
      %s131 = sphi 0, %s117
      %s135 = sphi 0, %s135
      %s137 = sphi 0, %s135
      %s138 = sphi 0, %s137
      %s152 = sphi 0, %s138
      %s156 = sphi 0, %s156
      %s158 = sphi 0, %s156
      %s159 = sphi 0, %s158
      %s173 = sphi 0, %s159
      %s177 = sphi 0, %s177
      %s179 = sphi 0, %s177
      %s180 = sphi 0, %s179
      %s194 = sphi 0, %s180
      %s200 = sphi 0, %s202
      %s203 = sphi 0, %s200
      %s204 = sphi 0, %s203
      %s220 = sphi 0, %s204
      %s228 = sphi 0, %s230
      %s231 = sphi 0, %s228
      %s232 = sphi 0, %s231
      %s248 = sphi 0, %s232
      %s256 = sphi 0, %s258
      %s259 = sphi 0, %s256
      %s260 = sphi 0, %s259
      %s276 = sphi 0, %s260
      %s282 = sphi 0, %s284
      %s285 = sphi 0, %s282
      %s286 = sphi 0, %s285
      %s302 = sphi 0, %s286
    $region4: #{downsample_rvq_forward.9} parent=1 // loop_header_branch
      %29 = sbr.rel (%p27) target = $region8
    $region5: #{downsample_rvq_forward.9} parent=1 // loop_body
      %s31 = ssub.s32 %s26, 1
      %s32 = ssub.s32 %s26, 2
      %s39 = sadd.s32 1, %s34
      %p40 = scmp.ge.s32.totalorder %s39, 4
      %s41 = scalar_select %p40, 0, %s39
      %s42 = sadd.s32 1, %s33
      %s43 = scalar_select %p40, %s42, %s33
      %p44 = scmp.ge.s32.totalorder %s43, 1
      %s45 = scalar_select %p44, 0, %s43
      %s46 = ssub.s32 %s33, %s45
      %p47 = scmp.eq.s32.totalorder %s46, 0
      %s49 = sadd.s32 %s48, 1
      %s50 = scalar_select %p47, %s48, %s49
      %p53 = pneg %p47
      %p54 = scmp.eq.s32.totalorder %s26, 3
      %p55 = por %p53, %p54
      %p56 = scmp.ne.s32.totalorder %s48, %s51
      %p57 = scmp.eq.s32.totalorder %s26, 0
      %p58 = por %p56, %p57
      %p59 = scmp.ne.s32.totalorder %s48, %s51
      %p60 = scmp.eq.s32.totalorder %s31, 3
      %p61 = por %p59, %p60
      %p62 = scmp.ne.s32.totalorder %s51, %s52
      %p63 = scmp.eq.s32.totalorder %s31, 0
      %p64 = por %p62, %p63
      %p65 = scmp.ne.s32.totalorder %s51, %s52
      %p66 = scmp.eq.s32.totalorder %s32, 3
      %p67 = por %p65, %p66
      %p69 = scmp.ne.s32.totalorder %s52, %s68
      %p70 = scmp.eq.s32.totalorder %s32, 0
      %p71 = por %p69, %p70
      %s73 = sadd.s32 %s72, 1
      %p76 = scmp.eq.s32.totalorder %s26, 3
      %p77 = scmp.ne.s32.totalorder %s72, %s74
      %p78 = scmp.eq.s32.totalorder %s26, 0
      %p79 = por %p77, %p78
      %p80 = scmp.ne.s32.totalorder %s72, %s74
      %p81 = scmp.eq.s32.totalorder %s31, 3
      %p82 = por %p80, %p81
      %p83 = scmp.ne.s32.totalorder %s74, %s75
      %p84 = scmp.eq.s32.totalorder %s31, 0
      %p85 = por %p83, %p84
      %p86 = scmp.ne.s32.totalorder %s74, %s75
      %p87 = scmp.eq.s32.totalorder %s32, 3
      %p88 = por %p86, %p87
      %p90 = scmp.ne.s32.totalorder %s75, %s89
      %p91 = scmp.eq.s32.totalorder %s32, 0
      %p92 = por %p90, %p91
      %s94 = sadd.s32 %s93, 1
      %p97 = scmp.eq.s32.totalorder %s26, 3
      %p98 = scmp.ne.s32.totalorder %s93, %s95
      %p99 = scmp.eq.s32.totalorder %s26, 0
      %p100 = por %p98, %p99
      %p101 = scmp.ne.s32.totalorder %s93, %s95
      %p102 = scmp.eq.s32.totalorder %s31, 3
      %p103 = por %p101, %p102
      %p104 = scmp.ne.s32.totalorder %s95, %s96
      %p105 = scmp.eq.s32.totalorder %s31, 0
      %p106 = por %p104, %p105
      %p107 = scmp.ne.s32.totalorder %s95, %s96
      %p108 = scmp.eq.s32.totalorder %s32, 3
      %p109 = por %p107, %p108
      %p111 = scmp.ne.s32.totalorder %s96, %s110
      %p112 = scmp.eq.s32.totalorder %s32, 0
      %p113 = por %p111, %p112
      %s115 = sadd.s32 %s114, 1
      %p118 = scmp.eq.s32.totalorder %s26, 3
      %p119 = scmp.ne.s32.totalorder %s114, %s116
      %p120 = scmp.eq.s32.totalorder %s26, 0
      %p121 = por %p119, %p120
      %p122 = scmp.ne.s32.totalorder %s114, %s116
      %p123 = scmp.eq.s32.totalorder %s31, 3
      %p124 = por %p122, %p123
      %p125 = scmp.ne.s32.totalorder %s116, %s117
      %p126 = scmp.eq.s32.totalorder %s31, 0
      %p127 = por %p125, %p126
      %p128 = scmp.ne.s32.totalorder %s116, %s117
      %p129 = scmp.eq.s32.totalorder %s32, 3
      %p130 = por %p128, %p129
      %p132 = scmp.ne.s32.totalorder %s117, %s131
      %p133 = scmp.eq.s32.totalorder %s32, 0
      %p134 = por %p132, %p133
      %s136 = sadd.s32 %s135, 1
      %p139 = scmp.eq.s32.totalorder %s26, 3
      %p140 = scmp.ne.s32.totalorder %s135, %s137
      %p141 = scmp.eq.s32.totalorder %s26, 0
      %p142 = por %p140, %p141
      %p143 = scmp.ne.s32.totalorder %s135, %s137
      %p144 = scmp.eq.s32.totalorder %s31, 3
      %p145 = por %p143, %p144
      %p146 = scmp.ne.s32.totalorder %s137, %s138
      %p147 = scmp.eq.s32.totalorder %s31, 0
      %p148 = por %p146, %p147
      %p149 = scmp.ne.s32.totalorder %s137, %s138
      %p150 = scmp.eq.s32.totalorder %s32, 3
      %p151 = por %p149, %p150
      %p153 = scmp.ne.s32.totalorder %s138, %s152
      %p154 = scmp.eq.s32.totalorder %s32, 0
      %p155 = por %p153, %p154
      %s157 = sadd.s32 %s156, 1
      %p160 = scmp.eq.s32.totalorder %s26, 3
      %p161 = scmp.ne.s32.totalorder %s156, %s158
      %p162 = scmp.eq.s32.totalorder %s26, 0
      %p163 = por %p161, %p162
      %p164 = scmp.ne.s32.totalorder %s156, %s158
      %p165 = scmp.eq.s32.totalorder %s31, 3
      %p166 = por %p164, %p165
      %p167 = scmp.ne.s32.totalorder %s158, %s159
      %p168 = scmp.eq.s32.totalorder %s31, 0
      %p169 = por %p167, %p168
      %p170 = scmp.ne.s32.totalorder %s158, %s159
      %p171 = scmp.eq.s32.totalorder %s32, 3
      %p172 = por %p170, %p171
      %p174 = scmp.ne.s32.totalorder %s159, %s173
      %p175 = scmp.eq.s32.totalorder %s32, 0
      %p176 = por %p174, %p175
      %s178 = sadd.s32 %s177, 1
      %p181 = scmp.eq.s32.totalorder %s26, 3
      %p182 = scmp.ne.s32.totalorder %s177, %s179
      %p183 = scmp.eq.s32.totalorder %s26, 0
      %p184 = por %p182, %p183
      %p185 = scmp.ne.s32.totalorder %s177, %s179
      %p186 = scmp.eq.s32.totalorder %s31, 3
      %p187 = por %p185, %p186
      %p188 = scmp.ne.s32.totalorder %s179, %s180
      %p189 = scmp.eq.s32.totalorder %s31, 0
      %p190 = por %p188, %p189
      %p191 = scmp.ne.s32.totalorder %s179, %s180
      %p192 = scmp.eq.s32.totalorder %s32, 3
      %p193 = por %p191, %p192
      %p195 = scmp.ne.s32.totalorder %s180, %s194
      %p196 = scmp.eq.s32.totalorder %s32, 0
      %p197 = por %p195, %p196
      %s198 = ssub.s32 %s33, %s45
      %p199 = scmp.eq.s32.totalorder %s198, 0
      %s201 = sadd.s32 %s200, 1
      %s202 = scalar_select %p199, %s200, %s201
      %p205 = pneg %p199
      %p206 = scmp.eq.s32.totalorder %s26, 3
      %p207 = por %p205, %p206
      %p208 = scmp.ne.s32.totalorder %s200, %s203
      %p209 = scmp.eq.s32.totalorder %s26, 0
      %p210 = por %p208, %p209
      %p211 = scmp.ne.s32.totalorder %s200, %s203
      %p212 = scmp.eq.s32.totalorder %s31, 3
      %p213 = por %p211, %p212
      %p214 = scmp.ne.s32.totalorder %s203, %s204
      %p215 = scmp.eq.s32.totalorder %s31, 0
      %p216 = por %p214, %p215
      %p217 = scmp.ne.s32.totalorder %s203, %s204
      %p218 = scmp.eq.s32.totalorder %s32, 3
      %p219 = por %p217, %p218
      %p221 = scmp.ne.s32.totalorder %s204, %s220
      %p222 = scmp.eq.s32.totalorder %s32, 0
      %p223 = por %p221, %p222
      %s224 = ssub.s32 %s34, %s41
      %s225 = ssub.s32 %s33, %s45
      %s226 = sor.u32 %s224, %s225
      %p227 = scmp.eq.s32.totalorder %s226, 0
      %s229 = sadd.s32 %s228, 1
      %s230 = scalar_select %p227, %s228, %s229
      %p233 = pneg %p227
      %p234 = scmp.eq.s32.totalorder %s26, 3
      %p235 = por %p233, %p234
      %p236 = scmp.ne.s32.totalorder %s228, %s231
      %p237 = scmp.eq.s32.totalorder %s26, 0
      %p238 = por %p236, %p237
      %p239 = scmp.ne.s32.totalorder %s228, %s231
      %p240 = scmp.eq.s32.totalorder %s31, 3
      %p241 = por %p239, %p240
      %p242 = scmp.ne.s32.totalorder %s231, %s232
      %p243 = scmp.eq.s32.totalorder %s31, 0
      %p244 = por %p242, %p243
      %p245 = scmp.ne.s32.totalorder %s231, %s232
      %p246 = scmp.eq.s32.totalorder %s32, 3
      %p247 = por %p245, %p246
      %p249 = scmp.ne.s32.totalorder %s232, %s248
      %p250 = scmp.eq.s32.totalorder %s32, 0
      %p251 = por %p249, %p250
      %s252 = ssub.s32 %s34, %s41
      %s253 = ssub.s32 %s33, %s45
      %s254 = sor.u32 %s252, %s253
      %p255 = scmp.eq.s32.totalorder %s254, 0
      %s257 = sadd.s32 %s256, 1
      %s258 = scalar_select %p255, %s256, %s257
      %p261 = pneg %p255
      %p262 = scmp.eq.s32.totalorder %s26, 3
      %p263 = por %p261, %p262
      %p264 = scmp.ne.s32.totalorder %s256, %s259
      %p265 = scmp.eq.s32.totalorder %s26, 0
      %p266 = por %p264, %p265
      %p267 = scmp.ne.s32.totalorder %s256, %s259
      %p268 = scmp.eq.s32.totalorder %s31, 3
      %p269 = por %p267, %p268
      %p270 = scmp.ne.s32.totalorder %s259, %s260
      %p271 = scmp.eq.s32.totalorder %s31, 0
      %p272 = por %p270, %p271
      %p273 = scmp.ne.s32.totalorder %s259, %s260
      %p274 = scmp.eq.s32.totalorder %s32, 3
      %p275 = por %p273, %p274
      %p277 = scmp.ne.s32.totalorder %s260, %s276
      %p278 = scmp.eq.s32.totalorder %s32, 0
      %p279 = por %p277, %p278
      %s280 = ssub.s32 %s33, %s45
      %p281 = scmp.eq.s32.totalorder %s280, 0
      %s283 = sadd.s32 %s282, 1
      %s284 = scalar_select %p281, %s282, %s283
      %p287 = pneg %p281
      %p288 = scmp.eq.s32.totalorder %s26, 3
      %p289 = por %p287, %p288
      %p290 = scmp.ne.s32.totalorder %s282, %s285
      %p291 = scmp.eq.s32.totalorder %s26, 0
      %p292 = por %p290, %p291
      %p293 = scmp.ne.s32.totalorder %s282, %s285
      %p294 = scmp.eq.s32.totalorder %s31, 3
      %p295 = por %p293, %p294
      %p296 = scmp.ne.s32.totalorder %s285, %s286
      %p297 = scmp.eq.s32.totalorder %s31, 0
      %p298 = por %p296, %p297
      %p299 = scmp.ne.s32.totalorder %s285, %s286
      %p300 = scmp.eq.s32.totalorder %s32, 3
      %p301 = por %p299, %p300
      %p303 = scmp.ne.s32.totalorder %s286, %s302
      %p304 = scmp.eq.s32.totalorder %s32, 0
      %p305 = por %p303, %p304
      %p306 = scmp.le.s32.totalorder 1, %s26
      %p307 = scmp.lt.s32.totalorder %s26, 5
      %p308 = pnand %p306, %p307
      %p309 = pneg %p308
      // Predicated region
      $region9: #{downsample_rvq_forward.9} parent=5 // pred_check
        _
      $region10: #{downsample_rvq_forward.9} parent=5 // pred_check_branch
        %311 = sbr.rel (%p308) target = $region12
      $region11: #{downsample_rvq_forward.9} parent=5 // pred_region
        %s312 = ssub.s32 %s26, 1
        // Predicated region
        $region13: #{downsample_rvq_forward.9} parent=11 // pred_check
          %p313 = pneg %p64
        $region14: #{downsample_rvq_forward.9} parent=11 // pred_check_branch
          %315 = sbr.rel (%p313) target = $region16
        $region15: #{downsample_rvq_forward.9} parent=11 // pred_region
          %p316 = scmp.lt.s32.totalorder %s35, 0
          %s317 = scalar_select %p316, %s35, 0
          %s318 = smul.addr %s317, 8
          %s319 = scalar_lea.vmem %s1, %s318
        $region16: #{downsample_rvq_forward.9} parent=11 // pred_fallthru
          _
        // Predicated region
        $region17: #{downsample_rvq_forward.9} parent=11 // pred_check
          %p320 = pneg %p85
        $region18: #{downsample_rvq_forward.9} parent=11 // pred_check_branch
          %322 = sbr.rel (%p320) target = $region20
        $region19: #{downsample_rvq_forward.9} parent=11 // pred_region
          %s324 = ssub.s32 2048, 2048
          %325 = vsyncadd [#allocation5], %s324
          %s326 = sshll.u32 [#allocation4], 4
          %s327 = int_to_ptr.vmem [resolvable:$true] %s326
          %332 = dma.hbm_to_vmem [thread:$0]  %s2, 2048, %s327, [#allocation5], 128, 128, 8
        $region20: #{downsample_rvq_forward.9} parent=11 // pred_fallthru
          _
        // Predicated region
        $region21: #{downsample_rvq_forward.9} parent=11 // pred_check
          %p333 = pneg %p106
        $region22: #{downsample_rvq_forward.9} parent=11 // pred_check_branch
          %335 = sbr.rel (%p333) target = $region24
        $region23: #{downsample_rvq_forward.9} parent=11 // pred_region
          _
        $region24: #{downsample_rvq_forward.9} parent=11 // pred_fallthru
          _
        // Predicated region
        $region25: #{downsample_rvq_forward.9} parent=11 // pred_check
          %p336 = pneg %p127
        $region26: #{downsample_rvq_forward.9} parent=11 // pred_check_branch
          %338 = sbr.rel (%p336) target = $region28
        $region27: #{downsample_rvq_forward.9} parent=11 // pred_region
          %s340 = ssub.s32 512, 512
          %341 = vsyncadd [#allocation7], %s340
          %s342 = sshll.u32 [#allocation6], 4
          %s343 = int_to_ptr.vmem [resolvable:$true] %s342
          %348 = dma.hbm_to_vmem [thread:$0]  %s4, 512, %s343, [#allocation7], 128, 128, 8
        $region28: #{downsample_rvq_forward.9} parent=11 // pred_fallthru
          _
        // Predicated region
        $region29: #{downsample_rvq_forward.9} parent=11 // pred_check
          %p349 = pneg %p148
        $region30: #{downsample_rvq_forward.9} parent=11 // pred_check_branch
          %351 = sbr.rel (%p349) target = $region32
        $region31: #{downsample_rvq_forward.9} parent=11 // pred_region
          _
        $region32: #{downsample_rvq_forward.9} parent=11 // pred_fallthru
          _
        // Predicated region
        $region33: #{downsample_rvq_forward.9} parent=11 // pred_check
          %p352 = pneg %p169
        $region34: #{downsample_rvq_forward.9} parent=11 // pred_check_branch
          %354 = sbr.rel (%p352) target = $region36
        $region35: #{downsample_rvq_forward.9} parent=11 // pred_region
          %s356 = ssub.s32 8192, 8192
          %357 = vsyncadd [#allocation7], %s356
          %s358 = sshll.u32 [#allocation8], 4
          %s359 = int_to_ptr.vmem [resolvable:$true] %s358
          %364 = dma.hbm_to_vmem [thread:$0]  %s6, 8192, %s359, [#allocation7], 128, 128, 8
        $region36: #{downsample_rvq_forward.9} parent=11 // pred_fallthru
          _
        // Predicated region
        $region37: #{downsample_rvq_forward.9} parent=11 // pred_check
          %p365 = pneg %p190
        $region38: #{downsample_rvq_forward.9} parent=11 // pred_check_branch
          %367 = sbr.rel (%p365) target = $region40
        $region39: #{downsample_rvq_forward.9} parent=11 // pred_region
          _
        $region40: #{downsample_rvq_forward.9} parent=11 // pred_fallthru
          _
      $region12: #{downsample_rvq_forward.9} parent=5 // pred_fallthru
        _
      %p368 = scmp.lt.s32.totalorder %s26, 4
      // Predicated region
      $region41: #{downsample_rvq_forward.9} parent=5 // pred_check
        %p369 = pneg %p368
      $region42: #{downsample_rvq_forward.9} parent=5 // pred_check_branch
        %371 = sbr.rel (%p369) target = $region44
      $region43: #{downsample_rvq_forward.9} parent=5 // pred_region
        _
      $region44: #{downsample_rvq_forward.9} parent=5 // pred_fallthru
        _
      %p372 = scmp.le.s32.totalorder 1, %s26
      %p373 = scmp.lt.s32.totalorder %s26, 5
      %p374 = pnand %p372, %p373
      %p375 = pneg %p374
      // Predicated region
      $region45: #{downsample_rvq_forward.9} parent=5 // pred_check
        _
      $region46: #{downsample_rvq_forward.9} parent=5 // pred_check_branch
        %377 = sbr.rel (%p374) target = $region48
      $region47: #{downsample_rvq_forward.9} parent=5 // pred_region
        %s378 = ssub.s32 %s26, 1
        // Predicated region
        $region49: #{downsample_rvq_forward.9} parent=47 // pred_check
          %p379 = pneg %p85
        $region50: #{downsample_rvq_forward.9} parent=47 // pred_check_branch
          %381 = sbr.rel (%p379) target = $region52
        $region51: #{downsample_rvq_forward.9} parent=47 // pred_region
          %382 = dma.done [#allocation5], 2048
        $region52: #{downsample_rvq_forward.9} parent=47 // pred_fallthru
          _
        // Predicated region
        $region53: #{downsample_rvq_forward.9} parent=47 // pred_check
          %p383 = pneg %p127
        $region54: #{downsample_rvq_forward.9} parent=47 // pred_check_branch
          %385 = sbr.rel (%p383) target = $region56
        $region55: #{downsample_rvq_forward.9} parent=47 // pred_region
          %386 = dma.done [#allocation7], 512
        $region56: #{downsample_rvq_forward.9} parent=47 // pred_fallthru
          _
        // Predicated region
        $region57: #{downsample_rvq_forward.9} parent=47 // pred_check
          %p387 = pneg %p169
        $region58: #{downsample_rvq_forward.9} parent=47 // pred_check_branch
          %389 = sbr.rel (%p387) target = $region60
        $region59: #{downsample_rvq_forward.9} parent=47 // pred_region
          %390 = dma.done [#allocation7], 8192
        $region60: #{downsample_rvq_forward.9} parent=47 // pred_fallthru
          _
        %p391 = scmp.lt.s32.totalorder %s35, 0
        %s392 = scalar_select %p391, %s35, 0
        %s393 = smul.addr %s392, 8
        %s394 = scalar_lea.vmem %s1, %s393
        %p395 = pneg %p64
        %p396 = pneg %p61
        %p397 = pneg %p85
        %p398 = pneg %p82
        %p399 = pneg %p106
        %p400 = pneg %p103
        %p401 = pneg %p127
        %p402 = pneg %p124
        %p403 = pneg %p148
        %p404 = pneg %p145
        %p405 = pneg %p169
        %p406 = pneg %p166
        %p407 = pneg %p190
        %p408 = pneg %p187
        %p409 = pneg %p216
        %p410 = pneg %p213
        %p411 = scmp.lt.s32.totalorder %s35, 0
        %s412 = scalar_select %p411, %s35, 0
        %s413 = smul.addr %s412, 8
        %s414 = scalar_lea.vmem %s8, %s413
        %p415 = pneg %p244
        %p416 = pneg %p241
        %p417 = scmp.lt.s32.totalorder %s36, 3
        %s418 = scalar_select %p417, %s36, 3
        %p419 = scmp.lt.s32.totalorder %s35, 0
        %s420 = scalar_select %p419, %s35, 0
        %s421 = sadd.s32 %s420, %s418
        %s422 = smul.addr %s421, 8
        %s423 = scalar_lea.vmem %s9, %s422
        %p424 = pneg %p272
        %p425 = pneg %p269
        %p426 = scmp.lt.s32.totalorder %s36, 3
        %s427 = scalar_select %p426, %s36, 3
        %p428 = scmp.lt.s32.totalorder %s35, 0
        %s429 = scalar_select %p428, %s35, 0
        %s430 = sadd.s32 %s429, %s427
        %s431 = smul.addr %s430, 8
        %s432 = scalar_lea.vmem %s10, %s431
        %p433 = pneg %p298
        %p434 = pneg %p295
        %p435 = scmp.lt.s32.totalorder %s35, 0
        %s436 = scalar_select %p435, %s35, 0
        %s437 = scalar_lea.vmem %s11, %s436
        %p438 = scmp.lt.s32.totalorder %s35, 0
        %s439 = scalar_select %p438, %s35, 0
        %s440 = smul.addr %s439, 8
        %s441 = scalar_lea.vmem %s1, %s440
        %p442 = scmp.lt.s32.totalorder %s35, 0
        %s443 = scalar_select %p442, %s35, 0
        %s444 = smul.addr %s443, 8
        %s445 = scalar_lea.vmem %s8, %s444
        %p446 = scmp.lt.s32.totalorder %s36, 3
        %s447 = scalar_select %p446, %s36, 3
        %p448 = scmp.lt.s32.totalorder %s35, 0
        %s449 = scalar_select %p448, %s35, 0
        %s450 = sadd.s32 %s449, %s447
        %s451 = smul.addr %s450, 8
        %s452 = scalar_lea.vmem %s9, %s451
        %p453 = scmp.lt.s32.totalorder %s36, 3
        %s454 = scalar_select %p453, %s36, 3
        %p455 = scmp.lt.s32.totalorder %s35, 0
        %s456 = scalar_select %p455, %s35, 0
        %s457 = sadd.s32 %s456, %s454
        %s458 = smul.addr %s457, 8
        %s459 = scalar_lea.vmem %s10, %s458
        %p460 = scmp.lt.s32.totalorder %s35, 0
        %s461 = scalar_select %p460, %s35, 0
        %s462 = scalar_lea.vmem %s11, %s461
        %p463 = scmp.eq.s32.totalorder %s36, 0
        // Predicated region
        $region61: #{downsample_rvq_forward.9} parent=47 // pred_check
          %p464 = pneg %p463
        $region62: #{downsample_rvq_forward.9} parent=47 // pred_check_branch
          %466 = sbr.rel (%p464) target = $region64
        $region63: #{downsample_rvq_forward.9} parent=47 // pred_region
          %vm467 = vcmask 261120
          %468 = vst.msk [vmem:[%s445] sm:$0xff] %vm467, 0.0
          %469 = vst [vmem:[%s462] sm:$0x1] 0.0
        $region64: #{downsample_rvq_forward.9} parent=47 // pred_fallthru
          _
        %v470 = vld [vmem:[%s441] sm:$0xff]
        %v471 = vld [vmem:[%s445] sm:$0xff]
        %v472 = vsub.f32 %v470, %v471
        %s473 = smul.u32 %s36, 32
        %s474 = scalar_lea.vmem [#allocation4], %s473
        %v475 = vld [vmem:[%s474] sm:$0xff]
        %v476 = vld [vmem:[%s474 + $0x8] sm:$0xff]
        %v477 = vld [vmem:[%s474 + $0x10] sm:$0xff]
        %v478 = vld [vmem:[%s474 + $0x18] sm:$0xff]
        %s479 = scalar_lea.vmem %s3, %s36
        %v480 = vld [vmem:[%s479] sm:$0x1]
        %v482 = vlaneseq
        %v483 = vshrl.u32 %v482, 7
        %v484 = vsub.s32 0, %v483
        %v485 = vrot.slane %v480, %v484
        %vm487 = vcmask 261120
        %v489 = vsel %vm487, %v472, 0
        %491 = vmatprep.subr.mxu0 0.0
        %492 = vmatpush1.msra.mxu0 %v475
        %493 = vmatprep.subr.mxu0 0.0
        %494 = vmatpush1.msra.mxu0 %v476
        %495 = vmatprep.subr.mxu0 0.0
        %496 = vmatpush1.msra.mxu0 %v477
        %497 = vmatprep.subr.mxu0 0.0
        %498 = vmatpush1.msra.mxu0 %v478
        %499 = vmatprep.subr.mxu0 0.0
        %500 = vmatpush1.msra.mxu0 0.0
        %501 = vmatprep.subr.mxu0 0.0
        %502 = vmatpush1.msra.mxu0 0.0
        %503 = vmatprep.subr.mxu0 0.0
        %504 = vmatpush1.msra.mxu0 0.0
        %505 = vmatprep.subr.mxu0 0.0
        %506 = vmatpush1.msra.mxu0 0.0
        %507 = vmatprep.subr.mxu0 0.0
        %508 = vmatpush1.msra.mxu0 0.0
        %509 = vmatprep.subr.mxu0 0.0
        %510 = vmatpush1.msra.mxu0 0.0
        %511 = vmatprep.subr.mxu0 0.0
        %512 = vmatpush1.msra.mxu0 0.0
        %513 = vmatprep.subr.mxu0 0.0
        %514 = vmatpush1.msra.mxu0 0.0
        %515 = vmatprep.subr.mxu0 0.0
        %516 = vmatpush1.msra.mxu0 0.0
        %517 = vmatprep.subr.mxu0 0.0
        %518 = vmatpush1.msra.mxu0 0.0
        %519 = vmatprep.subr.mxu0 0.0
        %520 = vmatpush1.msra.mxu0 0.0
        %521 = vmatprep.subr.mxu0 0.0
        %522 = vmatpush1.msra.mxu0 0.0
        %523 = vmatprep.subr.mxu0 0.0
        %524 = vmatpush1.msra.mxu0 0.0
        %525 = vmatprep.subr.mxu0 0.0
        %526 = vmatpush1.msra.mxu0 0.0
        %527 = vmatprep.subr.mxu0 0.0
        %528 = vmatpush1.msra.mxu0 0.0
        %529 = vmatprep.subr.mxu0 0.0
        %530 = vmatpush1.msra.mxu0 0.0
        %531 = vmatprep.subr.mxu0 0.0
        %532 = vmatpush1.msra.mxu0 0.0
        %533 = vmatprep.subr.mxu0 0.0
        %534 = vmatpush1.msra.mxu0 0.0
        %535 = vmatprep.subr.mxu0 0.0
        %536 = vmatpush1.msra.mxu0 0.0
        %537 = vmatprep.subr.mxu0 0.0
        %538 = vmatpush1.msra.mxu0 0.0
        %539 = vmatprep.subr.mxu0 0.0
        %540 = vmatpush1.msra.mxu0 0.0
        %541 = vmatprep.subr.mxu0 0.0
        %542 = vmatpush1.msra.mxu0 0.0
        %543 = vmatprep.subr.mxu0 0.0
        %544 = vmatpush1.msra.mxu0 0.0
        %545 = vmatprep.subr.mxu0 0.0
        %546 = vmatpush1.msra.mxu0 0.0
        %547 = vmatprep.subr.mxu0 0.0
        %548 = vmatpush1.msra.mxu0 0.0
        %549 = vmatprep.subr.mxu0 0.0
        %550 = vmatpush1.msra.mxu0 0.0
        %551 = vmatprep.subr.mxu0 0.0
        %552 = vmatpush1.msra.mxu0 0.0
        %553 = vmatprep.subr.mxu0 0.0
        %554 = vmatpush1.msra.mxu0 0.0
        %555 = vmatprep.mubr.f32.mxu0 0.0
        %556 = vmatmul.mubr.f32.gmra.mrb[0].mxu0 %v489
        %v557 = vpop.f32.mrb[0].mxu0
        %v558 = vadd.f32 %v485, %v557
        %v559 = vpop.f32.mrb[0].mxu0
        %560 = vdwg.mxu0
        %s561 = smul.u32 %s36, 8
        %s562 = scalar_lea.vmem [#allocation6], %s561
        %v563 = vld [vmem:[%s562] sm:$0xff]
        %vm564 = vcmask 64512
        %v566 = vsel %vm564, %v558, 0
        %568 = vmatprep.subr.mxu0 0.0
        %569 = vmatpush1.msra.mxu0 %v563
        %570 = vmatprep.subr.mxu0 0.0
        %571 = vmatpush1.msra.mxu0 0.0
        %572 = vmatprep.subr.mxu0 0.0
        %573 = vmatpush1.msra.mxu0 0.0
        %574 = vmatprep.subr.mxu0 0.0
        %575 = vmatpush1.msra.mxu0 0.0
        %576 = vmatprep.subr.mxu0 0.0
        %577 = vmatpush1.msra.mxu0 0.0
        %578 = vmatprep.subr.mxu0 0.0
        %579 = vmatpush1.msra.mxu0 0.0
        %580 = vmatprep.subr.mxu0 0.0
        %581 = vmatpush1.msra.mxu0 0.0
        %582 = vmatprep.subr.mxu0 0.0
        %583 = vmatpush1.msra.mxu0 0.0
        %584 = vmatprep.subr.mxu0 0.0
        %585 = vmatpush1.msra.mxu0 0.0
        %586 = vmatprep.subr.mxu0 0.0
        %587 = vmatpush1.msra.mxu0 0.0
        %588 = vmatprep.subr.mxu0 0.0
        %589 = vmatpush1.msra.mxu0 0.0
        %590 = vmatprep.subr.mxu0 0.0
        %591 = vmatpush1.msra.mxu0 0.0
        %592 = vmatprep.subr.mxu0 0.0
        %593 = vmatpush1.msra.mxu0 0.0
        %594 = vmatprep.subr.mxu0 0.0
        %595 = vmatpush1.msra.mxu0 0.0
        %596 = vmatprep.subr.mxu0 0.0
        %597 = vmatpush1.msra.mxu0 0.0
        %598 = vmatprep.subr.mxu0 0.0
        %599 = vmatpush1.msra.mxu0 0.0
        %600 = vmatprep.subr.mxu0 0.0
        %601 = vmatpush1.msra.mxu0 0.0
        %602 = vmatprep.subr.mxu0 0.0
        %603 = vmatpush1.msra.mxu0 0.0
        %604 = vmatprep.subr.mxu0 0.0
        %605 = vmatpush1.msra.mxu0 0.0
        %606 = vmatprep.subr.mxu0 0.0
        %607 = vmatpush1.msra.mxu0 0.0
        %608 = vmatprep.subr.mxu0 0.0
        %609 = vmatpush1.msra.mxu0 0.0
        %610 = vmatprep.subr.mxu0 0.0
        %611 = vmatpush1.msra.mxu0 0.0
        %612 = vmatprep.subr.mxu0 0.0
        %613 = vmatpush1.msra.mxu0 0.0
        %614 = vmatprep.subr.mxu0 0.0
        %615 = vmatpush1.msra.mxu0 0.0
        %616 = vmatprep.subr.mxu0 0.0
        %617 = vmatpush1.msra.mxu0 0.0
        %618 = vmatprep.subr.mxu0 0.0
        %619 = vmatpush1.msra.mxu0 0.0
        %620 = vmatprep.subr.mxu0 0.0
        %621 = vmatpush1.msra.mxu0 0.0
        %622 = vmatprep.subr.mxu0 0.0
        %623 = vmatpush1.msra.mxu0 0.0
        %624 = vmatprep.subr.mxu0 0.0
        %625 = vmatpush1.msra.mxu0 0.0
        %626 = vmatprep.subr.mxu0 0.0
        %627 = vmatpush1.msra.mxu0 0.0
        %628 = vmatprep.subr.mxu0 0.0
        %629 = vmatpush1.msra.mxu0 0.0
        %630 = vmatprep.subr.mxu0 0.0
        %631 = vmatpush1.msra.mxu0 0.0
        %632 = vmatprep.mubr.f32.mxu0 0.0
        %633 = vmatmul.mubr.f32.gmra.mrb[0].mxu0 %v566
        %v634 = vpop.f32.mrb[0].mxu0
        %v635 = vadd.f32 0.0, %v634
        %v636 = vpop.f32.mrb[0].mxu0
        %637 = vdwg.mxu0
        %s638 = sld [smem:[#allocation3 + %s36]]
        %v639 = vlaneseq
        %v640 = vand.u32 %v639, 127
        %v641 = vstv %s638
        %vm642 = vcmp.lt.s32.totalorder %v640, %v641
        %v643 = vsel %vm642, %v635, -1e+30
        %644 = vmax.xlane.f32.xlu0 %v643
        %v645 = vpop.xlane.xlu0 %644
        %vm646 = vcmp.ge.f32.partialorder %v643, %v645
        %v647 = vsel %vm646, %v640, 128
        %v648 = vand.u32 %v647, 65535
        %v649 = vshra.s32 %v647, 16
        %v650 = vcvt.s32.f32 %v648
        %v651 = vcvt.s32.f32 %v649
        %652 = vmin.xlane.f32.xlu0 %v651
        %v653 = vpop.xlane.xlu0 %652
        %vm654 = vcmp.eq.f32.partialorder %v651, %v653
        %v655 = vsel %vm654, %v650, inf
        %656 = vmin.xlane.f32.xlu0 %v655
        %v657 = vpop.xlane.xlu0 %656
        %v658 = vcvt.f32.s32 %v657
        %v659 = vcvt.f32.s32 %v653
        %v660 = vshll.u32 %v659, 16
        %v661 = vadd.s32 %v660, %v658
        %vm662 = vcmp.eq.s32.totalorder %v640, %v661
        %v663 = vsel %vm662, 1, 0
        %v664 = vcvt.s32.f32 %v663
        %vm665 = vcmask 7168
        %666 = vst.msk [vmem:[%s452] sm:$0xff] %vm665, %v661
        %667 = vst.msk [vmem:[%s459] sm:$0xff] %vm564, %v558
        %s668 = smul.u32 %s36, 128
        %s669 = scalar_lea.vmem %s5, %s668
        %v670 = vld [vmem:[%s669] sm:$0xff]
        %v671 = vld [vmem:[%s669 + $0x8] sm:$0xff]
        %v672 = vld [vmem:[%s669 + $0x10] sm:$0xff]
        %v673 = vld [vmem:[%s669 + $0x18] sm:$0xff]
        %v674 = vld [vmem:[%s669 + $0x20] sm:$0xff]
        %v675 = vld [vmem:[%s669 + $0x28] sm:$0xff]
        %v676 = vld [vmem:[%s669 + $0x30] sm:$0xff]
        %v677 = vld [vmem:[%s669 + $0x38] sm:$0xff]
        %v678 = vld [vmem:[%s669 + $0x40] sm:$0xff]
        %v679 = vld [vmem:[%s669 + $0x48] sm:$0xff]
        %v680 = vld [vmem:[%s669 + $0x50] sm:$0xff]
        %v681 = vld [vmem:[%s669 + $0x58] sm:$0xff]
        %v682 = vld [vmem:[%s669 + $0x60] sm:$0xff]
        %v683 = vld [vmem:[%s669 + $0x68] sm:$0xff]
        %v684 = vld [vmem:[%s669 + $0x70] sm:$0xff]
        %v685 = vld [vmem:[%s669 + $0x78] sm:$0xff]
        %686 = vmatprep.subr.mxu0 0.0
        %687 = vmatpush1.msra.mxu0 %v670
        %688 = vmatprep.subr.mxu0 0.0
        %689 = vmatpush1.msra.mxu0 %v671
        %690 = vmatprep.subr.mxu0 0.0
        %691 = vmatpush1.msra.mxu0 %v672
        %692 = vmatprep.subr.mxu0 0.0
        %693 = vmatpush1.msra.mxu0 %v673
        %694 = vmatprep.subr.mxu0 0.0
        %695 = vmatpush1.msra.mxu0 %v674
        %696 = vmatprep.subr.mxu0 0.0
        %697 = vmatpush1.msra.mxu0 %v675
        %698 = vmatprep.subr.mxu0 0.0
        %699 = vmatpush1.msra.mxu0 %v676
        %700 = vmatprep.subr.mxu0 0.0
        %701 = vmatpush1.msra.mxu0 %v677
        %702 = vmatprep.subr.mxu0 0.0
        %703 = vmatpush1.msra.mxu0 %v678
        %704 = vmatprep.subr.mxu0 0.0
        %705 = vmatpush1.msra.mxu0 %v679
        %706 = vmatprep.subr.mxu0 0.0
        %707 = vmatpush1.msra.mxu0 %v680
        %708 = vmatprep.subr.mxu0 0.0
        %709 = vmatpush1.msra.mxu0 %v681
        %710 = vmatprep.subr.mxu0 0.0
        %711 = vmatpush1.msra.mxu0 %v682
        %712 = vmatprep.subr.mxu0 0.0
        %713 = vmatpush1.msra.mxu0 %v683
        %714 = vmatprep.subr.mxu0 0.0
        %715 = vmatpush1.msra.mxu0 %v684
        %716 = vmatprep.subr.mxu0 0.0
        %717 = vmatpush1.msra.mxu0 %v685
        %718 = vmatprep.subr.mxu0 0.0
        %719 = vmatpush1.msra.mxu0 0.0
        %720 = vmatprep.subr.mxu0 0.0
        %721 = vmatpush1.msra.mxu0 0.0
        %722 = vmatprep.subr.mxu0 0.0
        %723 = vmatpush1.msra.mxu0 0.0
        %724 = vmatprep.subr.mxu0 0.0
        %725 = vmatpush1.msra.mxu0 0.0
        %726 = vmatprep.subr.mxu0 0.0
        %727 = vmatpush1.msra.mxu0 0.0
        %728 = vmatprep.subr.mxu0 0.0
        %729 = vmatpush1.msra.mxu0 0.0
        %730 = vmatprep.subr.mxu0 0.0
        %731 = vmatpush1.msra.mxu0 0.0
        %732 = vmatprep.subr.mxu0 0.0
        %733 = vmatpush1.msra.mxu0 0.0
        %734 = vmatprep.subr.mxu0 0.0
        %735 = vmatpush1.msra.mxu0 0.0
        %736 = vmatprep.subr.mxu0 0.0
        %737 = vmatpush1.msra.mxu0 0.0
        %738 = vmatprep.subr.mxu0 0.0
        %739 = vmatpush1.msra.mxu0 0.0
        %740 = vmatprep.subr.mxu0 0.0
        %741 = vmatpush1.msra.mxu0 0.0
        %742 = vmatprep.subr.mxu0 0.0
        %743 = vmatpush1.msra.mxu0 0.0
        %744 = vmatprep.subr.mxu0 0.0
        %745 = vmatpush1.msra.mxu0 0.0
        %746 = vmatprep.subr.mxu0 0.0
        %747 = vmatpush1.msra.mxu0 0.0
        %748 = vmatprep.subr.mxu0 0.0
        %749 = vmatpush1.msra.mxu0 0.0
        %750 = vmatprep.mubr.f32.mxu0 0.0
        %751 = vmatmul.mubr.f32.gmra.mrb[0].mxu0 %v664
        %v752 = vpop.f32.mrb[0].mxu0
        %v753 = vadd.f32 0.0, %v752
        %v754 = vpop.f32.mrb[0].mxu0
        %755 = vdwg.mxu0
        %v756 = vsub.f32 %v558, %v753
        %v757 = vmul.f32 %v756, %v756
        %v758 = vld [vmem:[%s462] sm:$0x1]
        %v759 = vsel %vm564, %v757, 0.0
        %760 = vadd.xlane.f32.xlu0 %v759
        %v761 = vpop.xlane.xlu0 %760
        %v762 = vrot.slane %v761, 4
        %v763 = vadd.f32 %v761, %v762
        %v764 = vrot.slane %v763, 2
        %v765 = vadd.f32 %v763, %v764
        %v766 = vrot.slane %v765, 1
        %v767 = vadd.f32 %v765, %v766
        %s768 = vtos %v767
        %s769 = smul.f32 %s768, 0.015625
        %v770 = vstv %s769
        %v771 = vadd.f32 %v758, %v770
        %772 = vst [vmem:[%s462] sm:$0x1] %v771
        %v773 = vld [vmem:[%s445] sm:$0xff]
        %s774 = scalar_lea.vmem [#allocation8], %s668
        %v775 = vld [vmem:[%s774] sm:$0xff]
        %v776 = vld [vmem:[%s774 + $0x8] sm:$0xff]
        %v777 = vld [vmem:[%s774 + $0x10] sm:$0xff]
        %v778 = vld [vmem:[%s774 + $0x18] sm:$0xff]
        %v779 = vld [vmem:[%s774 + $0x20] sm:$0xff]
        %v780 = vld [vmem:[%s774 + $0x28] sm:$0xff]
        %v781 = vld [vmem:[%s774 + $0x30] sm:$0xff]
        %v782 = vld [vmem:[%s774 + $0x38] sm:$0xff]
        %v783 = vld [vmem:[%s774 + $0x40] sm:$0xff]
        %v784 = vld [vmem:[%s774 + $0x48] sm:$0xff]
        %v785 = vld [vmem:[%s774 + $0x50] sm:$0xff]
        %v786 = vld [vmem:[%s774 + $0x58] sm:$0xff]
        %v787 = vld [vmem:[%s774 + $0x60] sm:$0xff]
        %v788 = vld [vmem:[%s774 + $0x68] sm:$0xff]
        %v789 = vld [vmem:[%s774 + $0x70] sm:$0xff]
        %v790 = vld [vmem:[%s774 + $0x78] sm:$0xff]
        %s791 = scalar_lea.vmem %s7, %s36
        %v792 = vld [vmem:[%s791] sm:$0x1]
        %v794 = vlaneseq
        %v795 = vshrl.u32 %v794, 7
        %v796 = vsub.s32 0, %v795
        %v797 = vrot.slane %v792, %v796
        %799 = vmatprep.subr.mxu0 0.0
        %800 = vmatpush1.msra.mxu0 %v775
        %801 = vmatprep.subr.mxu0 0.0
        %802 = vmatpush1.msra.mxu0 %v776
        %803 = vmatprep.subr.mxu0 0.0
        %804 = vmatpush1.msra.mxu0 %v777
        %805 = vmatprep.subr.mxu0 0.0
        %806 = vmatpush1.msra.mxu0 %v778
        %807 = vmatprep.subr.mxu0 0.0
        %808 = vmatpush1.msra.mxu0 %v779
        %809 = vmatprep.subr.mxu0 0.0
        %810 = vmatpush1.msra.mxu0 %v780
        %811 = vmatprep.subr.mxu0 0.0
        %812 = vmatpush1.msra.mxu0 %v781
        %813 = vmatprep.subr.mxu0 0.0
        %814 = vmatpush1.msra.mxu0 %v782
        %815 = vmatprep.subr.mxu0 0.0
        %816 = vmatpush1.msra.mxu0 %v783
        %817 = vmatprep.subr.mxu0 0.0
        %818 = vmatpush1.msra.mxu0 %v784
        %819 = vmatprep.subr.mxu0 0.0
        %820 = vmatpush1.msra.mxu0 %v785
        %821 = vmatprep.subr.mxu0 0.0
        %822 = vmatpush1.msra.mxu0 %v786
        %823 = vmatprep.subr.mxu0 0.0
        %824 = vmatpush1.msra.mxu0 %v787
        %825 = vmatprep.subr.mxu0 0.0
        %826 = vmatpush1.msra.mxu0 %v788
        %827 = vmatprep.subr.mxu0 0.0
        %828 = vmatpush1.msra.mxu0 %v789
        %829 = vmatprep.subr.mxu0 0.0
        %830 = vmatpush1.msra.mxu0 %v790
        %831 = vmatprep.subr.mxu0 0.0
        %832 = vmatpush1.msra.mxu0 0.0
        %833 = vmatprep.subr.mxu0 0.0
        %834 = vmatpush1.msra.mxu0 0.0
        %835 = vmatprep.subr.mxu0 0.0
        %836 = vmatpush1.msra.mxu0 0.0
        %837 = vmatprep.subr.mxu0 0.0
        %838 = vmatpush1.msra.mxu0 0.0
        %839 = vmatprep.subr.mxu0 0.0
        %840 = vmatpush1.msra.mxu0 0.0
        %841 = vmatprep.subr.mxu0 0.0
        %842 = vmatpush1.msra.mxu0 0.0
        %843 = vmatprep.subr.mxu0 0.0
        %844 = vmatpush1.msra.mxu0 0.0
        %845 = vmatprep.subr.mxu0 0.0
        %846 = vmatpush1.msra.mxu0 0.0
        %847 = vmatprep.subr.mxu0 0.0
        %848 = vmatpush1.msra.mxu0 0.0
        %849 = vmatprep.subr.mxu0 0.0
        %850 = vmatpush1.msra.mxu0 0.0
        %851 = vmatprep.subr.mxu0 0.0
        %852 = vmatpush1.msra.mxu0 0.0
        %853 = vmatprep.subr.mxu0 0.0
        %854 = vmatpush1.msra.mxu0 0.0
        %855 = vmatprep.subr.mxu0 0.0
        %856 = vmatpush1.msra.mxu0 0.0
        %857 = vmatprep.subr.mxu0 0.0
        %858 = vmatpush1.msra.mxu0 0.0
        %859 = vmatprep.subr.mxu0 0.0
        %860 = vmatpush1.msra.mxu0 0.0
        %861 = vmatprep.subr.mxu0 0.0
        %862 = vmatpush1.msra.mxu0 0.0
        %863 = vmatprep.mubr.f32.mxu0 0.0
        %864 = vmatmul.mubr.f32.gmra.mrb[0].mxu0 %v664
        %v865 = vpop.f32.mrb[0].mxu0
        %v866 = vadd.f32 %v797, %v865
        %v867 = vpop.f32.mrb[0].mxu0
        %868 = vdwg.mxu0
        %v869 = vadd.f32 %v773, %v866
        %870 = vst.msk [vmem:[%s445] sm:$0xff] %vm487, %v869
        %p871 = scmp.lt.s32.totalorder %s35, 0
        %s872 = scalar_select %p871, %s35, 0
        %s873 = smul.addr %s872, 8
        %s874 = scalar_lea.vmem %s8, %s873
        %p875 = scmp.lt.s32.totalorder %s36, 3
        %s876 = scalar_select %p875, %s36, 3
        %p877 = scmp.lt.s32.totalorder %s35, 0
        %s878 = scalar_select %p877, %s35, 0
        %s879 = sadd.s32 %s878, %s876
        %s880 = smul.addr %s879, 8
        %s881 = scalar_lea.vmem %s9, %s880
        %p882 = scmp.lt.s32.totalorder %s36, 3
        %s883 = scalar_select %p882, %s36, 3
        %p884 = scmp.lt.s32.totalorder %s35, 0
        %s885 = scalar_select %p884, %s35, 0
        %s886 = sadd.s32 %s885, %s883
        %s887 = smul.addr %s886, 8
        %s888 = scalar_lea.vmem %s10, %s887
        %p889 = scmp.lt.s32.totalorder %s35, 0
        %s890 = scalar_select %p889, %s35, 0
        %s891 = scalar_lea.vmem %s11, %s890
        // Predicated region
        $region65: #{downsample_rvq_forward.9} parent=47 // pred_check
          %p892 = pneg %p213
        $region66: #{downsample_rvq_forward.9} parent=47 // pred_check_branch
          %894 = sbr.rel (%p892) target = $region68
        $region67: #{downsample_rvq_forward.9} parent=47 // pred_region
          _
        $region68: #{downsample_rvq_forward.9} parent=47 // pred_fallthru
          _
        // Predicated region
        $region69: #{downsample_rvq_forward.9} parent=47 // pred_check
          %p895 = pneg %p241
        $region70: #{downsample_rvq_forward.9} parent=47 // pred_check_branch
          %897 = sbr.rel (%p895) target = $region72
        $region71: #{downsample_rvq_forward.9} parent=47 // pred_region
          _
        $region72: #{downsample_rvq_forward.9} parent=47 // pred_fallthru
          _
        // Predicated region
        $region73: #{downsample_rvq_forward.9} parent=47 // pred_check
          %p898 = pneg %p269
        $region74: #{downsample_rvq_forward.9} parent=47 // pred_check_branch
          %900 = sbr.rel (%p898) target = $region76
        $region75: #{downsample_rvq_forward.9} parent=47 // pred_region
          _
        $region76: #{downsample_rvq_forward.9} parent=47 // pred_fallthru
          _
        // Predicated region
        $region77: #{downsample_rvq_forward.9} parent=47 // pred_check
          %p901 = pneg %p295
        $region78: #{downsample_rvq_forward.9} parent=47 // pred_check_branch
          %903 = sbr.rel (%p901) target = $region80
        $region79: #{downsample_rvq_forward.9} parent=47 // pred_region
          _
        $region80: #{downsample_rvq_forward.9} parent=47 // pred_fallthru
          _
        // Predicated region
        $region81: #{downsample_rvq_forward.9} parent=47 // pred_check
          %p904 = pneg %p213
        $region82: #{downsample_rvq_forward.9} parent=47 // pred_check_branch
          %906 = sbr.rel (%p904) target = $region84
        $region83: #{downsample_rvq_forward.9} parent=47 // pred_region
          %p907 = scmp.lt.s32.totalorder %s35, 0
          %s908 = scalar_select %p907, %s35, 0
          %s909 = smul.addr %s908, 8
          %s910 = scalar_lea.vmem %s8, %s909
        $region84: #{downsample_rvq_forward.9} parent=47 // pred_fallthru
          _
        // Predicated region
        $region85: #{downsample_rvq_forward.9} parent=47 // pred_check
          %p911 = pneg %p295
        $region86: #{downsample_rvq_forward.9} parent=47 // pred_check_branch
          %913 = sbr.rel (%p911) target = $region88
        $region87: #{downsample_rvq_forward.9} parent=47 // pred_region
          %p914 = scmp.lt.s32.totalorder %s35, 0
          %s915 = scalar_select %p914, %s35, 0
          %s916 = scalar_lea.vmem %s11, %s915
        $region88: #{downsample_rvq_forward.9} parent=47 // pred_fallthru
          _
      $region48: #{downsample_rvq_forward.9} parent=5 // pred_fallthru
        _
      %p917 = scmp.le.s32.totalorder 2, %s26
      // Predicated region
      $region89: #{downsample_rvq_forward.9} parent=5 // pred_check
        %p918 = pneg %p917
      $region90: #{downsample_rvq_forward.9} parent=5 // pred_check_branch
        %920 = sbr.rel (%p918) target = $region92
      $region91: #{downsample_rvq_forward.9} parent=5 // pred_region
        %s921 = ssub.s32 %s26, 2
        // Predicated region
        $region93: #{downsample_rvq_forward.9} parent=91 // pred_check
          %p922 = pneg %p247
        $region94: #{downsample_rvq_forward.9} parent=91 // pred_check_branch
          %924 = sbr.rel (%p922) target = $region96
        $region95: #{downsample_rvq_forward.9} parent=91 // pred_region
          %p925 = scmp.lt.s32.totalorder %s38, 3
          %s926 = scalar_select %p925, %s38, 3
          %p927 = scmp.lt.s32.totalorder %s37, 0
          %s928 = scalar_select %p927, %s37, 0
          %s929 = sadd.s32 %s928, %s926
          %s930 = smul.addr %s929, 8
          %s931 = scalar_lea.vmem %s9, %s930
        $region96: #{downsample_rvq_forward.9} parent=91 // pred_fallthru
          _
        // Predicated region
        $region97: #{downsample_rvq_forward.9} parent=91 // pred_check
          %p932 = pneg %p275
        $region98: #{downsample_rvq_forward.9} parent=91 // pred_check_branch
          %934 = sbr.rel (%p932) target = $region100
        $region99: #{downsample_rvq_forward.9} parent=91 // pred_region
          %p935 = scmp.lt.s32.totalorder %s38, 3
          %s936 = scalar_select %p935, %s38, 3
          %p937 = scmp.lt.s32.totalorder %s37, 0
          %s938 = scalar_select %p937, %s37, 0
          %s939 = sadd.s32 %s938, %s936
          %s940 = smul.addr %s939, 8
          %s941 = scalar_lea.vmem %s10, %s940
        $region100: #{downsample_rvq_forward.9} parent=91 // pred_fallthru
          _
      $region92: #{downsample_rvq_forward.9} parent=5 // pred_fallthru
        _
    $region6: #{downsample_rvq_forward.9} parent=1 // loop_footer
      %s30 = sadd.s32 1, %s26
    $region7: #{downsample_rvq_forward.9} parent=1 // loop_footer_branch
      %25 = sbr.rel target = $region3
    $region8: #{downsample_rvq_forward.9} parent=1 // loop_exit
      _
    %942 = vsyncpa [#allocation5], 1
    %s943 = scalar_lea.sflag [#allocation5], 1
    %944 = vsyncpa %s943, 1
    %945 = vsyncpa [#allocation7], 1

// kernel: downsample_rvq_forward.10
$region0: #{downsample_rvq_forward.10}
  #allocation0 [shape = 'u32[]', space=smem, size = 0x4, offset = 0x4, fixed_abs, tag = 'smem constant byte address 0x4 - core index']
  #allocation1 [shape = 'u32[144,128]{1,0:T(1,128)}', space=vmem, size = 0x12000, scoped, tag = 'internal scratch']
  %s0 = inlined_call_operand.vmem [shape: f32[8,32], index: 0, kind: input, shape index: {}]
  %s1 = inlined_call_operand.vmem [shape: f32[32,64], index: 1, kind: input, shape index: {}]
  %s2 = inlined_call_operand.vmem [shape: f32[1,64], index: 2, kind: input, shape index: {}]
  %s3 = inlined_call_operand.vmem [shape: f32[8,64], index: 3, kind: output, shape index: {}]
  %s4 = sld [smem:[#allocation0]]
  $region22: #{downsample_rvq_forward.10} parent=0
    _
  %s6 = ssub.s32 1, %s4
  %s7 = scalar_select 0, %s6, %s4
  // Predicated region
  $region2: #{downsample_rvq_forward.10} parent=0 // pred_check
    _
  $region3: #{downsample_rvq_forward.10} parent=0 // pred_check_branch
    %9 = sbr.rel (0) target = $region5
  $region4: #{downsample_rvq_forward.10} parent=0 // pred_region
    _
  $region5: #{downsample_rvq_forward.10} parent=0 // pred_fallthru
    _
  // Predicated region
  $region6: #{downsample_rvq_forward.10} parent=0 // pred_check
    _
  $region7: #{downsample_rvq_forward.10} parent=0 // pred_check_branch
    %11 = sbr.rel (0) target = $region9
  $region8: #{downsample_rvq_forward.10} parent=0 // pred_region
    _
  $region9: #{downsample_rvq_forward.10} parent=0 // pred_fallthru
    _
  // Predicated region
  $region10: #{downsample_rvq_forward.10} parent=0 // pred_check
    _
  $region11: #{downsample_rvq_forward.10} parent=0 // pred_check_branch
    %13 = sbr.rel (0) target = $region13
  $region12: #{downsample_rvq_forward.10} parent=0 // pred_region
    _
  $region13: #{downsample_rvq_forward.10} parent=0 // pred_fallthru
    _
  %v14 = vld [vmem:[%s0] sm:$0xff]
  %v15 = vld [vmem:[%s1] sm:$0xff]
  %v16 = vld [vmem:[%s1 + $0x8] sm:$0xff]
  %v17 = vld [vmem:[%s1 + $0x10] sm:$0xff]
  %v18 = vld [vmem:[%s1 + $0x18] sm:$0xff]
  %v19 = vld [vmem:[%s2] sm:$0x1]
  %v21 = vlaneseq
  %v22 = vshrl.u32 %v21, 7
  %v23 = vsub.s32 0, %v22
  %v24 = vrot.slane %v19, %v23
  %vm26 = vcmask 261120
  %v28 = vsel %vm26, %v14, 0
  %30 = vmatprep.subr.mxu0 0.0
  %31 = vmatpush1.msra.mxu0 %v15
  %32 = vmatprep.subr.mxu0 0.0
  %33 = vmatpush1.msra.mxu0 %v16
  %34 = vmatprep.subr.mxu0 0.0
  %35 = vmatpush1.msra.mxu0 %v17
  %36 = vmatprep.subr.mxu0 0.0
  %37 = vmatpush1.msra.mxu0 %v18
  %38 = vmatprep.subr.mxu0 0.0
  %39 = vmatpush1.msra.mxu0 0.0
  %40 = vmatprep.subr.mxu0 0.0
  %41 = vmatpush1.msra.mxu0 0.0
  %42 = vmatprep.subr.mxu0 0.0
  %43 = vmatpush1.msra.mxu0 0.0
  %44 = vmatprep.subr.mxu0 0.0
  %45 = vmatpush1.msra.mxu0 0.0
  %46 = vmatprep.subr.mxu0 0.0
  %47 = vmatpush1.msra.mxu0 0.0
  %48 = vmatprep.subr.mxu0 0.0
  %49 = vmatpush1.msra.mxu0 0.0
  %50 = vmatprep.subr.mxu0 0.0
  %51 = vmatpush1.msra.mxu0 0.0
  %52 = vmatprep.subr.mxu0 0.0
  %53 = vmatpush1.msra.mxu0 0.0
  %54 = vmatprep.subr.mxu0 0.0
  %55 = vmatpush1.msra.mxu0 0.0
  %56 = vmatprep.subr.mxu0 0.0
  %57 = vmatpush1.msra.mxu0 0.0
  %58 = vmatprep.subr.mxu0 0.0
  %59 = vmatpush1.msra.mxu0 0.0
  %60 = vmatprep.subr.mxu0 0.0
  %61 = vmatpush1.msra.mxu0 0.0
  %62 = vmatprep.subr.mxu0 0.0
  %63 = vmatpush1.msra.mxu0 0.0
  %64 = vmatprep.subr.mxu0 0.0
  %65 = vmatpush1.msra.mxu0 0.0
  %66 = vmatprep.subr.mxu0 0.0
  %67 = vmatpush1.msra.mxu0 0.0
  %68 = vmatprep.subr.mxu0 0.0
  %69 = vmatpush1.msra.mxu0 0.0
  %70 = vmatprep.subr.mxu0 0.0
  %71 = vmatpush1.msra.mxu0 0.0
  %72 = vmatprep.subr.mxu0 0.0
  %73 = vmatpush1.msra.mxu0 0.0
  %74 = vmatprep.subr.mxu0 0.0
  %75 = vmatpush1.msra.mxu0 0.0
  %76 = vmatprep.subr.mxu0 0.0
  %77 = vmatpush1.msra.mxu0 0.0
  %78 = vmatprep.subr.mxu0 0.0
  %79 = vmatpush1.msra.mxu0 0.0
  %80 = vmatprep.subr.mxu0 0.0
  %81 = vmatpush1.msra.mxu0 0.0
  %82 = vmatprep.subr.mxu0 0.0
  %83 = vmatpush1.msra.mxu0 0.0
  %84 = vmatprep.subr.mxu0 0.0
  %85 = vmatpush1.msra.mxu0 0.0
  %86 = vmatprep.subr.mxu0 0.0
  %87 = vmatpush1.msra.mxu0 0.0
  %88 = vmatprep.subr.mxu0 0.0
  %89 = vmatpush1.msra.mxu0 0.0
  %90 = vmatprep.subr.mxu0 0.0
  %91 = vmatpush1.msra.mxu0 0.0
  %92 = vmatprep.subr.mxu0 0.0
  %93 = vmatpush1.msra.mxu0 0.0
  %94 = vmatprep.mubr.f32.mxu0 0.0
  %95 = vmatmul.mubr.f32.gmra.mrb[0].mxu0 %v28
  %v96 = vpop.f32.mrb[0].mxu0
  %v97 = vadd.f32 %v24, %v96
  %v98 = vpop.f32.mrb[0].mxu0
  %99 = vdwg.mxu0
  %vm100 = vcmask 523264
  %101 = vst.msk [vmem:[%s3] sm:$0xff] %vm100, %v97
  // Predicated region
  $region14: #{downsample_rvq_forward.10} parent=0 // pred_check
    _
  $region15: #{downsample_rvq_forward.10} parent=0 // pred_check_branch
    %103 = sbr.rel (0) target = $region17
  $region16: #{downsample_rvq_forward.10} parent=0 // pred_region
    _
  $region17: #{downsample_rvq_forward.10} parent=0 // pred_fallthru
    _
  // Predicated region
  $region18: #{downsample_rvq_forward.10} parent=0 // pred_check
    _
  $region19: #{downsample_rvq_forward.10} parent=0 // pred_check_branch
    %105 = sbr.rel (0) target = $region21
  $region20: #{downsample_rvq_forward.10} parent=0 // pred_region
    _
  $region21: #{downsample_rvq_forward.10} parent=0 // pred_fallthru
    _

// kernel: downsample_rvq_forward.12
$region0: #{downsample_rvq_forward.12}
  #allocation0 [shape = 'u32[]', space=smem, size = 0x4, offset = 0x4, fixed_abs, tag = 'smem constant byte address 0x4 - core index']
  #allocation1 [shape = 'u32[144,128]{1,0:T(1,128)}', space=vmem, size = 0x12000, scoped, tag = 'internal scratch']
  %s0 = inlined_call_operand.vmem [shape: f32[16,32], index: 0, kind: input, shape index: {}]
  %s1 = inlined_call_operand.vmem [shape: f32[32,64], index: 1, kind: input, shape index: {}]
  %s2 = inlined_call_operand.vmem [shape: f32[1,64], index: 2, kind: input, shape index: {}]
  %s3 = inlined_call_operand.vmem [shape: f32[16,64], index: 3, kind: output, shape index: {}]
  %s4 = sld [smem:[#allocation0]]
  $region22: #{downsample_rvq_forward.12} parent=0
    _
  %s6 = ssub.s32 1, %s4
  %s7 = scalar_select 0, %s6, %s4
  // Predicated region
  $region2: #{downsample_rvq_forward.12} parent=0 // pred_check
    _
  $region3: #{downsample_rvq_forward.12} parent=0 // pred_check_branch
    %9 = sbr.rel (0) target = $region5
  $region4: #{downsample_rvq_forward.12} parent=0 // pred_region
    _
  $region5: #{downsample_rvq_forward.12} parent=0 // pred_fallthru
    _
  // Predicated region
  $region6: #{downsample_rvq_forward.12} parent=0 // pred_check
    _
  $region7: #{downsample_rvq_forward.12} parent=0 // pred_check_branch
    %11 = sbr.rel (0) target = $region9
  $region8: #{downsample_rvq_forward.12} parent=0 // pred_region
    _
  $region9: #{downsample_rvq_forward.12} parent=0 // pred_fallthru
    _
  // Predicated region
  $region10: #{downsample_rvq_forward.12} parent=0 // pred_check
    _
  $region11: #{downsample_rvq_forward.12} parent=0 // pred_check_branch
    %13 = sbr.rel (0) target = $region13
  $region12: #{downsample_rvq_forward.12} parent=0 // pred_region
    _
  $region13: #{downsample_rvq_forward.12} parent=0 // pred_fallthru
    _
  %v14 = vld [vmem:[%s0] sm:$0xff]
  %v15 = vld [vmem:[%s0 + $0x8] sm:$0xff]
  %v16 = vld [vmem:[%s1] sm:$0xff]
  %v17 = vld [vmem:[%s1 + $0x8] sm:$0xff]
  %v18 = vld [vmem:[%s1 + $0x10] sm:$0xff]
  %v19 = vld [vmem:[%s1 + $0x18] sm:$0xff]
  %v20 = vld [vmem:[%s2] sm:$0x1]
  %v22 = vlaneseq
  %v23 = vshrl.u32 %v22, 7
  %v24 = vsub.s32 0, %v23
  %v25 = vrot.slane %v20, %v24
  %vm27 = vcmask 261120
  %v29 = vsel %vm27, %v14, 0
  %v32 = vsel %vm27, %v15, 0
  %34 = vmatprep.subr.mxu0 0.0
  %35 = vmatpush1.msra.mxu0 %v16
  %36 = vmatprep.subr.mxu0 0.0
  %37 = vmatpush1.msra.mxu0 %v17
  %38 = vmatprep.subr.mxu0 0.0
  %39 = vmatpush1.msra.mxu0 %v18
  %40 = vmatprep.subr.mxu0 0.0
  %41 = vmatpush1.msra.mxu0 %v19
  %42 = vmatprep.subr.mxu0 0.0
  %43 = vmatpush1.msra.mxu0 0.0
  %44 = vmatprep.subr.mxu0 0.0
  %45 = vmatpush1.msra.mxu0 0.0
  %46 = vmatprep.subr.mxu0 0.0
  %47 = vmatpush1.msra.mxu0 0.0
  %48 = vmatprep.subr.mxu0 0.0
  %49 = vmatpush1.msra.mxu0 0.0
  %50 = vmatprep.subr.mxu0 0.0
  %51 = vmatpush1.msra.mxu0 0.0
  %52 = vmatprep.subr.mxu0 0.0
  %53 = vmatpush1.msra.mxu0 0.0
  %54 = vmatprep.subr.mxu0 0.0
  %55 = vmatpush1.msra.mxu0 0.0
  %56 = vmatprep.subr.mxu0 0.0
  %57 = vmatpush1.msra.mxu0 0.0
  %58 = vmatprep.subr.mxu0 0.0
  %59 = vmatpush1.msra.mxu0 0.0
  %60 = vmatprep.subr.mxu0 0.0
  %61 = vmatpush1.msra.mxu0 0.0
  %62 = vmatprep.subr.mxu0 0.0
  %63 = vmatpush1.msra.mxu0 0.0
  %64 = vmatprep.subr.mxu0 0.0
  %65 = vmatpush1.msra.mxu0 0.0
  %66 = vmatprep.subr.mxu0 0.0
  %67 = vmatpush1.msra.mxu0 0.0
  %68 = vmatprep.subr.mxu0 0.0
  %69 = vmatpush1.msra.mxu0 0.0
  %70 = vmatprep.subr.mxu0 0.0
  %71 = vmatpush1.msra.mxu0 0.0
  %72 = vmatprep.subr.mxu0 0.0
  %73 = vmatpush1.msra.mxu0 0.0
  %74 = vmatprep.subr.mxu0 0.0
  %75 = vmatpush1.msra.mxu0 0.0
  %76 = vmatprep.subr.mxu0 0.0
  %77 = vmatpush1.msra.mxu0 0.0
  %78 = vmatprep.subr.mxu0 0.0
  %79 = vmatpush1.msra.mxu0 0.0
  %80 = vmatprep.subr.mxu0 0.0
  %81 = vmatpush1.msra.mxu0 0.0
  %82 = vmatprep.subr.mxu0 0.0
  %83 = vmatpush1.msra.mxu0 0.0
  %84 = vmatprep.subr.mxu0 0.0
  %85 = vmatpush1.msra.mxu0 0.0
  %86 = vmatprep.subr.mxu0 0.0
  %87 = vmatpush1.msra.mxu0 0.0
  %88 = vmatprep.subr.mxu0 0.0
  %89 = vmatpush1.msra.mxu0 0.0
  %90 = vmatprep.subr.mxu0 0.0
  %91 = vmatpush1.msra.mxu0 0.0
  %92 = vmatprep.subr.mxu0 0.0
  %93 = vmatpush1.msra.mxu0 0.0
  %94 = vmatprep.subr.mxu0 0.0
  %95 = vmatpush1.msra.mxu0 0.0
  %96 = vmatprep.subr.mxu0 0.0
  %97 = vmatpush1.msra.mxu0 0.0
  %98 = vmatprep.mubr.f32.mxu0 0.0
  %99 = vmatmul.mubr.f32.gmra.mrb[0].mxu0 %v29
  %v100 = vpop.f32.mrb[0].mxu0
  %v101 = vadd.f32 %v25, %v100
  %v102 = vpop.f32.mrb[0].mxu0
  %103 = vmatprep.mubr.f32.mxu0 0.0
  %104 = vmatmul.mubr.f32.gmra.mrb[0].mxu0 %v32
  %v105 = vpop.f32.mrb[0].mxu0
  %v106 = vadd.f32 %v25, %v105
  %v107 = vpop.f32.mrb[0].mxu0
  %108 = vdwg.mxu0
  %vm109 = vcmask 523264
  %110 = vst.msk [vmem:[%s3] sm:$0xff] %vm109, %v101
  %111 = vst.msk [vmem:[%s3 + $0x8] sm:$0xff] %vm109, %v106
  // Predicated region
  $region14: #{downsample_rvq_forward.12} parent=0 // pred_check
    _
  $region15: #{downsample_rvq_forward.12} parent=0 // pred_check_branch
    %113 = sbr.rel (0) target = $region17
  $region16: #{downsample_rvq_forward.12} parent=0 // pred_region
    _
  $region17: #{downsample_rvq_forward.12} parent=0 // pred_fallthru
    _
  // Predicated region
  $region18: #{downsample_rvq_forward.12} parent=0 // pred_check
    _
  $region19: #{downsample_rvq_forward.12} parent=0 // pred_check_branch
    %115 = sbr.rel (0) target = $region21
  $region20: #{downsample_rvq_forward.12} parent=0 // pred_region
    _
  $region21: #{downsample_rvq_forward.12} parent=0 // pred_fallthru
    _

// kernel: downsample_rvq_forward.11
$region0: #{downsample_rvq_forward.11}
  #allocation0 [shape = 'u32[]', space=smem, size = 0x4, offset = 0x4, fixed_abs, tag = 'smem constant byte address 0x4 - core index']
  #allocation1 [shape = 'u32[144,128]{1,0:T(1,128)}', space=vmem, size = 0x12000, scoped, tag = 'internal scratch']
  #allocation2 [shape = 'f32[16,32]{1,0:T(8,128)}', space=vmem, size = 0x2000, scoped, tag = 'scratch operand']
  %s0 = inlined_call_operand.vmem [shape: f32[2,8,32], index: 0, kind: input, shape index: {}]
  %s1 = inlined_call_operand.vmem [shape: f32[7,32], index: 1, kind: input, shape index: {}]
  %s2 = inlined_call_operand.vmem [shape: f32[1,32], index: 2, kind: input, shape index: {}, may-alias: {2,4,8}]
  %s3 = inlined_call_operand.vmem [shape: f32[1,32], index: 3, kind: input, shape index: {}]
  %s4 = inlined_call_operand.vmem [shape: f32[1,32], index: 4, kind: input, shape index: {}, may-alias: {2,4,8}]
  %s5 = inlined_call_operand.vmem [shape: f32[32,128], index: 5, kind: input, shape index: {}]
  %s6 = inlined_call_operand.vmem [shape: f32[1,128], index: 6, kind: input, shape index: {}]
  %s7 = inlined_call_operand.vmem [shape: f32[128,32], index: 7, kind: input, shape index: {}]
  %s8 = inlined_call_operand.vmem [shape: f32[1,32], index: 8, kind: input, shape index: {}, may-alias: {2,4,8}]
  %s9 = inlined_call_operand.vmem [shape: f32[1,32], index: 9, kind: input, shape index: {}]
  %s10 = inlined_call_operand.vmem [shape: f32[2,8,32], index: 10, kind: output, shape index: {}]
  %s11 = sld [smem:[#allocation0]]
  $region73: #{downsample_rvq_forward.11} parent=0
    _
  %s13 = ssub.s32 1, %s11
  %s14 = scalar_select 0, %s13, %s11
  loop: start=0, step=1, limit=4
  $region2: #{downsample_rvq_forward.11} parent=0 // loop_pre_header
    _
  $region3: #{downsample_rvq_forward.11} parent=0 // loop_header
    %s16 = sphi 0, %s20
    %p17 = scmp.ge.s32.totalorder %s16, 4
    %s23 = sphi 0, %s35
    %s24 = sphi 0, %s31
    %s25 = sphi 0, %s23
    %s26 = sphi 0, %s24
    %s27 = sphi 0, %s25
    %s28 = sphi 0, %s26
    %s40 = sphi 0, %s42
    %s43 = sphi 0, %s40
    %s44 = sphi 0, %s43
    %s60 = sphi 0, %s44
    %s64 = sphi 0, %s64
    %s66 = sphi 0, %s64
    %s67 = sphi 0, %s66
    %s81 = sphi 0, %s67
    %s85 = sphi 0, %s85
    %s87 = sphi 0, %s85
    %s88 = sphi 0, %s87
    %s102 = sphi 0, %s88
    %s106 = sphi 0, %s106
    %s108 = sphi 0, %s106
    %s109 = sphi 0, %s108
    %s123 = sphi 0, %s109
    %s127 = sphi 0, %s127
    %s129 = sphi 0, %s127
    %s130 = sphi 0, %s129
    %s144 = sphi 0, %s130
    %s148 = sphi 0, %s148
    %s150 = sphi 0, %s148
    %s151 = sphi 0, %s150
    %s165 = sphi 0, %s151
    %s169 = sphi 0, %s169
    %s171 = sphi 0, %s169
    %s172 = sphi 0, %s171
    %s186 = sphi 0, %s172
    %s190 = sphi 0, %s190
    %s192 = sphi 0, %s190
    %s193 = sphi 0, %s192
    %s207 = sphi 0, %s193
    %s211 = sphi 0, %s211
    %s213 = sphi 0, %s211
    %s214 = sphi 0, %s213
    %s228 = sphi 0, %s214
    %s232 = sphi 0, %s232
    %s234 = sphi 0, %s232
    %s235 = sphi 0, %s234
    %s249 = sphi 0, %s235
    %s257 = sphi 0, %s259
    %s260 = sphi 0, %s257
    %s261 = sphi 0, %s260
    %s277 = sphi 0, %s261
  $region4: #{downsample_rvq_forward.11} parent=0 // loop_header_branch
    %19 = sbr.rel (%p17) target = $region8
  $region5: #{downsample_rvq_forward.11} parent=0 // loop_body
    %s21 = ssub.s32 %s16, 1
    %s22 = ssub.s32 %s16, 2
    %s29 = sadd.s32 1, %s24
    %p30 = scmp.ge.s32.totalorder %s29, 1
    %s31 = scalar_select %p30, 0, %s29
    %s32 = sadd.s32 1, %s23
    %s33 = scalar_select %p30, %s32, %s23
    %p34 = scmp.ge.s32.totalorder %s33, 2
    %s35 = scalar_select %p34, 0, %s33
    %s36 = ssub.s32 %s23, %s35
    %s37 = ssub.s32 %s24, %s31
    %s38 = sor.u32 %s36, %s37
    %p39 = scmp.eq.s32.totalorder %s38, 0
    %s41 = sadd.s32 %s40, 1
    %s42 = scalar_select %p39, %s40, %s41
    %p45 = pneg %p39
    %p46 = scmp.eq.s32.totalorder %s16, 1
    %p47 = por %p45, %p46
    %p48 = scmp.ne.s32.totalorder %s40, %s43
    %p49 = scmp.eq.s32.totalorder %s16, 0
    %p50 = por %p48, %p49
    %p51 = scmp.ne.s32.totalorder %s40, %s43
    %p52 = scmp.eq.s32.totalorder %s21, 1
    %p53 = por %p51, %p52
    %p54 = scmp.ne.s32.totalorder %s43, %s44
    %p55 = scmp.eq.s32.totalorder %s21, 0
    %p56 = por %p54, %p55
    %p57 = scmp.ne.s32.totalorder %s43, %s44
    %p58 = scmp.eq.s32.totalorder %s22, 1
    %p59 = por %p57, %p58
    %p61 = scmp.ne.s32.totalorder %s44, %s60
    %p62 = scmp.eq.s32.totalorder %s22, 0
    %p63 = por %p61, %p62
    %s65 = sadd.s32 %s64, 1
    %p68 = scmp.eq.s32.totalorder %s16, 1
    %p69 = scmp.ne.s32.totalorder %s64, %s66
    %p70 = scmp.eq.s32.totalorder %s16, 0
    %p71 = por %p69, %p70
    %p72 = scmp.ne.s32.totalorder %s64, %s66
    %p73 = scmp.eq.s32.totalorder %s21, 1
    %p74 = por %p72, %p73
    %p75 = scmp.ne.s32.totalorder %s66, %s67
    %p76 = scmp.eq.s32.totalorder %s21, 0
    %p77 = por %p75, %p76
    %p78 = scmp.ne.s32.totalorder %s66, %s67
    %p79 = scmp.eq.s32.totalorder %s22, 1
    %p80 = por %p78, %p79
    %p82 = scmp.ne.s32.totalorder %s67, %s81
    %p83 = scmp.eq.s32.totalorder %s22, 0
    %p84 = por %p82, %p83
    %s86 = sadd.s32 %s85, 1
    %p89 = scmp.eq.s32.totalorder %s16, 1
    %p90 = scmp.ne.s32.totalorder %s85, %s87
    %p91 = scmp.eq.s32.totalorder %s16, 0
    %p92 = por %p90, %p91
    %p93 = scmp.ne.s32.totalorder %s85, %s87
    %p94 = scmp.eq.s32.totalorder %s21, 1
    %p95 = por %p93, %p94
    %p96 = scmp.ne.s32.totalorder %s87, %s88
    %p97 = scmp.eq.s32.totalorder %s21, 0
    %p98 = por %p96, %p97
    %p99 = scmp.ne.s32.totalorder %s87, %s88
    %p100 = scmp.eq.s32.totalorder %s22, 1
    %p101 = por %p99, %p100
    %p103 = scmp.ne.s32.totalorder %s88, %s102
    %p104 = scmp.eq.s32.totalorder %s22, 0
    %p105 = por %p103, %p104
    %s107 = sadd.s32 %s106, 1
    %p110 = scmp.eq.s32.totalorder %s16, 1
    %p111 = scmp.ne.s32.totalorder %s106, %s108
    %p112 = scmp.eq.s32.totalorder %s16, 0
    %p113 = por %p111, %p112
    %p114 = scmp.ne.s32.totalorder %s106, %s108
    %p115 = scmp.eq.s32.totalorder %s21, 1
    %p116 = por %p114, %p115
    %p117 = scmp.ne.s32.totalorder %s108, %s109
    %p118 = scmp.eq.s32.totalorder %s21, 0
    %p119 = por %p117, %p118
    %p120 = scmp.ne.s32.totalorder %s108, %s109
    %p121 = scmp.eq.s32.totalorder %s22, 1
    %p122 = por %p120, %p121
    %p124 = scmp.ne.s32.totalorder %s109, %s123
    %p125 = scmp.eq.s32.totalorder %s22, 0
    %p126 = por %p124, %p125
    %s128 = sadd.s32 %s127, 1
    %p131 = scmp.eq.s32.totalorder %s16, 1
    %p132 = scmp.ne.s32.totalorder %s127, %s129
    %p133 = scmp.eq.s32.totalorder %s16, 0
    %p134 = por %p132, %p133
    %p135 = scmp.ne.s32.totalorder %s127, %s129
    %p136 = scmp.eq.s32.totalorder %s21, 1
    %p137 = por %p135, %p136
    %p138 = scmp.ne.s32.totalorder %s129, %s130
    %p139 = scmp.eq.s32.totalorder %s21, 0
    %p140 = por %p138, %p139
    %p141 = scmp.ne.s32.totalorder %s129, %s130
    %p142 = scmp.eq.s32.totalorder %s22, 1
    %p143 = por %p141, %p142
    %p145 = scmp.ne.s32.totalorder %s130, %s144
    %p146 = scmp.eq.s32.totalorder %s22, 0
    %p147 = por %p145, %p146
    %s149 = sadd.s32 %s148, 1
    %p152 = scmp.eq.s32.totalorder %s16, 1
    %p153 = scmp.ne.s32.totalorder %s148, %s150
    %p154 = scmp.eq.s32.totalorder %s16, 0
    %p155 = por %p153, %p154
    %p156 = scmp.ne.s32.totalorder %s148, %s150
    %p157 = scmp.eq.s32.totalorder %s21, 1
    %p158 = por %p156, %p157
    %p159 = scmp.ne.s32.totalorder %s150, %s151
    %p160 = scmp.eq.s32.totalorder %s21, 0
    %p161 = por %p159, %p160
    %p162 = scmp.ne.s32.totalorder %s150, %s151
    %p163 = scmp.eq.s32.totalorder %s22, 1
    %p164 = por %p162, %p163
    %p166 = scmp.ne.s32.totalorder %s151, %s165
    %p167 = scmp.eq.s32.totalorder %s22, 0
    %p168 = por %p166, %p167
    %s170 = sadd.s32 %s169, 1
    %p173 = scmp.eq.s32.totalorder %s16, 1
    %p174 = scmp.ne.s32.totalorder %s169, %s171
    %p175 = scmp.eq.s32.totalorder %s16, 0
    %p176 = por %p174, %p175
    %p177 = scmp.ne.s32.totalorder %s169, %s171
    %p178 = scmp.eq.s32.totalorder %s21, 1
    %p179 = por %p177, %p178
    %p180 = scmp.ne.s32.totalorder %s171, %s172
    %p181 = scmp.eq.s32.totalorder %s21, 0
    %p182 = por %p180, %p181
    %p183 = scmp.ne.s32.totalorder %s171, %s172
    %p184 = scmp.eq.s32.totalorder %s22, 1
    %p185 = por %p183, %p184
    %p187 = scmp.ne.s32.totalorder %s172, %s186
    %p188 = scmp.eq.s32.totalorder %s22, 0
    %p189 = por %p187, %p188
    %s191 = sadd.s32 %s190, 1
    %p194 = scmp.eq.s32.totalorder %s16, 1
    %p195 = scmp.ne.s32.totalorder %s190, %s192
    %p196 = scmp.eq.s32.totalorder %s16, 0
    %p197 = por %p195, %p196
    %p198 = scmp.ne.s32.totalorder %s190, %s192
    %p199 = scmp.eq.s32.totalorder %s21, 1
    %p200 = por %p198, %p199
    %p201 = scmp.ne.s32.totalorder %s192, %s193
    %p202 = scmp.eq.s32.totalorder %s21, 0
    %p203 = por %p201, %p202
    %p204 = scmp.ne.s32.totalorder %s192, %s193
    %p205 = scmp.eq.s32.totalorder %s22, 1
    %p206 = por %p204, %p205
    %p208 = scmp.ne.s32.totalorder %s193, %s207
    %p209 = scmp.eq.s32.totalorder %s22, 0
    %p210 = por %p208, %p209
    %s212 = sadd.s32 %s211, 1
    %p215 = scmp.eq.s32.totalorder %s16, 1
    %p216 = scmp.ne.s32.totalorder %s211, %s213
    %p217 = scmp.eq.s32.totalorder %s16, 0
    %p218 = por %p216, %p217
    %p219 = scmp.ne.s32.totalorder %s211, %s213
    %p220 = scmp.eq.s32.totalorder %s21, 1
    %p221 = por %p219, %p220
    %p222 = scmp.ne.s32.totalorder %s213, %s214
    %p223 = scmp.eq.s32.totalorder %s21, 0
    %p224 = por %p222, %p223
    %p225 = scmp.ne.s32.totalorder %s213, %s214
    %p226 = scmp.eq.s32.totalorder %s22, 1
    %p227 = por %p225, %p226
    %p229 = scmp.ne.s32.totalorder %s214, %s228
    %p230 = scmp.eq.s32.totalorder %s22, 0
    %p231 = por %p229, %p230
    %s233 = sadd.s32 %s232, 1
    %p236 = scmp.eq.s32.totalorder %s16, 1
    %p237 = scmp.ne.s32.totalorder %s232, %s234
    %p238 = scmp.eq.s32.totalorder %s16, 0
    %p239 = por %p237, %p238
    %p240 = scmp.ne.s32.totalorder %s232, %s234
    %p241 = scmp.eq.s32.totalorder %s21, 1
    %p242 = por %p240, %p241
    %p243 = scmp.ne.s32.totalorder %s234, %s235
    %p244 = scmp.eq.s32.totalorder %s21, 0
    %p245 = por %p243, %p244
    %p246 = scmp.ne.s32.totalorder %s234, %s235
    %p247 = scmp.eq.s32.totalorder %s22, 1
    %p248 = por %p246, %p247
    %p250 = scmp.ne.s32.totalorder %s235, %s249
    %p251 = scmp.eq.s32.totalorder %s22, 0
    %p252 = por %p250, %p251
    %s253 = ssub.s32 %s23, %s35
    %s254 = ssub.s32 %s24, %s31
    %s255 = sor.u32 %s253, %s254
    %p256 = scmp.eq.s32.totalorder %s255, 0
    %s258 = sadd.s32 %s257, 1
    %s259 = scalar_select %p256, %s257, %s258
    %p262 = pneg %p256
    %p263 = scmp.eq.s32.totalorder %s16, 1
    %p264 = por %p262, %p263
    %p265 = scmp.ne.s32.totalorder %s257, %s260
    %p266 = scmp.eq.s32.totalorder %s16, 0
    %p267 = por %p265, %p266
    %p268 = scmp.ne.s32.totalorder %s257, %s260
    %p269 = scmp.eq.s32.totalorder %s21, 1
    %p270 = por %p268, %p269
    %p271 = scmp.ne.s32.totalorder %s260, %s261
    %p272 = scmp.eq.s32.totalorder %s21, 0
    %p273 = por %p271, %p272
    %p274 = scmp.ne.s32.totalorder %s260, %s261
    %p275 = scmp.eq.s32.totalorder %s22, 1
    %p276 = por %p274, %p275
    %p278 = scmp.ne.s32.totalorder %s261, %s277
    %p279 = scmp.eq.s32.totalorder %s22, 0
    %p280 = por %p278, %p279
    %p281 = scmp.le.s32.totalorder 1, %s16
    %p282 = scmp.lt.s32.totalorder %s16, 3
    %p283 = pnand %p281, %p282
    %p284 = pneg %p283
    // Predicated region
    $region9: #{downsample_rvq_forward.11} parent=5 // pred_check
      _
    $region10: #{downsample_rvq_forward.11} parent=5 // pred_check_branch
      %286 = sbr.rel (%p283) target = $region12
    $region11: #{downsample_rvq_forward.11} parent=5 // pred_region
      %s287 = ssub.s32 %s16, 1
      // Predicated region
      $region13: #{downsample_rvq_forward.11} parent=11 // pred_check
        %p288 = pneg %p77
      $region14: #{downsample_rvq_forward.11} parent=11 // pred_check_branch
        %290 = sbr.rel (%p288) target = $region16
      $region15: #{downsample_rvq_forward.11} parent=11 // pred_region
        _
      $region16: #{downsample_rvq_forward.11} parent=11 // pred_fallthru
        _
      // Predicated region
      $region17: #{downsample_rvq_forward.11} parent=11 // pred_check
        %p291 = pneg %p98
      $region18: #{downsample_rvq_forward.11} parent=11 // pred_check_branch
        %293 = sbr.rel (%p291) target = $region20
      $region19: #{downsample_rvq_forward.11} parent=11 // pred_region
        _
      $region20: #{downsample_rvq_forward.11} parent=11 // pred_fallthru
        _
      // Predicated region
      $region21: #{downsample_rvq_forward.11} parent=11 // pred_check
        %p294 = pneg %p119
      $region22: #{downsample_rvq_forward.11} parent=11 // pred_check_branch
        %296 = sbr.rel (%p294) target = $region24
      $region23: #{downsample_rvq_forward.11} parent=11 // pred_region
        _
      $region24: #{downsample_rvq_forward.11} parent=11 // pred_fallthru
        _
      // Predicated region
      $region25: #{downsample_rvq_forward.11} parent=11 // pred_check
        %p297 = pneg %p140
      $region26: #{downsample_rvq_forward.11} parent=11 // pred_check_branch
        %299 = sbr.rel (%p297) target = $region28
      $region27: #{downsample_rvq_forward.11} parent=11 // pred_region
        _
      $region28: #{downsample_rvq_forward.11} parent=11 // pred_fallthru
        _
      // Predicated region
      $region29: #{downsample_rvq_forward.11} parent=11 // pred_check
        %p300 = pneg %p161
      $region30: #{downsample_rvq_forward.11} parent=11 // pred_check_branch
        %302 = sbr.rel (%p300) target = $region32
      $region31: #{downsample_rvq_forward.11} parent=11 // pred_region
        _
      $region32: #{downsample_rvq_forward.11} parent=11 // pred_fallthru
        _
      // Predicated region
      $region33: #{downsample_rvq_forward.11} parent=11 // pred_check
        %p303 = pneg %p182
      $region34: #{downsample_rvq_forward.11} parent=11 // pred_check_branch
        %305 = sbr.rel (%p303) target = $region36
      $region35: #{downsample_rvq_forward.11} parent=11 // pred_region
        _
      $region36: #{downsample_rvq_forward.11} parent=11 // pred_fallthru
        _
      // Predicated region
      $region37: #{downsample_rvq_forward.11} parent=11 // pred_check
        %p306 = pneg %p203
      $region38: #{downsample_rvq_forward.11} parent=11 // pred_check_branch
        %308 = sbr.rel (%p306) target = $region40
      $region39: #{downsample_rvq_forward.11} parent=11 // pred_region
        _
      $region40: #{downsample_rvq_forward.11} parent=11 // pred_fallthru
        _
      // Predicated region
      $region41: #{downsample_rvq_forward.11} parent=11 // pred_check
        %p309 = pneg %p224
      $region42: #{downsample_rvq_forward.11} parent=11 // pred_check_branch
        %311 = sbr.rel (%p309) target = $region44
      $region43: #{downsample_rvq_forward.11} parent=11 // pred_region
        _
      $region44: #{downsample_rvq_forward.11} parent=11 // pred_fallthru
        _
      // Predicated region
      $region45: #{downsample_rvq_forward.11} parent=11 // pred_check
        %p312 = pneg %p245
      $region46: #{downsample_rvq_forward.11} parent=11 // pred_check_branch
        %314 = sbr.rel (%p312) target = $region48
      $region47: #{downsample_rvq_forward.11} parent=11 // pred_region
        _
      $region48: #{downsample_rvq_forward.11} parent=11 // pred_fallthru
        _
    $region12: #{downsample_rvq_forward.11} parent=5 // pred_fallthru
      _
    %p315 = scmp.lt.s32.totalorder %s16, 2
    // Predicated region
    $region49: #{downsample_rvq_forward.11} parent=5 // pred_check
      %p316 = pneg %p315
    $region50: #{downsample_rvq_forward.11} parent=5 // pred_check_branch
      %318 = sbr.rel (%p316) target = $region52
    $region51: #{downsample_rvq_forward.11} parent=5 // pred_region
      // Predicated region
      $region53: #{downsample_rvq_forward.11} parent=51 // pred_check
        %p319 = pneg %p50
      $region54: #{downsample_rvq_forward.11} parent=51 // pred_check_branch
        %321 = sbr.rel (%p319) target = $region56
      $region55: #{downsample_rvq_forward.11} parent=51 // pred_region
        %p322 = scmp.lt.s32.totalorder %s23, 1
        %s323 = scalar_select %p322, %s23, 1
        %p324 = scmp.lt.s32.totalorder %s24, 0
        %s325 = scalar_select %p324, %s24, 0
        %s326 = sadd.s32 %s325, %s323
        %s327 = smul.addr %s326, 8
        %s328 = scalar_lea.vmem %s0, %s327
      $region56: #{downsample_rvq_forward.11} parent=51 // pred_fallthru
        _
    $region52: #{downsample_rvq_forward.11} parent=5 // pred_fallthru
      _
    %p329 = scmp.le.s32.totalorder 1, %s16
    %p330 = scmp.lt.s32.totalorder %s16, 3
    %p331 = pnand %p329, %p330
    %p332 = pneg %p331
    // Predicated region
    $region57: #{downsample_rvq_forward.11} parent=5 // pred_check
      _
    $region58: #{downsample_rvq_forward.11} parent=5 // pred_check_branch
      %334 = sbr.rel (%p331) target = $region60
    $region59: #{downsample_rvq_forward.11} parent=5 // pred_region
      %s335 = ssub.s32 %s16, 1
      %p336 = scmp.lt.s32.totalorder %s25, 1
      %s337 = scalar_select %p336, %s25, 1
      %p338 = scmp.lt.s32.totalorder %s26, 0
      %s339 = scalar_select %p338, %s26, 0
      %s340 = sadd.s32 %s339, %s337
      %s341 = smul.addr %s340, 8
      %s342 = scalar_lea.vmem %s0, %s341
      %p343 = pneg %p56
      %p344 = pneg %p53
      %p345 = pneg %p77
      %p346 = pneg %p74
      %p347 = pneg %p98
      %p348 = pneg %p95
      %p349 = pneg %p119
      %p350 = pneg %p116
      %p351 = pneg %p140
      %p352 = pneg %p137
      %p353 = pneg %p161
      %p354 = pneg %p158
      %p355 = pneg %p182
      %p356 = pneg %p179
      %p357 = pneg %p203
      %p358 = pneg %p200
      %p359 = pneg %p224
      %p360 = pneg %p221
      %p361 = pneg %p245
      %p362 = pneg %p242
      %p363 = pneg %p273
      %p364 = pneg %p270
      %p365 = scmp.lt.s32.totalorder %s25, 1
      %s366 = scalar_select %p365, %s25, 1
      %p367 = scmp.lt.s32.totalorder %s26, 0
      %s368 = scalar_select %p367, %s26, 0
      %s369 = sadd.s32 %s368, %s366
      %s370 = smul.addr %s369, 8
      %s371 = scalar_lea.vmem %s10, %s370
      %p372 = scmp.lt.s32.totalorder %s25, 1
      %s373 = scalar_select %p372, %s25, 1
      %p374 = scmp.lt.s32.totalorder %s26, 0
      %s375 = scalar_select %p374, %s26, 0
      %s376 = sadd.s32 %s375, %s373
      %s377 = smul.addr %s376, 8
      %s378 = scalar_lea.vmem %s0, %s377
      %p379 = scmp.lt.s32.totalorder %s25, 1
      %s380 = scalar_select %p379, %s25, 1
      %p381 = scmp.lt.s32.totalorder %s26, 0
      %s382 = scalar_select %p381, %s26, 0
      %s383 = sadd.s32 %s382, %s380
      %s384 = smul.addr %s383, 8
      %s385 = scalar_lea.vmem %s10, %s384
      %v386 = vld [vmem:[%s378] sm:$0xff]
      %vm387 = vcmask 261120
      %388 = vst.msk [vmem:[#allocation2] sm:$0xff] %vm387, 0.0
      %389 = vst.msk [vmem:[#allocation2 + $0x8] sm:$0xff] %vm387, %v386
      %v390 = vld [vmem:[%s2] sm:$0x1]
      %v392 = vlaneseq
      %v393 = vshrl.u32 %v392, 7
      %v394 = vsub.s32 0, %v393
      %v395 = vrot.slane %v390, %v394
      %v397 = vld [vmem:[#allocation2 + $0x2] sm:$0xff]
      %v398 = vld [vmem:[%s1] sm:$0x1]
      %v399 = vlaneseq
      %v400 = vshrl.u32 %v399, 7
      %v401 = vsub.s32 0, %v400
      %v402 = vrot.slane %v398, %v401
      %v403 = vmul.f32 %v397, %v402
      %v404 = vadd.f32 %v395, %v403
      %v405 = vld [vmem:[#allocation2 + $0x3] sm:$0xff]
      %v406 = vld [vmem:[%s1 + $0x1] sm:$0x1]
      %v407 = vlaneseq
      %v408 = vshrl.u32 %v407, 7
      %v409 = vsub.s32 0, %v408
      %v410 = vrot.slane %v406, %v409
      %v411 = vmul.f32 %v405, %v410
      %v412 = vadd.f32 %v404, %v411
      %v413 = vld [vmem:[#allocation2 + $0x4] sm:$0xff]
      %v414 = vld [vmem:[%s1 + $0x2] sm:$0x1]
      %v415 = vlaneseq
      %v416 = vshrl.u32 %v415, 7
      %v417 = vsub.s32 0, %v416
      %v418 = vrot.slane %v414, %v417
      %v419 = vmul.f32 %v413, %v418
      %v420 = vadd.f32 %v412, %v419
      %v421 = vld [vmem:[#allocation2 + $0x5] sm:$0xff]
      %v422 = vld [vmem:[%s1 + $0x3] sm:$0x1]
      %v423 = vlaneseq
      %v424 = vshrl.u32 %v423, 7
      %v425 = vsub.s32 0, %v424
      %v426 = vrot.slane %v422, %v425
      %v427 = vmul.f32 %v421, %v426
      %v428 = vadd.f32 %v420, %v427
      %v429 = vld [vmem:[#allocation2 + $0x6] sm:$0xff]
      %v430 = vld [vmem:[%s1 + $0x4] sm:$0x1]
      %v431 = vlaneseq
      %v432 = vshrl.u32 %v431, 7
      %v433 = vsub.s32 0, %v432
      %v434 = vrot.slane %v430, %v433
      %v435 = vmul.f32 %v429, %v434
      %v436 = vadd.f32 %v428, %v435
      %v437 = vld [vmem:[#allocation2 + $0x7] sm:$0xff]
      %v438 = vld [vmem:[%s1 + $0x5] sm:$0x1]
      %v439 = vlaneseq
      %v440 = vshrl.u32 %v439, 7
      %v441 = vsub.s32 0, %v440
      %v442 = vrot.slane %v438, %v441
      %v443 = vmul.f32 %v437, %v442
      %v444 = vadd.f32 %v436, %v443
      %v445 = vld [vmem:[#allocation2 + $0x8] sm:$0xff]
      %v446 = vld [vmem:[%s1 + $0x6] sm:$0x1]
      %v447 = vlaneseq
      %v448 = vshrl.u32 %v447, 7
      %v449 = vsub.s32 0, %v448
      %v450 = vrot.slane %v446, %v449
      %v451 = vmul.f32 %v445, %v450
      %v452 = vadd.f32 %v444, %v451
      %v453 = vsel %vm387, %v452, 0.0
      %454 = vadd.xlane.f32.xlu0 %v453
      %v455 = vpop.xlane.xlu0 %454
      %v456 = vrcp.pop 32.0
      %v457 = vmul.f32 %v455, %v456
      %v458 = vsub.f32 %v452, %v457
      %v459 = vmul.f32 %v458, %v458
      %v460 = vsel %vm387, %v459, 0.0
      %461 = vadd.xlane.f32.xlu0 %v460
      %v462 = vpop.xlane.xlu0 %461
      %v463 = vmul.f32 %v462, %v456
      %v464 = vadd.f32 %v463, 1e-06
      %v465 = vrsqrt.pop %v464
      %v466 = vmul.f32 %v458, %v465
      %v467 = vld [vmem:[%s3] sm:$0x1]
      %v469 = vlaneseq
      %v470 = vshrl.u32 %v469, 7
      %v471 = vsub.s32 0, %v470
      %v472 = vrot.slane %v467, %v471
      %v474 = vmul.f32 %v466, %v472
      %v475 = vld [vmem:[%s4] sm:$0x1]
      %v477 = vlaneseq
      %v478 = vshrl.u32 %v477, 7
      %v479 = vsub.s32 0, %v478
      %v480 = vrot.slane %v475, %v479
      %v482 = vadd.f32 %v474, %v480
      %v483 = vld [vmem:[%s5] sm:$0xff]
      %v484 = vld [vmem:[%s5 + $0x8] sm:$0xff]
      %v485 = vld [vmem:[%s5 + $0x10] sm:$0xff]
      %v486 = vld [vmem:[%s5 + $0x18] sm:$0xff]
      %v487 = vld [vmem:[%s6] sm:$0x1]
      %v489 = vlaneseq
      %v490 = vshrl.u32 %v489, 7
      %v491 = vsub.s32 0, %v490
      %v492 = vrot.slane %v487, %v491
      %v495 = vsel %vm387, %v482, 0
      %497 = vmatprep.subr.mxu0 0.0
      %498 = vmatpush1.msra.mxu0 %v483
      %499 = vmatprep.subr.mxu0 0.0
      %500 = vmatpush1.msra.mxu0 %v484
      %501 = vmatprep.subr.mxu0 0.0
      %502 = vmatpush1.msra.mxu0 %v485
      %503 = vmatprep.subr.mxu0 0.0
      %504 = vmatpush1.msra.mxu0 %v486
      %505 = vmatprep.subr.mxu0 0.0
      %506 = vmatpush1.msra.mxu0 0.0
      %507 = vmatprep.subr.mxu0 0.0
      %508 = vmatpush1.msra.mxu0 0.0
      %509 = vmatprep.subr.mxu0 0.0
      %510 = vmatpush1.msra.mxu0 0.0
      %511 = vmatprep.subr.mxu0 0.0
      %512 = vmatpush1.msra.mxu0 0.0
      %513 = vmatprep.subr.mxu0 0.0
      %514 = vmatpush1.msra.mxu0 0.0
      %515 = vmatprep.subr.mxu0 0.0
      %516 = vmatpush1.msra.mxu0 0.0
      %517 = vmatprep.subr.mxu0 0.0
      %518 = vmatpush1.msra.mxu0 0.0
      %519 = vmatprep.subr.mxu0 0.0
      %520 = vmatpush1.msra.mxu0 0.0
      %521 = vmatprep.subr.mxu0 0.0
      %522 = vmatpush1.msra.mxu0 0.0
      %523 = vmatprep.subr.mxu0 0.0
      %524 = vmatpush1.msra.mxu0 0.0
      %525 = vmatprep.subr.mxu0 0.0
      %526 = vmatpush1.msra.mxu0 0.0
      %527 = vmatprep.subr.mxu0 0.0
      %528 = vmatpush1.msra.mxu0 0.0
      %529 = vmatprep.subr.mxu0 0.0
      %530 = vmatpush1.msra.mxu0 0.0
      %531 = vmatprep.subr.mxu0 0.0
      %532 = vmatpush1.msra.mxu0 0.0
      %533 = vmatprep.subr.mxu0 0.0
      %534 = vmatpush1.msra.mxu0 0.0
      %535 = vmatprep.subr.mxu0 0.0
      %536 = vmatpush1.msra.mxu0 0.0
      %537 = vmatprep.subr.mxu0 0.0
      %538 = vmatpush1.msra.mxu0 0.0
      %539 = vmatprep.subr.mxu0 0.0
      %540 = vmatpush1.msra.mxu0 0.0
      %541 = vmatprep.subr.mxu0 0.0
      %542 = vmatpush1.msra.mxu0 0.0
      %543 = vmatprep.subr.mxu0 0.0
      %544 = vmatpush1.msra.mxu0 0.0
      %545 = vmatprep.subr.mxu0 0.0
      %546 = vmatpush1.msra.mxu0 0.0
      %547 = vmatprep.subr.mxu0 0.0
      %548 = vmatpush1.msra.mxu0 0.0
      %549 = vmatprep.subr.mxu0 0.0
      %550 = vmatpush1.msra.mxu0 0.0
      %551 = vmatprep.subr.mxu0 0.0
      %552 = vmatpush1.msra.mxu0 0.0
      %553 = vmatprep.subr.mxu0 0.0
      %554 = vmatpush1.msra.mxu0 0.0
      %555 = vmatprep.subr.mxu0 0.0
      %556 = vmatpush1.msra.mxu0 0.0
      %557 = vmatprep.subr.mxu0 0.0
      %558 = vmatpush1.msra.mxu0 0.0
      %559 = vmatprep.subr.mxu0 0.0
      %560 = vmatpush1.msra.mxu0 0.0
      %561 = vmatprep.mubr.f32.mxu0 0.0
      %562 = vmatmul.mubr.f32.gmra.mrb[0].mxu0 %v495
      %v563 = vpop.f32.mrb[0].mxu0
      %v564 = vadd.f32 %v492, %v563
      %v565 = vpop.f32.mrb[0].mxu0
      %566 = vdwg.mxu0
      %v567 = vmul.f32 %v564, %v564
      %v568 = vmul.f32 %v564, %v567
      %v569 = vmul.f32 %v568, 0.044715
      %v570 = vadd.f32 %v564, %v569
      %v571 = vmul.f32 %v570, 0.7978846
      %v572 = vtanh.pop %v571
      %v573 = vadd.f32 %v572, 1.0
      %v574 = vmul.f32 %v573, 0.5
      %v575 = vmul.f32 %v564, %v574
      %v576 = vld [vmem:[%s7] sm:$0xff]
      %v577 = vld [vmem:[%s7 + $0x8] sm:$0xff]
      %v578 = vld [vmem:[%s7 + $0x10] sm:$0xff]
      %v579 = vld [vmem:[%s7 + $0x18] sm:$0xff]
      %v580 = vld [vmem:[%s7 + $0x20] sm:$0xff]
      %v581 = vld [vmem:[%s7 + $0x28] sm:$0xff]
      %v582 = vld [vmem:[%s7 + $0x30] sm:$0xff]
      %v583 = vld [vmem:[%s7 + $0x38] sm:$0xff]
      %v584 = vld [vmem:[%s7 + $0x40] sm:$0xff]
      %v585 = vld [vmem:[%s7 + $0x48] sm:$0xff]
      %v586 = vld [vmem:[%s7 + $0x50] sm:$0xff]
      %v587 = vld [vmem:[%s7 + $0x58] sm:$0xff]
      %v588 = vld [vmem:[%s7 + $0x60] sm:$0xff]
      %v589 = vld [vmem:[%s7 + $0x68] sm:$0xff]
      %v590 = vld [vmem:[%s7 + $0x70] sm:$0xff]
      %v591 = vld [vmem:[%s7 + $0x78] sm:$0xff]
      %v592 = vld [vmem:[%s8] sm:$0x1]
      %v594 = vlaneseq
      %v595 = vshrl.u32 %v594, 7
      %v596 = vsub.s32 0, %v595
      %v597 = vrot.slane %v592, %v596
      %599 = vmatprep.subr.mxu0 0.0
      %600 = vmatpush1.msra.mxu0 %v576
      %601 = vmatprep.subr.mxu0 0.0
      %602 = vmatpush1.msra.mxu0 %v577
      %603 = vmatprep.subr.mxu0 0.0
      %604 = vmatpush1.msra.mxu0 %v578
      %605 = vmatprep.subr.mxu0 0.0
      %606 = vmatpush1.msra.mxu0 %v579
      %607 = vmatprep.subr.mxu0 0.0
      %608 = vmatpush1.msra.mxu0 %v580
      %609 = vmatprep.subr.mxu0 0.0
      %610 = vmatpush1.msra.mxu0 %v581
      %611 = vmatprep.subr.mxu0 0.0
      %612 = vmatpush1.msra.mxu0 %v582
      %613 = vmatprep.subr.mxu0 0.0
      %614 = vmatpush1.msra.mxu0 %v583
      %615 = vmatprep.subr.mxu0 0.0
      %616 = vmatpush1.msra.mxu0 %v584
      %617 = vmatprep.subr.mxu0 0.0
      %618 = vmatpush1.msra.mxu0 %v585
      %619 = vmatprep.subr.mxu0 0.0
      %620 = vmatpush1.msra.mxu0 %v586
      %621 = vmatprep.subr.mxu0 0.0
      %622 = vmatpush1.msra.mxu0 %v587
      %623 = vmatprep.subr.mxu0 0.0
      %624 = vmatpush1.msra.mxu0 %v588
      %625 = vmatprep.subr.mxu0 0.0
      %626 = vmatpush1.msra.mxu0 %v589
      %627 = vmatprep.subr.mxu0 0.0
      %628 = vmatpush1.msra.mxu0 %v590
      %629 = vmatprep.subr.mxu0 0.0
      %630 = vmatpush1.msra.mxu0 %v591
      %631 = vmatprep.subr.mxu0 0.0
      %632 = vmatpush1.msra.mxu0 0.0
      %633 = vmatprep.subr.mxu0 0.0
      %634 = vmatpush1.msra.mxu0 0.0
      %635 = vmatprep.subr.mxu0 0.0
      %636 = vmatpush1.msra.mxu0 0.0
      %637 = vmatprep.subr.mxu0 0.0
      %638 = vmatpush1.msra.mxu0 0.0
      %639 = vmatprep.subr.mxu0 0.0
      %640 = vmatpush1.msra.mxu0 0.0
      %641 = vmatprep.subr.mxu0 0.0
      %642 = vmatpush1.msra.mxu0 0.0
      %643 = vmatprep.subr.mxu0 0.0
      %644 = vmatpush1.msra.mxu0 0.0
      %645 = vmatprep.subr.mxu0 0.0
      %646 = vmatpush1.msra.mxu0 0.0
      %647 = vmatprep.subr.mxu0 0.0
      %648 = vmatpush1.msra.mxu0 0.0
      %649 = vmatprep.subr.mxu0 0.0
      %650 = vmatpush1.msra.mxu0 0.0
      %651 = vmatprep.subr.mxu0 0.0
      %652 = vmatpush1.msra.mxu0 0.0
      %653 = vmatprep.subr.mxu0 0.0
      %654 = vmatpush1.msra.mxu0 0.0
      %655 = vmatprep.subr.mxu0 0.0
      %656 = vmatpush1.msra.mxu0 0.0
      %657 = vmatprep.subr.mxu0 0.0
      %658 = vmatpush1.msra.mxu0 0.0
      %659 = vmatprep.subr.mxu0 0.0
      %660 = vmatpush1.msra.mxu0 0.0
      %661 = vmatprep.subr.mxu0 0.0
      %662 = vmatpush1.msra.mxu0 0.0
      %663 = vmatprep.mubr.f32.mxu0 0.0
      %664 = vmatmul.mubr.f32.gmra.mrb[0].mxu0 %v575
      %v665 = vpop.f32.mrb[0].mxu0
      %v666 = vadd.f32 %v597, %v665
      %v667 = vpop.f32.mrb[0].mxu0
      %668 = vdwg.mxu0
      %v669 = vld [vmem:[%s9] sm:$0x1]
      %v671 = vlaneseq
      %v672 = vshrl.u32 %v671, 7
      %v673 = vsub.s32 0, %v672
      %v674 = vrot.slane %v669, %v673
      %v676 = vmul.f32 %v674, %v666
      %v677 = vadd.f32 %v386, %v676
      %678 = vst.msk [vmem:[%s385] sm:$0xff] %vm387, %v677
      %p679 = scmp.lt.s32.totalorder %s25, 1
      %s680 = scalar_select %p679, %s25, 1
      %p681 = scmp.lt.s32.totalorder %s26, 0
      %s682 = scalar_select %p681, %s26, 0
      %s683 = sadd.s32 %s682, %s680
      %s684 = smul.addr %s683, 8
      %s685 = scalar_lea.vmem %s10, %s684
      // Predicated region
      $region61: #{downsample_rvq_forward.11} parent=59 // pred_check
        %p686 = pneg %p270
      $region62: #{downsample_rvq_forward.11} parent=59 // pred_check_branch
        %688 = sbr.rel (%p686) target = $region64
      $region63: #{downsample_rvq_forward.11} parent=59 // pred_region
        _
      $region64: #{downsample_rvq_forward.11} parent=59 // pred_fallthru
        _
    $region60: #{downsample_rvq_forward.11} parent=5 // pred_fallthru
      _
    %p689 = scmp.le.s32.totalorder 2, %s16
    // Predicated region
    $region65: #{downsample_rvq_forward.11} parent=5 // pred_check
      %p690 = pneg %p689
    $region66: #{downsample_rvq_forward.11} parent=5 // pred_check_branch
      %692 = sbr.rel (%p690) target = $region68
    $region67: #{downsample_rvq_forward.11} parent=5 // pred_region
      %s693 = ssub.s32 %s16, 2
      // Predicated region
      $region69: #{downsample_rvq_forward.11} parent=67 // pred_check
        %p694 = pneg %p276
      $region70: #{downsample_rvq_forward.11} parent=67 // pred_check_branch
        %696 = sbr.rel (%p694) target = $region72
      $region71: #{downsample_rvq_forward.11} parent=67 // pred_region
        %p697 = scmp.lt.s32.totalorder %s27, 1
        %s698 = scalar_select %p697, %s27, 1
        %p699 = scmp.lt.s32.totalorder %s28, 0
        %s700 = scalar_select %p699, %s28, 0
        %s701 = sadd.s32 %s700, %s698
        %s702 = smul.addr %s701, 8
        %s703 = scalar_lea.vmem %s10, %s702
      $region72: #{downsample_rvq_forward.11} parent=67 // pred_fallthru
        _
    $region68: #{downsample_rvq_forward.11} parent=5 // pred_fallthru
      _
  $region6: #{downsample_rvq_forward.11} parent=0 // loop_footer
    %s20 = sadd.s32 1, %s16
  $region7: #{downsample_rvq_forward.11} parent=0 // loop_footer_branch
    %15 = sbr.rel target = $region3
  $region8: #{downsample_rvq_forward.11} parent=0 // loop_exit
    _

// kernel: downsample_rvq_forward.13
$region0: #{downsample_rvq_forward.13}
  #allocation0 [shape = 'u32[]', space=smem, size = 0x4, offset = 0x4, fixed_abs, tag = 'smem constant byte address 0x4 - core index']
  #allocation1 [shape = 'u32[144,128]{1,0:T(1,128)}', space=vmem, size = 0x12000, scoped, tag = 'internal scratch']
  #allocation2 [shape = 'f32[24,32]{1,0:T(8,128)}', space=vmem, size = 0x3000, scoped, tag = 'scratch operand']
  %s0 = inlined_call_operand.vmem [shape: f32[2,16,32], index: 0, kind: input, shape index: {}]
  %s1 = inlined_call_operand.vmem [shape: f32[7,32], index: 1, kind: input, shape index: {}]
  %s2 = inlined_call_operand.vmem [shape: f32[1,32], index: 2, kind: input, shape index: {}, may-alias: {2,4,8}]
  %s3 = inlined_call_operand.vmem [shape: f32[1,32], index: 3, kind: input, shape index: {}]
  %s4 = inlined_call_operand.vmem [shape: f32[1,32], index: 4, kind: input, shape index: {}, may-alias: {2,4,8}]
  %s5 = inlined_call_operand.vmem [shape: f32[32,128], index: 5, kind: input, shape index: {}]
  %s6 = inlined_call_operand.vmem [shape: f32[1,128], index: 6, kind: input, shape index: {}]
  %s7 = inlined_call_operand.vmem [shape: f32[128,32], index: 7, kind: input, shape index: {}]
  %s8 = inlined_call_operand.vmem [shape: f32[1,32], index: 8, kind: input, shape index: {}, may-alias: {2,4,8}]
  %s9 = inlined_call_operand.vmem [shape: f32[1,32], index: 9, kind: input, shape index: {}]
  %s10 = inlined_call_operand.hbm [shape: f32[2,16,32], index: 10, kind: output, shape index: {}]
  %s11 = sld [smem:[#allocation0]]
  $region73: #{downsample_rvq_forward.13} parent=0
    _
  %s13 = ssub.s32 1, %s11
  %s14 = scalar_select 0, %s13, %s11
  $region1: #{downsample_rvq_forward.13} parent=0
    #allocation3 [shape = 'u8[16384]{0}', space=vmem, size = 0x4000, scoped, tag = 'output window, operand 0']
    #allocation4 [shape = 's32[2]{0}', space=sflag, size = 0x8, scoped, tag = 'scoped memory for downsample_rvq_forward.13']
    %15 = vsyncpa [#allocation4], 0
    %s16 = scalar_lea.sflag [#allocation4], 1
    %17 = vsyncpa %s16, 0
    loop: start=0, step=1, limit=4
    $region2: #{downsample_rvq_forward.13} parent=1 // loop_pre_header
      _
    $region3: #{downsample_rvq_forward.13} parent=1 // loop_header
      %s19 = sphi 0, %s23
      %p20 = scmp.ge.s32.totalorder %s19, 4
      %s26 = sphi 0, %s38
      %s27 = sphi 0, %s34
      %s28 = sphi 0, %s26
      %s29 = sphi 0, %s27
      %s30 = sphi 0, %s28
      %s31 = sphi 0, %s29
      %s43 = sphi 0, %s45
      %s46 = sphi 0, %s43
      %s47 = sphi 0, %s46
      %s63 = sphi 0, %s47
      %s67 = sphi 0, %s67
      %s69 = sphi 0, %s67
      %s70 = sphi 0, %s69
      %s84 = sphi 0, %s70
      %s88 = sphi 0, %s88
      %s90 = sphi 0, %s88
      %s91 = sphi 0, %s90
      %s105 = sphi 0, %s91
      %s109 = sphi 0, %s109
      %s111 = sphi 0, %s109
      %s112 = sphi 0, %s111
      %s126 = sphi 0, %s112
      %s130 = sphi 0, %s130
      %s132 = sphi 0, %s130
      %s133 = sphi 0, %s132
      %s147 = sphi 0, %s133
      %s151 = sphi 0, %s151
      %s153 = sphi 0, %s151
      %s154 = sphi 0, %s153
      %s168 = sphi 0, %s154
      %s172 = sphi 0, %s172
      %s174 = sphi 0, %s172
      %s175 = sphi 0, %s174
      %s189 = sphi 0, %s175
      %s193 = sphi 0, %s193
      %s195 = sphi 0, %s193
      %s196 = sphi 0, %s195
      %s210 = sphi 0, %s196
      %s214 = sphi 0, %s214
      %s216 = sphi 0, %s214
      %s217 = sphi 0, %s216
      %s231 = sphi 0, %s217
      %s235 = sphi 0, %s235
      %s237 = sphi 0, %s235
      %s238 = sphi 0, %s237
      %s252 = sphi 0, %s238
      %s260 = sphi 0, %s262
      %s263 = sphi 0, %s260
      %s264 = sphi 0, %s263
      %s280 = sphi 0, %s264
    $region4: #{downsample_rvq_forward.13} parent=1 // loop_header_branch
      %22 = sbr.rel (%p20) target = $region8
    $region5: #{downsample_rvq_forward.13} parent=1 // loop_body
      %s24 = ssub.s32 %s19, 1
      %s25 = ssub.s32 %s19, 2
      %s32 = sadd.s32 1, %s27
      %p33 = scmp.ge.s32.totalorder %s32, 1
      %s34 = scalar_select %p33, 0, %s32
      %s35 = sadd.s32 1, %s26
      %s36 = scalar_select %p33, %s35, %s26
      %p37 = scmp.ge.s32.totalorder %s36, 2
      %s38 = scalar_select %p37, 0, %s36
      %s39 = ssub.s32 %s26, %s38
      %s40 = ssub.s32 %s27, %s34
      %s41 = sor.u32 %s39, %s40
      %p42 = scmp.eq.s32.totalorder %s41, 0
      %s44 = sadd.s32 %s43, 1
      %s45 = scalar_select %p42, %s43, %s44
      %p48 = pneg %p42
      %p49 = scmp.eq.s32.totalorder %s19, 1
      %p50 = por %p48, %p49
      %p51 = scmp.ne.s32.totalorder %s43, %s46
      %p52 = scmp.eq.s32.totalorder %s19, 0
      %p53 = por %p51, %p52
      %p54 = scmp.ne.s32.totalorder %s43, %s46
      %p55 = scmp.eq.s32.totalorder %s24, 1
      %p56 = por %p54, %p55
      %p57 = scmp.ne.s32.totalorder %s46, %s47
      %p58 = scmp.eq.s32.totalorder %s24, 0
      %p59 = por %p57, %p58
      %p60 = scmp.ne.s32.totalorder %s46, %s47
      %p61 = scmp.eq.s32.totalorder %s25, 1
      %p62 = por %p60, %p61
      %p64 = scmp.ne.s32.totalorder %s47, %s63
      %p65 = scmp.eq.s32.totalorder %s25, 0
      %p66 = por %p64, %p65
      %s68 = sadd.s32 %s67, 1
      %p71 = scmp.eq.s32.totalorder %s19, 1
      %p72 = scmp.ne.s32.totalorder %s67, %s69
      %p73 = scmp.eq.s32.totalorder %s19, 0
      %p74 = por %p72, %p73
      %p75 = scmp.ne.s32.totalorder %s67, %s69
      %p76 = scmp.eq.s32.totalorder %s24, 1
      %p77 = por %p75, %p76
      %p78 = scmp.ne.s32.totalorder %s69, %s70
      %p79 = scmp.eq.s32.totalorder %s24, 0
      %p80 = por %p78, %p79
      %p81 = scmp.ne.s32.totalorder %s69, %s70
      %p82 = scmp.eq.s32.totalorder %s25, 1
      %p83 = por %p81, %p82
      %p85 = scmp.ne.s32.totalorder %s70, %s84
      %p86 = scmp.eq.s32.totalorder %s25, 0
      %p87 = por %p85, %p86
      %s89 = sadd.s32 %s88, 1
      %p92 = scmp.eq.s32.totalorder %s19, 1
      %p93 = scmp.ne.s32.totalorder %s88, %s90
      %p94 = scmp.eq.s32.totalorder %s19, 0
      %p95 = por %p93, %p94
      %p96 = scmp.ne.s32.totalorder %s88, %s90
      %p97 = scmp.eq.s32.totalorder %s24, 1
      %p98 = por %p96, %p97
      %p99 = scmp.ne.s32.totalorder %s90, %s91
      %p100 = scmp.eq.s32.totalorder %s24, 0
      %p101 = por %p99, %p100
      %p102 = scmp.ne.s32.totalorder %s90, %s91
      %p103 = scmp.eq.s32.totalorder %s25, 1
      %p104 = por %p102, %p103
      %p106 = scmp.ne.s32.totalorder %s91, %s105
      %p107 = scmp.eq.s32.totalorder %s25, 0
      %p108 = por %p106, %p107
      %s110 = sadd.s32 %s109, 1
      %p113 = scmp.eq.s32.totalorder %s19, 1
      %p114 = scmp.ne.s32.totalorder %s109, %s111
      %p115 = scmp.eq.s32.totalorder %s19, 0
      %p116 = por %p114, %p115
      %p117 = scmp.ne.s32.totalorder %s109, %s111
      %p118 = scmp.eq.s32.totalorder %s24, 1
      %p119 = por %p117, %p118
      %p120 = scmp.ne.s32.totalorder %s111, %s112
      %p121 = scmp.eq.s32.totalorder %s24, 0
      %p122 = por %p120, %p121
      %p123 = scmp.ne.s32.totalorder %s111, %s112
      %p124 = scmp.eq.s32.totalorder %s25, 1
      %p125 = por %p123, %p124
      %p127 = scmp.ne.s32.totalorder %s112, %s126
      %p128 = scmp.eq.s32.totalorder %s25, 0
      %p129 = por %p127, %p128
      %s131 = sadd.s32 %s130, 1
      %p134 = scmp.eq.s32.totalorder %s19, 1
      %p135 = scmp.ne.s32.totalorder %s130, %s132
      %p136 = scmp.eq.s32.totalorder %s19, 0
      %p137 = por %p135, %p136
      %p138 = scmp.ne.s32.totalorder %s130, %s132
      %p139 = scmp.eq.s32.totalorder %s24, 1
      %p140 = por %p138, %p139
      %p141 = scmp.ne.s32.totalorder %s132, %s133
      %p142 = scmp.eq.s32.totalorder %s24, 0
      %p143 = por %p141, %p142
      %p144 = scmp.ne.s32.totalorder %s132, %s133
      %p145 = scmp.eq.s32.totalorder %s25, 1
      %p146 = por %p144, %p145
      %p148 = scmp.ne.s32.totalorder %s133, %s147
      %p149 = scmp.eq.s32.totalorder %s25, 0
      %p150 = por %p148, %p149
      %s152 = sadd.s32 %s151, 1
      %p155 = scmp.eq.s32.totalorder %s19, 1
      %p156 = scmp.ne.s32.totalorder %s151, %s153
      %p157 = scmp.eq.s32.totalorder %s19, 0
      %p158 = por %p156, %p157
      %p159 = scmp.ne.s32.totalorder %s151, %s153
      %p160 = scmp.eq.s32.totalorder %s24, 1
      %p161 = por %p159, %p160
      %p162 = scmp.ne.s32.totalorder %s153, %s154
      %p163 = scmp.eq.s32.totalorder %s24, 0
      %p164 = por %p162, %p163
      %p165 = scmp.ne.s32.totalorder %s153, %s154
      %p166 = scmp.eq.s32.totalorder %s25, 1
      %p167 = por %p165, %p166
      %p169 = scmp.ne.s32.totalorder %s154, %s168
      %p170 = scmp.eq.s32.totalorder %s25, 0
      %p171 = por %p169, %p170
      %s173 = sadd.s32 %s172, 1
      %p176 = scmp.eq.s32.totalorder %s19, 1
      %p177 = scmp.ne.s32.totalorder %s172, %s174
      %p178 = scmp.eq.s32.totalorder %s19, 0
      %p179 = por %p177, %p178
      %p180 = scmp.ne.s32.totalorder %s172, %s174
      %p181 = scmp.eq.s32.totalorder %s24, 1
      %p182 = por %p180, %p181
      %p183 = scmp.ne.s32.totalorder %s174, %s175
      %p184 = scmp.eq.s32.totalorder %s24, 0
      %p185 = por %p183, %p184
      %p186 = scmp.ne.s32.totalorder %s174, %s175
      %p187 = scmp.eq.s32.totalorder %s25, 1
      %p188 = por %p186, %p187
      %p190 = scmp.ne.s32.totalorder %s175, %s189
      %p191 = scmp.eq.s32.totalorder %s25, 0
      %p192 = por %p190, %p191
      %s194 = sadd.s32 %s193, 1
      %p197 = scmp.eq.s32.totalorder %s19, 1
      %p198 = scmp.ne.s32.totalorder %s193, %s195
      %p199 = scmp.eq.s32.totalorder %s19, 0
      %p200 = por %p198, %p199
      %p201 = scmp.ne.s32.totalorder %s193, %s195
      %p202 = scmp.eq.s32.totalorder %s24, 1
      %p203 = por %p201, %p202
      %p204 = scmp.ne.s32.totalorder %s195, %s196
      %p205 = scmp.eq.s32.totalorder %s24, 0
      %p206 = por %p204, %p205
      %p207 = scmp.ne.s32.totalorder %s195, %s196
      %p208 = scmp.eq.s32.totalorder %s25, 1
      %p209 = por %p207, %p208
      %p211 = scmp.ne.s32.totalorder %s196, %s210
      %p212 = scmp.eq.s32.totalorder %s25, 0
      %p213 = por %p211, %p212
      %s215 = sadd.s32 %s214, 1
      %p218 = scmp.eq.s32.totalorder %s19, 1
      %p219 = scmp.ne.s32.totalorder %s214, %s216
      %p220 = scmp.eq.s32.totalorder %s19, 0
      %p221 = por %p219, %p220
      %p222 = scmp.ne.s32.totalorder %s214, %s216
      %p223 = scmp.eq.s32.totalorder %s24, 1
      %p224 = por %p222, %p223
      %p225 = scmp.ne.s32.totalorder %s216, %s217
      %p226 = scmp.eq.s32.totalorder %s24, 0
      %p227 = por %p225, %p226
      %p228 = scmp.ne.s32.totalorder %s216, %s217
      %p229 = scmp.eq.s32.totalorder %s25, 1
      %p230 = por %p228, %p229
      %p232 = scmp.ne.s32.totalorder %s217, %s231
      %p233 = scmp.eq.s32.totalorder %s25, 0
      %p234 = por %p232, %p233
      %s236 = sadd.s32 %s235, 1
      %p239 = scmp.eq.s32.totalorder %s19, 1
      %p240 = scmp.ne.s32.totalorder %s235, %s237
      %p241 = scmp.eq.s32.totalorder %s19, 0
      %p242 = por %p240, %p241
      %p243 = scmp.ne.s32.totalorder %s235, %s237
      %p244 = scmp.eq.s32.totalorder %s24, 1
      %p245 = por %p243, %p244
      %p246 = scmp.ne.s32.totalorder %s237, %s238
      %p247 = scmp.eq.s32.totalorder %s24, 0
      %p248 = por %p246, %p247
      %p249 = scmp.ne.s32.totalorder %s237, %s238
      %p250 = scmp.eq.s32.totalorder %s25, 1
      %p251 = por %p249, %p250
      %p253 = scmp.ne.s32.totalorder %s238, %s252
      %p254 = scmp.eq.s32.totalorder %s25, 0
      %p255 = por %p253, %p254
      %s256 = ssub.s32 %s26, %s38
      %s257 = ssub.s32 %s27, %s34
      %s258 = sor.u32 %s256, %s257
      %p259 = scmp.eq.s32.totalorder %s258, 0
      %s261 = sadd.s32 %s260, 1
      %s262 = scalar_select %p259, %s260, %s261
      %p265 = pneg %p259
      %p266 = scmp.eq.s32.totalorder %s19, 1
      %p267 = por %p265, %p266
      %p268 = scmp.ne.s32.totalorder %s260, %s263
      %p269 = scmp.eq.s32.totalorder %s19, 0
      %p270 = por %p268, %p269
      %p271 = scmp.ne.s32.totalorder %s260, %s263
      %p272 = scmp.eq.s32.totalorder %s24, 1
      %p273 = por %p271, %p272
      %p274 = scmp.ne.s32.totalorder %s263, %s264
      %p275 = scmp.eq.s32.totalorder %s24, 0
      %p276 = por %p274, %p275
      %p277 = scmp.ne.s32.totalorder %s263, %s264
      %p278 = scmp.eq.s32.totalorder %s25, 1
      %p279 = por %p277, %p278
      %p281 = scmp.ne.s32.totalorder %s264, %s280
      %p282 = scmp.eq.s32.totalorder %s25, 0
      %p283 = por %p281, %p282
      %p284 = scmp.le.s32.totalorder 1, %s19
      %p285 = scmp.lt.s32.totalorder %s19, 3
      %p286 = pnand %p284, %p285
      %p287 = pneg %p286
      // Predicated region
      $region9: #{downsample_rvq_forward.13} parent=5 // pred_check
        _
      $region10: #{downsample_rvq_forward.13} parent=5 // pred_check_branch
        %289 = sbr.rel (%p286) target = $region12
      $region11: #{downsample_rvq_forward.13} parent=5 // pred_region
        %s290 = ssub.s32 %s19, 1
        // Predicated region
        $region13: #{downsample_rvq_forward.13} parent=11 // pred_check
          %p291 = pneg %p80
        $region14: #{downsample_rvq_forward.13} parent=11 // pred_check_branch
          %293 = sbr.rel (%p291) target = $region16
        $region15: #{downsample_rvq_forward.13} parent=11 // pred_region
          _
        $region16: #{downsample_rvq_forward.13} parent=11 // pred_fallthru
          _
        // Predicated region
        $region17: #{downsample_rvq_forward.13} parent=11 // pred_check
          %p294 = pneg %p101
        $region18: #{downsample_rvq_forward.13} parent=11 // pred_check_branch
          %296 = sbr.rel (%p294) target = $region20
        $region19: #{downsample_rvq_forward.13} parent=11 // pred_region
          _
        $region20: #{downsample_rvq_forward.13} parent=11 // pred_fallthru
          _
        // Predicated region
        $region21: #{downsample_rvq_forward.13} parent=11 // pred_check
          %p297 = pneg %p122
        $region22: #{downsample_rvq_forward.13} parent=11 // pred_check_branch
          %299 = sbr.rel (%p297) target = $region24
        $region23: #{downsample_rvq_forward.13} parent=11 // pred_region
          _
        $region24: #{downsample_rvq_forward.13} parent=11 // pred_fallthru
          _
        // Predicated region
        $region25: #{downsample_rvq_forward.13} parent=11 // pred_check
          %p300 = pneg %p143
        $region26: #{downsample_rvq_forward.13} parent=11 // pred_check_branch
          %302 = sbr.rel (%p300) target = $region28
        $region27: #{downsample_rvq_forward.13} parent=11 // pred_region
          _
        $region28: #{downsample_rvq_forward.13} parent=11 // pred_fallthru
          _
        // Predicated region
        $region29: #{downsample_rvq_forward.13} parent=11 // pred_check
          %p303 = pneg %p164
        $region30: #{downsample_rvq_forward.13} parent=11 // pred_check_branch
          %305 = sbr.rel (%p303) target = $region32
        $region31: #{downsample_rvq_forward.13} parent=11 // pred_region
          _
        $region32: #{downsample_rvq_forward.13} parent=11 // pred_fallthru
          _
        // Predicated region
        $region33: #{downsample_rvq_forward.13} parent=11 // pred_check
          %p306 = pneg %p185
        $region34: #{downsample_rvq_forward.13} parent=11 // pred_check_branch
          %308 = sbr.rel (%p306) target = $region36
        $region35: #{downsample_rvq_forward.13} parent=11 // pred_region
          _
        $region36: #{downsample_rvq_forward.13} parent=11 // pred_fallthru
          _
        // Predicated region
        $region37: #{downsample_rvq_forward.13} parent=11 // pred_check
          %p309 = pneg %p206
        $region38: #{downsample_rvq_forward.13} parent=11 // pred_check_branch
          %311 = sbr.rel (%p309) target = $region40
        $region39: #{downsample_rvq_forward.13} parent=11 // pred_region
          _
        $region40: #{downsample_rvq_forward.13} parent=11 // pred_fallthru
          _
        // Predicated region
        $region41: #{downsample_rvq_forward.13} parent=11 // pred_check
          %p312 = pneg %p227
        $region42: #{downsample_rvq_forward.13} parent=11 // pred_check_branch
          %314 = sbr.rel (%p312) target = $region44
        $region43: #{downsample_rvq_forward.13} parent=11 // pred_region
          _
        $region44: #{downsample_rvq_forward.13} parent=11 // pred_fallthru
          _
        // Predicated region
        $region45: #{downsample_rvq_forward.13} parent=11 // pred_check
          %p315 = pneg %p248
        $region46: #{downsample_rvq_forward.13} parent=11 // pred_check_branch
          %317 = sbr.rel (%p315) target = $region48
        $region47: #{downsample_rvq_forward.13} parent=11 // pred_region
          _
        $region48: #{downsample_rvq_forward.13} parent=11 // pred_fallthru
          _
      $region12: #{downsample_rvq_forward.13} parent=5 // pred_fallthru
        _
      %p318 = scmp.lt.s32.totalorder %s19, 2
      // Predicated region
      $region49: #{downsample_rvq_forward.13} parent=5 // pred_check
        %p319 = pneg %p318
      $region50: #{downsample_rvq_forward.13} parent=5 // pred_check_branch
        %321 = sbr.rel (%p319) target = $region52
      $region51: #{downsample_rvq_forward.13} parent=5 // pred_region
        // Predicated region
        $region53: #{downsample_rvq_forward.13} parent=51 // pred_check
          %p322 = pneg %p53
        $region54: #{downsample_rvq_forward.13} parent=51 // pred_check_branch
          %324 = sbr.rel (%p322) target = $region56
        $region55: #{downsample_rvq_forward.13} parent=51 // pred_region
          %s325 = smul.u32 2, %s27
          %p326 = scmp.lt.s32.totalorder %s26, 1
          %s327 = scalar_select %p326, %s26, 1
          %p328 = scmp.lt.s32.totalorder %s325, 1
          %s329 = scalar_select %p328, %s325, 1
          %s330 = smul.addr %s327, 2
          %s331 = sadd.s32 %s329, %s330
          %s332 = smul.addr %s331, 8
          %s333 = scalar_lea.vmem %s0, %s332
          %s334 = smul.u32 2, %s27
        $region56: #{downsample_rvq_forward.13} parent=51 // pred_fallthru
          _
      $region52: #{downsample_rvq_forward.13} parent=5 // pred_fallthru
        _
      %p335 = scmp.le.s32.totalorder 1, %s19
      %p336 = scmp.lt.s32.totalorder %s19, 3
      %p337 = pnand %p335, %p336
      %p338 = pneg %p337
      // Predicated region
      $region57: #{downsample_rvq_forward.13} parent=5 // pred_check
        _
      $region58: #{downsample_rvq_forward.13} parent=5 // pred_check_branch
        %340 = sbr.rel (%p337) target = $region60
      $region59: #{downsample_rvq_forward.13} parent=5 // pred_region
        %s341 = ssub.s32 %s19, 1
        %s342 = smul.u32 2, %s29
        %p343 = scmp.lt.s32.totalorder %s28, 1
        %s344 = scalar_select %p343, %s28, 1
        %p345 = scmp.lt.s32.totalorder %s342, 1
        %s346 = scalar_select %p345, %s342, 1
        %s347 = smul.addr %s344, 2
        %s348 = sadd.s32 %s346, %s347
        %s349 = smul.addr %s348, 8
        %s350 = scalar_lea.vmem %s0, %s349
        %p351 = pneg %p59
        %p352 = pneg %p56
        %p353 = pneg %p80
        %p354 = pneg %p77
        %p355 = pneg %p101
        %p356 = pneg %p98
        %p357 = pneg %p122
        %p358 = pneg %p119
        %p359 = pneg %p143
        %p360 = pneg %p140
        %p361 = pneg %p164
        %p362 = pneg %p161
        %p363 = pneg %p185
        %p364 = pneg %p182
        %p365 = pneg %p206
        %p366 = pneg %p203
        %p367 = pneg %p227
        %p368 = pneg %p224
        %p369 = pneg %p248
        %p370 = pneg %p245
        %p371 = pneg %p276
        %p372 = pneg %p273
        %s373 = sand.u32 %s263, 1
        %s374 = scalar_lea.sflag [#allocation4], %s373
        %s375 = sand.u32 %s263, 1
        %s376 = smul.addr %s375, 16
        %s377 = scalar_lea.vmem [#allocation3], %s376
        %s378 = smul.u32 2, %s29
        %p379 = scmp.lt.s32.totalorder %s28, 1
        %s380 = scalar_select %p379, %s28, 1
        %p381 = scmp.lt.s32.totalorder %s378, 1
        %s382 = scalar_select %p381, %s378, 1
        %s383 = smul.addr %s380, 2
        %s384 = sadd.s32 %s382, %s383
        %s385 = smul.addr %s384, 8
        %s386 = scalar_lea.vmem %s0, %s385
        %s387 = smul.u32 2, %s29
        %s388 = smul.u32 2, %s29
        %v389 = vld [vmem:[%s386] sm:$0xff]
        %v390 = vld [vmem:[%s386 + $0x8] sm:$0xff]
        %vm391 = vcmask 261120
        %392 = vst.msk [vmem:[#allocation2] sm:$0xff] %vm391, 0.0
        %393 = vst.msk [vmem:[#allocation2 + $0x8] sm:$0xff] %vm391, %v389
        %394 = vst.msk [vmem:[#allocation2 + $0x10] sm:$0xff] %vm391, %v390
        %v395 = vld [vmem:[%s2] sm:$0x1]
        %v397 = vlaneseq
        %v398 = vshrl.u32 %v397, 7
        %v399 = vsub.s32 0, %v398
        %v400 = vrot.slane %v395, %v399
        %v402 = vld [vmem:[#allocation2 + $0x2] sm:$0xff]
        %v403 = vld [vmem:[#allocation2 + $0xa] sm:$0xff]
        %v404 = vld [vmem:[%s1] sm:$0x1]
        %v405 = vlaneseq
        %v406 = vshrl.u32 %v405, 7
        %v407 = vsub.s32 0, %v406
        %v408 = vrot.slane %v404, %v407
        %v409 = vmul.f32 %v402, %v408
        %v410 = vmul.f32 %v403, %v408
        %v411 = vadd.f32 %v400, %v409
        %v412 = vadd.f32 %v400, %v410
        %v413 = vld [vmem:[#allocation2 + $0x3] sm:$0xff]
        %v414 = vld [vmem:[#allocation2 + $0xb] sm:$0xff]
        %v415 = vld [vmem:[%s1 + $0x1] sm:$0x1]
        %v416 = vlaneseq
        %v417 = vshrl.u32 %v416, 7
        %v418 = vsub.s32 0, %v417
        %v419 = vrot.slane %v415, %v418
        %v420 = vmul.f32 %v413, %v419
        %v421 = vmul.f32 %v414, %v419
        %v422 = vadd.f32 %v411, %v420
        %v423 = vadd.f32 %v412, %v421
        %v424 = vld [vmem:[#allocation2 + $0x4] sm:$0xff]
        %v425 = vld [vmem:[#allocation2 + $0xc] sm:$0xff]
        %v426 = vld [vmem:[%s1 + $0x2] sm:$0x1]
        %v427 = vlaneseq
        %v428 = vshrl.u32 %v427, 7
        %v429 = vsub.s32 0, %v428
        %v430 = vrot.slane %v426, %v429
        %v431 = vmul.f32 %v424, %v430
        %v432 = vmul.f32 %v425, %v430
        %v433 = vadd.f32 %v422, %v431
        %v434 = vadd.f32 %v423, %v432
        %v435 = vld [vmem:[#allocation2 + $0x5] sm:$0xff]
        %v436 = vld [vmem:[#allocation2 + $0xd] sm:$0xff]
        %v437 = vld [vmem:[%s1 + $0x3] sm:$0x1]
        %v438 = vlaneseq
        %v439 = vshrl.u32 %v438, 7
        %v440 = vsub.s32 0, %v439
        %v441 = vrot.slane %v437, %v440
        %v442 = vmul.f32 %v435, %v441
        %v443 = vmul.f32 %v436, %v441
        %v444 = vadd.f32 %v433, %v442
        %v445 = vadd.f32 %v434, %v443
        %v446 = vld [vmem:[#allocation2 + $0x6] sm:$0xff]
        %v447 = vld [vmem:[#allocation2 + $0xe] sm:$0xff]
        %v448 = vld [vmem:[%s1 + $0x4] sm:$0x1]
        %v449 = vlaneseq
        %v450 = vshrl.u32 %v449, 7
        %v451 = vsub.s32 0, %v450
        %v452 = vrot.slane %v448, %v451
        %v453 = vmul.f32 %v446, %v452
        %v454 = vmul.f32 %v447, %v452
        %v455 = vadd.f32 %v444, %v453
        %v456 = vadd.f32 %v445, %v454
        %v457 = vld [vmem:[#allocation2 + $0x7] sm:$0xff]
        %v458 = vld [vmem:[#allocation2 + $0xf] sm:$0xff]
        %v459 = vld [vmem:[%s1 + $0x5] sm:$0x1]
        %v460 = vlaneseq
        %v461 = vshrl.u32 %v460, 7
        %v462 = vsub.s32 0, %v461
        %v463 = vrot.slane %v459, %v462
        %v464 = vmul.f32 %v457, %v463
        %v465 = vmul.f32 %v458, %v463
        %v466 = vadd.f32 %v455, %v464
        %v467 = vadd.f32 %v456, %v465
        %v468 = vld [vmem:[#allocation2 + $0x8] sm:$0xff]
        %v469 = vld [vmem:[#allocation2 + $0x10] sm:$0xff]
        %v470 = vld [vmem:[%s1 + $0x6] sm:$0x1]
        %v471 = vlaneseq
        %v472 = vshrl.u32 %v471, 7
        %v473 = vsub.s32 0, %v472
        %v474 = vrot.slane %v470, %v473
        %v475 = vmul.f32 %v468, %v474
        %v476 = vmul.f32 %v469, %v474
        %v477 = vadd.f32 %v466, %v475
        %v478 = vadd.f32 %v467, %v476
        %v479 = vsel %vm391, %v477, 0.0
        %480 = vadd.xlane.f32.xlu0 %v479
        %v481 = vpop.xlane.xlu0 %480
        %v482 = vsel %vm391, %v478, 0.0
        %483 = vadd.xlane.f32.xlu0 %v482
        %v484 = vpop.xlane.xlu0 %483
        %v485 = vrcp.pop 32.0
        %v486 = vmul.f32 %v481, %v485
        %v487 = vmul.f32 %v484, %v485
        %v488 = vsub.f32 %v477, %v486
        %v489 = vsub.f32 %v478, %v487
        %v490 = vmul.f32 %v488, %v488
        %v491 = vmul.f32 %v489, %v489
        %v492 = vsel %vm391, %v490, 0.0
        %493 = vadd.xlane.f32.xlu0 %v492
        %v494 = vpop.xlane.xlu0 %493
        %v495 = vsel %vm391, %v491, 0.0
        %496 = vadd.xlane.f32.xlu0 %v495
        %v497 = vpop.xlane.xlu0 %496
        %v498 = vmul.f32 %v494, %v485
        %v499 = vmul.f32 %v497, %v485
        %v500 = vadd.f32 %v498, 1e-06
        %v501 = vadd.f32 %v499, 1e-06
        %v502 = vrsqrt.pop %v500
        %v503 = vrsqrt.pop %v501
        %v504 = vmul.f32 %v488, %v502
        %v505 = vmul.f32 %v489, %v503
        %v506 = vld [vmem:[%s3] sm:$0x1]
        %v508 = vlaneseq
        %v509 = vshrl.u32 %v508, 7
        %v510 = vsub.s32 0, %v509
        %v511 = vrot.slane %v506, %v510
        %v513 = vmul.f32 %v504, %v511
        %v514 = vmul.f32 %v505, %v511
        %v515 = vld [vmem:[%s4] sm:$0x1]
        %v517 = vlaneseq
        %v518 = vshrl.u32 %v517, 7
        %v519 = vsub.s32 0, %v518
        %v520 = vrot.slane %v515, %v519
        %v522 = vadd.f32 %v513, %v520
        %v523 = vadd.f32 %v514, %v520
        %v524 = vld [vmem:[%s5] sm:$0xff]
        %v525 = vld [vmem:[%s5 + $0x8] sm:$0xff]
        %v526 = vld [vmem:[%s5 + $0x10] sm:$0xff]
        %v527 = vld [vmem:[%s5 + $0x18] sm:$0xff]
        %v528 = vld [vmem:[%s6] sm:$0x1]
        %v530 = vlaneseq
        %v531 = vshrl.u32 %v530, 7
        %v532 = vsub.s32 0, %v531
        %v533 = vrot.slane %v528, %v532
        %v536 = vsel %vm391, %v522, 0
        %v539 = vsel %vm391, %v523, 0
        %541 = vmatprep.subr.mxu0 0.0
        %542 = vmatpush1.msra.mxu0 %v524
        %543 = vmatprep.subr.mxu0 0.0
        %544 = vmatpush1.msra.mxu0 %v525
        %545 = vmatprep.subr.mxu0 0.0
        %546 = vmatpush1.msra.mxu0 %v526
        %547 = vmatprep.subr.mxu0 0.0
        %548 = vmatpush1.msra.mxu0 %v527
        %549 = vmatprep.subr.mxu0 0.0
        %550 = vmatpush1.msra.mxu0 0.0
        %551 = vmatprep.subr.mxu0 0.0
        %552 = vmatpush1.msra.mxu0 0.0
        %553 = vmatprep.subr.mxu0 0.0
        %554 = vmatpush1.msra.mxu0 0.0
        %555 = vmatprep.subr.mxu0 0.0
        %556 = vmatpush1.msra.mxu0 0.0
        %557 = vmatprep.subr.mxu0 0.0
        %558 = vmatpush1.msra.mxu0 0.0
        %559 = vmatprep.subr.mxu0 0.0
        %560 = vmatpush1.msra.mxu0 0.0
        %561 = vmatprep.subr.mxu0 0.0
        %562 = vmatpush1.msra.mxu0 0.0
        %563 = vmatprep.subr.mxu0 0.0
        %564 = vmatpush1.msra.mxu0 0.0
        %565 = vmatprep.subr.mxu0 0.0
        %566 = vmatpush1.msra.mxu0 0.0
        %567 = vmatprep.subr.mxu0 0.0
        %568 = vmatpush1.msra.mxu0 0.0
        %569 = vmatprep.subr.mxu0 0.0
        %570 = vmatpush1.msra.mxu0 0.0
        %571 = vmatprep.subr.mxu0 0.0
        %572 = vmatpush1.msra.mxu0 0.0
        %573 = vmatprep.subr.mxu0 0.0
        %574 = vmatpush1.msra.mxu0 0.0
        %575 = vmatprep.subr.mxu0 0.0
        %576 = vmatpush1.msra.mxu0 0.0
        %577 = vmatprep.subr.mxu0 0.0
        %578 = vmatpush1.msra.mxu0 0.0
        %579 = vmatprep.subr.mxu0 0.0
        %580 = vmatpush1.msra.mxu0 0.0
        %581 = vmatprep.subr.mxu0 0.0
        %582 = vmatpush1.msra.mxu0 0.0
        %583 = vmatprep.subr.mxu0 0.0
        %584 = vmatpush1.msra.mxu0 0.0
        %585 = vmatprep.subr.mxu0 0.0
        %586 = vmatpush1.msra.mxu0 0.0
        %587 = vmatprep.subr.mxu0 0.0
        %588 = vmatpush1.msra.mxu0 0.0
        %589 = vmatprep.subr.mxu0 0.0
        %590 = vmatpush1.msra.mxu0 0.0
        %591 = vmatprep.subr.mxu0 0.0
        %592 = vmatpush1.msra.mxu0 0.0
        %593 = vmatprep.subr.mxu0 0.0
        %594 = vmatpush1.msra.mxu0 0.0
        %595 = vmatprep.subr.mxu0 0.0
        %596 = vmatpush1.msra.mxu0 0.0
        %597 = vmatprep.subr.mxu0 0.0
        %598 = vmatpush1.msra.mxu0 0.0
        %599 = vmatprep.subr.mxu0 0.0
        %600 = vmatpush1.msra.mxu0 0.0
        %601 = vmatprep.subr.mxu0 0.0
        %602 = vmatpush1.msra.mxu0 0.0
        %603 = vmatprep.subr.mxu0 0.0
        %604 = vmatpush1.msra.mxu0 0.0
        %605 = vmatprep.mubr.f32.mxu0 0.0
        %606 = vmatmul.mubr.f32.gmra.mrb[0].mxu0 %v536
        %v607 = vpop.f32.mrb[0].mxu0
        %v608 = vadd.f32 %v533, %v607
        %v609 = vpop.f32.mrb[0].mxu0
        %610 = vmatprep.mubr.f32.mxu0 0.0
        %611 = vmatmul.mubr.f32.gmra.mrb[0].mxu0 %v539
        %v612 = vpop.f32.mrb[0].mxu0
        %v613 = vadd.f32 %v533, %v612
        %v614 = vpop.f32.mrb[0].mxu0
        %615 = vdwg.mxu0
        %v616 = vmul.f32 %v608, %v608
        %v617 = vmul.f32 %v613, %v613
        %v618 = vmul.f32 %v608, %v616
        %v619 = vmul.f32 %v613, %v617
        %v620 = vmul.f32 %v618, 0.044715
        %v621 = vmul.f32 %v619, 0.044715
        %v622 = vadd.f32 %v608, %v620
        %v623 = vadd.f32 %v613, %v621
        %v624 = vmul.f32 %v622, 0.7978846
        %v625 = vmul.f32 %v623, 0.7978846
        %v626 = vtanh.pop %v624
        %v627 = vtanh.pop %v625
        %v628 = vadd.f32 %v626, 1.0
        %v629 = vadd.f32 %v627, 1.0
        %v630 = vmul.f32 %v628, 0.5
        %v631 = vmul.f32 %v629, 0.5
        %v632 = vmul.f32 %v608, %v630
        %v633 = vmul.f32 %v613, %v631
        %v634 = vld [vmem:[%s7] sm:$0xff]
        %v635 = vld [vmem:[%s7 + $0x8] sm:$0xff]
        %v636 = vld [vmem:[%s7 + $0x10] sm:$0xff]
        %v637 = vld [vmem:[%s7 + $0x18] sm:$0xff]
        %v638 = vld [vmem:[%s7 + $0x20] sm:$0xff]
        %v639 = vld [vmem:[%s7 + $0x28] sm:$0xff]
        %v640 = vld [vmem:[%s7 + $0x30] sm:$0xff]
        %v641 = vld [vmem:[%s7 + $0x38] sm:$0xff]
        %v642 = vld [vmem:[%s7 + $0x40] sm:$0xff]
        %v643 = vld [vmem:[%s7 + $0x48] sm:$0xff]
        %v644 = vld [vmem:[%s7 + $0x50] sm:$0xff]
        %v645 = vld [vmem:[%s7 + $0x58] sm:$0xff]
        %v646 = vld [vmem:[%s7 + $0x60] sm:$0xff]
        %v647 = vld [vmem:[%s7 + $0x68] sm:$0xff]
        %v648 = vld [vmem:[%s7 + $0x70] sm:$0xff]
        %v649 = vld [vmem:[%s7 + $0x78] sm:$0xff]
        %v650 = vld [vmem:[%s8] sm:$0x1]
        %v652 = vlaneseq
        %v653 = vshrl.u32 %v652, 7
        %v654 = vsub.s32 0, %v653
        %v655 = vrot.slane %v650, %v654
        %657 = vmatprep.subr.mxu0 0.0
        %658 = vmatpush1.msra.mxu0 %v634
        %659 = vmatprep.subr.mxu0 0.0
        %660 = vmatpush1.msra.mxu0 %v635
        %661 = vmatprep.subr.mxu0 0.0
        %662 = vmatpush1.msra.mxu0 %v636
        %663 = vmatprep.subr.mxu0 0.0
        %664 = vmatpush1.msra.mxu0 %v637
        %665 = vmatprep.subr.mxu0 0.0
        %666 = vmatpush1.msra.mxu0 %v638
        %667 = vmatprep.subr.mxu0 0.0
        %668 = vmatpush1.msra.mxu0 %v639
        %669 = vmatprep.subr.mxu0 0.0
        %670 = vmatpush1.msra.mxu0 %v640
        %671 = vmatprep.subr.mxu0 0.0
        %672 = vmatpush1.msra.mxu0 %v641
        %673 = vmatprep.subr.mxu0 0.0
        %674 = vmatpush1.msra.mxu0 %v642
        %675 = vmatprep.subr.mxu0 0.0
        %676 = vmatpush1.msra.mxu0 %v643
        %677 = vmatprep.subr.mxu0 0.0
        %678 = vmatpush1.msra.mxu0 %v644
        %679 = vmatprep.subr.mxu0 0.0
        %680 = vmatpush1.msra.mxu0 %v645
        %681 = vmatprep.subr.mxu0 0.0
        %682 = vmatpush1.msra.mxu0 %v646
        %683 = vmatprep.subr.mxu0 0.0
        %684 = vmatpush1.msra.mxu0 %v647
        %685 = vmatprep.subr.mxu0 0.0
        %686 = vmatpush1.msra.mxu0 %v648
        %687 = vmatprep.subr.mxu0 0.0
        %688 = vmatpush1.msra.mxu0 %v649
        %689 = vmatprep.subr.mxu0 0.0
        %690 = vmatpush1.msra.mxu0 0.0
        %691 = vmatprep.subr.mxu0 0.0
        %692 = vmatpush1.msra.mxu0 0.0
        %693 = vmatprep.subr.mxu0 0.0
        %694 = vmatpush1.msra.mxu0 0.0
        %695 = vmatprep.subr.mxu0 0.0
        %696 = vmatpush1.msra.mxu0 0.0
        %697 = vmatprep.subr.mxu0 0.0
        %698 = vmatpush1.msra.mxu0 0.0
        %699 = vmatprep.subr.mxu0 0.0
        %700 = vmatpush1.msra.mxu0 0.0
        %701 = vmatprep.subr.mxu0 0.0
        %702 = vmatpush1.msra.mxu0 0.0
        %703 = vmatprep.subr.mxu0 0.0
        %704 = vmatpush1.msra.mxu0 0.0
        %705 = vmatprep.subr.mxu0 0.0
        %706 = vmatpush1.msra.mxu0 0.0
        %707 = vmatprep.subr.mxu0 0.0
        %708 = vmatpush1.msra.mxu0 0.0
        %709 = vmatprep.subr.mxu0 0.0
        %710 = vmatpush1.msra.mxu0 0.0
        %711 = vmatprep.subr.mxu0 0.0
        %712 = vmatpush1.msra.mxu0 0.0
        %713 = vmatprep.subr.mxu0 0.0
        %714 = vmatpush1.msra.mxu0 0.0
        %715 = vmatprep.subr.mxu0 0.0
        %716 = vmatpush1.msra.mxu0 0.0
        %717 = vmatprep.subr.mxu0 0.0
        %718 = vmatpush1.msra.mxu0 0.0
        %719 = vmatprep.subr.mxu0 0.0
        %720 = vmatpush1.msra.mxu0 0.0
        %721 = vmatprep.mubr.f32.mxu0 0.0
        %722 = vmatmul.mubr.f32.gmra.mrb[0].mxu0 %v632
        %v723 = vpop.f32.mrb[0].mxu0
        %v724 = vadd.f32 %v655, %v723
        %v725 = vpop.f32.mrb[0].mxu0
        %726 = vmatprep.mubr.f32.mxu0 0.0
        %727 = vmatmul.mubr.f32.gmra.mrb[0].mxu0 %v633
        %v728 = vpop.f32.mrb[0].mxu0
        %v729 = vadd.f32 %v655, %v728
        %v730 = vpop.f32.mrb[0].mxu0
        %731 = vdwg.mxu0
        %v732 = vld [vmem:[%s9] sm:$0x1]
        %v734 = vlaneseq
        %v735 = vshrl.u32 %v734, 7
        %v736 = vsub.s32 0, %v735
        %v737 = vrot.slane %v732, %v736
        %v739 = vmul.f32 %v737, %v724
        %v740 = vmul.f32 %v737, %v729
        %v741 = vadd.f32 %v389, %v739
        %v742 = vadd.f32 %v390, %v740
        %743 = vst.msk [vmem:[%s377] sm:$0xff] %vm391, %v741
        %744 = vst.msk [vmem:[%s377 + $0x8] sm:$0xff] %vm391, %v742
        %s745 = sand.u32 %s263, 1
        %s746 = scalar_lea.sflag [#allocation4], %s745
        %s747 = sand.u32 %s263, 1
        %s748 = smul.addr %s747, 16
        %s749 = scalar_lea.vmem [#allocation3], %s748
        // Predicated region
        $region61: #{downsample_rvq_forward.13} parent=59 // pred_check
          %p750 = pneg %p273
        $region62: #{downsample_rvq_forward.13} parent=59 // pred_check_branch
          %752 = sbr.rel (%p750) target = $region64
        $region63: #{downsample_rvq_forward.13} parent=59 // pred_region
          %s753 = smul.u32 2, %s29
          %s755 = ssub.s32 256, 256
          %756 = vsyncadd %s746, %s755
          %s757 = smul.addr %s28, 2
          %s758 = sadd.s32 %s753, %s757
          %s759 = smul.addr %s758, 128
          %s760 = scalar_lea.hbm %s10, %s759
          %s761 = sshll.u32 %s749, 4
          %s762 = int_to_ptr.vmem [resolvable:$true] %s761
          %767 = dma.vmem_to_hbm [thread:$0]  %s762, 256, %s760, %s746, 128, 128, 8
        $region64: #{downsample_rvq_forward.13} parent=59 // pred_fallthru
          _
      $region60: #{downsample_rvq_forward.13} parent=5 // pred_fallthru
        _
      %p768 = scmp.le.s32.totalorder 2, %s19
      // Predicated region
      $region65: #{downsample_rvq_forward.13} parent=5 // pred_check
        %p769 = pneg %p768
      $region66: #{downsample_rvq_forward.13} parent=5 // pred_check_branch
        %771 = sbr.rel (%p769) target = $region68
      $region67: #{downsample_rvq_forward.13} parent=5 // pred_region
        %s772 = ssub.s32 %s19, 2
        // Predicated region
        $region69: #{downsample_rvq_forward.13} parent=67 // pred_check
          %p773 = pneg %p279
        $region70: #{downsample_rvq_forward.13} parent=67 // pred_check_branch
          %775 = sbr.rel (%p773) target = $region72
        $region71: #{downsample_rvq_forward.13} parent=67 // pred_region
          %s776 = sand.u32 %s264, 1
          %s777 = scalar_lea.sflag [#allocation4], %s776
          %s778 = sand.u32 %s264, 1
          %s779 = smul.addr %s778, 16
          %s780 = scalar_lea.vmem [#allocation3], %s779
          %781 = dma.done %s777, 256
        $region72: #{downsample_rvq_forward.13} parent=67 // pred_fallthru
          _
      $region68: #{downsample_rvq_forward.13} parent=5 // pred_fallthru
        _
    $region6: #{downsample_rvq_forward.13} parent=1 // loop_footer
      %s23 = sadd.s32 1, %s19
    $region7: #{downsample_rvq_forward.13} parent=1 // loop_footer_branch
      %18 = sbr.rel target = $region3
    $region8: #{downsample_rvq_forward.13} parent=1 // loop_exit
      _
    %782 = vsyncpa [#allocation4], 1
    %s783 = scalar_lea.sflag [#allocation4], 1
    %784 = vsyncpa %s783, 1

</llo_original>
